<compile_context>
chip_gen: v7x
topology: tpu7x:2x2x1
jax: 0.10.0
libtpu: 0.0.40
codegen_flags: <defaults>
</compile_context>

<pallas_src>
import jax
import jax.numpy as jnp
from jax.experimental import pallas as pl
from jax.experimental.pallas import tpu as pltpu


# ----------------------------------------------------------------------------
# Tiling helper
# ----------------------------------------------------------------------------
def _pick_row_strip(h, cap=64):
    """Largest even divisor of h that is <= min(cap, max(2, h // 2))."""
    target = min(cap, max(2, h // 2))
    best = h
    for th in range(2, h + 1, 2):
        if h % th == 0 and th <= target:
            best = th
    return best


# ----------------------------------------------------------------------------
# Fused conv3x3+ReLU -> conv3x3+ReLU -> maxpool2x2 kernel (one VGG block)
# ----------------------------------------------------------------------------
def _make_fused_block_kernel(TH, Hc, Wc, Cin, Cmid, Cout):
    """Builds the kernel for one (image, row-strip) grid point.

    Refs:
      xp_ref : (1, Hc+4, Wc+4, Cin) bf16   whole zero-padded image (VMEM resident)
      w1_ref : (9*Cin, Cmid) bf16 if Cin <= 8 else (3, 3*Cin, Cmid) bf16
      b1_ref : (1, Cmid) f32
      w2_ref : (3, 3*Cmid, Cout) bf16      (per-kh, kw-major / cin-fast)
      b2_ref : (1, Cout) f32
      o_ref  : (1, TH//2, Wc//2, Cout)     pooled output strip
      y1_ref : (TH+2, Wc+2, Cmid) bf16     scratch: conv1 halo strip (zero outside image)
    """
    Hy, Wy = TH + 2, Wc + 2

    def kernel(xp_ref, w1_ref, b1_ref, w2_ref, b2_ref, o_ref, y1_ref):
        s = pl.program_id(1)
        r0 = s * TH
        if TH % 8 == 0:
            r0 = pl.multiple_of(r0, 8)

        # ---- first conv: Cin -> Cmid, ReLU, into the halo strip y1 ----------
        # y1[i, j] = relu(conv1)(r0 - 1 + i, j - 1), zero outside the image.
        if Cin <= 8:
            # tiny-Cin layer: single K = 9*Cin im2col dot (fills the MXU better
            # than nine K=Cin dots).
            taps = []
            for kh in range(3):
                rows = xp_ref[0, pl.ds(r0 + kh, Hy), :, :]      # (Hy, Wc+4, Cin)
                for kw in range(3):
                    taps.append(rows[:, kw:kw + Wy, :])         # (Hy, Wy, Cin)
            patch = jnp.concatenate(taps, axis=-1)              # (Hy, Wy, 9*Cin)
            acc1 = jnp.dot(patch.reshape(Hy * Wy, 9 * Cin), w1_ref[...],
                           preferred_element_type=jnp.float32)
        else:
            # per-kh: concat the three kw-shifted taps -> K = 3*Cin per dot.
            acc1 = jnp.zeros((Hy * Wy, Cmid), jnp.float32)
            for kh in range(3):
                rows = xp_ref[0, pl.ds(r0 + kh, Hy), :, :]      # (Hy, Wc+4, Cin)
                cat = jnp.concatenate(
                    [rows[:, kw:kw + Wy, :] for kw in range(3)], axis=-1)
                acc1 = acc1 + jnp.dot(cat.reshape(Hy * Wy, 3 * Cin), w1_ref[kh],
                                      preferred_element_type=jnp.float32)
        acc1 = jnp.maximum(acc1 + b1_ref[...], 0.0).reshape(Hy, Wy, Cmid)

        # Zero halo positions outside the true image so the second conv's
        # 'same' zero padding is honored (branch-free mask).
        ri = r0 - 1 + jax.lax.broadcasted_iota(jnp.int32, (Hy, Wy, 1), 0)
        ci = -1 + jax.lax.broadcasted_iota(jnp.int32, (Hy, Wy, 1), 1)
        valid = (ri >= 0) & (ri < Hc) & (ci >= 0) & (ci < Wc)
        y1_ref[...] = jnp.where(valid, acc1, 0.0).astype(y1_ref.dtype)

        # ---- second conv: Cmid -> Cout, ReLU --------------------------------
        acc2 = jnp.zeros((TH * Wc, Cout), jnp.float32)
        for kh in range(3):
            rows = y1_ref[kh:kh + TH]                           # (TH, Wy, Cmid)
            cat = jnp.concatenate(
                [rows[:, kw:kw + Wc, :] for kw in range(3)], axis=-1)
            acc2 = acc2 + jnp.dot(cat.reshape(TH * Wc, 3 * Cmid), w2_ref[kh],
                                  preferred_element_type=jnp.float32)
        y2 = jnp.maximum(acc2 + b2_ref[...], 0.0).reshape(TH, Wc, Cout)

        # ---- fused 2x2 max pool, stride 2 ------------------------------------
        a = y2.reshape(TH // 2, 2, Wc, Cout)
        a = jnp.maximum(a[:, 0], a[:, 1])
        a = a.reshape(TH // 2, Wc // 2, 2, Cout)
        o_ref[0] = jnp.maximum(a[:, :, 0, :], a[:, :, 1, :]).astype(o_ref.dtype)

    return kernel


def fused_conv_conv_pool(x_nhwc, w1, b1, w2, b2, *, out_dtype, row_strip_cap=64):
    """Two 3x3 'same' convs (+ReLU) followed by 2x2/2 max pool (one VGG block).

    x_nhwc: (N, H, W, Cin); w*: (3, 3, Cin, Cout) f32; b*: (Cout,) f32.
    Returns (N, H//2, W//2, Cout) with dtype `out_dtype`.
    """
    N, H, W, Cin = x_nhwc.shape
    Cmid = w1.shape[-1]
    Cout = w2.shape[-1]
    assert H % 2 == 0 and W % 2 == 0
    TH = _pick_row_strip(H, row_strip_cap)   # conv rows per strip (even)
    S = H // TH

    # 2px zero pad of the (small) block input only; the big intermediate conv
    # activations never hit HBM thanks to the in-kernel fusion.
    # TODO(synk): emit the previous block's output pre-padded to drop this
    # pad's extra HBM round trip entirely.
    xp = jnp.pad(x_nhwc.astype(jnp.bfloat16), ((0, 0), (2, 2), (2, 2), (0, 0)))

    if Cin <= 8:
        w1k = w1.reshape(9 * Cin, Cmid).astype(jnp.bfloat16)
        w1_spec = pl.BlockSpec((9 * Cin, Cmid), lambda n, s: (0, 0))
    else:
        w1k = w1.reshape(3, 3 * Cin, Cmid).astype(jnp.bfloat16)
        w1_spec = pl.BlockSpec((3, 3 * Cin, Cmid), lambda n, s: (0, 0, 0))
    w2k = w2.reshape(3, 3 * Cmid, Cout).astype(jnp.bfloat16)
    b1k = b1.reshape(1, Cmid).astype(jnp.float32)
    b2k = b2.reshape(1, Cout).astype(jnp.float32)

    kernel = _make_fused_block_kernel(TH, H, W, Cin, Cmid, Cout)

    return pl.pallas_call(
        kernel,
        out_shape=jax.ShapeDtypeStruct((N, H // 2, W // 2, Cout), out_dtype),
        grid=(N, S),
        in_specs=[
            # Whole padded image; index map ignores the strip axis, so it is
            # fetched once per image and stays VMEM-resident across its strips
            # (this is what provides the row halo).
            pl.BlockSpec((1, H + 4, W + 4, Cin), lambda n, s: (n, 0, 0, 0)),
            w1_spec,
            pl.BlockSpec((1, Cmid), lambda n, s: (0, 0)),
            pl.BlockSpec((3, 3 * Cmid, Cout), lambda n, s: (0, 0, 0)),
            pl.BlockSpec((1, Cout), lambda n, s: (0, 0)),
        ],
        out_specs=pl.BlockSpec((1, TH // 2, W // 2, Cout),
                               lambda n, s: (n, s, 0, 0)),
        scratch_shapes=[pltpu.VMEM((TH + 2, W + 2, Cmid), jnp.bfloat16)],
        compiler_params=pltpu.CompilerParams(
            dimension_semantics=("parallel", "parallel"),
            vmem_limit_bytes=48 * 1024 * 1024),   # headroom on v7x's 64 MiB VMEM
    )(xp, w1k, b1k, w2k, b2k)


# ----------------------------------------------------------------------------
# Parameter construction (deterministic, synthetic)
# ----------------------------------------------------------------------------
def init_stage0_params(key):
    """Weights as (kh, kw, Cin, Cout) f32; biases as (Cout,) f32."""
    specs = [(3, 64), (64, 64), (64, 128), (128, 128)]
    params = []
    for cin, cout in specs:
        key, kw_key, kb_key = jax.random.split(key, 3)
        scale = (2.0 / (cin * 9)) ** 0.5
        w = scale * jax.random.normal(kw_key, (3, 3, cin, cout), jnp.float32)
        b = 0.01 * jax.random.normal(kb_key, (cout,), jnp.float32)
        params.append((w, b))
    return params


# ----------------------------------------------------------------------------
# VGGSplit.forward  (== Stage0.forward)
# ----------------------------------------------------------------------------
@jax.jit
def vgg_split_forward(x_nchw, params):
    """x_nchw: (N, 3, H, W) f32 -> (N, 128, H//4, W//4) f32."""
    x = jnp.transpose(x_nchw, (0, 2, 3, 1))                    # NCHW -> NHWC
    (w1, b1), (w2, b2), (w3, b3), (w4, b4) = params
    x = fused_conv_conv_pool(x, w1, b1, w2, b2, out_dtype=jnp.bfloat16)
    x = fused_conv_conv_pool(x, w3, b3, w4, b4, out_dtype=jnp.float32)
    return jnp.transpose(x, (0, 3, 1, 2))                      # NHWC -> NCHW


# ----------------------------------------------------------------------------
# Pure-JAX reference (same bf16-in / f32-accumulate numerics)
# ----------------------------------------------------------------------------
def _reference_forward(x_nchw, params):
    x = jnp.transpose(x_nchw, (0, 2, 3, 1))

    def conv(x, w, b):
        y = jax.lax.conv_general_dilated(
            x.astype(jnp.bfloat16), w.astype(jnp.bfloat16),
            window_strides=(1, 1), padding="SAME",
            dimension_numbers=("NHWC", "HWIO", "NHWC"),
            preferred_element_type=jnp.float32)
        return jnp.maximum(y + b, 0.0)

    def pool(x):
        return jax.lax.reduce_window(
            x, -jnp.inf, jax.lax.max,
            window_dimensions=(1, 2, 2, 1),
            window_strides=(1, 2, 2, 1), padding="VALID")

    (w1, b1), (w2, b2), (w3, b3), (w4, b4) = params
    x = conv(x, w1, b1)
    x = conv(x, w2, b2)
    x = pool(x)
    x = conv(x, w3, b3)
    x = conv(x, w4, b4)
    x = pool(x)
    return jnp.transpose(x, (0, 3, 1, 2))


if __name__ == "__main__":
    key = jax.random.PRNGKey(0)
    key, xkey = jax.random.split(key)

    # Small shapes consistent with the module (VGG: 3 input channels), NCHW.
    N, C, H, W = 2, 3, 16, 16
    x = jax.random.normal(xkey, (N, C, H, W), jnp.float32)
    params = init_stage0_params(key)

    out = jax.block_until_ready(vgg_split_forward(x, params))
    assert out.shape == (N, 128, H // 4, W // 4), out.shape

    ref = _reference_forward(x, params)
    max_err = float(jnp.max(jnp.abs(out - ref)))
    assert jnp.allclose(out, ref, atol=1e-2, rtol=1e-2), max_err

    print("KERNEL_OK")
</pallas_src>

<mosaic_0001>
module attributes {stable_mosaic.version = 11 : i64} {
  func.func @kernel(%arg0: i32, %arg1: i32, %arg2: memref<1x20x20x3xbf16, #tpu.memory_space<vmem>>, %arg3: memref<27x64xbf16, #tpu.memory_space<vmem>>, %arg4: memref<1x64xf32, #tpu.memory_space<vmem>>, %arg5: memref<3x192x64xbf16, #tpu.memory_space<vmem>>, %arg6: memref<1x64xf32, #tpu.memory_space<vmem>>, %arg7: memref<1x4x8x64xbf16, #tpu.memory_space<vmem>>, %arg8: memref<10x18x64xbf16, #tpu.memory_space<vmem>>) attributes {dimension_semantics = [#tpu.dimension_semantics<parallel>, #tpu.dimension_semantics<parallel>], iteration_bounds = array<i64: 2, 2>, scalar_prefetch = 0 : i64, scratch_operands = 1 : i64, tpu.core_type = #tpu.core_type<tc>, window_params = [{transform_indices = @transform_0, window_bounds = array<i64: 1, 20, 20, 3>}, {pipeline_mode = #tpu.pipeline_mode<synchronous>, transform_indices = @transform_1, window_bounds = array<i64: 27, 64>}, {pipeline_mode = #tpu.pipeline_mode<synchronous>, transform_indices = @transform_2, window_bounds = array<i64: 1, 64>}, {pipeline_mode = #tpu.pipeline_mode<synchronous>, transform_indices = @transform_3, window_bounds = array<i64: 3, 192, 64>}, {pipeline_mode = #tpu.pipeline_mode<synchronous>, transform_indices = @transform_4, window_bounds = array<i64: 1, 64>}, {transform_indices = @transform_5, window_bounds = array<i64: 1, 4, 8, 64>}]} {
    %c8_i32 = arith.constant 8 : i32
    %0 = arith.muli %arg1, %c8_i32 : i32
    %1 = tpu.assume_multiple %0, 8 : i32
    %c0_i32 = arith.constant 0 : i32
    %2 = arith.addi %1, %c0_i32 : i32
    %c0 = arith.constant 0 : index
    %3 = arith.index_cast %2 : i32 to index
    %c0_0 = arith.constant 0 : index
    %c0_1 = arith.constant 0 : index
    %4 = vector.load %arg2[%c0, %3, %c0_0, %c0_1] : memref<1x20x20x3xbf16, #tpu.memory_space<vmem>>, vector<1x10x20x3xbf16>
    %5 = vector.shape_cast %4 : vector<1x10x20x3xbf16> to vector<10x20x3xbf16>
    %6 = vector.extract_strided_slice %5 {offsets = [0, 0, 0], sizes = [10, 18, 3], strides = [1, 1, 1]} : vector<10x20x3xbf16> to vector<10x18x3xbf16>
    %7 = vector.extract_strided_slice %5 {offsets = [0, 1, 0], sizes = [10, 18, 3], strides = [1, 1, 1]} : vector<10x20x3xbf16> to vector<10x18x3xbf16>
    %8 = vector.extract_strided_slice %5 {offsets = [0, 2, 0], sizes = [10, 18, 3], strides = [1, 1, 1]} : vector<10x20x3xbf16> to vector<10x18x3xbf16>
    %c1_i32 = arith.constant 1 : i32
    %9 = arith.addi %1, %c1_i32 : i32
    %c0_2 = arith.constant 0 : index
    %10 = arith.index_cast %9 : i32 to index
    %c0_3 = arith.constant 0 : index
    %c0_4 = arith.constant 0 : index
    %11 = vector.load %arg2[%c0_2, %10, %c0_3, %c0_4] : memref<1x20x20x3xbf16, #tpu.memory_space<vmem>>, vector<1x10x20x3xbf16>
    %12 = vector.shape_cast %11 : vector<1x10x20x3xbf16> to vector<10x20x3xbf16>
    %13 = vector.extract_strided_slice %12 {offsets = [0, 0, 0], sizes = [10, 18, 3], strides = [1, 1, 1]} : vector<10x20x3xbf16> to vector<10x18x3xbf16>
    %14 = vector.extract_strided_slice %12 {offsets = [0, 1, 0], sizes = [10, 18, 3], strides = [1, 1, 1]} : vector<10x20x3xbf16> to vector<10x18x3xbf16>
    %15 = vector.extract_strided_slice %12 {offsets = [0, 2, 0], sizes = [10, 18, 3], strides = [1, 1, 1]} : vector<10x20x3xbf16> to vector<10x18x3xbf16>
    %c2_i32 = arith.constant 2 : i32
    %16 = arith.addi %1, %c2_i32 : i32
    %c0_5 = arith.constant 0 : index
    %17 = arith.index_cast %16 : i32 to index
    %c0_6 = arith.constant 0 : index
    %c0_7 = arith.constant 0 : index
    %18 = vector.load %arg2[%c0_5, %17, %c0_6, %c0_7] : memref<1x20x20x3xbf16, #tpu.memory_space<vmem>>, vector<1x10x20x3xbf16>
    %19 = vector.shape_cast %18 : vector<1x10x20x3xbf16> to vector<10x20x3xbf16>
    %20 = vector.extract_strided_slice %19 {offsets = [0, 0, 0], sizes = [10, 18, 3], strides = [1, 1, 1]} : vector<10x20x3xbf16> to vector<10x18x3xbf16>
    %21 = vector.extract_strided_slice %19 {offsets = [0, 1, 0], sizes = [10, 18, 3], strides = [1, 1, 1]} : vector<10x20x3xbf16> to vector<10x18x3xbf16>
    %22 = vector.extract_strided_slice %19 {offsets = [0, 2, 0], sizes = [10, 18, 3], strides = [1, 1, 1]} : vector<10x20x3xbf16> to vector<10x18x3xbf16>
    %23 = tpu.concatenate %6, %7, %8, %13, %14, %15, %20, %21, %22 in 2 : vector<10x18x3xbf16>, vector<10x18x3xbf16>, vector<10x18x3xbf16>, vector<10x18x3xbf16>, vector<10x18x3xbf16>, vector<10x18x3xbf16>, vector<10x18x3xbf16>, vector<10x18x3xbf16>, vector<10x18x3xbf16> -> vector<10x18x27xbf16>
    %24 = vector.shape_cast %23 : vector<10x18x27xbf16> to vector<180x27xbf16>
    %c0_8 = arith.constant 0 : index
    %c0_9 = arith.constant 0 : index
    %25 = vector.load %arg3[%c0_8, %c0_9] : memref<27x64xbf16, #tpu.memory_space<vmem>>, vector<27x64xbf16>
    %cst = arith.constant dense<0.000000e+00> : vector<180x64xf32>
    %26 = tpu.matmul %24, %25, %cst {dimension_numbers = #tpu.dot_dimension_numbers<[1], [0], [0], [1], [0, 0, 1, 1], [], []>} : vector<180x27xbf16>, vector<27x64xbf16>, vector<180x64xf32> -> vector<180x64xf32>
    %c0_10 = arith.constant 0 : index
    %c0_11 = arith.constant 0 : index
    %27 = vector.load %arg4[%c0_10, %c0_11] : memref<1x64xf32, #tpu.memory_space<vmem>>, vector<1x64xf32>
    %28 = vector.broadcast %27 : vector<1x64xf32> to vector<180x64xf32>
    %29 = arith.addf %26, %28 : vector<180x64xf32>
    %cst_12 = arith.constant 0.000000e+00 : f32
    %30 = vector.broadcast %cst_12 : f32 to vector<180x64xf32>
    %31 = arith.maximumf %29, %30 : vector<180x64xf32>
    %32 = vector.shape_cast %31 : vector<180x64xf32> to vector<10x18x64xf32>
    %c1_i32_13 = arith.constant 1 : i32
    %33 = arith.subi %1, %c1_i32_13 : i32
    %34 = tpu.iota {dimensions = array<i32: 0>} : vector<10x18x1xi32>
    %35 = vector.broadcast %33 : i32 to vector<10x18x1xi32>
    %36 = arith.addi %35, %34 : vector<10x18x1xi32>
    %37 = tpu.iota {dimensions = array<i32: 1>} : vector<10x18x1xi32>
    %c-1_i32 = arith.constant -1 : i32
    %38 = vector.broadcast %c-1_i32 : i32 to vector<10x18x1xi32>
    %39 = arith.addi %38, %37 : vector<10x18x1xi32>
    %c0_i32_14 = arith.constant 0 : i32
    %40 = vector.broadcast %c0_i32_14 : i32 to vector<10x18x1xi32>
    %41 = arith.cmpi sge, %36, %40 : vector<10x18x1xi32>
    %c16_i32 = arith.constant 16 : i32
    %42 = vector.broadcast %c16_i32 : i32 to vector<10x18x1xi32>
    %43 = arith.cmpi slt, %36, %42 : vector<10x18x1xi32>
    %44 = arith.andi %41, %43 : vector<10x18x1xi1>
    %c0_i32_15 = arith.constant 0 : i32
    %45 = vector.broadcast %c0_i32_15 : i32 to vector<10x18x1xi32>
    %46 = arith.cmpi sge, %39, %45 : vector<10x18x1xi32>
    %47 = arith.andi %44, %46 : vector<10x18x1xi1>
    %c16_i32_16 = arith.constant 16 : i32
    %48 = vector.broadcast %c16_i32_16 : i32 to vector<10x18x1xi32>
    %49 = arith.cmpi slt, %39, %48 : vector<10x18x1xi32>
    %50 = arith.andi %47, %49 : vector<10x18x1xi1>
    %cst_17 = arith.constant 0.000000e+00 : f32
    %51 = vector.shape_cast %50 : vector<10x18x1xi1> to vector<10x18x1xi1>
    %52 = vector.broadcast %51 : vector<10x18x1xi1> to vector<10x18x64xi1>
    %53 = vector.broadcast %cst_17 : f32 to vector<10x18x64xf32>
    %54 = arith.select %52, %32, %53 : vector<10x18x64xi1>, vector<10x18x64xf32>
    %55 = arith.truncf %54 : vector<10x18x64xf32> to vector<10x18x64xbf16>
    %c0_18 = arith.constant 0 : index
    %c0_19 = arith.constant 0 : index
    %c0_20 = arith.constant 0 : index
    %56 = vector.load %arg8[%c0_18, %c0_19, %c0_20] : memref<10x18x64xbf16, #tpu.memory_space<vmem>>, vector<10x18x64xbf16>
    tpu.vector_store %arg8[%c0_18, %c0_19, %c0_20], %55 {strides = array<i32>} : memref<10x18x64xbf16, #tpu.memory_space<vmem>>, vector<10x18x64xbf16>,
    %cst_21 = arith.constant 0.000000e+00 : f32
    %57 = vector.broadcast %cst_21 : f32 to vector<128x64xf32>
    %c0_22 = arith.constant 0 : index
    %c0_23 = arith.constant 0 : index
    %c0_24 = arith.constant 0 : index
    %58 = vector.load %arg8[%c0_22, %c0_23, %c0_24] : memref<10x18x64xbf16, #tpu.memory_space<vmem>>, vector<8x18x64xbf16>
    %59 = vector.extract_strided_slice %58 {offsets = [0, 0, 0], sizes = [8, 16, 64], strides = [1, 1, 1]} : vector<8x18x64xbf16> to vector<8x16x64xbf16>
    %60 = vector.extract_strided_slice %58 {offsets = [0, 1, 0], sizes = [8, 16, 64], strides = [1, 1, 1]} : vector<8x18x64xbf16> to vector<8x16x64xbf16>
    %61 = vector.extract_strided_slice %58 {offsets = [0, 2, 0], sizes = [8, 16, 64], strides = [1, 1, 1]} : vector<8x18x64xbf16> to vector<8x16x64xbf16>
    %62 = tpu.concatenate %59, %60, %61 in 2 : vector<8x16x64xbf16>, vector<8x16x64xbf16>, vector<8x16x64xbf16> -> vector<8x16x192xbf16>
    %63 = vector.shape_cast %62 : vector<8x16x192xbf16> to vector<128x192xbf16>
    %c0_25 = arith.constant 0 : index
    %c0_26 = arith.constant 0 : index
    %c0_27 = arith.constant 0 : index
    %64 = vector.load %arg5[%c0_25, %c0_26, %c0_27] : memref<3x192x64xbf16, #tpu.memory_space<vmem>>, vector<1x192x64xbf16>
    %65 = vector.shape_cast %64 : vector<1x192x64xbf16> to vector<192x64xbf16>
    %cst_28 = arith.constant dense<0.000000e+00> : vector<128x64xf32>
    %66 = tpu.matmul %63, %65, %cst_28 {dimension_numbers = #tpu.dot_dimension_numbers<[1], [0], [0], [1], [0, 0, 1, 1], [], []>} : vector<128x192xbf16>, vector<192x64xbf16>, vector<128x64xf32> -> vector<128x64xf32>
    %67 = arith.addf %57, %66 : vector<128x64xf32>
    %c1 = arith.constant 1 : index
    %c0_29 = arith.constant 0 : index
    %c0_30 = arith.constant 0 : index
    %68 = vector.load %arg8[%c1, %c0_29, %c0_30] : memref<10x18x64xbf16, #tpu.memory_space<vmem>>, vector<8x18x64xbf16>
    %69 = vector.extract_strided_slice %68 {offsets = [0, 0, 0], sizes = [8, 16, 64], strides = [1, 1, 1]} : vector<8x18x64xbf16> to vector<8x16x64xbf16>
    %70 = vector.extract_strided_slice %68 {offsets = [0, 1, 0], sizes = [8, 16, 64], strides = [1, 1, 1]} : vector<8x18x64xbf16> to vector<8x16x64xbf16>
    %71 = vector.extract_strided_slice %68 {offsets = [0, 2, 0], sizes = [8, 16, 64], strides = [1, 1, 1]} : vector<8x18x64xbf16> to vector<8x16x64xbf16>
    %72 = tpu.concatenate %69, %70, %71 in 2 : vector<8x16x64xbf16>, vector<8x16x64xbf16>, vector<8x16x64xbf16> -> vector<8x16x192xbf16>
    %73 = vector.shape_cast %72 : vector<8x16x192xbf16> to vector<128x192xbf16>
    %c1_31 = arith.constant 1 : index
    %c0_32 = arith.constant 0 : index
    %c0_33 = arith.constant 0 : index
    %74 = vector.load %arg5[%c1_31, %c0_32, %c0_33] : memref<3x192x64xbf16, #tpu.memory_space<vmem>>, vector<1x192x64xbf16>
    %75 = vector.shape_cast %74 : vector<1x192x64xbf16> to vector<192x64xbf16>
    %cst_34 = arith.constant dense<0.000000e+00> : vector<128x64xf32>
    %76 = tpu.matmul %73, %75, %cst_34 {dimension_numbers = #tpu.dot_dimension_numbers<[1], [0], [0], [1], [0, 0, 1, 1], [], []>} : vector<128x192xbf16>, vector<192x64xbf16>, vector<128x64xf32> -> vector<128x64xf32>
    %77 = arith.addf %67, %76 : vector<128x64xf32>
    %c2 = arith.constant 2 : index
    %c0_35 = arith.constant 0 : index
    %c0_36 = arith.constant 0 : index
    %78 = vector.load %arg8[%c2, %c0_35, %c0_36] : memref<10x18x64xbf16, #tpu.memory_space<vmem>>, vector<8x18x64xbf16>
    %79 = vector.extract_strided_slice %78 {offsets = [0, 0, 0], sizes = [8, 16, 64], strides = [1, 1, 1]} : vector<8x18x64xbf16> to vector<8x16x64xbf16>
    %80 = vector.extract_strided_slice %78 {offsets = [0, 1, 0], sizes = [8, 16, 64], strides = [1, 1, 1]} : vector<8x18x64xbf16> to vector<8x16x64xbf16>
    %81 = vector.extract_strided_slice %78 {offsets = [0, 2, 0], sizes = [8, 16, 64], strides = [1, 1, 1]} : vector<8x18x64xbf16> to vector<8x16x64xbf16>
    %82 = tpu.concatenate %79, %80, %81 in 2 : vector<8x16x64xbf16>, vector<8x16x64xbf16>, vector<8x16x64xbf16> -> vector<8x16x192xbf16>
    %83 = vector.shape_cast %82 : vector<8x16x192xbf16> to vector<128x192xbf16>
    %c2_37 = arith.constant 2 : index
    %c0_38 = arith.constant 0 : index
    %c0_39 = arith.constant 0 : index
    %84 = vector.load %arg5[%c2_37, %c0_38, %c0_39] : memref<3x192x64xbf16, #tpu.memory_space<vmem>>, vector<1x192x64xbf16>
    %85 = vector.shape_cast %84 : vector<1x192x64xbf16> to vector<192x64xbf16>
    %cst_40 = arith.constant dense<0.000000e+00> : vector<128x64xf32>
    %86 = tpu.matmul %83, %85, %cst_40 {dimension_numbers = #tpu.dot_dimension_numbers<[1], [0], [0], [1], [0, 0, 1, 1], [], []>} : vector<128x192xbf16>, vector<192x64xbf16>, vector<128x64xf32> -> vector<128x64xf32>
    %87 = arith.addf %77, %86 : vector<128x64xf32>
    %c0_41 = arith.constant 0 : index
    %c0_42 = arith.constant 0 : index
    %88 = vector.load %arg6[%c0_41, %c0_42] : memref<1x64xf32, #tpu.memory_space<vmem>>, vector<1x64xf32>
    %89 = vector.broadcast %88 : vector<1x64xf32> to vector<128x64xf32>
    %90 = arith.addf %87, %89 : vector<128x64xf32>
    %cst_43 = arith.constant 0.000000e+00 : f32
    %91 = vector.broadcast %cst_43 : f32 to vector<128x64xf32>
    %92 = arith.maximumf %90, %91 : vector<128x64xf32>
    %93 = vector.shape_cast %92 : vector<128x64xf32> to vector<8x16x64xf32>
    %94 = vector.shape_cast %93 : vector<8x16x64xf32> to vector<4x2x16x64xf32>
    %95 = vector.extract_strided_slice %94 {offsets = [0, 0, 0, 0], sizes = [4, 1, 16, 64], strides = [1, 1, 1, 1]} : vector<4x2x16x64xf32> to vector<4x1x16x64xf32>
    %96 = vector.shape_cast %95 : vector<4x1x16x64xf32> to vector<4x16x64xf32>
    %97 = vector.extract_strided_slice %94 {offsets = [0, 1, 0, 0], sizes = [4, 1, 16, 64], strides = [1, 1, 1, 1]} : vector<4x2x16x64xf32> to vector<4x1x16x64xf32>
    %98 = vector.shape_cast %97 : vector<4x1x16x64xf32> to vector<4x16x64xf32>
    %99 = arith.maximumf %96, %98 : vector<4x16x64xf32>
    %100 = vector.shape_cast %99 : vector<4x16x64xf32> to vector<4x8x2x64xf32>
    %101 = vector.extract_strided_slice %100 {offsets = [0, 0, 0, 0], sizes = [4, 8, 1, 64], strides = [1, 1, 1, 1]} : vector<4x8x2x64xf32> to vector<4x8x1x64xf32>
    %102 = vector.shape_cast %101 : vector<4x8x1x64xf32> to vector<4x8x64xf32>
    %103 = vector.extract_strided_slice %100 {offsets = [0, 0, 1, 0], sizes = [4, 8, 1, 64], strides = [1, 1, 1, 1]} : vector<4x8x2x64xf32> to vector<4x8x1x64xf32>
    %104 = vector.shape_cast %103 : vector<4x8x1x64xf32> to vector<4x8x64xf32>
    %105 = arith.maximumf %102, %104 : vector<4x8x64xf32>
    %106 = arith.truncf %105 : vector<4x8x64xf32> to vector<4x8x64xbf16>
    %c0_44 = arith.constant 0 : index
    %c0_45 = arith.constant 0 : index
    %c0_46 = arith.constant 0 : index
    %c0_47 = arith.constant 0 : index
    %107 = vector.load %arg7[%c0_44, %c0_45, %c0_46, %c0_47] : memref<1x4x8x64xbf16, #tpu.memory_space<vmem>>, vector<1x4x8x64xbf16>
    %108 = vector.shape_cast %107 : vector<1x4x8x64xbf16> to vector<4x8x64xbf16>
    %109 = vector.shape_cast %106 : vector<4x8x64xbf16> to vector<1x4x8x64xbf16>
    tpu.vector_store %arg7[%c0_44, %c0_45, %c0_46, %c0_47], %109 {strides = array<i32>} : memref<1x4x8x64xbf16, #tpu.memory_space<vmem>>, vector<1x4x8x64xbf16>,
    return
  }
  func.func @transform_0(%arg0: i32, %arg1: i32) -> (i32, i32, i32, i32) {
    %c0_i32 = arith.constant 0 : i32
    %c0_i32_0 = arith.constant 0 : i32
    %c0_i32_1 = arith.constant 0 : i32
    %c0_i32_2 = arith.constant 0 : i32
    return %arg0, %c0_i32, %c0_i32_0, %c0_i32_1 : i32, i32, i32, i32
  }
  func.func @transform_1(%arg0: i32, %arg1: i32) -> (i32, i32) {
    %c0_i32 = arith.constant 0 : i32
    %c0_i32_0 = arith.constant 0 : i32
    %c0_i32_1 = arith.constant 0 : i32
    return %c0_i32, %c0_i32_0 : i32, i32
  }
  func.func @transform_2(%arg0: i32, %arg1: i32) -> (i32, i32) {
    %c0_i32 = arith.constant 0 : i32
    %c0_i32_0 = arith.constant 0 : i32
    %c0_i32_1 = arith.constant 0 : i32
    return %c0_i32, %c0_i32_0 : i32, i32
  }
  func.func @transform_3(%arg0: i32, %arg1: i32) -> (i32, i32, i32) {
    %c0_i32 = arith.constant 0 : i32
    %c0_i32_0 = arith.constant 0 : i32
    %c0_i32_1 = arith.constant 0 : i32
    %c0_i32_2 = arith.constant 0 : i32
    return %c0_i32, %c0_i32_0, %c0_i32_1 : i32, i32, i32
  }
  func.func @transform_4(%arg0: i32, %arg1: i32) -> (i32, i32) {
    %c0_i32 = arith.constant 0 : i32
    %c0_i32_0 = arith.constant 0 : i32
    %c0_i32_1 = arith.constant 0 : i32
    return %c0_i32, %c0_i32_0 : i32, i32
  }
  func.func @transform_5(%arg0: i32, %arg1: i32) -> (i32, i32, i32, i32) {
    %c0_i32 = arith.constant 0 : i32
    %c0_i32_0 = arith.constant 0 : i32
    %c0_i32_1 = arith.constant 0 : i32
    return %arg0, %arg1, %c0_i32, %c0_i32_0 : i32, i32, i32, i32
  }
}

module attributes {stable_mosaic.version = 11 : i64} {
  func.func @kernel(%arg0: i32, %arg1: i32, %arg2: memref<1x12x12x64xbf16, #tpu.memory_space<vmem>>, %arg3: memref<3x192x128xbf16, #tpu.memory_space<vmem>>, %arg4: memref<1x128xf32, #tpu.memory_space<vmem>>, %arg5: memref<3x384x128xbf16, #tpu.memory_space<vmem>>, %arg6: memref<1x128xf32, #tpu.memory_space<vmem>>, %arg7: memref<1x2x4x128xf32, #tpu.memory_space<vmem>>, %arg8: memref<6x10x128xbf16, #tpu.memory_space<vmem>>) attributes {dimension_semantics = [#tpu.dimension_semantics<parallel>, #tpu.dimension_semantics<parallel>], iteration_bounds = array<i64: 2, 2>, scalar_prefetch = 0 : i64, scratch_operands = 1 : i64, tpu.core_type = #tpu.core_type<tc>, window_params = [{transform_indices = @transform_0, window_bounds = array<i64: 1, 12, 12, 64>}, {pipeline_mode = #tpu.pipeline_mode<synchronous>, transform_indices = @transform_1, window_bounds = array<i64: 3, 192, 128>}, {pipeline_mode = #tpu.pipeline_mode<synchronous>, transform_indices = @transform_2, window_bounds = array<i64: 1, 128>}, {pipeline_mode = #tpu.pipeline_mode<synchronous>, transform_indices = @transform_3, window_bounds = array<i64: 3, 384, 128>}, {pipeline_mode = #tpu.pipeline_mode<synchronous>, transform_indices = @transform_4, window_bounds = array<i64: 1, 128>}, {transform_indices = @transform_5, window_bounds = array<i64: 1, 2, 4, 128>}]} {
    %c4_i32 = arith.constant 4 : i32
    %0 = arith.muli %arg1, %c4_i32 : i32
    %cst = arith.constant 0.000000e+00 : f32
    %1 = vector.broadcast %cst : f32 to vector<60x128xf32>
    %c0_i32 = arith.constant 0 : i32
    %2 = arith.addi %0, %c0_i32 : i32
    %c0 = arith.constant 0 : index
    %3 = arith.index_cast %2 : i32 to index
    %c0_0 = arith.constant 0 : index
    %c0_1 = arith.constant 0 : index
    %4 = vector.load %arg2[%c0, %3, %c0_0, %c0_1] : memref<1x12x12x64xbf16, #tpu.memory_space<vmem>>, vector<1x6x12x64xbf16>
    %5 = vector.shape_cast %4 : vector<1x6x12x64xbf16> to vector<6x12x64xbf16>
    %6 = vector.extract_strided_slice %5 {offsets = [0, 0, 0], sizes = [6, 10, 64], strides = [1, 1, 1]} : vector<6x12x64xbf16> to vector<6x10x64xbf16>
    %7 = vector.extract_strided_slice %5 {offsets = [0, 1, 0], sizes = [6, 10, 64], strides = [1, 1, 1]} : vector<6x12x64xbf16> to vector<6x10x64xbf16>
    %8 = vector.extract_strided_slice %5 {offsets = [0, 2, 0], sizes = [6, 10, 64], strides = [1, 1, 1]} : vector<6x12x64xbf16> to vector<6x10x64xbf16>
    %9 = tpu.concatenate %6, %7, %8 in 2 : vector<6x10x64xbf16>, vector<6x10x64xbf16>, vector<6x10x64xbf16> -> vector<6x10x192xbf16>
    %10 = vector.shape_cast %9 : vector<6x10x192xbf16> to vector<60x192xbf16>
    %c0_2 = arith.constant 0 : index
    %c0_3 = arith.constant 0 : index
    %c0_4 = arith.constant 0 : index
    %11 = vector.load %arg3[%c0_2, %c0_3, %c0_4] : memref<3x192x128xbf16, #tpu.memory_space<vmem>>, vector<1x192x128xbf16>
    %12 = vector.shape_cast %11 : vector<1x192x128xbf16> to vector<192x128xbf16>
    %cst_5 = arith.constant dense<0.000000e+00> : vector<60x128xf32>
    %13 = tpu.matmul %10, %12, %cst_5 {dimension_numbers = #tpu.dot_dimension_numbers<[1], [0], [0], [1], [0, 0, 1, 1], [], []>} : vector<60x192xbf16>, vector<192x128xbf16>, vector<60x128xf32> -> vector<60x128xf32>
    %14 = arith.addf %1, %13 : vector<60x128xf32>
    %c1_i32 = arith.constant 1 : i32
    %15 = arith.addi %0, %c1_i32 : i32
    %c0_6 = arith.constant 0 : index
    %16 = arith.index_cast %15 : i32 to index
    %c0_7 = arith.constant 0 : index
    %c0_8 = arith.constant 0 : index
    %17 = vector.load %arg2[%c0_6, %16, %c0_7, %c0_8] : memref<1x12x12x64xbf16, #tpu.memory_space<vmem>>, vector<1x6x12x64xbf16>
    %18 = vector.shape_cast %17 : vector<1x6x12x64xbf16> to vector<6x12x64xbf16>
    %19 = vector.extract_strided_slice %18 {offsets = [0, 0, 0], sizes = [6, 10, 64], strides = [1, 1, 1]} : vector<6x12x64xbf16> to vector<6x10x64xbf16>
    %20 = vector.extract_strided_slice %18 {offsets = [0, 1, 0], sizes = [6, 10, 64], strides = [1, 1, 1]} : vector<6x12x64xbf16> to vector<6x10x64xbf16>
    %21 = vector.extract_strided_slice %18 {offsets = [0, 2, 0], sizes = [6, 10, 64], strides = [1, 1, 1]} : vector<6x12x64xbf16> to vector<6x10x64xbf16>
    %22 = tpu.concatenate %19, %20, %21 in 2 : vector<6x10x64xbf16>, vector<6x10x64xbf16>, vector<6x10x64xbf16> -> vector<6x10x192xbf16>
    %23 = vector.shape_cast %22 : vector<6x10x192xbf16> to vector<60x192xbf16>
    %c1 = arith.constant 1 : index
    %c0_9 = arith.constant 0 : index
    %c0_10 = arith.constant 0 : index
    %24 = vector.load %arg3[%c1, %c0_9, %c0_10] : memref<3x192x128xbf16, #tpu.memory_space<vmem>>, vector<1x192x128xbf16>
    %25 = vector.shape_cast %24 : vector<1x192x128xbf16> to vector<192x128xbf16>
    %cst_11 = arith.constant dense<0.000000e+00> : vector<60x128xf32>
    %26 = tpu.matmul %23, %25, %cst_11 {dimension_numbers = #tpu.dot_dimension_numbers<[1], [0], [0], [1], [0, 0, 1, 1], [], []>} : vector<60x192xbf16>, vector<192x128xbf16>, vector<60x128xf32> -> vector<60x128xf32>
    %27 = arith.addf %14, %26 : vector<60x128xf32>
    %c2_i32 = arith.constant 2 : i32
    %28 = arith.addi %0, %c2_i32 : i32
    %c0_12 = arith.constant 0 : index
    %29 = arith.index_cast %28 : i32 to index
    %c0_13 = arith.constant 0 : index
    %c0_14 = arith.constant 0 : index
    %30 = vector.load %arg2[%c0_12, %29, %c0_13, %c0_14] : memref<1x12x12x64xbf16, #tpu.memory_space<vmem>>, vector<1x6x12x64xbf16>
    %31 = vector.shape_cast %30 : vector<1x6x12x64xbf16> to vector<6x12x64xbf16>
    %32 = vector.extract_strided_slice %31 {offsets = [0, 0, 0], sizes = [6, 10, 64], strides = [1, 1, 1]} : vector<6x12x64xbf16> to vector<6x10x64xbf16>
    %33 = vector.extract_strided_slice %31 {offsets = [0, 1, 0], sizes = [6, 10, 64], strides = [1, 1, 1]} : vector<6x12x64xbf16> to vector<6x10x64xbf16>
    %34 = vector.extract_strided_slice %31 {offsets = [0, 2, 0], sizes = [6, 10, 64], strides = [1, 1, 1]} : vector<6x12x64xbf16> to vector<6x10x64xbf16>
    %35 = tpu.concatenate %32, %33, %34 in 2 : vector<6x10x64xbf16>, vector<6x10x64xbf16>, vector<6x10x64xbf16> -> vector<6x10x192xbf16>
    %36 = vector.shape_cast %35 : vector<6x10x192xbf16> to vector<60x192xbf16>
    %c2 = arith.constant 2 : index
    %c0_15 = arith.constant 0 : index
    %c0_16 = arith.constant 0 : index
    %37 = vector.load %arg3[%c2, %c0_15, %c0_16] : memref<3x192x128xbf16, #tpu.memory_space<vmem>>, vector<1x192x128xbf16>
    %38 = vector.shape_cast %37 : vector<1x192x128xbf16> to vector<192x128xbf16>
    %cst_17 = arith.constant dense<0.000000e+00> : vector<60x128xf32>
    %39 = tpu.matmul %36, %38, %cst_17 {dimension_numbers = #tpu.dot_dimension_numbers<[1], [0], [0], [1], [0, 0, 1, 1], [], []>} : vector<60x192xbf16>, vector<192x128xbf16>, vector<60x128xf32> -> vector<60x128xf32>
    %40 = arith.addf %27, %39 : vector<60x128xf32>
    %c0_18 = arith.constant 0 : index
    %c0_19 = arith.constant 0 : index
    %41 = vector.load %arg4[%c0_18, %c0_19] : memref<1x128xf32, #tpu.memory_space<vmem>>, vector<1x128xf32>
    %42 = vector.broadcast %41 : vector<1x128xf32> to vector<60x128xf32>
    %43 = arith.addf %40, %42 : vector<60x128xf32>
    %cst_20 = arith.constant 0.000000e+00 : f32
    %44 = vector.broadcast %cst_20 : f32 to vector<60x128xf32>
    %45 = arith.maximumf %43, %44 : vector<60x128xf32>
    %46 = vector.shape_cast %45 : vector<60x128xf32> to vector<6x10x128xf32>
    %c1_i32_21 = arith.constant 1 : i32
    %47 = arith.subi %0, %c1_i32_21 : i32
    %48 = tpu.iota {dimensions = array<i32: 0>} : vector<6x10x1xi32>
    %49 = vector.broadcast %47 : i32 to vector<6x10x1xi32>
    %50 = arith.addi %49, %48 : vector<6x10x1xi32>
    %51 = tpu.iota {dimensions = array<i32: 1>} : vector<6x10x1xi32>
    %c-1_i32 = arith.constant -1 : i32
    %52 = vector.broadcast %c-1_i32 : i32 to vector<6x10x1xi32>
    %53 = arith.addi %52, %51 : vector<6x10x1xi32>
    %c0_i32_22 = arith.constant 0 : i32
    %54 = vector.broadcast %c0_i32_22 : i32 to vector<6x10x1xi32>
    %55 = arith.cmpi sge, %50, %54 : vector<6x10x1xi32>
    %c8_i32 = arith.constant 8 : i32
    %56 = vector.broadcast %c8_i32 : i32 to vector<6x10x1xi32>
    %57 = arith.cmpi slt, %50, %56 : vector<6x10x1xi32>
    %58 = arith.andi %55, %57 : vector<6x10x1xi1>
    %c0_i32_23 = arith.constant 0 : i32
    %59 = vector.broadcast %c0_i32_23 : i32 to vector<6x10x1xi32>
    %60 = arith.cmpi sge, %53, %59 : vector<6x10x1xi32>
    %61 = arith.andi %58, %60 : vector<6x10x1xi1>
    %c8_i32_24 = arith.constant 8 : i32
    %62 = vector.broadcast %c8_i32_24 : i32 to vector<6x10x1xi32>
    %63 = arith.cmpi slt, %53, %62 : vector<6x10x1xi32>
    %64 = arith.andi %61, %63 : vector<6x10x1xi1>
    %cst_25 = arith.constant 0.000000e+00 : f32
    %65 = vector.shape_cast %64 : vector<6x10x1xi1> to vector<6x10x1xi1>
    %66 = vector.broadcast %65 : vector<6x10x1xi1> to vector<6x10x128xi1>
    %67 = vector.broadcast %cst_25 : f32 to vector<6x10x128xf32>
    %68 = arith.select %66, %46, %67 : vector<6x10x128xi1>, vector<6x10x128xf32>
    %69 = arith.truncf %68 : vector<6x10x128xf32> to vector<6x10x128xbf16>
    %c0_26 = arith.constant 0 : index
    %c0_27 = arith.constant 0 : index
    %c0_28 = arith.constant 0 : index
    %70 = vector.load %arg8[%c0_26, %c0_27, %c0_28] : memref<6x10x128xbf16, #tpu.memory_space<vmem>>, vector<6x10x128xbf16>
    tpu.vector_store %arg8[%c0_26, %c0_27, %c0_28], %69 {strides = array<i32>} : memref<6x10x128xbf16, #tpu.memory_space<vmem>>, vector<6x10x128xbf16>,
    %cst_29 = arith.constant 0.000000e+00 : f32
    %71 = vector.broadcast %cst_29 : f32 to vector<32x128xf32>
    %c0_30 = arith.constant 0 : index
    %c0_31 = arith.constant 0 : index
    %c0_32 = arith.constant 0 : index
    %72 = vector.load %arg8[%c0_30, %c0_31, %c0_32] : memref<6x10x128xbf16, #tpu.memory_space<vmem>>, vector<4x10x128xbf16>
    %73 = vector.extract_strided_slice %72 {offsets = [0, 0, 0], sizes = [4, 8, 128], strides = [1, 1, 1]} : vector<4x10x128xbf16> to vector<4x8x128xbf16>
    %74 = vector.extract_strided_slice %72 {offsets = [0, 1, 0], sizes = [4, 8, 128], strides = [1, 1, 1]} : vector<4x10x128xbf16> to vector<4x8x128xbf16>
    %75 = vector.extract_strided_slice %72 {offsets = [0, 2, 0], sizes = [4, 8, 128], strides = [1, 1, 1]} : vector<4x10x128xbf16> to vector<4x8x128xbf16>
    %76 = tpu.concatenate %73, %74, %75 in 2 : vector<4x8x128xbf16>, vector<4x8x128xbf16>, vector<4x8x128xbf16> -> vector<4x8x384xbf16>
    %77 = vector.shape_cast %76 : vector<4x8x384xbf16> to vector<32x384xbf16>
    %c0_33 = arith.constant 0 : index
    %c0_34 = arith.constant 0 : index
    %c0_35 = arith.constant 0 : index
    %78 = vector.load %arg5[%c0_33, %c0_34, %c0_35] : memref<3x384x128xbf16, #tpu.memory_space<vmem>>, vector<1x384x128xbf16>
    %79 = vector.shape_cast %78 : vector<1x384x128xbf16> to vector<384x128xbf16>
    %cst_36 = arith.constant dense<0.000000e+00> : vector<32x128xf32>
    %80 = tpu.matmul %77, %79, %cst_36 {dimension_numbers = #tpu.dot_dimension_numbers<[1], [0], [0], [1], [0, 0, 1, 1], [], []>} : vector<32x384xbf16>, vector<384x128xbf16>, vector<32x128xf32> -> vector<32x128xf32>
    %81 = arith.addf %71, %80 : vector<32x128xf32>
    %c1_37 = arith.constant 1 : index
    %c0_38 = arith.constant 0 : index
    %c0_39 = arith.constant 0 : index
    %82 = vector.load %arg8[%c1_37, %c0_38, %c0_39] : memref<6x10x128xbf16, #tpu.memory_space<vmem>>, vector<4x10x128xbf16>
    %83 = vector.extract_strided_slice %82 {offsets = [0, 0, 0], sizes = [4, 8, 128], strides = [1, 1, 1]} : vector<4x10x128xbf16> to vector<4x8x128xbf16>
    %84 = vector.extract_strided_slice %82 {offsets = [0, 1, 0], sizes = [4, 8, 128], strides = [1, 1, 1]} : vector<4x10x128xbf16> to vector<4x8x128xbf16>
    %85 = vector.extract_strided_slice %82 {offsets = [0, 2, 0], sizes = [4, 8, 128], strides = [1, 1, 1]} : vector<4x10x128xbf16> to vector<4x8x128xbf16>
    %86 = tpu.concatenate %83, %84, %85 in 2 : vector<4x8x128xbf16>, vector<4x8x128xbf16>, vector<4x8x128xbf16> -> vector<4x8x384xbf16>
    %87 = vector.shape_cast %86 : vector<4x8x384xbf16> to vector<32x384xbf16>
    %c1_40 = arith.constant 1 : index
    %c0_41 = arith.constant 0 : index
    %c0_42 = arith.constant 0 : index
    %88 = vector.load %arg5[%c1_40, %c0_41, %c0_42] : memref<3x384x128xbf16, #tpu.memory_space<vmem>>, vector<1x384x128xbf16>
    %89 = vector.shape_cast %88 : vector<1x384x128xbf16> to vector<384x128xbf16>
    %cst_43 = arith.constant dense<0.000000e+00> : vector<32x128xf32>
    %90 = tpu.matmul %87, %89, %cst_43 {dimension_numbers = #tpu.dot_dimension_numbers<[1], [0], [0], [1], [0, 0, 1, 1], [], []>} : vector<32x384xbf16>, vector<384x128xbf16>, vector<32x128xf32> -> vector<32x128xf32>
    %91 = arith.addf %81, %90 : vector<32x128xf32>
    %c2_44 = arith.constant 2 : index
    %c0_45 = arith.constant 0 : index
    %c0_46 = arith.constant 0 : index
    %92 = vector.load %arg8[%c2_44, %c0_45, %c0_46] : memref<6x10x128xbf16, #tpu.memory_space<vmem>>, vector<4x10x128xbf16>
    %93 = vector.extract_strided_slice %92 {offsets = [0, 0, 0], sizes = [4, 8, 128], strides = [1, 1, 1]} : vector<4x10x128xbf16> to vector<4x8x128xbf16>
    %94 = vector.extract_strided_slice %92 {offsets = [0, 1, 0], sizes = [4, 8, 128], strides = [1, 1, 1]} : vector<4x10x128xbf16> to vector<4x8x128xbf16>
    %95 = vector.extract_strided_slice %92 {offsets = [0, 2, 0], sizes = [4, 8, 128], strides = [1, 1, 1]} : vector<4x10x128xbf16> to vector<4x8x128xbf16>
    %96 = tpu.concatenate %93, %94, %95 in 2 : vector<4x8x128xbf16>, vector<4x8x128xbf16>, vector<4x8x128xbf16> -> vector<4x8x384xbf16>
    %97 = vector.shape_cast %96 : vector<4x8x384xbf16> to vector<32x384xbf16>
    %c2_47 = arith.constant 2 : index
    %c0_48 = arith.constant 0 : index
    %c0_49 = arith.constant 0 : index
    %98 = vector.load %arg5[%c2_47, %c0_48, %c0_49] : memref<3x384x128xbf16, #tpu.memory_space<vmem>>, vector<1x384x128xbf16>
    %99 = vector.shape_cast %98 : vector<1x384x128xbf16> to vector<384x128xbf16>
    %cst_50 = arith.constant dense<0.000000e+00> : vector<32x128xf32>
    %100 = tpu.matmul %97, %99, %cst_50 {dimension_numbers = #tpu.dot_dimension_numbers<[1], [0], [0], [1], [0, 0, 1, 1], [], []>} : vector<32x384xbf16>, vector<384x128xbf16>, vector<32x128xf32> -> vector<32x128xf32>
    %101 = arith.addf %91, %100 : vector<32x128xf32>
    %c0_51 = arith.constant 0 : index
    %c0_52 = arith.constant 0 : index
    %102 = vector.load %arg6[%c0_51, %c0_52] : memref<1x128xf32, #tpu.memory_space<vmem>>, vector<1x128xf32>
    %103 = vector.broadcast %102 : vector<1x128xf32> to vector<32x128xf32>
    %104 = arith.addf %101, %103 : vector<32x128xf32>
    %cst_53 = arith.constant 0.000000e+00 : f32
    %105 = vector.broadcast %cst_53 : f32 to vector<32x128xf32>
    %106 = arith.maximumf %104, %105 : vector<32x128xf32>
    %107 = vector.shape_cast %106 : vector<32x128xf32> to vector<4x8x128xf32>
    %108 = vector.shape_cast %107 : vector<4x8x128xf32> to vector<2x2x8x128xf32>
    %109 = vector.extract_strided_slice %108 {offsets = [0, 0, 0, 0], sizes = [2, 1, 8, 128], strides = [1, 1, 1, 1]} : vector<2x2x8x128xf32> to vector<2x1x8x128xf32>
    %110 = vector.shape_cast %109 : vector<2x1x8x128xf32> to vector<2x8x128xf32>
    %111 = vector.extract_strided_slice %108 {offsets = [0, 1, 0, 0], sizes = [2, 1, 8, 128], strides = [1, 1, 1, 1]} : vector<2x2x8x128xf32> to vector<2x1x8x128xf32>
    %112 = vector.shape_cast %111 : vector<2x1x8x128xf32> to vector<2x8x128xf32>
    %113 = arith.maximumf %110, %112 : vector<2x8x128xf32>
    %114 = vector.shape_cast %113 : vector<2x8x128xf32> to vector<2x4x2x128xf32>
    %115 = vector.extract_strided_slice %114 {offsets = [0, 0, 0, 0], sizes = [2, 4, 1, 128], strides = [1, 1, 1, 1]} : vector<2x4x2x128xf32> to vector<2x4x1x128xf32>
    %116 = vector.shape_cast %115 : vector<2x4x1x128xf32> to vector<2x4x128xf32>
    %117 = vector.extract_strided_slice %114 {offsets = [0, 0, 1, 0], sizes = [2, 4, 1, 128], strides = [1, 1, 1, 1]} : vector<2x4x2x128xf32> to vector<2x4x1x128xf32>
    %118 = vector.shape_cast %117 : vector<2x4x1x128xf32> to vector<2x4x128xf32>
    %119 = arith.maximumf %116, %118 : vector<2x4x128xf32>
    %c0_54 = arith.constant 0 : index
    %c0_55 = arith.constant 0 : index
    %c0_56 = arith.constant 0 : index
    %c0_57 = arith.constant 0 : index
    %120 = vector.load %arg7[%c0_54, %c0_55, %c0_56, %c0_57] : memref<1x2x4x128xf32, #tpu.memory_space<vmem>>, vector<1x2x4x128xf32>
    %121 = vector.shape_cast %120 : vector<1x2x4x128xf32> to vector<2x4x128xf32>
    %122 = vector.shape_cast %119 : vector<2x4x128xf32> to vector<1x2x4x128xf32>
    tpu.vector_store %arg7[%c0_54, %c0_55, %c0_56, %c0_57], %122 {strides = array<i32>} : memref<1x2x4x128xf32, #tpu.memory_space<vmem>>, vector<1x2x4x128xf32>,
    return
  }
  func.func @transform_0(%arg0: i32, %arg1: i32) -> (i32, i32, i32, i32) {
    %c0_i32 = arith.constant 0 : i32
    %c0_i32_0 = arith.constant 0 : i32
    %c0_i32_1 = arith.constant 0 : i32
    %c0_i32_2 = arith.constant 0 : i32
    return %arg0, %c0_i32, %c0_i32_0, %c0_i32_1 : i32, i32, i32, i32
  }
  func.func @transform_1(%arg0: i32, %arg1: i32) -> (i32, i32, i32) {
    %c0_i32 = arith.constant 0 : i32
    %c0_i32_0 = arith.constant 0 : i32
    %c0_i32_1 = arith.constant 0 : i32
    %c0_i32_2 = arith.constant 0 : i32
    return %c0_i32, %c0_i32_0, %c0_i32_1 : i32, i32, i32
  }
  func.func @transform_2(%arg0: i32, %arg1: i32) -> (i32, i32) {
    %c0_i32 = arith.constant 0 : i32
    %c0_i32_0 = arith.constant 0 : i32
    %c0_i32_1 = arith.constant 0 : i32
    return %c0_i32, %c0_i32_0 : i32, i32
  }
  func.func @transform_3(%arg0: i32, %arg1: i32) -> (i32, i32, i32) {
    %c0_i32 = arith.constant 0 : i32
    %c0_i32_0 = arith.constant 0 : i32
    %c0_i32_1 = arith.constant 0 : i32
    %c0_i32_2 = arith.constant 0 : i32
    return %c0_i32, %c0_i32_0, %c0_i32_1 : i32, i32, i32
  }
  func.func @transform_4(%arg0: i32, %arg1: i32) -> (i32, i32) {
    %c0_i32 = arith.constant 0 : i32
    %c0_i32_0 = arith.constant 0 : i32
    %c0_i32_1 = arith.constant 0 : i32
    return %c0_i32, %c0_i32_0 : i32, i32
  }
  func.func @transform_5(%arg0: i32, %arg1: i32) -> (i32, i32, i32, i32) {
    %c0_i32 = arith.constant 0 : i32
    %c0_i32_0 = arith.constant 0 : i32
    %c0_i32_1 = arith.constant 0 : i32
    return %arg0, %arg1, %c0_i32, %c0_i32_0 : i32, i32, i32, i32
  }
}

</mosaic_0001>

<llo_original>
// kernel: vgg_split_forward.3
$region0: #{vgg_split_forward.3}
  #allocation0 [shape = 'u32[]', space=smem, size = 0x4, offset = 0x4, fixed_abs, tag = 'smem constant byte address 0x4 - core index']
  #allocation1 [shape = 'u32[144,128]{1,0:T(1,128)}', space=vmem, size = 0x12000, scoped, tag = 'internal scratch']
  #allocation2 [shape = 'bf16[6,10,128]{2,1,0:T(8,128)(2,1)}', space=vmem, size = 0x6000, scoped, tag = 'scratch operand']
  %s0 = inlined_call_operand.vmem [shape: bf16[2,12,12,64], index: 0, kind: input, shape index: {}]
  %s1 = inlined_call_operand.vmem [shape: bf16[3,192,128], index: 1, kind: input, shape index: {}]
  %s2 = inlined_call_operand.vmem [shape: f32[1,128], index: 2, kind: input, shape index: {}]
  %s3 = inlined_call_operand.vmem [shape: bf16[3,384,128], index: 3, kind: input, shape index: {}]
  %s4 = inlined_call_operand.vmem [shape: f32[1,128], index: 4, kind: input, shape index: {}]
  %s5 = inlined_call_operand.hbm [shape: f32[2,4,4,128], index: 5, kind: output, shape index: {}]
  %s6 = sld [smem:[#allocation0]]
  $region53: #{vgg_split_forward.3} parent=0
    _
  %s8 = ssub.s32 1, %s6
  %s9 = scalar_select 0, %s8, %s6
  $region1: #{vgg_split_forward.3} parent=0
    #allocation3 [shape = 'u8[8192]{0}', space=vmem, size = 0x2000, scoped, tag = 'output window, operand 0']
    #allocation4 [shape = 's32[2]{0}', space=sflag, size = 0x8, scoped, tag = 'scoped memory for vgg_split_forward.3']
    %10 = vsyncpa [#allocation4], 0
    %s11 = scalar_lea.sflag [#allocation4], 1
    %12 = vsyncpa %s11, 0
    loop: start=0, step=1, limit=6
    $region2: #{vgg_split_forward.3} parent=1 // loop_pre_header
      _
    $region3: #{vgg_split_forward.3} parent=1 // loop_header
      %s14 = sphi 0, %s18
      %p15 = scmp.ge.s32.totalorder %s14, 6
      %s21 = sphi 0, %s33
      %s22 = sphi 0, %s29
      %s23 = sphi 0, %s21
      %s24 = sphi 0, %s22
      %s25 = sphi 0, %s23
      %s26 = sphi 0, %s24
      %s36 = sphi 0, %s38
      %s39 = sphi 0, %s36
      %s40 = sphi 0, %s39
      %s56 = sphi 0, %s40
      %s60 = sphi 0, %s60
      %s62 = sphi 0, %s60
      %s63 = sphi 0, %s62
      %s77 = sphi 0, %s63
      %s81 = sphi 0, %s81
      %s83 = sphi 0, %s81
      %s84 = sphi 0, %s83
      %s98 = sphi 0, %s84
      %s102 = sphi 0, %s102
      %s104 = sphi 0, %s102
      %s105 = sphi 0, %s104
      %s119 = sphi 0, %s105
      %s123 = sphi 0, %s123
      %s125 = sphi 0, %s123
      %s126 = sphi 0, %s125
      %s140 = sphi 0, %s126
      %s148 = sphi 0, %s150
      %s151 = sphi 0, %s148
      %s152 = sphi 0, %s151
      %s168 = sphi 0, %s152
    $region4: #{vgg_split_forward.3} parent=1 // loop_header_branch
      %17 = sbr.rel (%p15) target = $region8
    $region5: #{vgg_split_forward.3} parent=1 // loop_body
      %s19 = ssub.s32 %s14, 1
      %s20 = ssub.s32 %s14, 2
      %s27 = sadd.s32 1, %s22
      %p28 = scmp.ge.s32.totalorder %s27, 2
      %s29 = scalar_select %p28, 0, %s27
      %s30 = sadd.s32 1, %s21
      %s31 = scalar_select %p28, %s30, %s21
      %p32 = scmp.ge.s32.totalorder %s31, 2
      %s33 = scalar_select %p32, 0, %s31
      %s34 = ssub.s32 %s21, %s33
      %p35 = scmp.eq.s32.totalorder %s34, 0
      %s37 = sadd.s32 %s36, 1
      %s38 = scalar_select %p35, %s36, %s37
      %p41 = pneg %p35
      %p42 = scmp.eq.s32.totalorder %s14, 3
      %p43 = por %p41, %p42
      %p44 = scmp.ne.s32.totalorder %s36, %s39
      %p45 = scmp.eq.s32.totalorder %s14, 0
      %p46 = por %p44, %p45
      %p47 = scmp.ne.s32.totalorder %s36, %s39
      %p48 = scmp.eq.s32.totalorder %s19, 3
      %p49 = por %p47, %p48
      %p50 = scmp.ne.s32.totalorder %s39, %s40
      %p51 = scmp.eq.s32.totalorder %s19, 0
      %p52 = por %p50, %p51
      %p53 = scmp.ne.s32.totalorder %s39, %s40
      %p54 = scmp.eq.s32.totalorder %s20, 3
      %p55 = por %p53, %p54
      %p57 = scmp.ne.s32.totalorder %s40, %s56
      %p58 = scmp.eq.s32.totalorder %s20, 0
      %p59 = por %p57, %p58
      %s61 = sadd.s32 %s60, 1
      %p64 = scmp.eq.s32.totalorder %s14, 3
      %p65 = scmp.ne.s32.totalorder %s60, %s62
      %p66 = scmp.eq.s32.totalorder %s14, 0
      %p67 = por %p65, %p66
      %p68 = scmp.ne.s32.totalorder %s60, %s62
      %p69 = scmp.eq.s32.totalorder %s19, 3
      %p70 = por %p68, %p69
      %p71 = scmp.ne.s32.totalorder %s62, %s63
      %p72 = scmp.eq.s32.totalorder %s19, 0
      %p73 = por %p71, %p72
      %p74 = scmp.ne.s32.totalorder %s62, %s63
      %p75 = scmp.eq.s32.totalorder %s20, 3
      %p76 = por %p74, %p75
      %p78 = scmp.ne.s32.totalorder %s63, %s77
      %p79 = scmp.eq.s32.totalorder %s20, 0
      %p80 = por %p78, %p79
      %s82 = sadd.s32 %s81, 1
      %p85 = scmp.eq.s32.totalorder %s14, 3
      %p86 = scmp.ne.s32.totalorder %s81, %s83
      %p87 = scmp.eq.s32.totalorder %s14, 0
      %p88 = por %p86, %p87
      %p89 = scmp.ne.s32.totalorder %s81, %s83
      %p90 = scmp.eq.s32.totalorder %s19, 3
      %p91 = por %p89, %p90
      %p92 = scmp.ne.s32.totalorder %s83, %s84
      %p93 = scmp.eq.s32.totalorder %s19, 0
      %p94 = por %p92, %p93
      %p95 = scmp.ne.s32.totalorder %s83, %s84
      %p96 = scmp.eq.s32.totalorder %s20, 3
      %p97 = por %p95, %p96
      %p99 = scmp.ne.s32.totalorder %s84, %s98
      %p100 = scmp.eq.s32.totalorder %s20, 0
      %p101 = por %p99, %p100
      %s103 = sadd.s32 %s102, 1
      %p106 = scmp.eq.s32.totalorder %s14, 3
      %p107 = scmp.ne.s32.totalorder %s102, %s104
      %p108 = scmp.eq.s32.totalorder %s14, 0
      %p109 = por %p107, %p108
      %p110 = scmp.ne.s32.totalorder %s102, %s104
      %p111 = scmp.eq.s32.totalorder %s19, 3
      %p112 = por %p110, %p111
      %p113 = scmp.ne.s32.totalorder %s104, %s105
      %p114 = scmp.eq.s32.totalorder %s19, 0
      %p115 = por %p113, %p114
      %p116 = scmp.ne.s32.totalorder %s104, %s105
      %p117 = scmp.eq.s32.totalorder %s20, 3
      %p118 = por %p116, %p117
      %p120 = scmp.ne.s32.totalorder %s105, %s119
      %p121 = scmp.eq.s32.totalorder %s20, 0
      %p122 = por %p120, %p121
      %s124 = sadd.s32 %s123, 1
      %p127 = scmp.eq.s32.totalorder %s14, 3
      %p128 = scmp.ne.s32.totalorder %s123, %s125
      %p129 = scmp.eq.s32.totalorder %s14, 0
      %p130 = por %p128, %p129
      %p131 = scmp.ne.s32.totalorder %s123, %s125
      %p132 = scmp.eq.s32.totalorder %s19, 3
      %p133 = por %p131, %p132
      %p134 = scmp.ne.s32.totalorder %s125, %s126
      %p135 = scmp.eq.s32.totalorder %s19, 0
      %p136 = por %p134, %p135
      %p137 = scmp.ne.s32.totalorder %s125, %s126
      %p138 = scmp.eq.s32.totalorder %s20, 3
      %p139 = por %p137, %p138
      %p141 = scmp.ne.s32.totalorder %s126, %s140
      %p142 = scmp.eq.s32.totalorder %s20, 0
      %p143 = por %p141, %p142
      %s144 = ssub.s32 %s21, %s33
      %s145 = ssub.s32 %s22, %s29
      %s146 = sor.u32 %s144, %s145
      %p147 = scmp.eq.s32.totalorder %s146, 0
      %s149 = sadd.s32 %s148, 1
      %s150 = scalar_select %p147, %s148, %s149
      %p153 = pneg %p147
      %p154 = scmp.eq.s32.totalorder %s14, 3
      %p155 = por %p153, %p154
      %p156 = scmp.ne.s32.totalorder %s148, %s151
      %p157 = scmp.eq.s32.totalorder %s14, 0
      %p158 = por %p156, %p157
      %p159 = scmp.ne.s32.totalorder %s148, %s151
      %p160 = scmp.eq.s32.totalorder %s19, 3
      %p161 = por %p159, %p160
      %p162 = scmp.ne.s32.totalorder %s151, %s152
      %p163 = scmp.eq.s32.totalorder %s19, 0
      %p164 = por %p162, %p163
      %p165 = scmp.ne.s32.totalorder %s151, %s152
      %p166 = scmp.eq.s32.totalorder %s20, 3
      %p167 = por %p165, %p166
      %p169 = scmp.ne.s32.totalorder %s152, %s168
      %p170 = scmp.eq.s32.totalorder %s20, 0
      %p171 = por %p169, %p170
      %p172 = scmp.le.s32.totalorder 1, %s14
      %p173 = scmp.lt.s32.totalorder %s14, 5
      %p174 = pnand %p172, %p173
      %p175 = pneg %p174
      // Predicated region
      $region9: #{vgg_split_forward.3} parent=5 // pred_check
        _
      $region10: #{vgg_split_forward.3} parent=5 // pred_check_branch
        %177 = sbr.rel (%p174) target = $region12
      $region11: #{vgg_split_forward.3} parent=5 // pred_region
        %s178 = ssub.s32 %s14, 1
        // Predicated region
        $region13: #{vgg_split_forward.3} parent=11 // pred_check
          %p179 = pneg %p73
        $region14: #{vgg_split_forward.3} parent=11 // pred_check_branch
          %181 = sbr.rel (%p179) target = $region16
        $region15: #{vgg_split_forward.3} parent=11 // pred_region
          _
        $region16: #{vgg_split_forward.3} parent=11 // pred_fallthru
          _
        // Predicated region
        $region17: #{vgg_split_forward.3} parent=11 // pred_check
          %p182 = pneg %p94
        $region18: #{vgg_split_forward.3} parent=11 // pred_check_branch
          %184 = sbr.rel (%p182) target = $region20
        $region19: #{vgg_split_forward.3} parent=11 // pred_region
          _
        $region20: #{vgg_split_forward.3} parent=11 // pred_fallthru
          _
        // Predicated region
        $region21: #{vgg_split_forward.3} parent=11 // pred_check
          %p185 = pneg %p115
        $region22: #{vgg_split_forward.3} parent=11 // pred_check_branch
          %187 = sbr.rel (%p185) target = $region24
        $region23: #{vgg_split_forward.3} parent=11 // pred_region
          _
        $region24: #{vgg_split_forward.3} parent=11 // pred_fallthru
          _
        // Predicated region
        $region25: #{vgg_split_forward.3} parent=11 // pred_check
          %p188 = pneg %p136
        $region26: #{vgg_split_forward.3} parent=11 // pred_check_branch
          %190 = sbr.rel (%p188) target = $region28
        $region27: #{vgg_split_forward.3} parent=11 // pred_region
          _
        $region28: #{vgg_split_forward.3} parent=11 // pred_fallthru
          _
      $region12: #{vgg_split_forward.3} parent=5 // pred_fallthru
        _
      %p191 = scmp.lt.s32.totalorder %s14, 4
      // Predicated region
      $region29: #{vgg_split_forward.3} parent=5 // pred_check
        %p192 = pneg %p191
      $region30: #{vgg_split_forward.3} parent=5 // pred_check_branch
        %194 = sbr.rel (%p192) target = $region32
      $region31: #{vgg_split_forward.3} parent=5 // pred_region
        // Predicated region
        $region33: #{vgg_split_forward.3} parent=31 // pred_check
          %p195 = pneg %p46
        $region34: #{vgg_split_forward.3} parent=31 // pred_check_branch
          %197 = sbr.rel (%p195) target = $region36
        $region35: #{vgg_split_forward.3} parent=31 // pred_region
          %p198 = scmp.lt.s32.totalorder %s21, 1
          %s199 = scalar_select %p198, %s21, 1
          %s200 = smul.addr %s199, 24
          %s201 = smul.addr %s200, 4
          %s202 = scalar_lea.vmem %s0, %s201
        $region36: #{vgg_split_forward.3} parent=31 // pred_fallthru
          _
      $region32: #{vgg_split_forward.3} parent=5 // pred_fallthru
        _
      %p203 = scmp.le.s32.totalorder 1, %s14
      %p204 = scmp.lt.s32.totalorder %s14, 5
      %p205 = pnand %p203, %p204
      %p206 = pneg %p205
      // Predicated region
      $region37: #{vgg_split_forward.3} parent=5 // pred_check
        _
      $region38: #{vgg_split_forward.3} parent=5 // pred_check_branch
        %208 = sbr.rel (%p205) target = $region40
      $region39: #{vgg_split_forward.3} parent=5 // pred_region
        %s209 = ssub.s32 %s14, 1
        %p210 = scmp.lt.s32.totalorder %s23, 1
        %s211 = scalar_select %p210, %s23, 1
        %s212 = smul.addr %s211, 24
        %s213 = smul.addr %s212, 4
        %s214 = scalar_lea.vmem %s0, %s213
        %p215 = pneg %p52
        %p216 = pneg %p49
        %p217 = pneg %p73
        %p218 = pneg %p70
        %p219 = pneg %p94
        %p220 = pneg %p91
        %p221 = pneg %p115
        %p222 = pneg %p112
        %p223 = pneg %p136
        %p224 = pneg %p133
        %p225 = pneg %p164
        %p226 = pneg %p161
        %s227 = sand.u32 %s151, 1
        %s228 = scalar_lea.sflag [#allocation4], %s227
        %s229 = sand.u32 %s151, 1
        %s230 = smul.addr %s229, 8
        %s231 = scalar_lea.vmem [#allocation3], %s230
        %p232 = scmp.lt.s32.totalorder %s23, 1
        %s233 = scalar_select %p232, %s23, 1
        %s234 = smul.addr %s233, 24
        %s235 = smul.addr %s234, 4
        %s236 = scalar_lea.vmem %s0, %s235
        %s237 = smul.u32 2, %s24
        %s239 = smul.u32 %s24, 4
        %s240 = smul.u32 %s239, 2
        %s241 = smul.addr %s240, 4
        %s242 = scalar_lea.vmem %s236, %s241
        %v243 = vld [vmem:[%s242] sm:$0xf]
        %v244 = vld [vmem:[%s242 + $0x4] sm:$0x3]
        %v245 = vld [vmem:[%s242 + $0x8] sm:$0xf]
        %v246 = vld [vmem:[%s242 + $0xc] sm:$0x3]
        %v247 = vld [vmem:[%s242 + $0x10] sm:$0xf]
        %v248 = vld [vmem:[%s242 + $0x14] sm:$0x3]
        %v249 = vld [vmem:[%s242 + $0x18] sm:$0xf]
        %v250 = vld [vmem:[%s242 + $0x1c] sm:$0x3]
        %v251 = vld [vmem:[%s242 + $0x20] sm:$0xf]
        %v252 = vld [vmem:[%s242 + $0x24] sm:$0x3]
        %v253 = vld [vmem:[%s242 + $0x28] sm:$0xf]
        %v254 = vld [vmem:[%s242 + $0x2c] sm:$0x3]
        %v267 = vunpack.c.l.b16 %v243
        %v268 = vunpack.c.l.b16 %v244
        %v269 = vunpack.c.l.b16 %v245
        %v270 = vunpack.c.l.b16 %v246
        %v271 = vunpack.c.l.b16 %v247
        %v272 = vunpack.c.l.b16 %v248
        %v273 = vunpack.c.l.b16 %v249
        %v274 = vunpack.c.l.b16 %v250
        %v275 = vunpack.c.l.b16 %v251
        %v276 = vunpack.c.l.b16 %v252
        %v277 = vunpack.c.l.b16 %v253
        %v278 = vunpack.c.l.b16 %v254
        %v279 = vpack.c.b16 %v268, %v267
        %v280 = vpack.c.b16 %v270, %v269
        %v281 = vpack.c.b16 %v272, %v271
        %v282 = vpack.c.b16 %v274, %v273
        %v283 = vpack.c.b16 %v276, %v275
        %v284 = vpack.c.b16 %v278, %v277
        %v286 = vshrl.u32 %v279, 16
        %v288 = vshll.u32 %v279, 16
        %v290 = vrot.slane %v288, 1
        %v291 = vor.u32 %v286, %v290
        %v293 = vshrl.u32 %v280, 16
        %v295 = vshll.u32 %v280, 16
        %v297 = vrot.slane %v295, 1
        %v298 = vor.u32 %v293, %v297
        %v300 = vshrl.u32 %v281, 16
        %v302 = vshll.u32 %v281, 16
        %v304 = vrot.slane %v302, 1
        %v305 = vor.u32 %v300, %v304
        %v307 = vshrl.u32 %v282, 16
        %v309 = vshll.u32 %v282, 16
        %v311 = vrot.slane %v309, 1
        %v312 = vor.u32 %v307, %v311
        %v314 = vshrl.u32 %v283, 16
        %v316 = vshll.u32 %v283, 16
        %v318 = vrot.slane %v316, 1
        %v319 = vor.u32 %v314, %v318
        %v321 = vshrl.u32 %v284, 16
        %v323 = vshll.u32 %v284, 16
        %v325 = vrot.slane %v323, 1
        %v326 = vor.u32 %v321, %v325
        %327 = vrot.lane.b32.xlu0 %v291, 64
        %v328 = vpop.permute.xlu0 %327
        %329 = vrot.lane.b32.xlu0 %v298, 64
        %v330 = vpop.permute.xlu0 %329
        %331 = vrot.lane.b32.xlu0 %v305, 64
        %v332 = vpop.permute.xlu0 %331
        %333 = vrot.lane.b32.xlu0 %v312, 64
        %v334 = vpop.permute.xlu0 %333
        %335 = vrot.lane.b32.xlu0 %v319, 64
        %v336 = vpop.permute.xlu0 %335
        %337 = vrot.lane.b32.xlu0 %v326, 64
        %v338 = vpop.permute.xlu0 %337
        %v339 = vrot.slane %v279, 1
        %v340 = vrot.slane %v280, 1
        %v341 = vrot.slane %v281, 1
        %v342 = vrot.slane %v282, 1
        %v343 = vrot.slane %v283, 1
        %v344 = vrot.slane %v284, 1
        %vm345 = vcmask 523264
        %v347 = vsel %vm345, %v279, %v328
        %v349 = vsel %vm345, %v280, %v330
        %v351 = vsel %vm345, %v281, %v332
        %v353 = vsel %vm345, %v282, %v334
        %v355 = vsel %vm345, %v283, %v336
        %v357 = vsel %vm345, %v284, %v338
        %v364 = vcombine.low %v347, %v339
        %v365 = vcombine.high %v347, %v339
        %v367 = vunpack.c.l.s4 1966171168
        %v368 = vunpack.c.0.s8 %v367
        %v369 = vlaneseq
        %v370 = vshrl.u32 %v369, 7
        %v371 = vsub.s32 %v368, %v370
        %v372 = vrot.slane %v364, %v371
        %v374 = vunpack.c.l.s4 1966171168
        %v375 = vunpack.c.0.s8 %v374
        %v376 = vlaneseq
        %v377 = vshrl.u32 %v376, 7
        %v378 = vsub.s32 %v375, %v377
        %v379 = vrot.slane %v365, %v378
        %v380 = vcombine.high %v372, %v372
        %v382 = vunpack.c.l.s4 1966171168
        %v383 = vunpack.c.0.s8 %v382
        %v384 = vlaneseq
        %v385 = vshrl.u32 %v384, 7
        %v386 = vsub.s32 %v383, %v385
        %v387 = vrot.slane %v372, %v386
        %v389 = vunpack.c.l.s4 1966171168
        %v390 = vunpack.c.0.s8 %v389
        %v391 = vlaneseq
        %v392 = vshrl.u32 %v391, 7
        %v393 = vsub.s32 %v390, %v392
        %v394 = vrot.slane %v379, %v393
        %v396 = vunpack.c.l.s4 1966171168
        %v397 = vunpack.c.0.s8 %v396
        %v398 = vlaneseq
        %v399 = vshrl.u32 %v398, 7
        %v400 = vsub.s32 %v397, %v399
        %v401 = vrot.slane %v380, %v400
        %v402 = vcombine.high %v387, %v387
        %v403 = vcombine.high %v401, %v401
        %v404 = vcombine.low %v349, %v340
        %v405 = vcombine.high %v349, %v340
        %v407 = vunpack.c.l.s4 1966171168
        %v408 = vunpack.c.0.s8 %v407
        %v409 = vlaneseq
        %v410 = vshrl.u32 %v409, 7
        %v411 = vsub.s32 %v408, %v410
        %v412 = vrot.slane %v404, %v411
        %v414 = vunpack.c.l.s4 1966171168
        %v415 = vunpack.c.0.s8 %v414
        %v416 = vlaneseq
        %v417 = vshrl.u32 %v416, 7
        %v418 = vsub.s32 %v415, %v417
        %v419 = vrot.slane %v405, %v418
        %v420 = vcombine.high %v412, %v412
        %v422 = vunpack.c.l.s4 1966171168
        %v423 = vunpack.c.0.s8 %v422
        %v424 = vlaneseq
        %v425 = vshrl.u32 %v424, 7
        %v426 = vsub.s32 %v423, %v425
        %v427 = vrot.slane %v412, %v426
        %v429 = vunpack.c.l.s4 1966171168
        %v430 = vunpack.c.0.s8 %v429
        %v431 = vlaneseq
        %v432 = vshrl.u32 %v431, 7
        %v433 = vsub.s32 %v430, %v432
        %v434 = vrot.slane %v419, %v433
        %v436 = vunpack.c.l.s4 1966171168
        %v437 = vunpack.c.0.s8 %v436
        %v438 = vlaneseq
        %v439 = vshrl.u32 %v438, 7
        %v440 = vsub.s32 %v437, %v439
        %v441 = vrot.slane %v420, %v440
        %v442 = vcombine.high %v427, %v427
        %v443 = vcombine.high %v441, %v441
        %v444 = vcombine.low %v351, %v341
        %v445 = vcombine.high %v351, %v341
        %v447 = vunpack.c.l.s4 1966171168
        %v448 = vunpack.c.0.s8 %v447
        %v449 = vlaneseq
        %v450 = vshrl.u32 %v449, 7
        %v451 = vsub.s32 %v448, %v450
        %v452 = vrot.slane %v444, %v451
        %v454 = vunpack.c.l.s4 1966171168
        %v455 = vunpack.c.0.s8 %v454
        %v456 = vlaneseq
        %v457 = vshrl.u32 %v456, 7
        %v458 = vsub.s32 %v455, %v457
        %v459 = vrot.slane %v445, %v458
        %v460 = vcombine.high %v452, %v452
        %v462 = vunpack.c.l.s4 1966171168
        %v463 = vunpack.c.0.s8 %v462
        %v464 = vlaneseq
        %v465 = vshrl.u32 %v464, 7
        %v466 = vsub.s32 %v463, %v465
        %v467 = vrot.slane %v452, %v466
        %v469 = vunpack.c.l.s4 1966171168
        %v470 = vunpack.c.0.s8 %v469
        %v471 = vlaneseq
        %v472 = vshrl.u32 %v471, 7
        %v473 = vsub.s32 %v470, %v472
        %v474 = vrot.slane %v459, %v473
        %v476 = vunpack.c.l.s4 1966171168
        %v477 = vunpack.c.0.s8 %v476
        %v478 = vlaneseq
        %v479 = vshrl.u32 %v478, 7
        %v480 = vsub.s32 %v477, %v479
        %v481 = vrot.slane %v460, %v480
        %v482 = vcombine.high %v467, %v467
        %v483 = vcombine.high %v481, %v481
        %v484 = vcombine.low %v353, %v342
        %v485 = vcombine.high %v353, %v342
        %v487 = vunpack.c.l.s4 1966171168
        %v488 = vunpack.c.0.s8 %v487
        %v489 = vlaneseq
        %v490 = vshrl.u32 %v489, 7
        %v491 = vsub.s32 %v488, %v490
        %v492 = vrot.slane %v484, %v491
        %v494 = vunpack.c.l.s4 1966171168
        %v495 = vunpack.c.0.s8 %v494
        %v496 = vlaneseq
        %v497 = vshrl.u32 %v496, 7
        %v498 = vsub.s32 %v495, %v497
        %v499 = vrot.slane %v485, %v498
        %v500 = vcombine.high %v492, %v492
        %v502 = vunpack.c.l.s4 1966171168
        %v503 = vunpack.c.0.s8 %v502
        %v504 = vlaneseq
        %v505 = vshrl.u32 %v504, 7
        %v506 = vsub.s32 %v503, %v505
        %v507 = vrot.slane %v492, %v506
        %v509 = vunpack.c.l.s4 1966171168
        %v510 = vunpack.c.0.s8 %v509
        %v511 = vlaneseq
        %v512 = vshrl.u32 %v511, 7
        %v513 = vsub.s32 %v510, %v512
        %v514 = vrot.slane %v499, %v513
        %v516 = vunpack.c.l.s4 1966171168
        %v517 = vunpack.c.0.s8 %v516
        %v518 = vlaneseq
        %v519 = vshrl.u32 %v518, 7
        %v520 = vsub.s32 %v517, %v519
        %v521 = vrot.slane %v500, %v520
        %v522 = vcombine.high %v507, %v507
        %v523 = vcombine.high %v521, %v521
        %v524 = vcombine.low %v355, %v343
        %v525 = vcombine.high %v355, %v343
        %v527 = vunpack.c.l.s4 1966171168
        %v528 = vunpack.c.0.s8 %v527
        %v529 = vlaneseq
        %v530 = vshrl.u32 %v529, 7
        %v531 = vsub.s32 %v528, %v530
        %v532 = vrot.slane %v524, %v531
        %v534 = vunpack.c.l.s4 1966171168
        %v535 = vunpack.c.0.s8 %v534
        %v536 = vlaneseq
        %v537 = vshrl.u32 %v536, 7
        %v538 = vsub.s32 %v535, %v537
        %v539 = vrot.slane %v525, %v538
        %v540 = vcombine.high %v532, %v532
        %v542 = vunpack.c.l.s4 1966171168
        %v543 = vunpack.c.0.s8 %v542
        %v544 = vlaneseq
        %v545 = vshrl.u32 %v544, 7
        %v546 = vsub.s32 %v543, %v545
        %v547 = vrot.slane %v532, %v546
        %v549 = vunpack.c.l.s4 1966171168
        %v550 = vunpack.c.0.s8 %v549
        %v551 = vlaneseq
        %v552 = vshrl.u32 %v551, 7
        %v553 = vsub.s32 %v550, %v552
        %v554 = vrot.slane %v539, %v553
        %v556 = vunpack.c.l.s4 1966171168
        %v557 = vunpack.c.0.s8 %v556
        %v558 = vlaneseq
        %v559 = vshrl.u32 %v558, 7
        %v560 = vsub.s32 %v557, %v559
        %v561 = vrot.slane %v540, %v560
        %v562 = vcombine.high %v547, %v547
        %v563 = vcombine.high %v561, %v561
        %v564 = vcombine.low %v357, %v344
        %v565 = vcombine.high %v357, %v344
        %v567 = vunpack.c.l.s4 1966171168
        %v568 = vunpack.c.0.s8 %v567
        %v569 = vlaneseq
        %v570 = vshrl.u32 %v569, 7
        %v571 = vsub.s32 %v568, %v570
        %v572 = vrot.slane %v564, %v571
        %v574 = vunpack.c.l.s4 1966171168
        %v575 = vunpack.c.0.s8 %v574
        %v576 = vlaneseq
        %v577 = vshrl.u32 %v576, 7
        %v578 = vsub.s32 %v575, %v577
        %v579 = vrot.slane %v565, %v578
        %v580 = vcombine.high %v572, %v572
        %v582 = vunpack.c.l.s4 1966171168
        %v583 = vunpack.c.0.s8 %v582
        %v584 = vlaneseq
        %v585 = vshrl.u32 %v584, 7
        %v586 = vsub.s32 %v583, %v585
        %v587 = vrot.slane %v572, %v586
        %v589 = vunpack.c.l.s4 1966171168
        %v590 = vunpack.c.0.s8 %v589
        %v591 = vlaneseq
        %v592 = vshrl.u32 %v591, 7
        %v593 = vsub.s32 %v590, %v592
        %v594 = vrot.slane %v579, %v593
        %v596 = vunpack.c.l.s4 1966171168
        %v597 = vunpack.c.0.s8 %v596
        %v598 = vlaneseq
        %v599 = vshrl.u32 %v598, 7
        %v600 = vsub.s32 %v597, %v599
        %v601 = vrot.slane %v580, %v600
        %v602 = vcombine.high %v587, %v587
        %v603 = vcombine.high %v601, %v601
        %v604 = vld [vmem:[%s1] sm:$0xf]
        %v605 = vld [vmem:[%s1 + $0x4] sm:$0xf]
        %v606 = vld [vmem:[%s1 + $0x8] sm:$0xf]
        %v607 = vld [vmem:[%s1 + $0xc] sm:$0xf]
        %v608 = vld [vmem:[%s1 + $0x10] sm:$0xf]
        %v609 = vld [vmem:[%s1 + $0x14] sm:$0xf]
        %v610 = vld [vmem:[%s1 + $0x18] sm:$0xf]
        %v611 = vld [vmem:[%s1 + $0x1c] sm:$0xf]
        %v612 = vld [vmem:[%s1 + $0x20] sm:$0xf]
        %v613 = vld [vmem:[%s1 + $0x24] sm:$0xf]
        %v614 = vld [vmem:[%s1 + $0x28] sm:$0xf]
        %v615 = vld [vmem:[%s1 + $0x2c] sm:$0xf]
        %v616 = vld [vmem:[%s1 + $0x30] sm:$0xf]
        %v617 = vld [vmem:[%s1 + $0x34] sm:$0xf]
        %v618 = vld [vmem:[%s1 + $0x38] sm:$0xf]
        %v619 = vld [vmem:[%s1 + $0x3c] sm:$0xf]
        %v620 = vld [vmem:[%s1 + $0x40] sm:$0xf]
        %v621 = vld [vmem:[%s1 + $0x44] sm:$0xf]
        %v622 = vld [vmem:[%s1 + $0x48] sm:$0xf]
        %v623 = vld [vmem:[%s1 + $0x4c] sm:$0xf]
        %v624 = vld [vmem:[%s1 + $0x50] sm:$0xf]
        %v625 = vld [vmem:[%s1 + $0x54] sm:$0xf]
        %v626 = vld [vmem:[%s1 + $0x58] sm:$0xf]
        %v627 = vld [vmem:[%s1 + $0x5c] sm:$0xf]
        %s628 = sadd.s32 %s239, 1
        %s629 = smul.u32 %s628, 2
        %s630 = smul.addr %s629, 4
        %s631 = scalar_lea.vmem %s236, %s630
        %v632 = vld [vmem:[%s631] sm:$0xf]
        %v633 = vld [vmem:[%s631 + $0x4] sm:$0x3]
        %v634 = vld [vmem:[%s631 + $0x8] sm:$0xf]
        %v635 = vld [vmem:[%s631 + $0xc] sm:$0x3]
        %v636 = vld [vmem:[%s631 + $0x10] sm:$0xf]
        %v637 = vld [vmem:[%s631 + $0x14] sm:$0x3]
        %v638 = vld [vmem:[%s631 + $0x18] sm:$0xf]
        %v639 = vld [vmem:[%s631 + $0x1c] sm:$0x3]
        %v640 = vld [vmem:[%s631 + $0x20] sm:$0xf]
        %v641 = vld [vmem:[%s631 + $0x24] sm:$0x3]
        %v642 = vld [vmem:[%s631 + $0x28] sm:$0xf]
        %v643 = vld [vmem:[%s631 + $0x2c] sm:$0x3]
        %v656 = vunpack.c.l.b16 %v632
        %v657 = vunpack.c.l.b16 %v633
        %v658 = vunpack.c.l.b16 %v634
        %v659 = vunpack.c.l.b16 %v635
        %v660 = vunpack.c.l.b16 %v636
        %v661 = vunpack.c.l.b16 %v637
        %v662 = vunpack.c.l.b16 %v638
        %v663 = vunpack.c.l.b16 %v639
        %v664 = vunpack.c.l.b16 %v640
        %v665 = vunpack.c.l.b16 %v641
        %v666 = vunpack.c.l.b16 %v642
        %v667 = vunpack.c.l.b16 %v643
        %v668 = vpack.c.b16 %v657, %v656
        %v669 = vpack.c.b16 %v659, %v658
        %v670 = vpack.c.b16 %v661, %v660
        %v671 = vpack.c.b16 %v663, %v662
        %v672 = vpack.c.b16 %v665, %v664
        %v673 = vpack.c.b16 %v667, %v666
        %v675 = vshrl.u32 %v668, 16
        %v677 = vshll.u32 %v668, 16
        %v679 = vrot.slane %v677, 1
        %v680 = vor.u32 %v675, %v679
        %v682 = vshrl.u32 %v669, 16
        %v684 = vshll.u32 %v669, 16
        %v686 = vrot.slane %v684, 1
        %v687 = vor.u32 %v682, %v686
        %v689 = vshrl.u32 %v670, 16
        %v691 = vshll.u32 %v670, 16
        %v693 = vrot.slane %v691, 1
        %v694 = vor.u32 %v689, %v693
        %v696 = vshrl.u32 %v671, 16
        %v698 = vshll.u32 %v671, 16
        %v700 = vrot.slane %v698, 1
        %v701 = vor.u32 %v696, %v700
        %v703 = vshrl.u32 %v672, 16
        %v705 = vshll.u32 %v672, 16
        %v707 = vrot.slane %v705, 1
        %v708 = vor.u32 %v703, %v707
        %v710 = vshrl.u32 %v673, 16
        %v712 = vshll.u32 %v673, 16
        %v714 = vrot.slane %v712, 1
        %v715 = vor.u32 %v710, %v714
        %716 = vrot.lane.b32.xlu0 %v680, 64
        %v717 = vpop.permute.xlu0 %716
        %718 = vrot.lane.b32.xlu0 %v687, 64
        %v719 = vpop.permute.xlu0 %718
        %720 = vrot.lane.b32.xlu0 %v694, 64
        %v721 = vpop.permute.xlu0 %720
        %722 = vrot.lane.b32.xlu0 %v701, 64
        %v723 = vpop.permute.xlu0 %722
        %724 = vrot.lane.b32.xlu0 %v708, 64
        %v725 = vpop.permute.xlu0 %724
        %726 = vrot.lane.b32.xlu0 %v715, 64
        %v727 = vpop.permute.xlu0 %726
        %v728 = vrot.slane %v668, 1
        %v729 = vrot.slane %v669, 1
        %v730 = vrot.slane %v670, 1
        %v731 = vrot.slane %v671, 1
        %v732 = vrot.slane %v672, 1
        %v733 = vrot.slane %v673, 1
        %v735 = vsel %vm345, %v668, %v717
        %v737 = vsel %vm345, %v669, %v719
        %v739 = vsel %vm345, %v670, %v721
        %v741 = vsel %vm345, %v671, %v723
        %v743 = vsel %vm345, %v672, %v725
        %v745 = vsel %vm345, %v673, %v727
        %v752 = vcombine.low %v735, %v728
        %v753 = vcombine.high %v735, %v728
        %v755 = vunpack.c.l.s4 1966171168
        %v756 = vunpack.c.0.s8 %v755
        %v757 = vlaneseq
        %v758 = vshrl.u32 %v757, 7
        %v759 = vsub.s32 %v756, %v758
        %v760 = vrot.slane %v752, %v759
        %v762 = vunpack.c.l.s4 1966171168
        %v763 = vunpack.c.0.s8 %v762
        %v764 = vlaneseq
        %v765 = vshrl.u32 %v764, 7
        %v766 = vsub.s32 %v763, %v765
        %v767 = vrot.slane %v753, %v766
        %v768 = vcombine.high %v760, %v760
        %v770 = vunpack.c.l.s4 1966171168
        %v771 = vunpack.c.0.s8 %v770
        %v772 = vlaneseq
        %v773 = vshrl.u32 %v772, 7
        %v774 = vsub.s32 %v771, %v773
        %v775 = vrot.slane %v760, %v774
        %v777 = vunpack.c.l.s4 1966171168
        %v778 = vunpack.c.0.s8 %v777
        %v779 = vlaneseq
        %v780 = vshrl.u32 %v779, 7
        %v781 = vsub.s32 %v778, %v780
        %v782 = vrot.slane %v767, %v781
        %v784 = vunpack.c.l.s4 1966171168
        %v785 = vunpack.c.0.s8 %v784
        %v786 = vlaneseq
        %v787 = vshrl.u32 %v786, 7
        %v788 = vsub.s32 %v785, %v787
        %v789 = vrot.slane %v768, %v788
        %v790 = vcombine.high %v775, %v775
        %v791 = vcombine.high %v789, %v789
        %v792 = vcombine.low %v737, %v729
        %v793 = vcombine.high %v737, %v729
        %v795 = vunpack.c.l.s4 1966171168
        %v796 = vunpack.c.0.s8 %v795
        %v797 = vlaneseq
        %v798 = vshrl.u32 %v797, 7
        %v799 = vsub.s32 %v796, %v798
        %v800 = vrot.slane %v792, %v799
        %v802 = vunpack.c.l.s4 1966171168
        %v803 = vunpack.c.0.s8 %v802
        %v804 = vlaneseq
        %v805 = vshrl.u32 %v804, 7
        %v806 = vsub.s32 %v803, %v805
        %v807 = vrot.slane %v793, %v806
        %v808 = vcombine.high %v800, %v800
        %v810 = vunpack.c.l.s4 1966171168
        %v811 = vunpack.c.0.s8 %v810
        %v812 = vlaneseq
        %v813 = vshrl.u32 %v812, 7
        %v814 = vsub.s32 %v811, %v813
        %v815 = vrot.slane %v800, %v814
        %v817 = vunpack.c.l.s4 1966171168
        %v818 = vunpack.c.0.s8 %v817
        %v819 = vlaneseq
        %v820 = vshrl.u32 %v819, 7
        %v821 = vsub.s32 %v818, %v820
        %v822 = vrot.slane %v807, %v821
        %v824 = vunpack.c.l.s4 1966171168
        %v825 = vunpack.c.0.s8 %v824
        %v826 = vlaneseq
        %v827 = vshrl.u32 %v826, 7
        %v828 = vsub.s32 %v825, %v827
        %v829 = vrot.slane %v808, %v828
        %v830 = vcombine.high %v815, %v815
        %v831 = vcombine.high %v829, %v829
        %v832 = vcombine.low %v739, %v730
        %v833 = vcombine.high %v739, %v730
        %v835 = vunpack.c.l.s4 1966171168
        %v836 = vunpack.c.0.s8 %v835
        %v837 = vlaneseq
        %v838 = vshrl.u32 %v837, 7
        %v839 = vsub.s32 %v836, %v838
        %v840 = vrot.slane %v832, %v839
        %v842 = vunpack.c.l.s4 1966171168
        %v843 = vunpack.c.0.s8 %v842
        %v844 = vlaneseq
        %v845 = vshrl.u32 %v844, 7
        %v846 = vsub.s32 %v843, %v845
        %v847 = vrot.slane %v833, %v846
        %v848 = vcombine.high %v840, %v840
        %v850 = vunpack.c.l.s4 1966171168
        %v851 = vunpack.c.0.s8 %v850
        %v852 = vlaneseq
        %v853 = vshrl.u32 %v852, 7
        %v854 = vsub.s32 %v851, %v853
        %v855 = vrot.slane %v840, %v854
        %v857 = vunpack.c.l.s4 1966171168
        %v858 = vunpack.c.0.s8 %v857
        %v859 = vlaneseq
        %v860 = vshrl.u32 %v859, 7
        %v861 = vsub.s32 %v858, %v860
        %v862 = vrot.slane %v847, %v861
        %v864 = vunpack.c.l.s4 1966171168
        %v865 = vunpack.c.0.s8 %v864
        %v866 = vlaneseq
        %v867 = vshrl.u32 %v866, 7
        %v868 = vsub.s32 %v865, %v867
        %v869 = vrot.slane %v848, %v868
        %v870 = vcombine.high %v855, %v855
        %v871 = vcombine.high %v869, %v869
        %v872 = vcombine.low %v741, %v731
        %v873 = vcombine.high %v741, %v731
        %v875 = vunpack.c.l.s4 1966171168
        %v876 = vunpack.c.0.s8 %v875
        %v877 = vlaneseq
        %v878 = vshrl.u32 %v877, 7
        %v879 = vsub.s32 %v876, %v878
        %v880 = vrot.slane %v872, %v879
        %v882 = vunpack.c.l.s4 1966171168
        %v883 = vunpack.c.0.s8 %v882
        %v884 = vlaneseq
        %v885 = vshrl.u32 %v884, 7
        %v886 = vsub.s32 %v883, %v885
        %v887 = vrot.slane %v873, %v886
        %v888 = vcombine.high %v880, %v880
        %v890 = vunpack.c.l.s4 1966171168
        %v891 = vunpack.c.0.s8 %v890
        %v892 = vlaneseq
        %v893 = vshrl.u32 %v892, 7
        %v894 = vsub.s32 %v891, %v893
        %v895 = vrot.slane %v880, %v894
        %v897 = vunpack.c.l.s4 1966171168
        %v898 = vunpack.c.0.s8 %v897
        %v899 = vlaneseq
        %v900 = vshrl.u32 %v899, 7
        %v901 = vsub.s32 %v898, %v900
        %v902 = vrot.slane %v887, %v901
        %v904 = vunpack.c.l.s4 1966171168
        %v905 = vunpack.c.0.s8 %v904
        %v906 = vlaneseq
        %v907 = vshrl.u32 %v906, 7
        %v908 = vsub.s32 %v905, %v907
        %v909 = vrot.slane %v888, %v908
        %v910 = vcombine.high %v895, %v895
        %v911 = vcombine.high %v909, %v909
        %v912 = vcombine.low %v743, %v732
        %v913 = vcombine.high %v743, %v732
        %v915 = vunpack.c.l.s4 1966171168
        %v916 = vunpack.c.0.s8 %v915
        %v917 = vlaneseq
        %v918 = vshrl.u32 %v917, 7
        %v919 = vsub.s32 %v916, %v918
        %v920 = vrot.slane %v912, %v919
        %v922 = vunpack.c.l.s4 1966171168
        %v923 = vunpack.c.0.s8 %v922
        %v924 = vlaneseq
        %v925 = vshrl.u32 %v924, 7
        %v926 = vsub.s32 %v923, %v925
        %v927 = vrot.slane %v913, %v926
        %v928 = vcombine.high %v920, %v920
        %v930 = vunpack.c.l.s4 1966171168
        %v931 = vunpack.c.0.s8 %v930
        %v932 = vlaneseq
        %v933 = vshrl.u32 %v932, 7
        %v934 = vsub.s32 %v931, %v933
        %v935 = vrot.slane %v920, %v934
        %v937 = vunpack.c.l.s4 1966171168
        %v938 = vunpack.c.0.s8 %v937
        %v939 = vlaneseq
        %v940 = vshrl.u32 %v939, 7
        %v941 = vsub.s32 %v938, %v940
        %v942 = vrot.slane %v927, %v941
        %v944 = vunpack.c.l.s4 1966171168
        %v945 = vunpack.c.0.s8 %v944
        %v946 = vlaneseq
        %v947 = vshrl.u32 %v946, 7
        %v948 = vsub.s32 %v945, %v947
        %v949 = vrot.slane %v928, %v948
        %v950 = vcombine.high %v935, %v935
        %v951 = vcombine.high %v949, %v949
        %v952 = vcombine.low %v745, %v733
        %v953 = vcombine.high %v745, %v733
        %v955 = vunpack.c.l.s4 1966171168
        %v956 = vunpack.c.0.s8 %v955
        %v957 = vlaneseq
        %v958 = vshrl.u32 %v957, 7
        %v959 = vsub.s32 %v956, %v958
        %v960 = vrot.slane %v952, %v959
        %v962 = vunpack.c.l.s4 1966171168
        %v963 = vunpack.c.0.s8 %v962
        %v964 = vlaneseq
        %v965 = vshrl.u32 %v964, 7
        %v966 = vsub.s32 %v963, %v965
        %v967 = vrot.slane %v953, %v966
        %v968 = vcombine.high %v960, %v960
        %v970 = vunpack.c.l.s4 1966171168
        %v971 = vunpack.c.0.s8 %v970
        %v972 = vlaneseq
        %v973 = vshrl.u32 %v972, 7
        %v974 = vsub.s32 %v971, %v973
        %v975 = vrot.slane %v960, %v974
        %v977 = vunpack.c.l.s4 1966171168
        %v978 = vunpack.c.0.s8 %v977
        %v979 = vlaneseq
        %v980 = vshrl.u32 %v979, 7
        %v981 = vsub.s32 %v978, %v980
        %v982 = vrot.slane %v967, %v981
        %v984 = vunpack.c.l.s4 1966171168
        %v985 = vunpack.c.0.s8 %v984
        %v986 = vlaneseq
        %v987 = vshrl.u32 %v986, 7
        %v988 = vsub.s32 %v985, %v987
        %v989 = vrot.slane %v968, %v988
        %v990 = vcombine.high %v975, %v975
        %v991 = vcombine.high %v989, %v989
        %s992 = scalar_lea.vmem %s1, 96
        %v993 = vld [vmem:[%s992] sm:$0xf]
        %v994 = vld [vmem:[%s992 + $0x4] sm:$0xf]
        %v995 = vld [vmem:[%s992 + $0x8] sm:$0xf]
        %v996 = vld [vmem:[%s992 + $0xc] sm:$0xf]
        %v997 = vld [vmem:[%s992 + $0x10] sm:$0xf]
        %v998 = vld [vmem:[%s992 + $0x14] sm:$0xf]
        %v999 = vld [vmem:[%s992 + $0x18] sm:$0xf]
        %v1000 = vld [vmem:[%s992 + $0x1c] sm:$0xf]
        %v1001 = vld [vmem:[%s992 + $0x20] sm:$0xf]
        %v1002 = vld [vmem:[%s992 + $0x24] sm:$0xf]
        %v1003 = vld [vmem:[%s992 + $0x28] sm:$0xf]
        %v1004 = vld [vmem:[%s992 + $0x2c] sm:$0xf]
        %v1005 = vld [vmem:[%s992 + $0x30] sm:$0xf]
        %v1006 = vld [vmem:[%s992 + $0x34] sm:$0xf]
        %v1007 = vld [vmem:[%s992 + $0x38] sm:$0xf]
        %v1008 = vld [vmem:[%s992 + $0x3c] sm:$0xf]
        %v1009 = vld [vmem:[%s992 + $0x40] sm:$0xf]
        %v1010 = vld [vmem:[%s992 + $0x44] sm:$0xf]
        %v1011 = vld [vmem:[%s992 + $0x48] sm:$0xf]
        %v1012 = vld [vmem:[%s992 + $0x4c] sm:$0xf]
        %v1013 = vld [vmem:[%s992 + $0x50] sm:$0xf]
        %v1014 = vld [vmem:[%s992 + $0x54] sm:$0xf]
        %v1015 = vld [vmem:[%s992 + $0x58] sm:$0xf]
        %v1016 = vld [vmem:[%s992 + $0x5c] sm:$0xf]
        %v1017 = vcombine.low %v775, %v789
        %v1018 = vcombine.low %v790, %v791
        %v1019 = vcombine.low %v782, %v815
        %v1020 = vcombine.low %v829, %v830
        %v1022 = vunpack.c.l.s4 1966171168
        %v1023 = vunpack.c.0.s8 %v1022
        %v1024 = vlaneseq
        %v1025 = vshrl.u32 %v1024, 7
        %v1026 = vsub.s32 %v1023, %v1025
        %v1027 = vrot.slane %v1017, %v1026
        %v1029 = vunpack.c.l.s4 1966171168
        %v1030 = vunpack.c.0.s8 %v1029
        %v1031 = vlaneseq
        %v1032 = vshrl.u32 %v1031, 7
        %v1033 = vsub.s32 %v1030, %v1032
        %v1034 = vrot.slane %v1018, %v1033
        %v1036 = vunpack.c.l.s4 1966171168
        %v1037 = vunpack.c.0.s8 %v1036
        %v1038 = vlaneseq
        %v1039 = vshrl.u32 %v1038, 7
        %v1040 = vsub.s32 %v1037, %v1039
        %v1041 = vrot.slane %v1019, %v1040
        %v1043 = vunpack.c.l.s4 1966171168
        %v1044 = vunpack.c.0.s8 %v1043
        %v1045 = vlaneseq
        %v1046 = vshrl.u32 %v1045, 7
        %v1047 = vsub.s32 %v1044, %v1046
        %v1048 = vrot.slane %v1020, %v1047
        %v1049 = vcombine.low %v1027, %v1034
        %v1050 = vcombine.high %v1027, %v1034
        %v1051 = vcombine.low %v1041, %v1048
        %v1052 = vcombine.high %v1041, %v1048
        %v1054 = vunpack.c.l.s4 1966171168
        %v1055 = vunpack.c.0.s8 %v1054
        %v1056 = vlaneseq
        %v1057 = vshrl.u32 %v1056, 7
        %v1058 = vsub.s32 %v1055, %v1057
        %v1059 = vrot.slane %v1049, %v1058
        %v1061 = vunpack.c.l.s4 1966171168
        %v1062 = vunpack.c.0.s8 %v1061
        %v1063 = vlaneseq
        %v1064 = vshrl.u32 %v1063, 7
        %v1065 = vsub.s32 %v1062, %v1064
        %v1066 = vrot.slane %v1050, %v1065
        %v1068 = vunpack.c.l.s4 1966171168
        %v1069 = vunpack.c.0.s8 %v1068
        %v1070 = vlaneseq
        %v1071 = vshrl.u32 %v1070, 7
        %v1072 = vsub.s32 %v1069, %v1071
        %v1073 = vrot.slane %v1051, %v1072
        %v1075 = vunpack.c.l.s4 1966171168
        %v1076 = vunpack.c.0.s8 %v1075
        %v1077 = vlaneseq
        %v1078 = vshrl.u32 %v1077, 7
        %v1079 = vsub.s32 %v1076, %v1078
        %v1080 = vrot.slane %v1052, %v1079
        %v1081 = vcombine.low %v1059, %v1073
        %v1082 = vcombine.low %v1066, %v1080
        %v1083 = vcombine.low %v831, %v822
        %v1084 = vcombine.low %v855, %v869
        %v1085 = vcombine.low %v870, %v871
        %v1086 = vcombine.low %v862, %v895
        %v1088 = vunpack.c.l.s4 1966171168
        %v1089 = vunpack.c.0.s8 %v1088
        %v1090 = vlaneseq
        %v1091 = vshrl.u32 %v1090, 7
        %v1092 = vsub.s32 %v1089, %v1091
        %v1093 = vrot.slane %v1083, %v1092
        %v1095 = vunpack.c.l.s4 1966171168
        %v1096 = vunpack.c.0.s8 %v1095
        %v1097 = vlaneseq
        %v1098 = vshrl.u32 %v1097, 7
        %v1099 = vsub.s32 %v1096, %v1098
        %v1100 = vrot.slane %v1084, %v1099
        %v1102 = vunpack.c.l.s4 1966171168
        %v1103 = vunpack.c.0.s8 %v1102
        %v1104 = vlaneseq
        %v1105 = vshrl.u32 %v1104, 7
        %v1106 = vsub.s32 %v1103, %v1105
        %v1107 = vrot.slane %v1085, %v1106
        %v1109 = vunpack.c.l.s4 1966171168
        %v1110 = vunpack.c.0.s8 %v1109
        %v1111 = vlaneseq
        %v1112 = vshrl.u32 %v1111, 7
        %v1113 = vsub.s32 %v1110, %v1112
        %v1114 = vrot.slane %v1086, %v1113
        %v1115 = vcombine.low %v1093, %v1100
        %v1116 = vcombine.high %v1093, %v1100
        %v1117 = vcombine.low %v1107, %v1114
        %v1118 = vcombine.high %v1107, %v1114
        %v1120 = vunpack.c.l.s4 1966171168
        %v1121 = vunpack.c.0.s8 %v1120
        %v1122 = vlaneseq
        %v1123 = vshrl.u32 %v1122, 7
        %v1124 = vsub.s32 %v1121, %v1123
        %v1125 = vrot.slane %v1115, %v1124
        %v1127 = vunpack.c.l.s4 1966171168
        %v1128 = vunpack.c.0.s8 %v1127
        %v1129 = vlaneseq
        %v1130 = vshrl.u32 %v1129, 7
        %v1131 = vsub.s32 %v1128, %v1130
        %v1132 = vrot.slane %v1116, %v1131
        %v1134 = vunpack.c.l.s4 1966171168
        %v1135 = vunpack.c.0.s8 %v1134
        %v1136 = vlaneseq
        %v1137 = vshrl.u32 %v1136, 7
        %v1138 = vsub.s32 %v1135, %v1137
        %v1139 = vrot.slane %v1117, %v1138
        %v1141 = vunpack.c.l.s4 1966171168
        %v1142 = vunpack.c.0.s8 %v1141
        %v1143 = vlaneseq
        %v1144 = vshrl.u32 %v1143, 7
        %v1145 = vsub.s32 %v1142, %v1144
        %v1146 = vrot.slane %v1118, %v1145
        %v1147 = vcombine.low %v1125, %v1139
        %v1148 = vcombine.low %v1132, %v1146
        %v1149 = vcombine.low %v909, %v910
        %v1150 = vcombine.low %v911, %v902
        %v1151 = vcombine.low %v935, %v949
        %v1152 = vcombine.low %v950, %v951
        %v1154 = vunpack.c.l.s4 1966171168
        %v1155 = vunpack.c.0.s8 %v1154
        %v1156 = vlaneseq
        %v1157 = vshrl.u32 %v1156, 7
        %v1158 = vsub.s32 %v1155, %v1157
        %v1159 = vrot.slane %v1149, %v1158
        %v1161 = vunpack.c.l.s4 1966171168
        %v1162 = vunpack.c.0.s8 %v1161
        %v1163 = vlaneseq
        %v1164 = vshrl.u32 %v1163, 7
        %v1165 = vsub.s32 %v1162, %v1164
        %v1166 = vrot.slane %v1150, %v1165
        %v1168 = vunpack.c.l.s4 1966171168
        %v1169 = vunpack.c.0.s8 %v1168
        %v1170 = vlaneseq
        %v1171 = vshrl.u32 %v1170, 7
        %v1172 = vsub.s32 %v1169, %v1171
        %v1173 = vrot.slane %v1151, %v1172
        %v1175 = vunpack.c.l.s4 1966171168
        %v1176 = vunpack.c.0.s8 %v1175
        %v1177 = vlaneseq
        %v1178 = vshrl.u32 %v1177, 7
        %v1179 = vsub.s32 %v1176, %v1178
        %v1180 = vrot.slane %v1152, %v1179
        %v1181 = vcombine.low %v1159, %v1166
        %v1182 = vcombine.high %v1159, %v1166
        %v1183 = vcombine.low %v1173, %v1180
        %v1184 = vcombine.high %v1173, %v1180
        %v1186 = vunpack.c.l.s4 1966171168
        %v1187 = vunpack.c.0.s8 %v1186
        %v1188 = vlaneseq
        %v1189 = vshrl.u32 %v1188, 7
        %v1190 = vsub.s32 %v1187, %v1189
        %v1191 = vrot.slane %v1181, %v1190
        %v1193 = vunpack.c.l.s4 1966171168
        %v1194 = vunpack.c.0.s8 %v1193
        %v1195 = vlaneseq
        %v1196 = vshrl.u32 %v1195, 7
        %v1197 = vsub.s32 %v1194, %v1196
        %v1198 = vrot.slane %v1182, %v1197
        %v1200 = vunpack.c.l.s4 1966171168
        %v1201 = vunpack.c.0.s8 %v1200
        %v1202 = vlaneseq
        %v1203 = vshrl.u32 %v1202, 7
        %v1204 = vsub.s32 %v1201, %v1203
        %v1205 = vrot.slane %v1183, %v1204
        %v1207 = vunpack.c.l.s4 1966171168
        %v1208 = vunpack.c.0.s8 %v1207
        %v1209 = vlaneseq
        %v1210 = vshrl.u32 %v1209, 7
        %v1211 = vsub.s32 %v1208, %v1210
        %v1212 = vrot.slane %v1184, %v1211
        %v1213 = vcombine.low %v1191, %v1205
        %v1214 = vcombine.low %v1198, %v1212
        %v1215 = vcombine.low %v942, %v975
        %v1216 = vcombine.low %v989, %v990
        %v1217 = vcombine.low %v991, %v982
        %v1219 = vunpack.c.l.s4 1966171168
        %v1220 = vunpack.c.0.s8 %v1219
        %v1221 = vlaneseq
        %v1222 = vshrl.u32 %v1221, 7
        %v1223 = vsub.s32 %v1220, %v1222
        %v1224 = vrot.slane %v1215, %v1223
        %v1226 = vunpack.c.l.s4 1966171168
        %v1227 = vunpack.c.0.s8 %v1226
        %v1228 = vlaneseq
        %v1229 = vshrl.u32 %v1228, 7
        %v1230 = vsub.s32 %v1227, %v1229
        %v1231 = vrot.slane %v1216, %v1230
        %v1233 = vunpack.c.l.s4 1966171168
        %v1234 = vunpack.c.0.s8 %v1233
        %v1235 = vlaneseq
        %v1236 = vshrl.u32 %v1235, 7
        %v1237 = vsub.s32 %v1234, %v1236
        %v1238 = vrot.slane %v1217, %v1237
        %v1239 = vcombine.low %v1224, %v1231
        %v1240 = vcombine.high %v1224, %v1231
        %v1241 = vcombine.high %v1238, %v1238
        %v1243 = vunpack.c.l.s4 1966171168
        %v1244 = vunpack.c.0.s8 %v1243
        %v1245 = vlaneseq
        %v1246 = vshrl.u32 %v1245, 7
        %v1247 = vsub.s32 %v1244, %v1246
        %v1248 = vrot.slane %v1239, %v1247
        %v1250 = vunpack.c.l.s4 1966171168
        %v1251 = vunpack.c.0.s8 %v1250
        %v1252 = vlaneseq
        %v1253 = vshrl.u32 %v1252, 7
        %v1254 = vsub.s32 %v1251, %v1253
        %v1255 = vrot.slane %v1240, %v1254
        %v1257 = vunpack.c.l.s4 1966171168
        %v1258 = vunpack.c.0.s8 %v1257
        %v1259 = vlaneseq
        %v1260 = vshrl.u32 %v1259, 7
        %v1261 = vsub.s32 %v1258, %v1260
        %v1262 = vrot.slane %v1238, %v1261
        %v1264 = vunpack.c.l.s4 1966171168
        %v1265 = vunpack.c.0.s8 %v1264
        %v1266 = vlaneseq
        %v1267 = vshrl.u32 %v1266, 7
        %v1268 = vsub.s32 %v1265, %v1267
        %v1269 = vrot.slane %v1241, %v1268
        %v1270 = vcombine.low %v1248, %v1262
        %v1271 = vcombine.low %v1255, %v1269
        %v1300 = vunpack.c.l.b16 %v993
        %v1301 = vunpack.c.l.b16 %v994
        %v1302 = vunpack.c.l.b16 %v995
        %v1303 = vunpack.c.l.b16 %v996
        %v1304 = vunpack.c.l.b16 %v997
        %v1305 = vunpack.c.l.b16 %v998
        %v1306 = vunpack.c.l.b16 %v999
        %v1307 = vunpack.c.l.b16 %v1000
        %v1308 = vunpack.c.l.b16 %v1001
        %v1309 = vunpack.c.l.b16 %v1002
        %v1310 = vunpack.c.l.b16 %v1003
        %v1311 = vunpack.c.l.b16 %v1004
        %v1312 = vunpack.c.l.b16 %v1005
        %v1313 = vunpack.c.l.b16 %v1006
        %v1314 = vunpack.c.l.b16 %v1007
        %v1315 = vunpack.c.l.b16 %v1008
        %v1316 = vunpack.c.l.b16 %v1009
        %v1317 = vunpack.c.l.b16 %v1010
        %v1318 = vunpack.c.l.b16 %v1011
        %v1319 = vunpack.c.l.b16 %v1012
        %v1320 = vunpack.c.l.b16 %v1013
        %v1321 = vunpack.c.l.b16 %v1014
        %v1322 = vunpack.c.l.b16 %v1015
        %v1323 = vunpack.c.l.b16 %v1016
        %v1324 = vpack.c.b16 %v1301, %v1300
        %v1325 = vpack.c.b16 %v1303, %v1302
        %v1326 = vpack.c.b16 %v1305, %v1304
        %v1327 = vpack.c.b16 %v1307, %v1306
        %v1328 = vpack.c.b16 %v1309, %v1308
        %v1329 = vpack.c.b16 %v1311, %v1310
        %v1330 = vpack.c.b16 %v1313, %v1312
        %v1331 = vpack.c.b16 %v1315, %v1314
        %v1332 = vpack.c.b16 %v1317, %v1316
        %v1333 = vpack.c.b16 %v1319, %v1318
        %v1334 = vpack.c.b16 %v1321, %v1320
        %v1335 = vpack.c.b16 %v1323, %v1322
        %v1349 = vsel %vm345, %v1082, 0
        %v1352 = vsel %vm345, %v1148, 0
        %v1355 = vsel %vm345, %v1214, 0
        %v1358 = vsel %vm345, %v1271, 0
        %1360 = vmatprep.subr.bf16.mxu0 0
        %1361 = vmatpush1.bf16.msra.mxu0 %v1324
        %1362 = vmatprep.subr.bf16.mxu0 0
        %1363 = vmatpush1.bf16.msra.mxu0 %v1325
        %1364 = vmatprep.subr.bf16.mxu0 0
        %1365 = vmatpush1.bf16.msra.mxu0 %v1326
        %1366 = vmatprep.subr.bf16.mxu0 0
        %1367 = vmatpush1.bf16.msra.mxu0 %v1327
        %1368 = vmatprep.subr.bf16.mxu0 0
        %1369 = vmatpush1.bf16.msra.mxu0 %v1328
        %1370 = vmatprep.subr.bf16.mxu0 0
        %1371 = vmatpush1.bf16.msra.mxu0 %v1329
        %1372 = vmatprep.subr.bf16.mxu0 0
        %1373 = vmatpush1.bf16.msra.mxu0 %v1330
        %1374 = vmatprep.subr.bf16.mxu0 0
        %1375 = vmatpush1.bf16.msra.mxu0 %v1331
        %1376 = vmatprep.subr.bf16.mxu0 0
        %1377 = vmatpush1.bf16.msra.mxu0 %v1332
        %1378 = vmatprep.subr.bf16.mxu0 0
        %1379 = vmatpush1.bf16.msra.mxu0 %v1333
        %1380 = vmatprep.subr.bf16.mxu0 0
        %1381 = vmatpush1.bf16.msra.mxu0 %v1334
        %1382 = vmatprep.subr.bf16.mxu0 0
        %1383 = vmatpush1.bf16.msra.mxu0 %v1335
        %1384 = vmatprep.subr.bf16.mxu0 0
        %1385 = vmatpush1.bf16.msra.mxu0 0
        %1386 = vmatprep.subr.bf16.mxu0 0
        %1387 = vmatpush1.bf16.msra.mxu0 0
        %1388 = vmatprep.subr.bf16.mxu0 0
        %1389 = vmatpush1.bf16.msra.mxu0 0
        %1390 = vmatprep.subr.bf16.mxu0 0
        %1391 = vmatpush1.bf16.msra.mxu0 0
        %1392 = vmatprep.mubr.bf16.mxu0 %v1349
        %1393 = vmatmul.mubr.bf16.gmra.mrb[0].mxu0 %v1081
        %v1394 = vpop.f32.mrb[0].mxu0
        %v1395 = vadd.f32 0.0, %v1394
        %v1396 = vpop.f32.mrb[0].mxu0
        %v1397 = vpop.f32.mrb[0].mxu0
        %v1398 = vadd.f32 0.0, %v1397
        %v1399 = vpop.f32.mrb[0].mxu0
        %1400 = vmatprep.mubr.bf16.mxu0 %v1352
        %1401 = vmatmul.mubr.bf16.gmra.mrb[0].mxu0 %v1147
        %v1402 = vpop.f32.mrb[0].mxu0
        %v1403 = vadd.f32 0.0, %v1402
        %v1404 = vpop.f32.mrb[0].mxu0
        %v1405 = vpop.f32.mrb[0].mxu0
        %v1406 = vadd.f32 0.0, %v1405
        %v1407 = vpop.f32.mrb[0].mxu0
        %1408 = vmatprep.mubr.bf16.mxu0 %v1355
        %1409 = vmatmul.mubr.bf16.gmra.mrb[0].mxu0 %v1213
        %v1410 = vpop.f32.mrb[0].mxu0
        %v1411 = vadd.f32 0.0, %v1410
        %v1412 = vpop.f32.mrb[0].mxu0
        %v1413 = vpop.f32.mrb[0].mxu0
        %v1414 = vadd.f32 0.0, %v1413
        %v1415 = vpop.f32.mrb[0].mxu0
        %1416 = vmatprep.mubr.bf16.mxu0 %v1358
        %1417 = vmatmul.mubr.bf16.gmra.mrb[0].mxu0 %v1270
        %v1418 = vpop.f32.mrb[0].mxu0
        %v1419 = vadd.f32 0.0, %v1418
        %v1420 = vpop.f32.mrb[0].mxu0
        %v1421 = vpop.f32.mrb[0].mxu0
        %v1422 = vadd.f32 0.0, %v1421
        %v1423 = vpop.f32.mrb[0].mxu0
        %1424 = vdwg.mxu0
        %v1425 = vcombine.low %v387, %v401
        %v1426 = vcombine.low %v402, %v403
        %v1427 = vcombine.low %v394, %v427
        %v1428 = vcombine.low %v441, %v442
        %v1430 = vunpack.c.l.s4 1966171168
        %v1431 = vunpack.c.0.s8 %v1430
        %v1432 = vlaneseq
        %v1433 = vshrl.u32 %v1432, 7
        %v1434 = vsub.s32 %v1431, %v1433
        %v1435 = vrot.slane %v1425, %v1434
        %v1437 = vunpack.c.l.s4 1966171168
        %v1438 = vunpack.c.0.s8 %v1437
        %v1439 = vlaneseq
        %v1440 = vshrl.u32 %v1439, 7
        %v1441 = vsub.s32 %v1438, %v1440
        %v1442 = vrot.slane %v1426, %v1441
        %v1444 = vunpack.c.l.s4 1966171168
        %v1445 = vunpack.c.0.s8 %v1444
        %v1446 = vlaneseq
        %v1447 = vshrl.u32 %v1446, 7
        %v1448 = vsub.s32 %v1445, %v1447
        %v1449 = vrot.slane %v1427, %v1448
        %v1451 = vunpack.c.l.s4 1966171168
        %v1452 = vunpack.c.0.s8 %v1451
        %v1453 = vlaneseq
        %v1454 = vshrl.u32 %v1453, 7
        %v1455 = vsub.s32 %v1452, %v1454
        %v1456 = vrot.slane %v1428, %v1455
        %v1457 = vcombine.low %v1435, %v1442
        %v1458 = vcombine.high %v1435, %v1442
        %v1459 = vcombine.low %v1449, %v1456
        %v1460 = vcombine.high %v1449, %v1456
        %v1462 = vunpack.c.l.s4 1966171168
        %v1463 = vunpack.c.0.s8 %v1462
        %v1464 = vlaneseq
        %v1465 = vshrl.u32 %v1464, 7
        %v1466 = vsub.s32 %v1463, %v1465
        %v1467 = vrot.slane %v1457, %v1466
        %v1469 = vunpack.c.l.s4 1966171168
        %v1470 = vunpack.c.0.s8 %v1469
        %v1471 = vlaneseq
        %v1472 = vshrl.u32 %v1471, 7
        %v1473 = vsub.s32 %v1470, %v1472
        %v1474 = vrot.slane %v1458, %v1473
        %v1476 = vunpack.c.l.s4 1966171168
        %v1477 = vunpack.c.0.s8 %v1476
        %v1478 = vlaneseq
        %v1479 = vshrl.u32 %v1478, 7
        %v1480 = vsub.s32 %v1477, %v1479
        %v1481 = vrot.slane %v1459, %v1480
        %v1483 = vunpack.c.l.s4 1966171168
        %v1484 = vunpack.c.0.s8 %v1483
        %v1485 = vlaneseq
        %v1486 = vshrl.u32 %v1485, 7
        %v1487 = vsub.s32 %v1484, %v1486
        %v1488 = vrot.slane %v1460, %v1487
        %v1489 = vcombine.low %v1467, %v1481
        %v1490 = vcombine.low %v1474, %v1488
        %v1491 = vcombine.low %v443, %v434
        %v1492 = vcombine.low %v467, %v481
        %v1493 = vcombine.low %v482, %v483
        %v1494 = vcombine.low %v474, %v507
        %v1496 = vunpack.c.l.s4 1966171168
        %v1497 = vunpack.c.0.s8 %v1496
        %v1498 = vlaneseq
        %v1499 = vshrl.u32 %v1498, 7
        %v1500 = vsub.s32 %v1497, %v1499
        %v1501 = vrot.slane %v1491, %v1500
        %v1503 = vunpack.c.l.s4 1966171168
        %v1504 = vunpack.c.0.s8 %v1503
        %v1505 = vlaneseq
        %v1506 = vshrl.u32 %v1505, 7
        %v1507 = vsub.s32 %v1504, %v1506
        %v1508 = vrot.slane %v1492, %v1507
        %v1510 = vunpack.c.l.s4 1966171168
        %v1511 = vunpack.c.0.s8 %v1510
        %v1512 = vlaneseq
        %v1513 = vshrl.u32 %v1512, 7
        %v1514 = vsub.s32 %v1511, %v1513
        %v1515 = vrot.slane %v1493, %v1514
        %v1517 = vunpack.c.l.s4 1966171168
        %v1518 = vunpack.c.0.s8 %v1517
        %v1519 = vlaneseq
        %v1520 = vshrl.u32 %v1519, 7
        %v1521 = vsub.s32 %v1518, %v1520
        %v1522 = vrot.slane %v1494, %v1521
        %v1523 = vcombine.low %v1501, %v1508
        %v1524 = vcombine.high %v1501, %v1508
        %v1525 = vcombine.low %v1515, %v1522
        %v1526 = vcombine.high %v1515, %v1522
        %v1528 = vunpack.c.l.s4 1966171168
        %v1529 = vunpack.c.0.s8 %v1528
        %v1530 = vlaneseq
        %v1531 = vshrl.u32 %v1530, 7
        %v1532 = vsub.s32 %v1529, %v1531
        %v1533 = vrot.slane %v1523, %v1532
        %v1535 = vunpack.c.l.s4 1966171168
        %v1536 = vunpack.c.0.s8 %v1535
        %v1537 = vlaneseq
        %v1538 = vshrl.u32 %v1537, 7
        %v1539 = vsub.s32 %v1536, %v1538
        %v1540 = vrot.slane %v1524, %v1539
        %v1542 = vunpack.c.l.s4 1966171168
        %v1543 = vunpack.c.0.s8 %v1542
        %v1544 = vlaneseq
        %v1545 = vshrl.u32 %v1544, 7
        %v1546 = vsub.s32 %v1543, %v1545
        %v1547 = vrot.slane %v1525, %v1546
        %v1549 = vunpack.c.l.s4 1966171168
        %v1550 = vunpack.c.0.s8 %v1549
        %v1551 = vlaneseq
        %v1552 = vshrl.u32 %v1551, 7
        %v1553 = vsub.s32 %v1550, %v1552
        %v1554 = vrot.slane %v1526, %v1553
        %v1555 = vcombine.low %v1533, %v1547
        %v1556 = vcombine.low %v1540, %v1554
        %v1557 = vcombine.low %v521, %v522
        %v1558 = vcombine.low %v523, %v514
        %v1559 = vcombine.low %v547, %v561
        %v1560 = vcombine.low %v562, %v563
        %v1562 = vunpack.c.l.s4 1966171168
        %v1563 = vunpack.c.0.s8 %v1562
        %v1564 = vlaneseq
        %v1565 = vshrl.u32 %v1564, 7
        %v1566 = vsub.s32 %v1563, %v1565
        %v1567 = vrot.slane %v1557, %v1566
        %v1569 = vunpack.c.l.s4 1966171168
        %v1570 = vunpack.c.0.s8 %v1569
        %v1571 = vlaneseq
        %v1572 = vshrl.u32 %v1571, 7
        %v1573 = vsub.s32 %v1570, %v1572
        %v1574 = vrot.slane %v1558, %v1573
        %v1576 = vunpack.c.l.s4 1966171168
        %v1577 = vunpack.c.0.s8 %v1576
        %v1578 = vlaneseq
        %v1579 = vshrl.u32 %v1578, 7
        %v1580 = vsub.s32 %v1577, %v1579
        %v1581 = vrot.slane %v1559, %v1580
        %v1583 = vunpack.c.l.s4 1966171168
        %v1584 = vunpack.c.0.s8 %v1583
        %v1585 = vlaneseq
        %v1586 = vshrl.u32 %v1585, 7
        %v1587 = vsub.s32 %v1584, %v1586
        %v1588 = vrot.slane %v1560, %v1587
        %v1589 = vcombine.low %v1567, %v1574
        %v1590 = vcombine.high %v1567, %v1574
        %v1591 = vcombine.low %v1581, %v1588
        %v1592 = vcombine.high %v1581, %v1588
        %v1594 = vunpack.c.l.s4 1966171168
        %v1595 = vunpack.c.0.s8 %v1594
        %v1596 = vlaneseq
        %v1597 = vshrl.u32 %v1596, 7
        %v1598 = vsub.s32 %v1595, %v1597
        %v1599 = vrot.slane %v1589, %v1598
        %v1601 = vunpack.c.l.s4 1966171168
        %v1602 = vunpack.c.0.s8 %v1601
        %v1603 = vlaneseq
        %v1604 = vshrl.u32 %v1603, 7
        %v1605 = vsub.s32 %v1602, %v1604
        %v1606 = vrot.slane %v1590, %v1605
        %v1608 = vunpack.c.l.s4 1966171168
        %v1609 = vunpack.c.0.s8 %v1608
        %v1610 = vlaneseq
        %v1611 = vshrl.u32 %v1610, 7
        %v1612 = vsub.s32 %v1609, %v1611
        %v1613 = vrot.slane %v1591, %v1612
        %v1615 = vunpack.c.l.s4 1966171168
        %v1616 = vunpack.c.0.s8 %v1615
        %v1617 = vlaneseq
        %v1618 = vshrl.u32 %v1617, 7
        %v1619 = vsub.s32 %v1616, %v1618
        %v1620 = vrot.slane %v1592, %v1619
        %v1621 = vcombine.low %v1599, %v1613
        %v1622 = vcombine.low %v1606, %v1620
        %v1623 = vcombine.low %v554, %v587
        %v1624 = vcombine.low %v601, %v602
        %v1625 = vcombine.low %v603, %v594
        %v1627 = vunpack.c.l.s4 1966171168
        %v1628 = vunpack.c.0.s8 %v1627
        %v1629 = vlaneseq
        %v1630 = vshrl.u32 %v1629, 7
        %v1631 = vsub.s32 %v1628, %v1630
        %v1632 = vrot.slane %v1623, %v1631
        %v1634 = vunpack.c.l.s4 1966171168
        %v1635 = vunpack.c.0.s8 %v1634
        %v1636 = vlaneseq
        %v1637 = vshrl.u32 %v1636, 7
        %v1638 = vsub.s32 %v1635, %v1637
        %v1639 = vrot.slane %v1624, %v1638
        %v1641 = vunpack.c.l.s4 1966171168
        %v1642 = vunpack.c.0.s8 %v1641
        %v1643 = vlaneseq
        %v1644 = vshrl.u32 %v1643, 7
        %v1645 = vsub.s32 %v1642, %v1644
        %v1646 = vrot.slane %v1625, %v1645
        %v1647 = vcombine.low %v1632, %v1639
        %v1648 = vcombine.high %v1632, %v1639
        %v1649 = vcombine.high %v1646, %v1646
        %v1651 = vunpack.c.l.s4 1966171168
        %v1652 = vunpack.c.0.s8 %v1651
        %v1653 = vlaneseq
        %v1654 = vshrl.u32 %v1653, 7
        %v1655 = vsub.s32 %v1652, %v1654
        %v1656 = vrot.slane %v1647, %v1655
        %v1658 = vunpack.c.l.s4 1966171168
        %v1659 = vunpack.c.0.s8 %v1658
        %v1660 = vlaneseq
        %v1661 = vshrl.u32 %v1660, 7
        %v1662 = vsub.s32 %v1659, %v1661
        %v1663 = vrot.slane %v1648, %v1662
        %v1665 = vunpack.c.l.s4 1966171168
        %v1666 = vunpack.c.0.s8 %v1665
        %v1667 = vlaneseq
        %v1668 = vshrl.u32 %v1667, 7
        %v1669 = vsub.s32 %v1666, %v1668
        %v1670 = vrot.slane %v1646, %v1669
        %v1672 = vunpack.c.l.s4 1966171168
        %v1673 = vunpack.c.0.s8 %v1672
        %v1674 = vlaneseq
        %v1675 = vshrl.u32 %v1674, 7
        %v1676 = vsub.s32 %v1673, %v1675
        %v1677 = vrot.slane %v1649, %v1676
        %v1678 = vcombine.low %v1656, %v1670
        %v1679 = vcombine.low %v1663, %v1677
        %v1708 = vunpack.c.l.b16 %v604
        %v1709 = vunpack.c.l.b16 %v605
        %v1710 = vunpack.c.l.b16 %v606
        %v1711 = vunpack.c.l.b16 %v607
        %v1712 = vunpack.c.l.b16 %v608
        %v1713 = vunpack.c.l.b16 %v609
        %v1714 = vunpack.c.l.b16 %v610
        %v1715 = vunpack.c.l.b16 %v611
        %v1716 = vunpack.c.l.b16 %v612
        %v1717 = vunpack.c.l.b16 %v613
        %v1718 = vunpack.c.l.b16 %v614
        %v1719 = vunpack.c.l.b16 %v615
        %v1720 = vunpack.c.l.b16 %v616
        %v1721 = vunpack.c.l.b16 %v617
        %v1722 = vunpack.c.l.b16 %v618
        %v1723 = vunpack.c.l.b16 %v619
        %v1724 = vunpack.c.l.b16 %v620
        %v1725 = vunpack.c.l.b16 %v621
        %v1726 = vunpack.c.l.b16 %v622
        %v1727 = vunpack.c.l.b16 %v623
        %v1728 = vunpack.c.l.b16 %v624
        %v1729 = vunpack.c.l.b16 %v625
        %v1730 = vunpack.c.l.b16 %v626
        %v1731 = vunpack.c.l.b16 %v627
        %v1732 = vpack.c.b16 %v1709, %v1708
        %v1733 = vpack.c.b16 %v1711, %v1710
        %v1734 = vpack.c.b16 %v1713, %v1712
        %v1735 = vpack.c.b16 %v1715, %v1714
        %v1736 = vpack.c.b16 %v1717, %v1716
        %v1737 = vpack.c.b16 %v1719, %v1718
        %v1738 = vpack.c.b16 %v1721, %v1720
        %v1739 = vpack.c.b16 %v1723, %v1722
        %v1740 = vpack.c.b16 %v1725, %v1724
        %v1741 = vpack.c.b16 %v1727, %v1726
        %v1742 = vpack.c.b16 %v1729, %v1728
        %v1743 = vpack.c.b16 %v1731, %v1730
        %v1757 = vsel %vm345, %v1490, 0
        %v1760 = vsel %vm345, %v1556, 0
        %v1763 = vsel %vm345, %v1622, 0
        %v1766 = vsel %vm345, %v1679, 0
        %1768 = vmatprep.subr.bf16.mxu0 0
        %1769 = vmatpush1.bf16.msra.mxu0 %v1732
        %1770 = vmatprep.subr.bf16.mxu0 0
        %1771 = vmatpush1.bf16.msra.mxu0 %v1733
        %1772 = vmatprep.subr.bf16.mxu0 0
        %1773 = vmatpush1.bf16.msra.mxu0 %v1734
        %1774 = vmatprep.subr.bf16.mxu0 0
        %1775 = vmatpush1.bf16.msra.mxu0 %v1735
        %1776 = vmatprep.subr.bf16.mxu0 0
        %1777 = vmatpush1.bf16.msra.mxu0 %v1736
        %1778 = vmatprep.subr.bf16.mxu0 0
        %1779 = vmatpush1.bf16.msra.mxu0 %v1737
        %1780 = vmatprep.subr.bf16.mxu0 0
        %1781 = vmatpush1.bf16.msra.mxu0 %v1738
        %1782 = vmatprep.subr.bf16.mxu0 0
        %1783 = vmatpush1.bf16.msra.mxu0 %v1739
        %1784 = vmatprep.subr.bf16.mxu0 0
        %1785 = vmatpush1.bf16.msra.mxu0 %v1740
        %1786 = vmatprep.subr.bf16.mxu0 0
        %1787 = vmatpush1.bf16.msra.mxu0 %v1741
        %1788 = vmatprep.subr.bf16.mxu0 0
        %1789 = vmatpush1.bf16.msra.mxu0 %v1742
        %1790 = vmatprep.subr.bf16.mxu0 0
        %1791 = vmatpush1.bf16.msra.mxu0 %v1743
        %1792 = vmatprep.subr.bf16.mxu0 0
        %1793 = vmatpush1.bf16.msra.mxu0 0
        %1794 = vmatprep.subr.bf16.mxu0 0
        %1795 = vmatpush1.bf16.msra.mxu0 0
        %1796 = vmatprep.subr.bf16.mxu0 0
        %1797 = vmatpush1.bf16.msra.mxu0 0
        %1798 = vmatprep.subr.bf16.mxu0 0
        %1799 = vmatpush1.bf16.msra.mxu0 0
        %1800 = vmatprep.mubr.bf16.mxu0 %v1757
        %1801 = vmatmul.mubr.bf16.gmra.mrb[0].mxu0 %v1489
        %v1802 = vpop.f32.mrb[0].mxu0
        %v1803 = vadd.f32 %v1395, %v1802
        %v1804 = vpop.f32.mrb[0].mxu0
        %v1805 = vpop.f32.mrb[0].mxu0
        %v1806 = vadd.f32 %v1398, %v1805
        %v1807 = vpop.f32.mrb[0].mxu0
        %1808 = vmatprep.mubr.bf16.mxu0 %v1760
        %1809 = vmatmul.mubr.bf16.gmra.mrb[0].mxu0 %v1555
        %v1810 = vpop.f32.mrb[0].mxu0
        %v1811 = vadd.f32 %v1403, %v1810
        %v1812 = vpop.f32.mrb[0].mxu0
        %v1813 = vpop.f32.mrb[0].mxu0
        %v1814 = vadd.f32 %v1406, %v1813
        %v1815 = vpop.f32.mrb[0].mxu0
        %1816 = vmatprep.mubr.bf16.mxu0 %v1763
        %1817 = vmatmul.mubr.bf16.gmra.mrb[0].mxu0 %v1621
        %v1818 = vpop.f32.mrb[0].mxu0
        %v1819 = vadd.f32 %v1411, %v1818
        %v1820 = vpop.f32.mrb[0].mxu0
        %v1821 = vpop.f32.mrb[0].mxu0
        %v1822 = vadd.f32 %v1414, %v1821
        %v1823 = vpop.f32.mrb[0].mxu0
        %1824 = vmatprep.mubr.bf16.mxu0 %v1766
        %1825 = vmatmul.mubr.bf16.gmra.mrb[0].mxu0 %v1678
        %v1826 = vpop.f32.mrb[0].mxu0
        %v1827 = vadd.f32 %v1419, %v1826
        %v1828 = vpop.f32.mrb[0].mxu0
        %v1829 = vpop.f32.mrb[0].mxu0
        %v1830 = vadd.f32 %v1422, %v1829
        %v1831 = vpop.f32.mrb[0].mxu0
        %1832 = vdwg.mxu0
        %s1833 = sadd.s32 %s239, 2
        %s1834 = smul.u32 %s1833, 2
        %s1835 = smul.addr %s1834, 4
        %s1836 = scalar_lea.vmem %s236, %s1835
        %v1837 = vld [vmem:[%s1836] sm:$0xf]
        %v1838 = vld [vmem:[%s1836 + $0x4] sm:$0x3]
        %v1839 = vld [vmem:[%s1836 + $0x8] sm:$0xf]
        %v1840 = vld [vmem:[%s1836 + $0xc] sm:$0x3]
        %v1841 = vld [vmem:[%s1836 + $0x10] sm:$0xf]
        %v1842 = vld [vmem:[%s1836 + $0x14] sm:$0x3]
        %v1843 = vld [vmem:[%s1836 + $0x18] sm:$0xf]
        %v1844 = vld [vmem:[%s1836 + $0x1c] sm:$0x3]
        %v1845 = vld [vmem:[%s1836 + $0x20] sm:$0xf]
        %v1846 = vld [vmem:[%s1836 + $0x24] sm:$0x3]
        %v1847 = vld [vmem:[%s1836 + $0x28] sm:$0xf]
        %v1848 = vld [vmem:[%s1836 + $0x2c] sm:$0x3]
        %v1861 = vunpack.c.l.b16 %v1837
        %v1862 = vunpack.c.l.b16 %v1838
        %v1863 = vunpack.c.l.b16 %v1839
        %v1864 = vunpack.c.l.b16 %v1840
        %v1865 = vunpack.c.l.b16 %v1841
        %v1866 = vunpack.c.l.b16 %v1842
        %v1867 = vunpack.c.l.b16 %v1843
        %v1868 = vunpack.c.l.b16 %v1844
        %v1869 = vunpack.c.l.b16 %v1845
        %v1870 = vunpack.c.l.b16 %v1846
        %v1871 = vunpack.c.l.b16 %v1847
        %v1872 = vunpack.c.l.b16 %v1848
        %v1873 = vpack.c.b16 %v1862, %v1861
        %v1874 = vpack.c.b16 %v1864, %v1863
        %v1875 = vpack.c.b16 %v1866, %v1865
        %v1876 = vpack.c.b16 %v1868, %v1867
        %v1877 = vpack.c.b16 %v1870, %v1869
        %v1878 = vpack.c.b16 %v1872, %v1871
        %v1880 = vshrl.u32 %v1873, 16
        %v1882 = vshll.u32 %v1873, 16
        %v1884 = vrot.slane %v1882, 1
        %v1885 = vor.u32 %v1880, %v1884
        %v1887 = vshrl.u32 %v1874, 16
        %v1889 = vshll.u32 %v1874, 16
        %v1891 = vrot.slane %v1889, 1
        %v1892 = vor.u32 %v1887, %v1891
        %v1894 = vshrl.u32 %v1875, 16
        %v1896 = vshll.u32 %v1875, 16
        %v1898 = vrot.slane %v1896, 1
        %v1899 = vor.u32 %v1894, %v1898
        %v1901 = vshrl.u32 %v1876, 16
        %v1903 = vshll.u32 %v1876, 16
        %v1905 = vrot.slane %v1903, 1
        %v1906 = vor.u32 %v1901, %v1905
        %v1908 = vshrl.u32 %v1877, 16
        %v1910 = vshll.u32 %v1877, 16
        %v1912 = vrot.slane %v1910, 1
        %v1913 = vor.u32 %v1908, %v1912
        %v1915 = vshrl.u32 %v1878, 16
        %v1917 = vshll.u32 %v1878, 16
        %v1919 = vrot.slane %v1917, 1
        %v1920 = vor.u32 %v1915, %v1919
        %1921 = vrot.lane.b32.xlu0 %v1885, 64
        %v1922 = vpop.permute.xlu0 %1921
        %1923 = vrot.lane.b32.xlu0 %v1892, 64
        %v1924 = vpop.permute.xlu0 %1923
        %1925 = vrot.lane.b32.xlu0 %v1899, 64
        %v1926 = vpop.permute.xlu0 %1925
        %1927 = vrot.lane.b32.xlu0 %v1906, 64
        %v1928 = vpop.permute.xlu0 %1927
        %1929 = vrot.lane.b32.xlu0 %v1913, 64
        %v1930 = vpop.permute.xlu0 %1929
        %1931 = vrot.lane.b32.xlu0 %v1920, 64
        %v1932 = vpop.permute.xlu0 %1931
        %v1933 = vrot.slane %v1873, 1
        %v1934 = vrot.slane %v1874, 1
        %v1935 = vrot.slane %v1875, 1
        %v1936 = vrot.slane %v1876, 1
        %v1937 = vrot.slane %v1877, 1
        %v1938 = vrot.slane %v1878, 1
        %v1940 = vsel %vm345, %v1873, %v1922
        %v1942 = vsel %vm345, %v1874, %v1924
        %v1944 = vsel %vm345, %v1875, %v1926
        %v1946 = vsel %vm345, %v1876, %v1928
        %v1948 = vsel %vm345, %v1877, %v1930
        %v1950 = vsel %vm345, %v1878, %v1932
        %v1957 = vcombine.low %v1940, %v1933
        %v1958 = vcombine.high %v1940, %v1933
        %v1960 = vunpack.c.l.s4 1966171168
        %v1961 = vunpack.c.0.s8 %v1960
        %v1962 = vlaneseq
        %v1963 = vshrl.u32 %v1962, 7
        %v1964 = vsub.s32 %v1961, %v1963
        %v1965 = vrot.slane %v1957, %v1964
        %v1967 = vunpack.c.l.s4 1966171168
        %v1968 = vunpack.c.0.s8 %v1967
        %v1969 = vlaneseq
        %v1970 = vshrl.u32 %v1969, 7
        %v1971 = vsub.s32 %v1968, %v1970
        %v1972 = vrot.slane %v1958, %v1971
        %v1973 = vcombine.high %v1965, %v1965
        %v1975 = vunpack.c.l.s4 1966171168
        %v1976 = vunpack.c.0.s8 %v1975
        %v1977 = vlaneseq
        %v1978 = vshrl.u32 %v1977, 7
        %v1979 = vsub.s32 %v1976, %v1978
        %v1980 = vrot.slane %v1965, %v1979
        %v1982 = vunpack.c.l.s4 1966171168
        %v1983 = vunpack.c.0.s8 %v1982
        %v1984 = vlaneseq
        %v1985 = vshrl.u32 %v1984, 7
        %v1986 = vsub.s32 %v1983, %v1985
        %v1987 = vrot.slane %v1972, %v1986
        %v1989 = vunpack.c.l.s4 1966171168
        %v1990 = vunpack.c.0.s8 %v1989
        %v1991 = vlaneseq
        %v1992 = vshrl.u32 %v1991, 7
        %v1993 = vsub.s32 %v1990, %v1992
        %v1994 = vrot.slane %v1973, %v1993
        %v1995 = vcombine.high %v1980, %v1980
        %v1996 = vcombine.high %v1994, %v1994
        %v1997 = vcombine.low %v1942, %v1934
        %v1998 = vcombine.high %v1942, %v1934
        %v2000 = vunpack.c.l.s4 1966171168
        %v2001 = vunpack.c.0.s8 %v2000
        %v2002 = vlaneseq
        %v2003 = vshrl.u32 %v2002, 7
        %v2004 = vsub.s32 %v2001, %v2003
        %v2005 = vrot.slane %v1997, %v2004
        %v2007 = vunpack.c.l.s4 1966171168
        %v2008 = vunpack.c.0.s8 %v2007
        %v2009 = vlaneseq
        %v2010 = vshrl.u32 %v2009, 7
        %v2011 = vsub.s32 %v2008, %v2010
        %v2012 = vrot.slane %v1998, %v2011
        %v2013 = vcombine.high %v2005, %v2005
        %v2015 = vunpack.c.l.s4 1966171168
        %v2016 = vunpack.c.0.s8 %v2015
        %v2017 = vlaneseq
        %v2018 = vshrl.u32 %v2017, 7
        %v2019 = vsub.s32 %v2016, %v2018
        %v2020 = vrot.slane %v2005, %v2019
        %v2022 = vunpack.c.l.s4 1966171168
        %v2023 = vunpack.c.0.s8 %v2022
        %v2024 = vlaneseq
        %v2025 = vshrl.u32 %v2024, 7
        %v2026 = vsub.s32 %v2023, %v2025
        %v2027 = vrot.slane %v2012, %v2026
        %v2029 = vunpack.c.l.s4 1966171168
        %v2030 = vunpack.c.0.s8 %v2029
        %v2031 = vlaneseq
        %v2032 = vshrl.u32 %v2031, 7
        %v2033 = vsub.s32 %v2030, %v2032
        %v2034 = vrot.slane %v2013, %v2033
        %v2035 = vcombine.high %v2020, %v2020
        %v2036 = vcombine.high %v2034, %v2034
        %v2037 = vcombine.low %v1944, %v1935
        %v2038 = vcombine.high %v1944, %v1935
        %v2040 = vunpack.c.l.s4 1966171168
        %v2041 = vunpack.c.0.s8 %v2040
        %v2042 = vlaneseq
        %v2043 = vshrl.u32 %v2042, 7
        %v2044 = vsub.s32 %v2041, %v2043
        %v2045 = vrot.slane %v2037, %v2044
        %v2047 = vunpack.c.l.s4 1966171168
        %v2048 = vunpack.c.0.s8 %v2047
        %v2049 = vlaneseq
        %v2050 = vshrl.u32 %v2049, 7
        %v2051 = vsub.s32 %v2048, %v2050
        %v2052 = vrot.slane %v2038, %v2051
        %v2053 = vcombine.high %v2045, %v2045
        %v2055 = vunpack.c.l.s4 1966171168
        %v2056 = vunpack.c.0.s8 %v2055
        %v2057 = vlaneseq
        %v2058 = vshrl.u32 %v2057, 7
        %v2059 = vsub.s32 %v2056, %v2058
        %v2060 = vrot.slane %v2045, %v2059
        %v2062 = vunpack.c.l.s4 1966171168
        %v2063 = vunpack.c.0.s8 %v2062
        %v2064 = vlaneseq
        %v2065 = vshrl.u32 %v2064, 7
        %v2066 = vsub.s32 %v2063, %v2065
        %v2067 = vrot.slane %v2052, %v2066
        %v2069 = vunpack.c.l.s4 1966171168
        %v2070 = vunpack.c.0.s8 %v2069
        %v2071 = vlaneseq
        %v2072 = vshrl.u32 %v2071, 7
        %v2073 = vsub.s32 %v2070, %v2072
        %v2074 = vrot.slane %v2053, %v2073
        %v2075 = vcombine.high %v2060, %v2060
        %v2076 = vcombine.high %v2074, %v2074
        %v2077 = vcombine.low %v1946, %v1936
        %v2078 = vcombine.high %v1946, %v1936
        %v2080 = vunpack.c.l.s4 1966171168
        %v2081 = vunpack.c.0.s8 %v2080
        %v2082 = vlaneseq
        %v2083 = vshrl.u32 %v2082, 7
        %v2084 = vsub.s32 %v2081, %v2083
        %v2085 = vrot.slane %v2077, %v2084
        %v2087 = vunpack.c.l.s4 1966171168
        %v2088 = vunpack.c.0.s8 %v2087
        %v2089 = vlaneseq
        %v2090 = vshrl.u32 %v2089, 7
        %v2091 = vsub.s32 %v2088, %v2090
        %v2092 = vrot.slane %v2078, %v2091
        %v2093 = vcombine.high %v2085, %v2085
        %v2095 = vunpack.c.l.s4 1966171168
        %v2096 = vunpack.c.0.s8 %v2095
        %v2097 = vlaneseq
        %v2098 = vshrl.u32 %v2097, 7
        %v2099 = vsub.s32 %v2096, %v2098
        %v2100 = vrot.slane %v2085, %v2099
        %v2102 = vunpack.c.l.s4 1966171168
        %v2103 = vunpack.c.0.s8 %v2102
        %v2104 = vlaneseq
        %v2105 = vshrl.u32 %v2104, 7
        %v2106 = vsub.s32 %v2103, %v2105
        %v2107 = vrot.slane %v2092, %v2106
        %v2109 = vunpack.c.l.s4 1966171168
        %v2110 = vunpack.c.0.s8 %v2109
        %v2111 = vlaneseq
        %v2112 = vshrl.u32 %v2111, 7
        %v2113 = vsub.s32 %v2110, %v2112
        %v2114 = vrot.slane %v2093, %v2113
        %v2115 = vcombine.high %v2100, %v2100
        %v2116 = vcombine.high %v2114, %v2114
        %v2117 = vcombine.low %v1948, %v1937
        %v2118 = vcombine.high %v1948, %v1937
        %v2120 = vunpack.c.l.s4 1966171168
        %v2121 = vunpack.c.0.s8 %v2120
        %v2122 = vlaneseq
        %v2123 = vshrl.u32 %v2122, 7
        %v2124 = vsub.s32 %v2121, %v2123
        %v2125 = vrot.slane %v2117, %v2124
        %v2127 = vunpack.c.l.s4 1966171168
        %v2128 = vunpack.c.0.s8 %v2127
        %v2129 = vlaneseq
        %v2130 = vshrl.u32 %v2129, 7
        %v2131 = vsub.s32 %v2128, %v2130
        %v2132 = vrot.slane %v2118, %v2131
        %v2133 = vcombine.high %v2125, %v2125
        %v2135 = vunpack.c.l.s4 1966171168
        %v2136 = vunpack.c.0.s8 %v2135
        %v2137 = vlaneseq
        %v2138 = vshrl.u32 %v2137, 7
        %v2139 = vsub.s32 %v2136, %v2138
        %v2140 = vrot.slane %v2125, %v2139
        %v2142 = vunpack.c.l.s4 1966171168
        %v2143 = vunpack.c.0.s8 %v2142
        %v2144 = vlaneseq
        %v2145 = vshrl.u32 %v2144, 7
        %v2146 = vsub.s32 %v2143, %v2145
        %v2147 = vrot.slane %v2132, %v2146
        %v2149 = vunpack.c.l.s4 1966171168
        %v2150 = vunpack.c.0.s8 %v2149
        %v2151 = vlaneseq
        %v2152 = vshrl.u32 %v2151, 7
        %v2153 = vsub.s32 %v2150, %v2152
        %v2154 = vrot.slane %v2133, %v2153
        %v2155 = vcombine.high %v2140, %v2140
        %v2156 = vcombine.high %v2154, %v2154
        %v2157 = vcombine.low %v1950, %v1938
        %v2158 = vcombine.high %v1950, %v1938
        %v2160 = vunpack.c.l.s4 1966171168
        %v2161 = vunpack.c.0.s8 %v2160
        %v2162 = vlaneseq
        %v2163 = vshrl.u32 %v2162, 7
        %v2164 = vsub.s32 %v2161, %v2163
        %v2165 = vrot.slane %v2157, %v2164
        %v2167 = vunpack.c.l.s4 1966171168
        %v2168 = vunpack.c.0.s8 %v2167
        %v2169 = vlaneseq
        %v2170 = vshrl.u32 %v2169, 7
        %v2171 = vsub.s32 %v2168, %v2170
        %v2172 = vrot.slane %v2158, %v2171
        %v2173 = vcombine.high %v2165, %v2165
        %v2175 = vunpack.c.l.s4 1966171168
        %v2176 = vunpack.c.0.s8 %v2175
        %v2177 = vlaneseq
        %v2178 = vshrl.u32 %v2177, 7
        %v2179 = vsub.s32 %v2176, %v2178
        %v2180 = vrot.slane %v2165, %v2179
        %v2182 = vunpack.c.l.s4 1966171168
        %v2183 = vunpack.c.0.s8 %v2182
        %v2184 = vlaneseq
        %v2185 = vshrl.u32 %v2184, 7
        %v2186 = vsub.s32 %v2183, %v2185
        %v2187 = vrot.slane %v2172, %v2186
        %v2189 = vunpack.c.l.s4 1966171168
        %v2190 = vunpack.c.0.s8 %v2189
        %v2191 = vlaneseq
        %v2192 = vshrl.u32 %v2191, 7
        %v2193 = vsub.s32 %v2190, %v2192
        %v2194 = vrot.slane %v2173, %v2193
        %v2195 = vcombine.high %v2180, %v2180
        %v2196 = vcombine.high %v2194, %v2194
        %s2197 = scalar_lea.vmem %s1, 192
        %v2198 = vld [vmem:[%s2197] sm:$0xf]
        %v2199 = vld [vmem:[%s2197 + $0x4] sm:$0xf]
        %v2200 = vld [vmem:[%s2197 + $0x8] sm:$0xf]
        %v2201 = vld [vmem:[%s2197 + $0xc] sm:$0xf]
        %v2202 = vld [vmem:[%s2197 + $0x10] sm:$0xf]
        %v2203 = vld [vmem:[%s2197 + $0x14] sm:$0xf]
        %v2204 = vld [vmem:[%s2197 + $0x18] sm:$0xf]
        %v2205 = vld [vmem:[%s2197 + $0x1c] sm:$0xf]
        %v2206 = vld [vmem:[%s2197 + $0x20] sm:$0xf]
        %v2207 = vld [vmem:[%s2197 + $0x24] sm:$0xf]
        %v2208 = vld [vmem:[%s2197 + $0x28] sm:$0xf]
        %v2209 = vld [vmem:[%s2197 + $0x2c] sm:$0xf]
        %v2210 = vld [vmem:[%s2197 + $0x30] sm:$0xf]
        %v2211 = vld [vmem:[%s2197 + $0x34] sm:$0xf]
        %v2212 = vld [vmem:[%s2197 + $0x38] sm:$0xf]
        %v2213 = vld [vmem:[%s2197 + $0x3c] sm:$0xf]
        %v2214 = vld [vmem:[%s2197 + $0x40] sm:$0xf]
        %v2215 = vld [vmem:[%s2197 + $0x44] sm:$0xf]
        %v2216 = vld [vmem:[%s2197 + $0x48] sm:$0xf]
        %v2217 = vld [vmem:[%s2197 + $0x4c] sm:$0xf]
        %v2218 = vld [vmem:[%s2197 + $0x50] sm:$0xf]
        %v2219 = vld [vmem:[%s2197 + $0x54] sm:$0xf]
        %v2220 = vld [vmem:[%s2197 + $0x58] sm:$0xf]
        %v2221 = vld [vmem:[%s2197 + $0x5c] sm:$0xf]
        %v2222 = vcombine.low %v1980, %v1994
        %v2223 = vcombine.low %v1995, %v1996
        %v2224 = vcombine.low %v1987, %v2020
        %v2225 = vcombine.low %v2034, %v2035
        %v2227 = vunpack.c.l.s4 1966171168
        %v2228 = vunpack.c.0.s8 %v2227
        %v2229 = vlaneseq
        %v2230 = vshrl.u32 %v2229, 7
        %v2231 = vsub.s32 %v2228, %v2230
        %v2232 = vrot.slane %v2222, %v2231
        %v2234 = vunpack.c.l.s4 1966171168
        %v2235 = vunpack.c.0.s8 %v2234
        %v2236 = vlaneseq
        %v2237 = vshrl.u32 %v2236, 7
        %v2238 = vsub.s32 %v2235, %v2237
        %v2239 = vrot.slane %v2223, %v2238
        %v2241 = vunpack.c.l.s4 1966171168
        %v2242 = vunpack.c.0.s8 %v2241
        %v2243 = vlaneseq
        %v2244 = vshrl.u32 %v2243, 7
        %v2245 = vsub.s32 %v2242, %v2244
        %v2246 = vrot.slane %v2224, %v2245
        %v2248 = vunpack.c.l.s4 1966171168
        %v2249 = vunpack.c.0.s8 %v2248
        %v2250 = vlaneseq
        %v2251 = vshrl.u32 %v2250, 7
        %v2252 = vsub.s32 %v2249, %v2251
        %v2253 = vrot.slane %v2225, %v2252
        %v2254 = vcombine.low %v2232, %v2239
        %v2255 = vcombine.high %v2232, %v2239
        %v2256 = vcombine.low %v2246, %v2253
        %v2257 = vcombine.high %v2246, %v2253
        %v2259 = vunpack.c.l.s4 1966171168
        %v2260 = vunpack.c.0.s8 %v2259
        %v2261 = vlaneseq
        %v2262 = vshrl.u32 %v2261, 7
        %v2263 = vsub.s32 %v2260, %v2262
        %v2264 = vrot.slane %v2254, %v2263
        %v2266 = vunpack.c.l.s4 1966171168
        %v2267 = vunpack.c.0.s8 %v2266
        %v2268 = vlaneseq
        %v2269 = vshrl.u32 %v2268, 7
        %v2270 = vsub.s32 %v2267, %v2269
        %v2271 = vrot.slane %v2255, %v2270
        %v2273 = vunpack.c.l.s4 1966171168
        %v2274 = vunpack.c.0.s8 %v2273
        %v2275 = vlaneseq
        %v2276 = vshrl.u32 %v2275, 7
        %v2277 = vsub.s32 %v2274, %v2276
        %v2278 = vrot.slane %v2256, %v2277
        %v2280 = vunpack.c.l.s4 1966171168
        %v2281 = vunpack.c.0.s8 %v2280
        %v2282 = vlaneseq
        %v2283 = vshrl.u32 %v2282, 7
        %v2284 = vsub.s32 %v2281, %v2283
        %v2285 = vrot.slane %v2257, %v2284
        %v2286 = vcombine.low %v2264, %v2278
        %v2287 = vcombine.low %v2271, %v2285
        %v2288 = vcombine.low %v2036, %v2027
        %v2289 = vcombine.low %v2060, %v2074
        %v2290 = vcombine.low %v2075, %v2076
        %v2291 = vcombine.low %v2067, %v2100
        %v2293 = vunpack.c.l.s4 1966171168
        %v2294 = vunpack.c.0.s8 %v2293
        %v2295 = vlaneseq
        %v2296 = vshrl.u32 %v2295, 7
        %v2297 = vsub.s32 %v2294, %v2296
        %v2298 = vrot.slane %v2288, %v2297
        %v2300 = vunpack.c.l.s4 1966171168
        %v2301 = vunpack.c.0.s8 %v2300
        %v2302 = vlaneseq
        %v2303 = vshrl.u32 %v2302, 7
        %v2304 = vsub.s32 %v2301, %v2303
        %v2305 = vrot.slane %v2289, %v2304
        %v2307 = vunpack.c.l.s4 1966171168
        %v2308 = vunpack.c.0.s8 %v2307
        %v2309 = vlaneseq
        %v2310 = vshrl.u32 %v2309, 7
        %v2311 = vsub.s32 %v2308, %v2310
        %v2312 = vrot.slane %v2290, %v2311
        %v2314 = vunpack.c.l.s4 1966171168
        %v2315 = vunpack.c.0.s8 %v2314
        %v2316 = vlaneseq
        %v2317 = vshrl.u32 %v2316, 7
        %v2318 = vsub.s32 %v2315, %v2317
        %v2319 = vrot.slane %v2291, %v2318
        %v2320 = vcombine.low %v2298, %v2305
        %v2321 = vcombine.high %v2298, %v2305
        %v2322 = vcombine.low %v2312, %v2319
        %v2323 = vcombine.high %v2312, %v2319
        %v2325 = vunpack.c.l.s4 1966171168
        %v2326 = vunpack.c.0.s8 %v2325
        %v2327 = vlaneseq
        %v2328 = vshrl.u32 %v2327, 7
        %v2329 = vsub.s32 %v2326, %v2328
        %v2330 = vrot.slane %v2320, %v2329
        %v2332 = vunpack.c.l.s4 1966171168
        %v2333 = vunpack.c.0.s8 %v2332
        %v2334 = vlaneseq
        %v2335 = vshrl.u32 %v2334, 7
        %v2336 = vsub.s32 %v2333, %v2335
        %v2337 = vrot.slane %v2321, %v2336
        %v2339 = vunpack.c.l.s4 1966171168
        %v2340 = vunpack.c.0.s8 %v2339
        %v2341 = vlaneseq
        %v2342 = vshrl.u32 %v2341, 7
        %v2343 = vsub.s32 %v2340, %v2342
        %v2344 = vrot.slane %v2322, %v2343
        %v2346 = vunpack.c.l.s4 1966171168
        %v2347 = vunpack.c.0.s8 %v2346
        %v2348 = vlaneseq
        %v2349 = vshrl.u32 %v2348, 7
        %v2350 = vsub.s32 %v2347, %v2349
        %v2351 = vrot.slane %v2323, %v2350
        %v2352 = vcombine.low %v2330, %v2344
        %v2353 = vcombine.low %v2337, %v2351
        %v2354 = vcombine.low %v2114, %v2115
        %v2355 = vcombine.low %v2116, %v2107
        %v2356 = vcombine.low %v2140, %v2154
        %v2357 = vcombine.low %v2155, %v2156
        %v2359 = vunpack.c.l.s4 1966171168
        %v2360 = vunpack.c.0.s8 %v2359
        %v2361 = vlaneseq
        %v2362 = vshrl.u32 %v2361, 7
        %v2363 = vsub.s32 %v2360, %v2362
        %v2364 = vrot.slane %v2354, %v2363
        %v2366 = vunpack.c.l.s4 1966171168
        %v2367 = vunpack.c.0.s8 %v2366
        %v2368 = vlaneseq
        %v2369 = vshrl.u32 %v2368, 7
        %v2370 = vsub.s32 %v2367, %v2369
        %v2371 = vrot.slane %v2355, %v2370
        %v2373 = vunpack.c.l.s4 1966171168
        %v2374 = vunpack.c.0.s8 %v2373
        %v2375 = vlaneseq
        %v2376 = vshrl.u32 %v2375, 7
        %v2377 = vsub.s32 %v2374, %v2376
        %v2378 = vrot.slane %v2356, %v2377
        %v2380 = vunpack.c.l.s4 1966171168
        %v2381 = vunpack.c.0.s8 %v2380
        %v2382 = vlaneseq
        %v2383 = vshrl.u32 %v2382, 7
        %v2384 = vsub.s32 %v2381, %v2383
        %v2385 = vrot.slane %v2357, %v2384
        %v2386 = vcombine.low %v2364, %v2371
        %v2387 = vcombine.high %v2364, %v2371
        %v2388 = vcombine.low %v2378, %v2385
        %v2389 = vcombine.high %v2378, %v2385
        %v2391 = vunpack.c.l.s4 1966171168
        %v2392 = vunpack.c.0.s8 %v2391
        %v2393 = vlaneseq
        %v2394 = vshrl.u32 %v2393, 7
        %v2395 = vsub.s32 %v2392, %v2394
        %v2396 = vrot.slane %v2386, %v2395
        %v2398 = vunpack.c.l.s4 1966171168
        %v2399 = vunpack.c.0.s8 %v2398
        %v2400 = vlaneseq
        %v2401 = vshrl.u32 %v2400, 7
        %v2402 = vsub.s32 %v2399, %v2401
        %v2403 = vrot.slane %v2387, %v2402
        %v2405 = vunpack.c.l.s4 1966171168
        %v2406 = vunpack.c.0.s8 %v2405
        %v2407 = vlaneseq
        %v2408 = vshrl.u32 %v2407, 7
        %v2409 = vsub.s32 %v2406, %v2408
        %v2410 = vrot.slane %v2388, %v2409
        %v2412 = vunpack.c.l.s4 1966171168
        %v2413 = vunpack.c.0.s8 %v2412
        %v2414 = vlaneseq
        %v2415 = vshrl.u32 %v2414, 7
        %v2416 = vsub.s32 %v2413, %v2415
        %v2417 = vrot.slane %v2389, %v2416
        %v2418 = vcombine.low %v2396, %v2410
        %v2419 = vcombine.low %v2403, %v2417
        %v2420 = vcombine.low %v2147, %v2180
        %v2421 = vcombine.low %v2194, %v2195
        %v2422 = vcombine.low %v2196, %v2187
        %v2424 = vunpack.c.l.s4 1966171168
        %v2425 = vunpack.c.0.s8 %v2424
        %v2426 = vlaneseq
        %v2427 = vshrl.u32 %v2426, 7
        %v2428 = vsub.s32 %v2425, %v2427
        %v2429 = vrot.slane %v2420, %v2428
        %v2431 = vunpack.c.l.s4 1966171168
        %v2432 = vunpack.c.0.s8 %v2431
        %v2433 = vlaneseq
        %v2434 = vshrl.u32 %v2433, 7
        %v2435 = vsub.s32 %v2432, %v2434
        %v2436 = vrot.slane %v2421, %v2435
        %v2438 = vunpack.c.l.s4 1966171168
        %v2439 = vunpack.c.0.s8 %v2438
        %v2440 = vlaneseq
        %v2441 = vshrl.u32 %v2440, 7
        %v2442 = vsub.s32 %v2439, %v2441
        %v2443 = vrot.slane %v2422, %v2442
        %v2444 = vcombine.low %v2429, %v2436
        %v2445 = vcombine.high %v2429, %v2436
        %v2446 = vcombine.high %v2443, %v2443
        %v2448 = vunpack.c.l.s4 1966171168
        %v2449 = vunpack.c.0.s8 %v2448
        %v2450 = vlaneseq
        %v2451 = vshrl.u32 %v2450, 7
        %v2452 = vsub.s32 %v2449, %v2451
        %v2453 = vrot.slane %v2444, %v2452
        %v2455 = vunpack.c.l.s4 1966171168
        %v2456 = vunpack.c.0.s8 %v2455
        %v2457 = vlaneseq
        %v2458 = vshrl.u32 %v2457, 7
        %v2459 = vsub.s32 %v2456, %v2458
        %v2460 = vrot.slane %v2445, %v2459
        %v2462 = vunpack.c.l.s4 1966171168
        %v2463 = vunpack.c.0.s8 %v2462
        %v2464 = vlaneseq
        %v2465 = vshrl.u32 %v2464, 7
        %v2466 = vsub.s32 %v2463, %v2465
        %v2467 = vrot.slane %v2443, %v2466
        %v2469 = vunpack.c.l.s4 1966171168
        %v2470 = vunpack.c.0.s8 %v2469
        %v2471 = vlaneseq
        %v2472 = vshrl.u32 %v2471, 7
        %v2473 = vsub.s32 %v2470, %v2472
        %v2474 = vrot.slane %v2446, %v2473
        %v2475 = vcombine.low %v2453, %v2467
        %v2476 = vcombine.low %v2460, %v2474
        %v2505 = vunpack.c.l.b16 %v2198
        %v2506 = vunpack.c.l.b16 %v2199
        %v2507 = vunpack.c.l.b16 %v2200
        %v2508 = vunpack.c.l.b16 %v2201
        %v2509 = vunpack.c.l.b16 %v2202
        %v2510 = vunpack.c.l.b16 %v2203
        %v2511 = vunpack.c.l.b16 %v2204
        %v2512 = vunpack.c.l.b16 %v2205
        %v2513 = vunpack.c.l.b16 %v2206
        %v2514 = vunpack.c.l.b16 %v2207
        %v2515 = vunpack.c.l.b16 %v2208
        %v2516 = vunpack.c.l.b16 %v2209
        %v2517 = vunpack.c.l.b16 %v2210
        %v2518 = vunpack.c.l.b16 %v2211
        %v2519 = vunpack.c.l.b16 %v2212
        %v2520 = vunpack.c.l.b16 %v2213
        %v2521 = vunpack.c.l.b16 %v2214
        %v2522 = vunpack.c.l.b16 %v2215
        %v2523 = vunpack.c.l.b16 %v2216
        %v2524 = vunpack.c.l.b16 %v2217
        %v2525 = vunpack.c.l.b16 %v2218
        %v2526 = vunpack.c.l.b16 %v2219
        %v2527 = vunpack.c.l.b16 %v2220
        %v2528 = vunpack.c.l.b16 %v2221
        %v2529 = vpack.c.b16 %v2506, %v2505
        %v2530 = vpack.c.b16 %v2508, %v2507
        %v2531 = vpack.c.b16 %v2510, %v2509
        %v2532 = vpack.c.b16 %v2512, %v2511
        %v2533 = vpack.c.b16 %v2514, %v2513
        %v2534 = vpack.c.b16 %v2516, %v2515
        %v2535 = vpack.c.b16 %v2518, %v2517
        %v2536 = vpack.c.b16 %v2520, %v2519
        %v2537 = vpack.c.b16 %v2522, %v2521
        %v2538 = vpack.c.b16 %v2524, %v2523
        %v2539 = vpack.c.b16 %v2526, %v2525
        %v2540 = vpack.c.b16 %v2528, %v2527
        %v2554 = vsel %vm345, %v2287, 0
        %v2557 = vsel %vm345, %v2353, 0
        %v2560 = vsel %vm345, %v2419, 0
        %v2563 = vsel %vm345, %v2476, 0
        %2565 = vmatprep.subr.bf16.mxu0 0
        %2566 = vmatpush1.bf16.msra.mxu0 %v2529
        %2567 = vmatprep.subr.bf16.mxu0 0
        %2568 = vmatpush1.bf16.msra.mxu0 %v2530
        %2569 = vmatprep.subr.bf16.mxu0 0
        %2570 = vmatpush1.bf16.msra.mxu0 %v2531
        %2571 = vmatprep.subr.bf16.mxu0 0
        %2572 = vmatpush1.bf16.msra.mxu0 %v2532
        %2573 = vmatprep.subr.bf16.mxu0 0
        %2574 = vmatpush1.bf16.msra.mxu0 %v2533
        %2575 = vmatprep.subr.bf16.mxu0 0
        %2576 = vmatpush1.bf16.msra.mxu0 %v2534
        %2577 = vmatprep.subr.bf16.mxu0 0
        %2578 = vmatpush1.bf16.msra.mxu0 %v2535
        %2579 = vmatprep.subr.bf16.mxu0 0
        %2580 = vmatpush1.bf16.msra.mxu0 %v2536
        %2581 = vmatprep.subr.bf16.mxu0 0
        %2582 = vmatpush1.bf16.msra.mxu0 %v2537
        %2583 = vmatprep.subr.bf16.mxu0 0
        %2584 = vmatpush1.bf16.msra.mxu0 %v2538
        %2585 = vmatprep.subr.bf16.mxu0 0
        %2586 = vmatpush1.bf16.msra.mxu0 %v2539
        %2587 = vmatprep.subr.bf16.mxu0 0
        %2588 = vmatpush1.bf16.msra.mxu0 %v2540
        %2589 = vmatprep.subr.bf16.mxu0 0
        %2590 = vmatpush1.bf16.msra.mxu0 0
        %2591 = vmatprep.subr.bf16.mxu0 0
        %2592 = vmatpush1.bf16.msra.mxu0 0
        %2593 = vmatprep.subr.bf16.mxu0 0
        %2594 = vmatpush1.bf16.msra.mxu0 0
        %2595 = vmatprep.subr.bf16.mxu0 0
        %2596 = vmatpush1.bf16.msra.mxu0 0
        %2597 = vmatprep.mubr.bf16.mxu0 %v2554
        %2598 = vmatmul.mubr.bf16.gmra.mrb[0].mxu0 %v2286
        %v2599 = vpop.f32.mrb[0].mxu0
        %v2600 = vadd.f32 0.0, %v2599
        %v2601 = vpop.f32.mrb[0].mxu0
        %v2602 = vpop.f32.mrb[0].mxu0
        %v2603 = vadd.f32 0.0, %v2602
        %v2604 = vpop.f32.mrb[0].mxu0
        %2605 = vmatprep.mubr.bf16.mxu0 %v2557
        %2606 = vmatmul.mubr.bf16.gmra.mrb[0].mxu0 %v2352
        %v2607 = vpop.f32.mrb[0].mxu0
        %v2608 = vadd.f32 0.0, %v2607
        %v2609 = vpop.f32.mrb[0].mxu0
        %v2610 = vpop.f32.mrb[0].mxu0
        %v2611 = vadd.f32 0.0, %v2610
        %v2612 = vpop.f32.mrb[0].mxu0
        %2613 = vmatprep.mubr.bf16.mxu0 %v2560
        %2614 = vmatmul.mubr.bf16.gmra.mrb[0].mxu0 %v2418
        %v2615 = vpop.f32.mrb[0].mxu0
        %v2616 = vadd.f32 0.0, %v2615
        %v2617 = vpop.f32.mrb[0].mxu0
        %v2618 = vpop.f32.mrb[0].mxu0
        %v2619 = vadd.f32 0.0, %v2618
        %v2620 = vpop.f32.mrb[0].mxu0
        %2621 = vmatprep.mubr.bf16.mxu0 %v2563
        %2622 = vmatmul.mubr.bf16.gmra.mrb[0].mxu0 %v2475
        %v2623 = vpop.f32.mrb[0].mxu0
        %v2624 = vadd.f32 0.0, %v2623
        %v2625 = vpop.f32.mrb[0].mxu0
        %v2626 = vpop.f32.mrb[0].mxu0
        %v2627 = vadd.f32 0.0, %v2626
        %v2628 = vpop.f32.mrb[0].mxu0
        %2629 = vdwg.mxu0
        %v2630 = vadd.f32 %v1803, %v2600
        %v2631 = vadd.f32 %v1806, %v2603
        %v2632 = vadd.f32 %v1811, %v2608
        %v2633 = vadd.f32 %v1814, %v2611
        %v2634 = vadd.f32 %v1819, %v2616
        %v2635 = vadd.f32 %v1822, %v2619
        %v2636 = vadd.f32 %v1827, %v2624
        %v2637 = vadd.f32 %v1830, %v2627
        %v2638 = vld [vmem:[%s2] sm:$0x1]
        %v2640 = vlaneseq
        %v2641 = vshrl.u32 %v2640, 7
        %v2642 = vsub.s32 0, %v2641
        %v2643 = vrot.slane %v2638, %v2642
        %v2645 = vadd.f32 %v2630, %v2643
        %v2646 = vadd.f32 %v2631, %v2643
        %v2647 = vadd.f32 %v2632, %v2643
        %v2648 = vadd.f32 %v2633, %v2643
        %v2649 = vadd.f32 %v2634, %v2643
        %v2650 = vadd.f32 %v2635, %v2643
        %v2651 = vadd.f32 %v2636, %v2643
        %v2652 = vadd.f32 %v2637, %v2643
        %v2653 = vmax.f32 %v2645, 0.0
        %v2654 = vmax.f32 %v2646, 0.0
        %v2655 = vmax.f32 %v2647, 0.0
        %v2656 = vmax.f32 %v2648, 0.0
        %v2657 = vmax.f32 %v2649, 0.0
        %v2658 = vmax.f32 %v2650, 0.0
        %v2659 = vmax.f32 %v2651, 0.0
        %v2660 = vmax.f32 %v2652, 0.0
        %v2669 = vcombine.high %v2653, %v2653
        %v2671 = vunpack.c.l.s4 1983009808
        %v2672 = vunpack.c.0.s8 %v2671
        %v2673 = vlaneseq
        %v2674 = vshrl.u32 %v2673, 7
        %v2675 = vsub.s32 %v2672, %v2674
        %v2676 = vrot.slane %v2653, %v2675
        %v2678 = vunpack.c.l.s4 1983009808
        %v2679 = vunpack.c.0.s8 %v2678
        %v2680 = vlaneseq
        %v2681 = vshrl.u32 %v2680, 7
        %v2682 = vsub.s32 %v2679, %v2681
        %v2683 = vrot.slane %v2669, %v2682
        %v2684 = vcombine.high %v2676, %v2676
        %v2685 = vcombine.high %v2683, %v2683
        %v2686 = vcombine.high %v2654, %v2654
        %v2688 = vunpack.c.l.s4 1983009808
        %v2689 = vunpack.c.0.s8 %v2688
        %v2690 = vlaneseq
        %v2691 = vshrl.u32 %v2690, 7
        %v2692 = vsub.s32 %v2689, %v2691
        %v2693 = vrot.slane %v2654, %v2692
        %v2695 = vunpack.c.l.s4 1983009808
        %v2696 = vunpack.c.0.s8 %v2695
        %v2697 = vlaneseq
        %v2698 = vshrl.u32 %v2697, 7
        %v2699 = vsub.s32 %v2696, %v2698
        %v2700 = vrot.slane %v2686, %v2699
        %v2701 = vcombine.high %v2693, %v2693
        %v2702 = vcombine.high %v2700, %v2700
        %v2703 = vcombine.high %v2655, %v2655
        %v2705 = vunpack.c.l.s4 1983009808
        %v2706 = vunpack.c.0.s8 %v2705
        %v2707 = vlaneseq
        %v2708 = vshrl.u32 %v2707, 7
        %v2709 = vsub.s32 %v2706, %v2708
        %v2710 = vrot.slane %v2655, %v2709
        %v2712 = vunpack.c.l.s4 1983009808
        %v2713 = vunpack.c.0.s8 %v2712
        %v2714 = vlaneseq
        %v2715 = vshrl.u32 %v2714, 7
        %v2716 = vsub.s32 %v2713, %v2715
        %v2717 = vrot.slane %v2703, %v2716
        %v2718 = vcombine.high %v2710, %v2710
        %v2719 = vcombine.high %v2717, %v2717
        %v2720 = vcombine.high %v2656, %v2656
        %v2722 = vunpack.c.l.s4 1983009808
        %v2723 = vunpack.c.0.s8 %v2722
        %v2724 = vlaneseq
        %v2725 = vshrl.u32 %v2724, 7
        %v2726 = vsub.s32 %v2723, %v2725
        %v2727 = vrot.slane %v2656, %v2726
        %v2729 = vunpack.c.l.s4 1983009808
        %v2730 = vunpack.c.0.s8 %v2729
        %v2731 = vlaneseq
        %v2732 = vshrl.u32 %v2731, 7
        %v2733 = vsub.s32 %v2730, %v2732
        %v2734 = vrot.slane %v2720, %v2733
        %v2735 = vcombine.high %v2727, %v2727
        %v2736 = vcombine.high %v2734, %v2734
        %v2737 = vcombine.high %v2657, %v2657
        %v2739 = vunpack.c.l.s4 1983009808
        %v2740 = vunpack.c.0.s8 %v2739
        %v2741 = vlaneseq
        %v2742 = vshrl.u32 %v2741, 7
        %v2743 = vsub.s32 %v2740, %v2742
        %v2744 = vrot.slane %v2657, %v2743
        %v2746 = vunpack.c.l.s4 1983009808
        %v2747 = vunpack.c.0.s8 %v2746
        %v2748 = vlaneseq
        %v2749 = vshrl.u32 %v2748, 7
        %v2750 = vsub.s32 %v2747, %v2749
        %v2751 = vrot.slane %v2737, %v2750
        %v2752 = vcombine.high %v2744, %v2744
        %v2753 = vcombine.high %v2751, %v2751
        %v2754 = vcombine.high %v2658, %v2658
        %v2756 = vunpack.c.l.s4 1983009808
        %v2757 = vunpack.c.0.s8 %v2756
        %v2758 = vlaneseq
        %v2759 = vshrl.u32 %v2758, 7
        %v2760 = vsub.s32 %v2757, %v2759
        %v2761 = vrot.slane %v2658, %v2760
        %v2763 = vunpack.c.l.s4 1983009808
        %v2764 = vunpack.c.0.s8 %v2763
        %v2765 = vlaneseq
        %v2766 = vshrl.u32 %v2765, 7
        %v2767 = vsub.s32 %v2764, %v2766
        %v2768 = vrot.slane %v2754, %v2767
        %v2769 = vcombine.high %v2761, %v2761
        %v2770 = vcombine.high %v2768, %v2768
        %v2771 = vcombine.high %v2659, %v2659
        %v2773 = vunpack.c.l.s4 1983009808
        %v2774 = vunpack.c.0.s8 %v2773
        %v2775 = vlaneseq
        %v2776 = vshrl.u32 %v2775, 7
        %v2777 = vsub.s32 %v2774, %v2776
        %v2778 = vrot.slane %v2659, %v2777
        %v2780 = vunpack.c.l.s4 1983009808
        %v2781 = vunpack.c.0.s8 %v2780
        %v2782 = vlaneseq
        %v2783 = vshrl.u32 %v2782, 7
        %v2784 = vsub.s32 %v2781, %v2783
        %v2785 = vrot.slane %v2771, %v2784
        %v2786 = vcombine.high %v2778, %v2778
        %v2787 = vcombine.high %v2785, %v2785
        %v2789 = vunpack.c.l.s4 1983009808
        %v2790 = vunpack.c.0.s8 %v2789
        %v2791 = vlaneseq
        %v2792 = vshrl.u32 %v2791, 7
        %v2793 = vsub.s32 %v2790, %v2792
        %v2794 = vrot.slane %v2660, %v2793
        %v2795 = vcombine.high %v2794, %v2794
        %s2796 = ssub.s32 %s239, 1
        %v2797 = vstv %s2796
        %v2798 = vadd.s32 %v2797, 1
        %v2799 = vadd.s32 %v2797, 2
        %v2800 = vadd.s32 %v2797, 3
        %v2801 = vadd.s32 %v2797, 4
        %v2802 = vadd.s32 %v2797, 5
        %v2803 = vlaneseq
        %v2804 = vshrl.u32 %v2803, 7
        %v2805 = vadd.s32 %v2804, 8
        %v2806 = vadd.s32 %v2804, 4294967295
        %v2807 = vadd.s32 %v2805, 4294967295
        %vm2808 = vcmp.ge.s32.totalorder %v2797, 0
        %vm2809 = vcmp.ge.s32.totalorder %v2798, 0
        %vm2810 = vcmp.ge.s32.totalorder %v2799, 0
        %vm2811 = vcmp.ge.s32.totalorder %v2800, 0
        %vm2812 = vcmp.ge.s32.totalorder %v2801, 0
        %vm2813 = vcmp.ge.s32.totalorder %v2802, 0
        %vm2814 = vcmp.lt.s32.totalorder %v2797, 8
        %vm2815 = vcmp.lt.s32.totalorder %v2798, 8
        %vm2816 = vcmp.lt.s32.totalorder %v2799, 8
        %vm2817 = vcmp.lt.s32.totalorder %v2800, 8
        %vm2818 = vcmp.lt.s32.totalorder %v2801, 8
        %vm2819 = vcmp.lt.s32.totalorder %v2802, 8
        %vm2820 = vmand %vm2808, %vm2814
        %vm2821 = vmand %vm2809, %vm2815
        %vm2822 = vmand %vm2810, %vm2816
        %vm2823 = vmand %vm2811, %vm2817
        %vm2824 = vmand %vm2812, %vm2818
        %vm2825 = vmand %vm2813, %vm2819
        %vm2826 = vcmp.ge.s32.totalorder %v2806, 0
        %vm2827 = vcmp.ge.s32.totalorder %v2807, 0
        %vm2828 = vmand %vm2820, %vm2826
        %vm2829 = vmand %vm2820, %vm2827
        %vm2830 = vmand %vm2821, %vm2826
        %vm2831 = vmand %vm2821, %vm2827
        %vm2832 = vmand %vm2822, %vm2826
        %vm2833 = vmand %vm2822, %vm2827
        %vm2834 = vmand %vm2823, %vm2826
        %vm2835 = vmand %vm2823, %vm2827
        %vm2836 = vmand %vm2824, %vm2826
        %vm2837 = vmand %vm2824, %vm2827
        %vm2838 = vmand %vm2825, %vm2826
        %vm2839 = vmand %vm2825, %vm2827
        %vm2840 = vcmp.lt.s32.totalorder %v2806, 8
        %vm2841 = vcmp.lt.s32.totalorder %v2807, 8
        %vm2842 = vmand %vm2828, %vm2840
        %vm2843 = vmand %vm2829, %vm2841
        %vm2844 = vmand %vm2830, %vm2840
        %vm2845 = vmand %vm2831, %vm2841
        %vm2846 = vmand %vm2832, %vm2840
        %vm2847 = vmand %vm2833, %vm2841
        %vm2848 = vmand %vm2834, %vm2840
        %vm2849 = vmand %vm2835, %vm2841
        %vm2850 = vmand %vm2836, %vm2840
        %vm2851 = vmand %vm2837, %vm2841
        %vm2852 = vmand %vm2838, %vm2840
        %vm2853 = vmand %vm2839, %vm2841
        %v2854 = vsel %vm2842, 1, 0
        %v2855 = vsel %vm2843, 1, 0
        %v2856 = vsel %vm2844, 1, 0
        %v2857 = vsel %vm2845, 1, 0
        %v2858 = vsel %vm2846, 1, 0
        %v2859 = vsel %vm2847, 1, 0
        %v2860 = vsel %vm2848, 1, 0
        %v2861 = vsel %vm2849, 1, 0
        %v2862 = vsel %vm2850, 1, 0
        %v2863 = vsel %vm2851, 1, 0
        %v2864 = vsel %vm2852, 1, 0
        %v2865 = vsel %vm2853, 1, 0
        %vm2866 = vcmp.eq.s32.totalorder %v2854, 1
        %vm2867 = vcmp.eq.s32.totalorder %v2855, 1
        %vm2868 = vcmp.eq.s32.totalorder %v2856, 1
        %vm2869 = vcmp.eq.s32.totalorder %v2857, 1
        %vm2870 = vcmp.eq.s32.totalorder %v2858, 1
        %vm2871 = vcmp.eq.s32.totalorder %v2859, 1
        %vm2872 = vcmp.eq.s32.totalorder %v2860, 1
        %vm2873 = vcmp.eq.s32.totalorder %v2861, 1
        %vm2874 = vcmp.eq.s32.totalorder %v2862, 1
        %vm2875 = vcmp.eq.s32.totalorder %v2863, 1
        %vm2876 = vcmp.eq.s32.totalorder %v2864, 1
        %vm2877 = vcmp.eq.s32.totalorder %v2865, 1
        %v2878 = vcombine.low %v2676, %v2684
        %v2879 = vcombine.low %v2683, %v2685
        %v2881 = vunpack.c.l.s4 1983009808
        %v2882 = vunpack.c.0.s8 %v2881
        %v2883 = vlaneseq
        %v2884 = vshrl.u32 %v2883, 7
        %v2885 = vsub.s32 %v2882, %v2884
        %v2886 = vrot.slane %v2878, %v2885
        %v2888 = vunpack.c.l.s4 1983009808
        %v2889 = vunpack.c.0.s8 %v2888
        %v2890 = vlaneseq
        %v2891 = vshrl.u32 %v2890, 7
        %v2892 = vsub.s32 %v2889, %v2891
        %v2893 = vrot.slane %v2879, %v2892
        %v2894 = vcombine.low %v2886, %v2893
        %v2896 = vunpack.c.l.s4 1983009808
        %v2897 = vunpack.c.0.s8 %v2896
        %v2898 = vlaneseq
        %v2899 = vshrl.u32 %v2898, 7
        %v2900 = vsub.s32 %v2897, %v2899
        %v2901 = vrot.slane %v2693, %v2900
        %v2902 = vcombine.low %v2701, %v2700
        %v2903 = vcombine.low %v2702, %v2710
        %v2905 = vunpack.c.l.s4 1983009808
        %v2906 = vunpack.c.0.s8 %v2905
        %v2907 = vlaneseq
        %v2908 = vshrl.u32 %v2907, 7
        %v2909 = vsub.s32 %v2906, %v2908
        %v2910 = vrot.slane %v2902, %v2909
        %v2912 = vunpack.c.l.s4 1983009808
        %v2913 = vunpack.c.0.s8 %v2912
        %v2914 = vlaneseq
        %v2915 = vshrl.u32 %v2914, 7
        %v2916 = vsub.s32 %v2913, %v2915
        %v2917 = vrot.slane %v2903, %v2916
        %v2918 = vcombine.low %v2910, %v2917
        %v2920 = vunpack.c.l.s4 1983009808
        %v2921 = vunpack.c.0.s8 %v2920
        %v2922 = vlaneseq
        %v2923 = vshrl.u32 %v2922, 7
        %v2924 = vsub.s32 %v2921, %v2923
        %v2925 = vrot.slane %v2718, %v2924
        %v2926 = vcombine.low %v2717, %v2719
        %v2927 = vcombine.low %v2727, %v2735
        %v2929 = vunpack.c.l.s4 1983009808
        %v2930 = vunpack.c.0.s8 %v2929
        %v2931 = vlaneseq
        %v2932 = vshrl.u32 %v2931, 7
        %v2933 = vsub.s32 %v2930, %v2932
        %v2934 = vrot.slane %v2926, %v2933
        %v2936 = vunpack.c.l.s4 1983009808
        %v2937 = vunpack.c.0.s8 %v2936
        %v2938 = vlaneseq
        %v2939 = vshrl.u32 %v2938, 7
        %v2940 = vsub.s32 %v2937, %v2939
        %v2941 = vrot.slane %v2927, %v2940
        %v2942 = vcombine.low %v2934, %v2941
        %v2944 = vunpack.c.l.s4 1983009808
        %v2945 = vunpack.c.0.s8 %v2944
        %v2946 = vlaneseq
        %v2947 = vshrl.u32 %v2946, 7
        %v2948 = vsub.s32 %v2945, %v2947
        %v2949 = vrot.slane %v2734, %v2948
        %v2950 = vcombine.low %v2736, %v2744
        %v2951 = vcombine.low %v2752, %v2751
        %v2953 = vunpack.c.l.s4 1983009808
        %v2954 = vunpack.c.0.s8 %v2953
        %v2955 = vlaneseq
        %v2956 = vshrl.u32 %v2955, 7
        %v2957 = vsub.s32 %v2954, %v2956
        %v2958 = vrot.slane %v2950, %v2957
        %v2960 = vunpack.c.l.s4 1983009808
        %v2961 = vunpack.c.0.s8 %v2960
        %v2962 = vlaneseq
        %v2963 = vshrl.u32 %v2962, 7
        %v2964 = vsub.s32 %v2961, %v2963
        %v2965 = vrot.slane %v2951, %v2964
        %v2966 = vcombine.low %v2958, %v2965
        %v2968 = vunpack.c.l.s4 1983009808
        %v2969 = vunpack.c.0.s8 %v2968
        %v2970 = vlaneseq
        %v2971 = vshrl.u32 %v2970, 7
        %v2972 = vsub.s32 %v2969, %v2971
        %v2973 = vrot.slane %v2753, %v2972
        %v2974 = vcombine.low %v2761, %v2769
        %v2975 = vcombine.low %v2768, %v2770
        %v2977 = vunpack.c.l.s4 1983009808
        %v2978 = vunpack.c.0.s8 %v2977
        %v2979 = vlaneseq
        %v2980 = vshrl.u32 %v2979, 7
        %v2981 = vsub.s32 %v2978, %v2980
        %v2982 = vrot.slane %v2974, %v2981
        %v2984 = vunpack.c.l.s4 1983009808
        %v2985 = vunpack.c.0.s8 %v2984
        %v2986 = vlaneseq
        %v2987 = vshrl.u32 %v2986, 7
        %v2988 = vsub.s32 %v2985, %v2987
        %v2989 = vrot.slane %v2975, %v2988
        %v2990 = vcombine.low %v2982, %v2989
        %v2992 = vunpack.c.l.s4 1983009808
        %v2993 = vunpack.c.0.s8 %v2992
        %v2994 = vlaneseq
        %v2995 = vshrl.u32 %v2994, 7
        %v2996 = vsub.s32 %v2993, %v2995
        %v2997 = vrot.slane %v2778, %v2996
        %v2998 = vcombine.low %v2786, %v2785
        %v2999 = vcombine.low %v2787, %v2794
        %v3001 = vunpack.c.l.s4 1983009808
        %v3002 = vunpack.c.0.s8 %v3001
        %v3003 = vlaneseq
        %v3004 = vshrl.u32 %v3003, 7
        %v3005 = vsub.s32 %v3002, %v3004
        %v3006 = vrot.slane %v2998, %v3005
        %v3008 = vunpack.c.l.s4 1983009808
        %v3009 = vunpack.c.0.s8 %v3008
        %v3010 = vlaneseq
        %v3011 = vshrl.u32 %v3010, 7
        %v3012 = vsub.s32 %v3009, %v3011
        %v3013 = vrot.slane %v2999, %v3012
        %v3014 = vcombine.low %v3006, %v3013
        %v3016 = vunpack.c.l.s4 1983009808
        %v3017 = vunpack.c.0.s8 %v3016
        %v3018 = vlaneseq
        %v3019 = vshrl.u32 %v3018, 7
        %v3020 = vsub.s32 %v3017, %v3019
        %v3021 = vrot.slane %v2795, %v3020
        %v3034 = vsel %vm2866, %v2894, 0.0
        %v3035 = vsel %vm2867, %v2901, 0.0
        %v3036 = vsel %vm2868, %v2918, 0.0
        %v3037 = vsel %vm2869, %v2925, 0.0
        %v3038 = vsel %vm2870, %v2942, 0.0
        %v3039 = vsel %vm2871, %v2949, 0.0
        %v3040 = vsel %vm2872, %v2966, 0.0
        %v3041 = vsel %vm2873, %v2973, 0.0
        %v3042 = vsel %vm2874, %v2990, 0.0
        %v3043 = vsel %vm2875, %v2997, 0.0
        %v3044 = vsel %vm2876, %v3014, 0.0
        %v3045 = vsel %vm2877, %v3021, 0.0
        %v3046 = vpack.c.bf16 %v3035, %v3034
        %v3047 = vpack.c.bf16 %v3037, %v3036
        %v3048 = vpack.c.bf16 %v3039, %v3038
        %v3049 = vpack.c.bf16 %v3041, %v3040
        %v3050 = vpack.c.bf16 %v3043, %v3042
        %v3051 = vpack.c.bf16 %v3045, %v3044
        %v3058 = vunpack.c.l.b16 %v3046
        %v3059 = vunpack.c.h.b16 %v3046
        %v3060 = vunpack.c.l.b16 %v3047
        %v3061 = vunpack.c.h.b16 %v3047
        %v3062 = vunpack.c.l.b16 %v3048
        %v3063 = vunpack.c.h.b16 %v3048
        %v3064 = vunpack.c.l.b16 %v3049
        %v3065 = vunpack.c.h.b16 %v3049
        %v3066 = vunpack.c.l.b16 %v3050
        %v3067 = vunpack.c.h.b16 %v3050
        %v3068 = vunpack.c.l.b16 %v3051
        %v3069 = vunpack.c.h.b16 %v3051
        %v3070 = vpack.c.b16 %v3058, %v3058
        %v3071 = vpack.c.b16 %v3059, %v3059
        %v3072 = vpack.c.b16 %v3060, %v3060
        %v3073 = vpack.c.b16 %v3061, %v3061
        %v3074 = vpack.c.b16 %v3062, %v3062
        %v3075 = vpack.c.b16 %v3063, %v3063
        %v3076 = vpack.c.b16 %v3064, %v3064
        %v3077 = vpack.c.b16 %v3065, %v3065
        %v3078 = vpack.c.b16 %v3066, %v3066
        %v3079 = vpack.c.b16 %v3067, %v3067
        %v3080 = vpack.c.b16 %v3068, %v3068
        %v3081 = vpack.c.b16 %v3069, %v3069
        %3094 = vst [vmem:[#allocation2] sm:$0xf] %v3070
        %3095 = vst [vmem:[#allocation2 + $0x4] sm:$0x1] %v3071
        %3096 = vst [vmem:[#allocation2 + $0x8] sm:$0xf] %v3072
        %3097 = vst [vmem:[#allocation2 + $0xc] sm:$0x1] %v3073
        %3098 = vst [vmem:[#allocation2 + $0x10] sm:$0xf] %v3074
        %3099 = vst [vmem:[#allocation2 + $0x14] sm:$0x1] %v3075
        %3100 = vst [vmem:[#allocation2 + $0x18] sm:$0xf] %v3076
        %3101 = vst [vmem:[#allocation2 + $0x1c] sm:$0x1] %v3077
        %3102 = vst [vmem:[#allocation2 + $0x20] sm:$0xf] %v3078
        %3103 = vst [vmem:[#allocation2 + $0x24] sm:$0x1] %v3079
        %3104 = vst [vmem:[#allocation2 + $0x28] sm:$0xf] %v3080
        %3105 = vst [vmem:[#allocation2 + $0x2c] sm:$0x1] %v3081
        %v3106 = vld [vmem:[#allocation2] sm:$0xf]
        %v3107 = vld [vmem:[#allocation2 + $0x4] sm:$0x1]
        %v3108 = vld [vmem:[#allocation2 + $0x8] sm:$0xf]
        %v3109 = vld [vmem:[#allocation2 + $0xc] sm:$0x1]
        %v3110 = vld [vmem:[#allocation2 + $0x10] sm:$0xf]
        %v3111 = vld [vmem:[#allocation2 + $0x14] sm:$0x1]
        %v3112 = vld [vmem:[#allocation2 + $0x18] sm:$0xf]
        %v3113 = vld [vmem:[#allocation2 + $0x1c] sm:$0x1]
        %v3122 = vunpack.c.l.b16 %v3106
        %v3123 = vunpack.c.l.b16 %v3107
        %v3124 = vunpack.c.l.b16 %v3108
        %v3125 = vunpack.c.l.b16 %v3109
        %v3126 = vunpack.c.l.b16 %v3110
        %v3127 = vunpack.c.l.b16 %v3111
        %v3128 = vunpack.c.l.b16 %v3112
        %v3129 = vunpack.c.l.b16 %v3113
        %v3130 = vpack.c.b16 %v3123, %v3122
        %v3131 = vpack.c.b16 %v3125, %v3124
        %v3132 = vpack.c.b16 %v3127, %v3126
        %v3133 = vpack.c.b16 %v3129, %v3128
        %v3135 = vshrl.u32 %v3130, 16
        %v3137 = vshll.u32 %v3130, 16
        %v3139 = vrot.slane %v3137, 1
        %v3140 = vor.u32 %v3135, %v3139
        %v3142 = vshrl.u32 %v3131, 16
        %v3144 = vshll.u32 %v3131, 16
        %v3146 = vrot.slane %v3144, 1
        %v3147 = vor.u32 %v3142, %v3146
        %v3149 = vshrl.u32 %v3132, 16
        %v3151 = vshll.u32 %v3132, 16
        %v3153 = vrot.slane %v3151, 1
        %v3154 = vor.u32 %v3149, %v3153
        %v3156 = vshrl.u32 %v3133, 16
        %v3158 = vshll.u32 %v3133, 16
        %v3160 = vrot.slane %v3158, 1
        %v3161 = vor.u32 %v3156, %v3160
        %v3162 = vrot.slane %v3130, 1
        %v3163 = vrot.slane %v3131, 1
        %v3164 = vrot.slane %v3132, 1
        %v3165 = vrot.slane %v3133, 1
        %v3166 = vunpack.c.l.b16 %v3140
        %v3167 = vunpack.c.l.b16 %v3162
        %v3168 = vunpack.c.l.b16 %v3147
        %v3169 = vunpack.c.l.b16 %v3163
        %v3170 = vunpack.c.l.b16 %v3154
        %v3171 = vunpack.c.l.b16 %v3164
        %v3172 = vunpack.c.l.b16 %v3161
        %v3173 = vunpack.c.l.b16 %v3165
        %v3174 = vld [vmem:[%s3] sm:$0xf]
        %v3175 = vld [vmem:[%s3 + $0x4] sm:$0xf]
        %v3176 = vld [vmem:[%s3 + $0x8] sm:$0xf]
        %v3177 = vld [vmem:[%s3 + $0xc] sm:$0xf]
        %v3178 = vld [vmem:[%s3 + $0x10] sm:$0xf]
        %v3179 = vld [vmem:[%s3 + $0x14] sm:$0xf]
        %v3180 = vld [vmem:[%s3 + $0x18] sm:$0xf]
        %v3181 = vld [vmem:[%s3 + $0x1c] sm:$0xf]
        %v3182 = vld [vmem:[%s3 + $0x20] sm:$0xf]
        %v3183 = vld [vmem:[%s3 + $0x24] sm:$0xf]
        %v3184 = vld [vmem:[%s3 + $0x28] sm:$0xf]
        %v3185 = vld [vmem:[%s3 + $0x2c] sm:$0xf]
        %v3186 = vld [vmem:[%s3 + $0x30] sm:$0xf]
        %v3187 = vld [vmem:[%s3 + $0x34] sm:$0xf]
        %v3188 = vld [vmem:[%s3 + $0x38] sm:$0xf]
        %v3189 = vld [vmem:[%s3 + $0x3c] sm:$0xf]
        %v3190 = vld [vmem:[%s3 + $0x40] sm:$0xf]
        %v3191 = vld [vmem:[%s3 + $0x44] sm:$0xf]
        %v3192 = vld [vmem:[%s3 + $0x48] sm:$0xf]
        %v3193 = vld [vmem:[%s3 + $0x4c] sm:$0xf]
        %v3194 = vld [vmem:[%s3 + $0x50] sm:$0xf]
        %v3195 = vld [vmem:[%s3 + $0x54] sm:$0xf]
        %v3196 = vld [vmem:[%s3 + $0x58] sm:$0xf]
        %v3197 = vld [vmem:[%s3 + $0x5c] sm:$0xf]
        %v3198 = vld [vmem:[%s3 + $0x60] sm:$0xf]
        %v3199 = vld [vmem:[%s3 + $0x64] sm:$0xf]
        %v3200 = vld [vmem:[%s3 + $0x68] sm:$0xf]
        %v3201 = vld [vmem:[%s3 + $0x6c] sm:$0xf]
        %v3202 = vld [vmem:[%s3 + $0x70] sm:$0xf]
        %v3203 = vld [vmem:[%s3 + $0x74] sm:$0xf]
        %v3204 = vld [vmem:[%s3 + $0x78] sm:$0xf]
        %v3205 = vld [vmem:[%s3 + $0x7c] sm:$0xf]
        %v3206 = vld [vmem:[%s3 + $0x80] sm:$0xf]
        %v3207 = vld [vmem:[%s3 + $0x84] sm:$0xf]
        %v3208 = vld [vmem:[%s3 + $0x88] sm:$0xf]
        %v3209 = vld [vmem:[%s3 + $0x8c] sm:$0xf]
        %v3210 = vld [vmem:[%s3 + $0x90] sm:$0xf]
        %v3211 = vld [vmem:[%s3 + $0x94] sm:$0xf]
        %v3212 = vld [vmem:[%s3 + $0x98] sm:$0xf]
        %v3213 = vld [vmem:[%s3 + $0x9c] sm:$0xf]
        %v3214 = vld [vmem:[%s3 + $0xa0] sm:$0xf]
        %v3215 = vld [vmem:[%s3 + $0xa4] sm:$0xf]
        %v3216 = vld [vmem:[%s3 + $0xa8] sm:$0xf]
        %v3217 = vld [vmem:[%s3 + $0xac] sm:$0xf]
        %v3218 = vld [vmem:[%s3 + $0xb0] sm:$0xf]
        %v3219 = vld [vmem:[%s3 + $0xb4] sm:$0xf]
        %v3220 = vld [vmem:[%s3 + $0xb8] sm:$0xf]
        %v3221 = vld [vmem:[%s3 + $0xbc] sm:$0xf]
        %s3222 = scalar_lea.vmem [#allocation2], 8
        %v3223 = vld [vmem:[%s3222] sm:$0xf]
        %v3224 = vld [vmem:[%s3222 + $0x4] sm:$0x1]
        %v3225 = vld [vmem:[%s3222 + $0x8] sm:$0xf]
        %v3226 = vld [vmem:[%s3222 + $0xc] sm:$0x1]
        %v3227 = vld [vmem:[%s3222 + $0x10] sm:$0xf]
        %v3228 = vld [vmem:[%s3222 + $0x14] sm:$0x1]
        %v3229 = vld [vmem:[%s3222 + $0x18] sm:$0xf]
        %v3230 = vld [vmem:[%s3222 + $0x1c] sm:$0x1]
        %v3239 = vunpack.c.l.b16 %v3223
        %v3240 = vunpack.c.l.b16 %v3224
        %v3241 = vunpack.c.l.b16 %v3225
        %v3242 = vunpack.c.l.b16 %v3226
        %v3243 = vunpack.c.l.b16 %v3227
        %v3244 = vunpack.c.l.b16 %v3228
        %v3245 = vunpack.c.l.b16 %v3229
        %v3246 = vunpack.c.l.b16 %v3230
        %v3247 = vpack.c.b16 %v3240, %v3239
        %v3248 = vpack.c.b16 %v3242, %v3241
        %v3249 = vpack.c.b16 %v3244, %v3243
        %v3250 = vpack.c.b16 %v3246, %v3245
        %v3252 = vshrl.u32 %v3247, 16
        %v3254 = vshll.u32 %v3247, 16
        %v3256 = vrot.slane %v3254, 1
        %v3257 = vor.u32 %v3252, %v3256
        %v3259 = vshrl.u32 %v3248, 16
        %v3261 = vshll.u32 %v3248, 16
        %v3263 = vrot.slane %v3261, 1
        %v3264 = vor.u32 %v3259, %v3263
        %v3266 = vshrl.u32 %v3249, 16
        %v3268 = vshll.u32 %v3249, 16
        %v3270 = vrot.slane %v3268, 1
        %v3271 = vor.u32 %v3266, %v3270
        %v3273 = vshrl.u32 %v3250, 16
        %v3275 = vshll.u32 %v3250, 16
        %v3277 = vrot.slane %v3275, 1
        %v3278 = vor.u32 %v3273, %v3277
        %v3279 = vrot.slane %v3247, 1
        %v3280 = vrot.slane %v3248, 1
        %v3281 = vrot.slane %v3249, 1
        %v3282 = vrot.slane %v3250, 1
        %v3283 = vunpack.c.l.b16 %v3257
        %v3284 = vunpack.c.l.b16 %v3279
        %v3285 = vunpack.c.l.b16 %v3264
        %v3286 = vunpack.c.l.b16 %v3280
        %v3287 = vunpack.c.l.b16 %v3271
        %v3288 = vunpack.c.l.b16 %v3281
        %v3289 = vunpack.c.l.b16 %v3278
        %v3290 = vunpack.c.l.b16 %v3282
        %s3291 = scalar_lea.vmem %s3, 192
        %v3292 = vld [vmem:[%s3291] sm:$0xf]
        %v3293 = vld [vmem:[%s3291 + $0x4] sm:$0xf]
        %v3294 = vld [vmem:[%s3291 + $0x8] sm:$0xf]
        %v3295 = vld [vmem:[%s3291 + $0xc] sm:$0xf]
        %v3296 = vld [vmem:[%s3291 + $0x10] sm:$0xf]
        %v3297 = vld [vmem:[%s3291 + $0x14] sm:$0xf]
        %v3298 = vld [vmem:[%s3291 + $0x18] sm:$0xf]
        %v3299 = vld [vmem:[%s3291 + $0x1c] sm:$0xf]
        %v3300 = vld [vmem:[%s3291 + $0x20] sm:$0xf]
        %v3301 = vld [vmem:[%s3291 + $0x24] sm:$0xf]
        %v3302 = vld [vmem:[%s3291 + $0x28] sm:$0xf]
        %v3303 = vld [vmem:[%s3291 + $0x2c] sm:$0xf]
        %v3304 = vld [vmem:[%s3291 + $0x30] sm:$0xf]
        %v3305 = vld [vmem:[%s3291 + $0x34] sm:$0xf]
        %v3306 = vld [vmem:[%s3291 + $0x38] sm:$0xf]
        %v3307 = vld [vmem:[%s3291 + $0x3c] sm:$0xf]
        %v3308 = vld [vmem:[%s3291 + $0x40] sm:$0xf]
        %v3309 = vld [vmem:[%s3291 + $0x44] sm:$0xf]
        %v3310 = vld [vmem:[%s3291 + $0x48] sm:$0xf]
        %v3311 = vld [vmem:[%s3291 + $0x4c] sm:$0xf]
        %v3312 = vld [vmem:[%s3291 + $0x50] sm:$0xf]
        %v3313 = vld [vmem:[%s3291 + $0x54] sm:$0xf]
        %v3314 = vld [vmem:[%s3291 + $0x58] sm:$0xf]
        %v3315 = vld [vmem:[%s3291 + $0x5c] sm:$0xf]
        %v3316 = vld [vmem:[%s3291 + $0x60] sm:$0xf]
        %v3317 = vld [vmem:[%s3291 + $0x64] sm:$0xf]
        %v3318 = vld [vmem:[%s3291 + $0x68] sm:$0xf]
        %v3319 = vld [vmem:[%s3291 + $0x6c] sm:$0xf]
        %v3320 = vld [vmem:[%s3291 + $0x70] sm:$0xf]
        %v3321 = vld [vmem:[%s3291 + $0x74] sm:$0xf]
        %v3322 = vld [vmem:[%s3291 + $0x78] sm:$0xf]
        %v3323 = vld [vmem:[%s3291 + $0x7c] sm:$0xf]
        %v3324 = vld [vmem:[%s3291 + $0x80] sm:$0xf]
        %v3325 = vld [vmem:[%s3291 + $0x84] sm:$0xf]
        %v3326 = vld [vmem:[%s3291 + $0x88] sm:$0xf]
        %v3327 = vld [vmem:[%s3291 + $0x8c] sm:$0xf]
        %v3328 = vld [vmem:[%s3291 + $0x90] sm:$0xf]
        %v3329 = vld [vmem:[%s3291 + $0x94] sm:$0xf]
        %v3330 = vld [vmem:[%s3291 + $0x98] sm:$0xf]
        %v3331 = vld [vmem:[%s3291 + $0x9c] sm:$0xf]
        %v3332 = vld [vmem:[%s3291 + $0xa0] sm:$0xf]
        %v3333 = vld [vmem:[%s3291 + $0xa4] sm:$0xf]
        %v3334 = vld [vmem:[%s3291 + $0xa8] sm:$0xf]
        %v3335 = vld [vmem:[%s3291 + $0xac] sm:$0xf]
        %v3336 = vld [vmem:[%s3291 + $0xb0] sm:$0xf]
        %v3337 = vld [vmem:[%s3291 + $0xb4] sm:$0xf]
        %v3338 = vld [vmem:[%s3291 + $0xb8] sm:$0xf]
        %v3339 = vld [vmem:[%s3291 + $0xbc] sm:$0xf]
        %v3340 = vpack.c.b16 %v3241, %v3239
        %v3341 = vpack.c.b16 %v3285, %v3283
        %v3342 = vpack.c.b16 %v3286, %v3284
        %v3343 = vpack.c.b16 %v3245, %v3243
        %v3344 = vpack.c.b16 %v3289, %v3287
        %v3345 = vpack.c.b16 %v3290, %v3288
        %v3400 = vunpack.c.l.b16 %v3292
        %v3401 = vunpack.c.l.b16 %v3293
        %v3402 = vunpack.c.l.b16 %v3294
        %v3403 = vunpack.c.l.b16 %v3295
        %v3404 = vunpack.c.l.b16 %v3296
        %v3405 = vunpack.c.l.b16 %v3297
        %v3406 = vunpack.c.l.b16 %v3298
        %v3407 = vunpack.c.l.b16 %v3299
        %v3408 = vunpack.c.l.b16 %v3300
        %v3409 = vunpack.c.l.b16 %v3301
        %v3410 = vunpack.c.l.b16 %v3302
        %v3411 = vunpack.c.l.b16 %v3303
        %v3412 = vunpack.c.l.b16 %v3304
        %v3413 = vunpack.c.l.b16 %v3305
        %v3414 = vunpack.c.l.b16 %v3306
        %v3415 = vunpack.c.l.b16 %v3307
        %v3416 = vunpack.c.l.b16 %v3308
        %v3417 = vunpack.c.l.b16 %v3309
        %v3418 = vunpack.c.l.b16 %v3310
        %v3419 = vunpack.c.l.b16 %v3311
        %v3420 = vunpack.c.l.b16 %v3312
        %v3421 = vunpack.c.l.b16 %v3313
        %v3422 = vunpack.c.l.b16 %v3314
        %v3423 = vunpack.c.l.b16 %v3315
        %v3424 = vunpack.c.l.b16 %v3316
        %v3425 = vunpack.c.l.b16 %v3317
        %v3426 = vunpack.c.l.b16 %v3318
        %v3427 = vunpack.c.l.b16 %v3319
        %v3428 = vunpack.c.l.b16 %v3320
        %v3429 = vunpack.c.l.b16 %v3321
        %v3430 = vunpack.c.l.b16 %v3322
        %v3431 = vunpack.c.l.b16 %v3323
        %v3432 = vunpack.c.l.b16 %v3324
        %v3433 = vunpack.c.l.b16 %v3325
        %v3434 = vunpack.c.l.b16 %v3326
        %v3435 = vunpack.c.l.b16 %v3327
        %v3436 = vunpack.c.l.b16 %v3328
        %v3437 = vunpack.c.l.b16 %v3329
        %v3438 = vunpack.c.l.b16 %v3330
        %v3439 = vunpack.c.l.b16 %v3331
        %v3440 = vunpack.c.l.b16 %v3332
        %v3441 = vunpack.c.l.b16 %v3333
        %v3442 = vunpack.c.l.b16 %v3334
        %v3443 = vunpack.c.l.b16 %v3335
        %v3444 = vunpack.c.l.b16 %v3336
        %v3445 = vunpack.c.l.b16 %v3337
        %v3446 = vunpack.c.l.b16 %v3338
        %v3447 = vunpack.c.l.b16 %v3339
        %v3448 = vpack.c.b16 %v3401, %v3400
        %v3449 = vpack.c.b16 %v3403, %v3402
        %v3450 = vpack.c.b16 %v3405, %v3404
        %v3451 = vpack.c.b16 %v3407, %v3406
        %v3452 = vpack.c.b16 %v3409, %v3408
        %v3453 = vpack.c.b16 %v3411, %v3410
        %v3454 = vpack.c.b16 %v3413, %v3412
        %v3455 = vpack.c.b16 %v3415, %v3414
        %v3456 = vpack.c.b16 %v3417, %v3416
        %v3457 = vpack.c.b16 %v3419, %v3418
        %v3458 = vpack.c.b16 %v3421, %v3420
        %v3459 = vpack.c.b16 %v3423, %v3422
        %v3460 = vpack.c.b16 %v3425, %v3424
        %v3461 = vpack.c.b16 %v3427, %v3426
        %v3462 = vpack.c.b16 %v3429, %v3428
        %v3463 = vpack.c.b16 %v3431, %v3430
        %v3464 = vpack.c.b16 %v3433, %v3432
        %v3465 = vpack.c.b16 %v3435, %v3434
        %v3466 = vpack.c.b16 %v3437, %v3436
        %v3467 = vpack.c.b16 %v3439, %v3438
        %v3468 = vpack.c.b16 %v3441, %v3440
        %v3469 = vpack.c.b16 %v3443, %v3442
        %v3470 = vpack.c.b16 %v3445, %v3444
        %v3471 = vpack.c.b16 %v3447, %v3446
        %3496 = vmatprep.subr.bf16.mxu0 0
        %3497 = vmatpush1.bf16.msra.mxu0 %v3448
        %3498 = vmatprep.subr.bf16.mxu0 0
        %3499 = vmatpush1.bf16.msra.mxu0 %v3449
        %3500 = vmatprep.subr.bf16.mxu0 0
        %3501 = vmatpush1.bf16.msra.mxu0 %v3450
        %3502 = vmatprep.subr.bf16.mxu0 0
        %3503 = vmatpush1.bf16.msra.mxu0 %v3451
        %3504 = vmatprep.subr.bf16.mxu0 0
        %3505 = vmatpush1.bf16.msra.mxu0 %v3452
        %3506 = vmatprep.subr.bf16.mxu0 0
        %3507 = vmatpush1.bf16.msra.mxu0 %v3453
        %3508 = vmatprep.subr.bf16.mxu0 0
        %3509 = vmatpush1.bf16.msra.mxu0 %v3454
        %3510 = vmatprep.subr.bf16.mxu0 0
        %3511 = vmatpush1.bf16.msra.mxu0 %v3455
        %3512 = vmatprep.subr.bf16.mxu0 0
        %3513 = vmatpush1.bf16.msra.mxu0 %v3456
        %3514 = vmatprep.subr.bf16.mxu0 0
        %3515 = vmatpush1.bf16.msra.mxu0 %v3457
        %3516 = vmatprep.subr.bf16.mxu0 0
        %3517 = vmatpush1.bf16.msra.mxu0 %v3458
        %3518 = vmatprep.subr.bf16.mxu0 0
        %3519 = vmatpush1.bf16.msra.mxu0 %v3459
        %3520 = vmatprep.subr.bf16.mxu0 0
        %3521 = vmatpush1.bf16.msra.mxu0 %v3460
        %3522 = vmatprep.subr.bf16.mxu0 0
        %3523 = vmatpush1.bf16.msra.mxu0 %v3461
        %3524 = vmatprep.subr.bf16.mxu0 0
        %3525 = vmatpush1.bf16.msra.mxu0 %v3462
        %3526 = vmatprep.subr.bf16.mxu0 0
        %3527 = vmatpush1.bf16.msra.mxu0 %v3463
        %3528 = vmatprep.mubr.bf16.mxu0 %v3341
        %3529 = vmatmul.mubr.bf16.gmra.mrb[0].mxu0 %v3340
        %v3530 = vpop.f32.mrb[0].mxu0
        %v3531 = vadd.f32 0.0, %v3530
        %v3532 = vpop.f32.mrb[0].mxu0
        %v3533 = vpop.f32.mrb[0].mxu0
        %v3534 = vadd.f32 0.0, %v3533
        %v3535 = vpop.f32.mrb[0].mxu0
        %3536 = vmatprep.mubr.bf16.mxu0 %v3344
        %3537 = vmatmul.mubr.bf16.gmra.mrb[0].mxu0 %v3343
        %v3538 = vpop.f32.mrb[0].mxu0
        %v3539 = vadd.f32 0.0, %v3538
        %v3540 = vpop.f32.mrb[0].mxu0
        %v3541 = vpop.f32.mrb[0].mxu0
        %v3542 = vadd.f32 0.0, %v3541
        %v3543 = vpop.f32.mrb[0].mxu0
        %3544 = vdwg.mxu0
        %3545 = vmatprep.subr.bf16.mxu0 0
        %3546 = vmatpush1.bf16.msra.mxu0 %v3464
        %3547 = vmatprep.subr.bf16.mxu0 0
        %3548 = vmatpush1.bf16.msra.mxu0 %v3465
        %3549 = vmatprep.subr.bf16.mxu0 0
        %3550 = vmatpush1.bf16.msra.mxu0 %v3466
        %3551 = vmatprep.subr.bf16.mxu0 0
        %3552 = vmatpush1.bf16.msra.mxu0 %v3467
        %3553 = vmatprep.subr.bf16.mxu0 0
        %3554 = vmatpush1.bf16.msra.mxu0 %v3468
        %3555 = vmatprep.subr.bf16.mxu0 0
        %3556 = vmatpush1.bf16.msra.mxu0 %v3469
        %3557 = vmatprep.subr.bf16.mxu0 0
        %3558 = vmatpush1.bf16.msra.mxu0 %v3470
        %3559 = vmatprep.subr.bf16.mxu0 0
        %3560 = vmatpush1.bf16.msra.mxu0 %v3471
        %3561 = vmatprep.subr.bf16.mxu0 0
        %3562 = vmatpush1.bf16.msra.mxu0 0
        %3563 = vmatprep.subr.bf16.mxu0 0
        %3564 = vmatpush1.bf16.msra.mxu0 0
        %3565 = vmatprep.subr.bf16.mxu0 0
        %3566 = vmatpush1.bf16.msra.mxu0 0
        %3567 = vmatprep.subr.bf16.mxu0 0
        %3568 = vmatpush1.bf16.msra.mxu0 0
        %3569 = vmatprep.subr.bf16.mxu0 0
        %3570 = vmatpush1.bf16.msra.mxu0 0
        %3571 = vmatprep.subr.bf16.mxu0 0
        %3572 = vmatpush1.bf16.msra.mxu0 0
        %3573 = vmatprep.subr.bf16.mxu0 0
        %3574 = vmatpush1.bf16.msra.mxu0 0
        %3575 = vmatprep.subr.bf16.mxu0 0
        %3576 = vmatpush1.bf16.msra.mxu0 0
        %3577 = vmatprep.mubr.bf16.mxu0 0
        %3578 = vmatmul.mubr.bf16.gmra.mrb[0].mxu0 %v3342
        %v3579 = vpop.f32.mrb[0].mxu0
        %v3580 = vadd.f32 %v3531, %v3579
        %v3581 = vpop.f32.mrb[0].mxu0
        %v3582 = vpop.f32.mrb[0].mxu0
        %v3583 = vadd.f32 %v3534, %v3582
        %v3584 = vpop.f32.mrb[0].mxu0
        %3585 = vmatprep.mubr.bf16.mxu0 0
        %3586 = vmatmul.mubr.bf16.gmra.mrb[0].mxu0 %v3345
        %v3587 = vpop.f32.mrb[0].mxu0
        %v3588 = vadd.f32 %v3539, %v3587
        %v3589 = vpop.f32.mrb[0].mxu0
        %v3590 = vpop.f32.mrb[0].mxu0
        %v3591 = vadd.f32 %v3542, %v3590
        %v3592 = vpop.f32.mrb[0].mxu0
        %3593 = vdwg.mxu0
        %v3594 = vpack.c.b16 %v3124, %v3122
        %v3595 = vpack.c.b16 %v3168, %v3166
        %v3596 = vpack.c.b16 %v3169, %v3167
        %v3597 = vpack.c.b16 %v3128, %v3126
        %v3598 = vpack.c.b16 %v3172, %v3170
        %v3599 = vpack.c.b16 %v3173, %v3171
        %v3654 = vunpack.c.l.b16 %v3174
        %v3655 = vunpack.c.l.b16 %v3175
        %v3656 = vunpack.c.l.b16 %v3176
        %v3657 = vunpack.c.l.b16 %v3177
        %v3658 = vunpack.c.l.b16 %v3178
        %v3659 = vunpack.c.l.b16 %v3179
        %v3660 = vunpack.c.l.b16 %v3180
        %v3661 = vunpack.c.l.b16 %v3181
        %v3662 = vunpack.c.l.b16 %v3182
        %v3663 = vunpack.c.l.b16 %v3183
        %v3664 = vunpack.c.l.b16 %v3184
        %v3665 = vunpack.c.l.b16 %v3185
        %v3666 = vunpack.c.l.b16 %v3186
        %v3667 = vunpack.c.l.b16 %v3187
        %v3668 = vunpack.c.l.b16 %v3188
        %v3669 = vunpack.c.l.b16 %v3189
        %v3670 = vunpack.c.l.b16 %v3190
        %v3671 = vunpack.c.l.b16 %v3191
        %v3672 = vunpack.c.l.b16 %v3192
        %v3673 = vunpack.c.l.b16 %v3193
        %v3674 = vunpack.c.l.b16 %v3194
        %v3675 = vunpack.c.l.b16 %v3195
        %v3676 = vunpack.c.l.b16 %v3196
        %v3677 = vunpack.c.l.b16 %v3197
        %v3678 = vunpack.c.l.b16 %v3198
        %v3679 = vunpack.c.l.b16 %v3199
        %v3680 = vunpack.c.l.b16 %v3200
        %v3681 = vunpack.c.l.b16 %v3201
        %v3682 = vunpack.c.l.b16 %v3202
        %v3683 = vunpack.c.l.b16 %v3203
        %v3684 = vunpack.c.l.b16 %v3204
        %v3685 = vunpack.c.l.b16 %v3205
        %v3686 = vunpack.c.l.b16 %v3206
        %v3687 = vunpack.c.l.b16 %v3207
        %v3688 = vunpack.c.l.b16 %v3208
        %v3689 = vunpack.c.l.b16 %v3209
        %v3690 = vunpack.c.l.b16 %v3210
        %v3691 = vunpack.c.l.b16 %v3211
        %v3692 = vunpack.c.l.b16 %v3212
        %v3693 = vunpack.c.l.b16 %v3213
        %v3694 = vunpack.c.l.b16 %v3214
        %v3695 = vunpack.c.l.b16 %v3215
        %v3696 = vunpack.c.l.b16 %v3216
        %v3697 = vunpack.c.l.b16 %v3217
        %v3698 = vunpack.c.l.b16 %v3218
        %v3699 = vunpack.c.l.b16 %v3219
        %v3700 = vunpack.c.l.b16 %v3220
        %v3701 = vunpack.c.l.b16 %v3221
        %v3702 = vpack.c.b16 %v3655, %v3654
        %v3703 = vpack.c.b16 %v3657, %v3656
        %v3704 = vpack.c.b16 %v3659, %v3658
        %v3705 = vpack.c.b16 %v3661, %v3660
        %v3706 = vpack.c.b16 %v3663, %v3662
        %v3707 = vpack.c.b16 %v3665, %v3664
        %v3708 = vpack.c.b16 %v3667, %v3666
        %v3709 = vpack.c.b16 %v3669, %v3668
        %v3710 = vpack.c.b16 %v3671, %v3670
        %v3711 = vpack.c.b16 %v3673, %v3672
        %v3712 = vpack.c.b16 %v3675, %v3674
        %v3713 = vpack.c.b16 %v3677, %v3676
        %v3714 = vpack.c.b16 %v3679, %v3678
        %v3715 = vpack.c.b16 %v3681, %v3680
        %v3716 = vpack.c.b16 %v3683, %v3682
        %v3717 = vpack.c.b16 %v3685, %v3684
        %v3718 = vpack.c.b16 %v3687, %v3686
        %v3719 = vpack.c.b16 %v3689, %v3688
        %v3720 = vpack.c.b16 %v3691, %v3690
        %v3721 = vpack.c.b16 %v3693, %v3692
        %v3722 = vpack.c.b16 %v3695, %v3694
        %v3723 = vpack.c.b16 %v3697, %v3696
        %v3724 = vpack.c.b16 %v3699, %v3698
        %v3725 = vpack.c.b16 %v3701, %v3700
        %3750 = vmatprep.subr.bf16.mxu0 0
        %3751 = vmatpush1.bf16.msra.mxu0 %v3702
        %3752 = vmatprep.subr.bf16.mxu0 0
        %3753 = vmatpush1.bf16.msra.mxu0 %v3703
        %3754 = vmatprep.subr.bf16.mxu0 0
        %3755 = vmatpush1.bf16.msra.mxu0 %v3704
        %3756 = vmatprep.subr.bf16.mxu0 0
        %3757 = vmatpush1.bf16.msra.mxu0 %v3705
        %3758 = vmatprep.subr.bf16.mxu0 0
        %3759 = vmatpush1.bf16.msra.mxu0 %v3706
        %3760 = vmatprep.subr.bf16.mxu0 0
        %3761 = vmatpush1.bf16.msra.mxu0 %v3707
        %3762 = vmatprep.subr.bf16.mxu0 0
        %3763 = vmatpush1.bf16.msra.mxu0 %v3708
        %3764 = vmatprep.subr.bf16.mxu0 0
        %3765 = vmatpush1.bf16.msra.mxu0 %v3709
        %3766 = vmatprep.subr.bf16.mxu0 0
        %3767 = vmatpush1.bf16.msra.mxu0 %v3710
        %3768 = vmatprep.subr.bf16.mxu0 0
        %3769 = vmatpush1.bf16.msra.mxu0 %v3711
        %3770 = vmatprep.subr.bf16.mxu0 0
        %3771 = vmatpush1.bf16.msra.mxu0 %v3712
        %3772 = vmatprep.subr.bf16.mxu0 0
        %3773 = vmatpush1.bf16.msra.mxu0 %v3713
        %3774 = vmatprep.subr.bf16.mxu0 0
        %3775 = vmatpush1.bf16.msra.mxu0 %v3714
        %3776 = vmatprep.subr.bf16.mxu0 0
        %3777 = vmatpush1.bf16.msra.mxu0 %v3715
        %3778 = vmatprep.subr.bf16.mxu0 0
        %3779 = vmatpush1.bf16.msra.mxu0 %v3716
        %3780 = vmatprep.subr.bf16.mxu0 0
        %3781 = vmatpush1.bf16.msra.mxu0 %v3717
        %3782 = vmatprep.mubr.bf16.mxu0 %v3595
        %3783 = vmatmul.mubr.bf16.gmra.mrb[0].mxu0 %v3594
        %v3784 = vpop.f32.mrb[0].mxu0
        %v3785 = vadd.f32 %v3580, %v3784
        %v3786 = vpop.f32.mrb[0].mxu0
        %v3787 = vpop.f32.mrb[0].mxu0
        %v3788 = vadd.f32 %v3583, %v3787
        %v3789 = vpop.f32.mrb[0].mxu0
        %3790 = vmatprep.mubr.bf16.mxu0 %v3598
        %3791 = vmatmul.mubr.bf16.gmra.mrb[0].mxu0 %v3597
        %v3792 = vpop.f32.mrb[0].mxu0
        %v3793 = vadd.f32 %v3588, %v3792
        %v3794 = vpop.f32.mrb[0].mxu0
        %v3795 = vpop.f32.mrb[0].mxu0
        %v3796 = vadd.f32 %v3591, %v3795
        %v3797 = vpop.f32.mrb[0].mxu0
        %3798 = vdwg.mxu0
        %3799 = vmatprep.subr.bf16.mxu0 0
        %3800 = vmatpush1.bf16.msra.mxu0 %v3718
        %3801 = vmatprep.subr.bf16.mxu0 0
        %3802 = vmatpush1.bf16.msra.mxu0 %v3719
        %3803 = vmatprep.subr.bf16.mxu0 0
        %3804 = vmatpush1.bf16.msra.mxu0 %v3720
        %3805 = vmatprep.subr.bf16.mxu0 0
        %3806 = vmatpush1.bf16.msra.mxu0 %v3721
        %3807 = vmatprep.subr.bf16.mxu0 0
        %3808 = vmatpush1.bf16.msra.mxu0 %v3722
        %3809 = vmatprep.subr.bf16.mxu0 0
        %3810 = vmatpush1.bf16.msra.mxu0 %v3723
        %3811 = vmatprep.subr.bf16.mxu0 0
        %3812 = vmatpush1.bf16.msra.mxu0 %v3724
        %3813 = vmatprep.subr.bf16.mxu0 0
        %3814 = vmatpush1.bf16.msra.mxu0 %v3725
        %3815 = vmatprep.subr.bf16.mxu0 0
        %3816 = vmatpush1.bf16.msra.mxu0 0
        %3817 = vmatprep.subr.bf16.mxu0 0
        %3818 = vmatpush1.bf16.msra.mxu0 0
        %3819 = vmatprep.subr.bf16.mxu0 0
        %3820 = vmatpush1.bf16.msra.mxu0 0
        %3821 = vmatprep.subr.bf16.mxu0 0
        %3822 = vmatpush1.bf16.msra.mxu0 0
        %3823 = vmatprep.subr.bf16.mxu0 0
        %3824 = vmatpush1.bf16.msra.mxu0 0
        %3825 = vmatprep.subr.bf16.mxu0 0
        %3826 = vmatpush1.bf16.msra.mxu0 0
        %3827 = vmatprep.subr.bf16.mxu0 0
        %3828 = vmatpush1.bf16.msra.mxu0 0
        %3829 = vmatprep.subr.bf16.mxu0 0
        %3830 = vmatpush1.bf16.msra.mxu0 0
        %3831 = vmatprep.mubr.bf16.mxu0 0
        %3832 = vmatmul.mubr.bf16.gmra.mrb[0].mxu0 %v3596
        %v3833 = vpop.f32.mrb[0].mxu0
        %v3834 = vadd.f32 %v3785, %v3833
        %v3835 = vpop.f32.mrb[0].mxu0
        %v3836 = vpop.f32.mrb[0].mxu0
        %v3837 = vadd.f32 %v3788, %v3836
        %v3838 = vpop.f32.mrb[0].mxu0
        %3839 = vmatprep.mubr.bf16.mxu0 0
        %3840 = vmatmul.mubr.bf16.gmra.mrb[0].mxu0 %v3599
        %v3841 = vpop.f32.mrb[0].mxu0
        %v3842 = vadd.f32 %v3793, %v3841
        %v3843 = vpop.f32.mrb[0].mxu0
        %v3844 = vpop.f32.mrb[0].mxu0
        %v3845 = vadd.f32 %v3796, %v3844
        %v3846 = vpop.f32.mrb[0].mxu0
        %3847 = vdwg.mxu0
        %s3848 = scalar_lea.vmem [#allocation2], 16
        %v3849 = vld [vmem:[%s3848] sm:$0xf]
        %v3850 = vld [vmem:[%s3848 + $0x4] sm:$0x1]
        %v3851 = vld [vmem:[%s3848 + $0x8] sm:$0xf]
        %v3852 = vld [vmem:[%s3848 + $0xc] sm:$0x1]
        %v3853 = vld [vmem:[%s3848 + $0x10] sm:$0xf]
        %v3854 = vld [vmem:[%s3848 + $0x14] sm:$0x1]
        %v3855 = vld [vmem:[%s3848 + $0x18] sm:$0xf]
        %v3856 = vld [vmem:[%s3848 + $0x1c] sm:$0x1]
        %v3865 = vunpack.c.l.b16 %v3849
        %v3866 = vunpack.c.l.b16 %v3850
        %v3867 = vunpack.c.l.b16 %v3851
        %v3868 = vunpack.c.l.b16 %v3852
        %v3869 = vunpack.c.l.b16 %v3853
        %v3870 = vunpack.c.l.b16 %v3854
        %v3871 = vunpack.c.l.b16 %v3855
        %v3872 = vunpack.c.l.b16 %v3856
        %v3873 = vpack.c.b16 %v3866, %v3865
        %v3874 = vpack.c.b16 %v3868, %v3867
        %v3875 = vpack.c.b16 %v3870, %v3869
        %v3876 = vpack.c.b16 %v3872, %v3871
        %v3878 = vshrl.u32 %v3873, 16
        %v3880 = vshll.u32 %v3873, 16
        %v3882 = vrot.slane %v3880, 1
        %v3883 = vor.u32 %v3878, %v3882
        %v3885 = vshrl.u32 %v3874, 16
        %v3887 = vshll.u32 %v3874, 16
        %v3889 = vrot.slane %v3887, 1
        %v3890 = vor.u32 %v3885, %v3889
        %v3892 = vshrl.u32 %v3875, 16
        %v3894 = vshll.u32 %v3875, 16
        %v3896 = vrot.slane %v3894, 1
        %v3897 = vor.u32 %v3892, %v3896
        %v3899 = vshrl.u32 %v3876, 16
        %v3901 = vshll.u32 %v3876, 16
        %v3903 = vrot.slane %v3901, 1
        %v3904 = vor.u32 %v3899, %v3903
        %v3905 = vrot.slane %v3873, 1
        %v3906 = vrot.slane %v3874, 1
        %v3907 = vrot.slane %v3875, 1
        %v3908 = vrot.slane %v3876, 1
        %v3909 = vunpack.c.l.b16 %v3883
        %v3910 = vunpack.c.l.b16 %v3905
        %v3911 = vunpack.c.l.b16 %v3890
        %v3912 = vunpack.c.l.b16 %v3906
        %v3913 = vunpack.c.l.b16 %v3897
        %v3914 = vunpack.c.l.b16 %v3907
        %v3915 = vunpack.c.l.b16 %v3904
        %v3916 = vunpack.c.l.b16 %v3908
        %s3917 = scalar_lea.vmem %s3, 384
        %v3918 = vld [vmem:[%s3917] sm:$0xf]
        %v3919 = vld [vmem:[%s3917 + $0x4] sm:$0xf]
        %v3920 = vld [vmem:[%s3917 + $0x8] sm:$0xf]
        %v3921 = vld [vmem:[%s3917 + $0xc] sm:$0xf]
        %v3922 = vld [vmem:[%s3917 + $0x10] sm:$0xf]
        %v3923 = vld [vmem:[%s3917 + $0x14] sm:$0xf]
        %v3924 = vld [vmem:[%s3917 + $0x18] sm:$0xf]
        %v3925 = vld [vmem:[%s3917 + $0x1c] sm:$0xf]
        %v3926 = vld [vmem:[%s3917 + $0x20] sm:$0xf]
        %v3927 = vld [vmem:[%s3917 + $0x24] sm:$0xf]
        %v3928 = vld [vmem:[%s3917 + $0x28] sm:$0xf]
        %v3929 = vld [vmem:[%s3917 + $0x2c] sm:$0xf]
        %v3930 = vld [vmem:[%s3917 + $0x30] sm:$0xf]
        %v3931 = vld [vmem:[%s3917 + $0x34] sm:$0xf]
        %v3932 = vld [vmem:[%s3917 + $0x38] sm:$0xf]
        %v3933 = vld [vmem:[%s3917 + $0x3c] sm:$0xf]
        %v3934 = vld [vmem:[%s3917 + $0x40] sm:$0xf]
        %v3935 = vld [vmem:[%s3917 + $0x44] sm:$0xf]
        %v3936 = vld [vmem:[%s3917 + $0x48] sm:$0xf]
        %v3937 = vld [vmem:[%s3917 + $0x4c] sm:$0xf]
        %v3938 = vld [vmem:[%s3917 + $0x50] sm:$0xf]
        %v3939 = vld [vmem:[%s3917 + $0x54] sm:$0xf]
        %v3940 = vld [vmem:[%s3917 + $0x58] sm:$0xf]
        %v3941 = vld [vmem:[%s3917 + $0x5c] sm:$0xf]
        %v3942 = vld [vmem:[%s3917 + $0x60] sm:$0xf]
        %v3943 = vld [vmem:[%s3917 + $0x64] sm:$0xf]
        %v3944 = vld [vmem:[%s3917 + $0x68] sm:$0xf]
        %v3945 = vld [vmem:[%s3917 + $0x6c] sm:$0xf]
        %v3946 = vld [vmem:[%s3917 + $0x70] sm:$0xf]
        %v3947 = vld [vmem:[%s3917 + $0x74] sm:$0xf]
        %v3948 = vld [vmem:[%s3917 + $0x78] sm:$0xf]
        %v3949 = vld [vmem:[%s3917 + $0x7c] sm:$0xf]
        %v3950 = vld [vmem:[%s3917 + $0x80] sm:$0xf]
        %v3951 = vld [vmem:[%s3917 + $0x84] sm:$0xf]
        %v3952 = vld [vmem:[%s3917 + $0x88] sm:$0xf]
        %v3953 = vld [vmem:[%s3917 + $0x8c] sm:$0xf]
        %v3954 = vld [vmem:[%s3917 + $0x90] sm:$0xf]
        %v3955 = vld [vmem:[%s3917 + $0x94] sm:$0xf]
        %v3956 = vld [vmem:[%s3917 + $0x98] sm:$0xf]
        %v3957 = vld [vmem:[%s3917 + $0x9c] sm:$0xf]
        %v3958 = vld [vmem:[%s3917 + $0xa0] sm:$0xf]
        %v3959 = vld [vmem:[%s3917 + $0xa4] sm:$0xf]
        %v3960 = vld [vmem:[%s3917 + $0xa8] sm:$0xf]
        %v3961 = vld [vmem:[%s3917 + $0xac] sm:$0xf]
        %v3962 = vld [vmem:[%s3917 + $0xb0] sm:$0xf]
        %v3963 = vld [vmem:[%s3917 + $0xb4] sm:$0xf]
        %v3964 = vld [vmem:[%s3917 + $0xb8] sm:$0xf]
        %v3965 = vld [vmem:[%s3917 + $0xbc] sm:$0xf]
        %v3966 = vpack.c.b16 %v3867, %v3865
        %v3967 = vpack.c.b16 %v3911, %v3909
        %v3968 = vpack.c.b16 %v3912, %v3910
        %v3969 = vpack.c.b16 %v3871, %v3869
        %v3970 = vpack.c.b16 %v3915, %v3913
        %v3971 = vpack.c.b16 %v3916, %v3914
        %v4026 = vunpack.c.l.b16 %v3918
        %v4027 = vunpack.c.l.b16 %v3919
        %v4028 = vunpack.c.l.b16 %v3920
        %v4029 = vunpack.c.l.b16 %v3921
        %v4030 = vunpack.c.l.b16 %v3922
        %v4031 = vunpack.c.l.b16 %v3923
        %v4032 = vunpack.c.l.b16 %v3924
        %v4033 = vunpack.c.l.b16 %v3925
        %v4034 = vunpack.c.l.b16 %v3926
        %v4035 = vunpack.c.l.b16 %v3927
        %v4036 = vunpack.c.l.b16 %v3928
        %v4037 = vunpack.c.l.b16 %v3929
        %v4038 = vunpack.c.l.b16 %v3930
        %v4039 = vunpack.c.l.b16 %v3931
        %v4040 = vunpack.c.l.b16 %v3932
        %v4041 = vunpack.c.l.b16 %v3933
        %v4042 = vunpack.c.l.b16 %v3934
        %v4043 = vunpack.c.l.b16 %v3935
        %v4044 = vunpack.c.l.b16 %v3936
        %v4045 = vunpack.c.l.b16 %v3937
        %v4046 = vunpack.c.l.b16 %v3938
        %v4047 = vunpack.c.l.b16 %v3939
        %v4048 = vunpack.c.l.b16 %v3940
        %v4049 = vunpack.c.l.b16 %v3941
        %v4050 = vunpack.c.l.b16 %v3942
        %v4051 = vunpack.c.l.b16 %v3943
        %v4052 = vunpack.c.l.b16 %v3944
        %v4053 = vunpack.c.l.b16 %v3945
        %v4054 = vunpack.c.l.b16 %v3946
        %v4055 = vunpack.c.l.b16 %v3947
        %v4056 = vunpack.c.l.b16 %v3948
        %v4057 = vunpack.c.l.b16 %v3949
        %v4058 = vunpack.c.l.b16 %v3950
        %v4059 = vunpack.c.l.b16 %v3951
        %v4060 = vunpack.c.l.b16 %v3952
        %v4061 = vunpack.c.l.b16 %v3953
        %v4062 = vunpack.c.l.b16 %v3954
        %v4063 = vunpack.c.l.b16 %v3955
        %v4064 = vunpack.c.l.b16 %v3956
        %v4065 = vunpack.c.l.b16 %v3957
        %v4066 = vunpack.c.l.b16 %v3958
        %v4067 = vunpack.c.l.b16 %v3959
        %v4068 = vunpack.c.l.b16 %v3960
        %v4069 = vunpack.c.l.b16 %v3961
        %v4070 = vunpack.c.l.b16 %v3962
        %v4071 = vunpack.c.l.b16 %v3963
        %v4072 = vunpack.c.l.b16 %v3964
        %v4073 = vunpack.c.l.b16 %v3965
        %v4074 = vpack.c.b16 %v4027, %v4026
        %v4075 = vpack.c.b16 %v4029, %v4028
        %v4076 = vpack.c.b16 %v4031, %v4030
        %v4077 = vpack.c.b16 %v4033, %v4032
        %v4078 = vpack.c.b16 %v4035, %v4034
        %v4079 = vpack.c.b16 %v4037, %v4036
        %v4080 = vpack.c.b16 %v4039, %v4038
        %v4081 = vpack.c.b16 %v4041, %v4040
        %v4082 = vpack.c.b16 %v4043, %v4042
        %v4083 = vpack.c.b16 %v4045, %v4044
        %v4084 = vpack.c.b16 %v4047, %v4046
        %v4085 = vpack.c.b16 %v4049, %v4048
        %v4086 = vpack.c.b16 %v4051, %v4050
        %v4087 = vpack.c.b16 %v4053, %v4052
        %v4088 = vpack.c.b16 %v4055, %v4054
        %v4089 = vpack.c.b16 %v4057, %v4056
        %v4090 = vpack.c.b16 %v4059, %v4058
        %v4091 = vpack.c.b16 %v4061, %v4060
        %v4092 = vpack.c.b16 %v4063, %v4062
        %v4093 = vpack.c.b16 %v4065, %v4064
        %v4094 = vpack.c.b16 %v4067, %v4066
        %v4095 = vpack.c.b16 %v4069, %v4068
        %v4096 = vpack.c.b16 %v4071, %v4070
        %v4097 = vpack.c.b16 %v4073, %v4072
        %4122 = vmatprep.subr.bf16.mxu0 0
        %4123 = vmatpush1.bf16.msra.mxu0 %v4074
        %4124 = vmatprep.subr.bf16.mxu0 0
        %4125 = vmatpush1.bf16.msra.mxu0 %v4075
        %4126 = vmatprep.subr.bf16.mxu0 0
        %4127 = vmatpush1.bf16.msra.mxu0 %v4076
        %4128 = vmatprep.subr.bf16.mxu0 0
        %4129 = vmatpush1.bf16.msra.mxu0 %v4077
        %4130 = vmatprep.subr.bf16.mxu0 0
        %4131 = vmatpush1.bf16.msra.mxu0 %v4078
        %4132 = vmatprep.subr.bf16.mxu0 0
        %4133 = vmatpush1.bf16.msra.mxu0 %v4079
        %4134 = vmatprep.subr.bf16.mxu0 0
        %4135 = vmatpush1.bf16.msra.mxu0 %v4080
        %4136 = vmatprep.subr.bf16.mxu0 0
        %4137 = vmatpush1.bf16.msra.mxu0 %v4081
        %4138 = vmatprep.subr.bf16.mxu0 0
        %4139 = vmatpush1.bf16.msra.mxu0 %v4082
        %4140 = vmatprep.subr.bf16.mxu0 0
        %4141 = vmatpush1.bf16.msra.mxu0 %v4083
        %4142 = vmatprep.subr.bf16.mxu0 0
        %4143 = vmatpush1.bf16.msra.mxu0 %v4084
        %4144 = vmatprep.subr.bf16.mxu0 0
        %4145 = vmatpush1.bf16.msra.mxu0 %v4085
        %4146 = vmatprep.subr.bf16.mxu0 0
        %4147 = vmatpush1.bf16.msra.mxu0 %v4086
        %4148 = vmatprep.subr.bf16.mxu0 0
        %4149 = vmatpush1.bf16.msra.mxu0 %v4087
        %4150 = vmatprep.subr.bf16.mxu0 0
        %4151 = vmatpush1.bf16.msra.mxu0 %v4088
        %4152 = vmatprep.subr.bf16.mxu0 0
        %4153 = vmatpush1.bf16.msra.mxu0 %v4089
        %4154 = vmatprep.mubr.bf16.mxu0 %v3967
        %4155 = vmatmul.mubr.bf16.gmra.mrb[0].mxu0 %v3966
        %v4156 = vpop.f32.mrb[0].mxu0
        %v4157 = vadd.f32 0.0, %v4156
        %v4158 = vpop.f32.mrb[0].mxu0
        %v4159 = vpop.f32.mrb[0].mxu0
        %v4160 = vadd.f32 0.0, %v4159
        %v4161 = vpop.f32.mrb[0].mxu0
        %4162 = vmatprep.mubr.bf16.mxu0 %v3970
        %4163 = vmatmul.mubr.bf16.gmra.mrb[0].mxu0 %v3969
        %v4164 = vpop.f32.mrb[0].mxu0
        %v4165 = vadd.f32 0.0, %v4164
        %v4166 = vpop.f32.mrb[0].mxu0
        %v4167 = vpop.f32.mrb[0].mxu0
        %v4168 = vadd.f32 0.0, %v4167
        %v4169 = vpop.f32.mrb[0].mxu0
        %4170 = vdwg.mxu0
        %4171 = vmatprep.subr.bf16.mxu0 0
        %4172 = vmatpush1.bf16.msra.mxu0 %v4090
        %4173 = vmatprep.subr.bf16.mxu0 0
        %4174 = vmatpush1.bf16.msra.mxu0 %v4091
        %4175 = vmatprep.subr.bf16.mxu0 0
        %4176 = vmatpush1.bf16.msra.mxu0 %v4092
        %4177 = vmatprep.subr.bf16.mxu0 0
        %4178 = vmatpush1.bf16.msra.mxu0 %v4093
        %4179 = vmatprep.subr.bf16.mxu0 0
        %4180 = vmatpush1.bf16.msra.mxu0 %v4094
        %4181 = vmatprep.subr.bf16.mxu0 0
        %4182 = vmatpush1.bf16.msra.mxu0 %v4095
        %4183 = vmatprep.subr.bf16.mxu0 0
        %4184 = vmatpush1.bf16.msra.mxu0 %v4096
        %4185 = vmatprep.subr.bf16.mxu0 0
        %4186 = vmatpush1.bf16.msra.mxu0 %v4097
        %4187 = vmatprep.subr.bf16.mxu0 0
        %4188 = vmatpush1.bf16.msra.mxu0 0
        %4189 = vmatprep.subr.bf16.mxu0 0
        %4190 = vmatpush1.bf16.msra.mxu0 0
        %4191 = vmatprep.subr.bf16.mxu0 0
        %4192 = vmatpush1.bf16.msra.mxu0 0
        %4193 = vmatprep.subr.bf16.mxu0 0
        %4194 = vmatpush1.bf16.msra.mxu0 0
        %4195 = vmatprep.subr.bf16.mxu0 0
        %4196 = vmatpush1.bf16.msra.mxu0 0
        %4197 = vmatprep.subr.bf16.mxu0 0
        %4198 = vmatpush1.bf16.msra.mxu0 0
        %4199 = vmatprep.subr.bf16.mxu0 0
        %4200 = vmatpush1.bf16.msra.mxu0 0
        %4201 = vmatprep.subr.bf16.mxu0 0
        %4202 = vmatpush1.bf16.msra.mxu0 0
        %4203 = vmatprep.mubr.bf16.mxu0 0
        %4204 = vmatmul.mubr.bf16.gmra.mrb[0].mxu0 %v3968
        %v4205 = vpop.f32.mrb[0].mxu0
        %v4206 = vadd.f32 %v4157, %v4205
        %v4207 = vpop.f32.mrb[0].mxu0
        %v4208 = vpop.f32.mrb[0].mxu0
        %v4209 = vadd.f32 %v4160, %v4208
        %v4210 = vpop.f32.mrb[0].mxu0
        %4211 = vmatprep.mubr.bf16.mxu0 0
        %4212 = vmatmul.mubr.bf16.gmra.mrb[0].mxu0 %v3971
        %v4213 = vpop.f32.mrb[0].mxu0
        %v4214 = vadd.f32 %v4165, %v4213
        %v4215 = vpop.f32.mrb[0].mxu0
        %v4216 = vpop.f32.mrb[0].mxu0
        %v4217 = vadd.f32 %v4168, %v4216
        %v4218 = vpop.f32.mrb[0].mxu0
        %4219 = vdwg.mxu0
        %v4220 = vadd.f32 %v3834, %v4206
        %v4221 = vadd.f32 %v3837, %v4209
        %v4222 = vadd.f32 %v3842, %v4214
        %v4223 = vadd.f32 %v3845, %v4217
        %v4224 = vld [vmem:[%s4] sm:$0x1]
        %v4226 = vlaneseq
        %v4227 = vshrl.u32 %v4226, 7
        %v4228 = vsub.s32 0, %v4227
        %v4229 = vrot.slane %v4224, %v4228
        %v4231 = vadd.f32 %v4220, %v4229
        %v4232 = vadd.f32 %v4221, %v4229
        %v4233 = vadd.f32 %v4222, %v4229
        %v4234 = vadd.f32 %v4223, %v4229
        %v4235 = vmax.f32 %v4231, 0.0
        %v4236 = vmax.f32 %v4232, 0.0
        %v4237 = vmax.f32 %v4233, 0.0
        %v4238 = vmax.f32 %v4234, 0.0
        %v4239 = vmax.f32 %v4235, %v4236
        %v4240 = vmax.f32 %v4237, %v4238
        %v4243 = vcombine.high %v4239, %v4239
        %v4245 = vunpack.c.l.s4 1983009808
        %v4246 = vunpack.c.0.s8 %v4245
        %v4247 = vlaneseq
        %v4248 = vshrl.u32 %v4247, 7
        %v4249 = vsub.s32 %v4246, %v4248
        %v4250 = vrot.slane %v4239, %v4249
        %v4252 = vunpack.c.l.s4 1983009808
        %v4253 = vunpack.c.0.s8 %v4252
        %v4254 = vlaneseq
        %v4255 = vshrl.u32 %v4254, 7
        %v4256 = vsub.s32 %v4253, %v4255
        %v4257 = vrot.slane %v4243, %v4256
        %v4258 = vcombine.high %v4250, %v4250
        %v4259 = vcombine.high %v4257, %v4257
        %v4260 = vcombine.high %v4240, %v4240
        %v4262 = vunpack.c.l.s4 1983009808
        %v4263 = vunpack.c.0.s8 %v4262
        %v4264 = vlaneseq
        %v4265 = vshrl.u32 %v4264, 7
        %v4266 = vsub.s32 %v4263, %v4265
        %v4267 = vrot.slane %v4240, %v4266
        %v4269 = vunpack.c.l.s4 1983009808
        %v4270 = vunpack.c.0.s8 %v4269
        %v4271 = vlaneseq
        %v4272 = vshrl.u32 %v4271, 7
        %v4273 = vsub.s32 %v4270, %v4272
        %v4274 = vrot.slane %v4260, %v4273
        %v4275 = vcombine.high %v4267, %v4267
        %v4276 = vcombine.high %v4274, %v4274
        %v4285 = vrot.slane %v4250, 7
        %v4286 = vrot.slane %v4285, 2
        %v4287 = vrot.slane %v4258, 7
        %v4288 = vrot.slane %v4287, 2
        %v4289 = vrot.slane %v4257, 7
        %v4290 = vrot.slane %v4289, 2
        %v4291 = vrot.slane %v4259, 7
        %v4292 = vrot.slane %v4291, 2
        %v4293 = vrot.slane %v4267, 7
        %v4294 = vrot.slane %v4293, 2
        %v4295 = vrot.slane %v4275, 7
        %v4296 = vrot.slane %v4295, 2
        %v4297 = vrot.slane %v4274, 7
        %v4298 = vrot.slane %v4297, 2
        %v4299 = vrot.slane %v4276, 7
        %v4300 = vrot.slane %v4299, 2
        %v4309 = vmax.f32 %v4250, %v4286
        %v4310 = vmax.f32 %v4258, %v4288
        %v4311 = vmax.f32 %v4257, %v4290
        %v4312 = vmax.f32 %v4259, %v4292
        %v4313 = vmax.f32 %v4267, %v4294
        %v4314 = vmax.f32 %v4275, %v4296
        %v4315 = vmax.f32 %v4274, %v4298
        %v4316 = vmax.f32 %v4276, %v4300
        %v4325 = vlaneseq
        %v4326 = vshrl.u32 %v4325, 7
        %v4327 = vsub.s32 0, %v4326
        %v4328 = vrot.slane %v4309, %v4327
        %v4329 = vlaneseq
        %v4330 = vshrl.u32 %v4329, 7
        %v4331 = vsub.s32 0, %v4330
        %v4332 = vrot.slane %v4310, %v4331
        %v4333 = vlaneseq
        %v4334 = vshrl.u32 %v4333, 7
        %v4335 = vsub.s32 0, %v4334
        %v4336 = vrot.slane %v4311, %v4335
        %v4337 = vlaneseq
        %v4338 = vshrl.u32 %v4337, 7
        %v4339 = vsub.s32 0, %v4338
        %v4340 = vrot.slane %v4312, %v4339
        %v4341 = vlaneseq
        %v4342 = vshrl.u32 %v4341, 7
        %v4343 = vsub.s32 0, %v4342
        %v4344 = vrot.slane %v4313, %v4343
        %v4345 = vlaneseq
        %v4346 = vshrl.u32 %v4345, 7
        %v4347 = vsub.s32 0, %v4346
        %v4348 = vrot.slane %v4314, %v4347
        %v4349 = vlaneseq
        %v4350 = vshrl.u32 %v4349, 7
        %v4351 = vsub.s32 0, %v4350
        %v4352 = vrot.slane %v4315, %v4351
        %v4353 = vlaneseq
        %v4354 = vshrl.u32 %v4353, 7
        %v4355 = vsub.s32 0, %v4354
        %v4356 = vrot.slane %v4316, %v4355
        %vm4357 = vcmask 1041409
        %v4358 = vsel %vm4357, %v4332, %v4328
        %vm4359 = vcmask 1042434
        %v4360 = vsel %vm4359, %v4336, %v4358
        %vm4361 = vcmask 1043459
        %v4362 = vsel %vm4361, %v4340, %v4360
        %v4363 = vsel %vm4357, %v4348, %v4344
        %v4364 = vsel %vm4359, %v4352, %v4363
        %v4365 = vsel %vm4361, %v4356, %v4364
        %4368 = vst [vmem:[%s231] sm:$0xf] %v4362
        %4369 = vst [vmem:[%s231 + $0x4] sm:$0xf] %v4365
        %s4370 = sand.u32 %s151, 1
        %s4371 = scalar_lea.sflag [#allocation4], %s4370
        %s4372 = sand.u32 %s151, 1
        %s4373 = smul.addr %s4372, 8
        %s4374 = scalar_lea.vmem [#allocation3], %s4373
        // Predicated region
        $region41: #{vgg_split_forward.3} parent=39 // pred_check
          %p4375 = pneg %p161
        $region42: #{vgg_split_forward.3} parent=39 // pred_check_branch
          %4377 = sbr.rel (%p4375) target = $region44
        $region43: #{vgg_split_forward.3} parent=39 // pred_region
          %s4378 = smul.u32 2, %s24
          %s4380 = ssub.s32 128, 128
          %4381 = vsyncadd %s4371, %s4380
          %s4382 = smul.addr %s23, 4
          %s4383 = sadd.s32 %s4378, %s4382
          %s4384 = smul.addr %s4383, 64
          %s4385 = scalar_lea.hbm %s5, %s4384
          %s4386 = sshll.u32 %s4374, 4
          %s4387 = int_to_ptr.vmem [resolvable:$true] %s4386
          %4392 = dma.vmem_to_hbm [thread:$0]  %s4387, 128, %s4385, %s4371, 64, 64, 4
        $region44: #{vgg_split_forward.3} parent=39 // pred_fallthru
          _
      $region40: #{vgg_split_forward.3} parent=5 // pred_fallthru
        _
      %p4393 = scmp.le.s32.totalorder 2, %s14
      // Predicated region
      $region45: #{vgg_split_forward.3} parent=5 // pred_check
        %p4394 = pneg %p4393
      $region46: #{vgg_split_forward.3} parent=5 // pred_check_branch
        %4396 = sbr.rel (%p4394) target = $region48
      $region47: #{vgg_split_forward.3} parent=5 // pred_region
        %s4397 = ssub.s32 %s14, 2
        // Predicated region
        $region49: #{vgg_split_forward.3} parent=47 // pred_check
          %p4398 = pneg %p167
        $region50: #{vgg_split_forward.3} parent=47 // pred_check_branch
          %4400 = sbr.rel (%p4398) target = $region52
        $region51: #{vgg_split_forward.3} parent=47 // pred_region
          %s4401 = sand.u32 %s152, 1
          %s4402 = scalar_lea.sflag [#allocation4], %s4401
          %s4403 = sand.u32 %s152, 1
          %s4404 = smul.addr %s4403, 8
          %s4405 = scalar_lea.vmem [#allocation3], %s4404
          %4406 = dma.done %s4402, 128
        $region52: #{vgg_split_forward.3} parent=47 // pred_fallthru
          _
      $region48: #{vgg_split_forward.3} parent=5 // pred_fallthru
        _
    $region6: #{vgg_split_forward.3} parent=1 // loop_footer
      %s18 = sadd.s32 1, %s14
    $region7: #{vgg_split_forward.3} parent=1 // loop_footer_branch
      %13 = sbr.rel target = $region3
    $region8: #{vgg_split_forward.3} parent=1 // loop_exit
      _
    %4407 = vsyncpa [#allocation4], 1
    %s4408 = scalar_lea.sflag [#allocation4], 1
    %4409 = vsyncpa %s4408, 1

// kernel: vgg_split_forward.2
$region0: #{vgg_split_forward.2}
  #allocation0 [shape = 'u32[]', space=smem, size = 0x4, offset = 0x4, fixed_abs, tag = 'smem constant byte address 0x4 - core index']
  #allocation1 [shape = 'u32[144,128]{1,0:T(1,128)}', space=vmem, size = 0x12000, scoped, tag = 'internal scratch']
  #allocation2 [shape = 'bf16[10,18,64]{2,1,0:T(8,128)(2,1)}', space=vmem, size = 0xf000, scoped, tag = 'scratch operand']
  %s0 = inlined_call_operand.vmem [shape: bf16[2,20,20,3], index: 0, kind: input, shape index: {}]
  %s1 = inlined_call_operand.vmem [shape: bf16[27,64], index: 1, kind: input, shape index: {}]
  %s2 = inlined_call_operand.vmem [shape: f32[1,64], index: 2, kind: input, shape index: {}]
  %s3 = inlined_call_operand.vmem [shape: bf16[3,192,64], index: 3, kind: input, shape index: {}]
  %s4 = inlined_call_operand.vmem [shape: f32[1,64], index: 4, kind: input, shape index: {}]
  %s5 = inlined_call_operand.vmem [shape: bf16[2,8,8,64], index: 5, kind: output, shape index: {}]
  %s6 = sld [smem:[#allocation0]]
  $region53: #{vgg_split_forward.2} parent=0
    _
  %s8 = ssub.s32 1, %s6
  %s9 = scalar_select 0, %s8, %s6
  loop: start=0, step=1, limit=6
  $region2: #{vgg_split_forward.2} parent=0 // loop_pre_header
    _
  $region3: #{vgg_split_forward.2} parent=0 // loop_header
    %s11 = sphi 0, %s15
    %p12 = scmp.ge.s32.totalorder %s11, 6
    %s18 = sphi 0, %s30
    %s19 = sphi 0, %s26
    %s20 = sphi 0, %s18
    %s21 = sphi 0, %s19
    %s22 = sphi 0, %s20
    %s23 = sphi 0, %s21
    %s33 = sphi 0, %s35
    %s36 = sphi 0, %s33
    %s37 = sphi 0, %s36
    %s53 = sphi 0, %s37
    %s57 = sphi 0, %s57
    %s59 = sphi 0, %s57
    %s60 = sphi 0, %s59
    %s74 = sphi 0, %s60
    %s78 = sphi 0, %s78
    %s80 = sphi 0, %s78
    %s81 = sphi 0, %s80
    %s95 = sphi 0, %s81
    %s99 = sphi 0, %s99
    %s101 = sphi 0, %s99
    %s102 = sphi 0, %s101
    %s116 = sphi 0, %s102
    %s120 = sphi 0, %s120
    %s122 = sphi 0, %s120
    %s123 = sphi 0, %s122
    %s137 = sphi 0, %s123
    %s145 = sphi 0, %s147
    %s148 = sphi 0, %s145
    %s149 = sphi 0, %s148
    %s165 = sphi 0, %s149
  $region4: #{vgg_split_forward.2} parent=0 // loop_header_branch
    %14 = sbr.rel (%p12) target = $region8
  $region5: #{vgg_split_forward.2} parent=0 // loop_body
    %s16 = ssub.s32 %s11, 1
    %s17 = ssub.s32 %s11, 2
    %s24 = sadd.s32 1, %s19
    %p25 = scmp.ge.s32.totalorder %s24, 2
    %s26 = scalar_select %p25, 0, %s24
    %s27 = sadd.s32 1, %s18
    %s28 = scalar_select %p25, %s27, %s18
    %p29 = scmp.ge.s32.totalorder %s28, 2
    %s30 = scalar_select %p29, 0, %s28
    %s31 = ssub.s32 %s18, %s30
    %p32 = scmp.eq.s32.totalorder %s31, 0
    %s34 = sadd.s32 %s33, 1
    %s35 = scalar_select %p32, %s33, %s34
    %p38 = pneg %p32
    %p39 = scmp.eq.s32.totalorder %s11, 3
    %p40 = por %p38, %p39
    %p41 = scmp.ne.s32.totalorder %s33, %s36
    %p42 = scmp.eq.s32.totalorder %s11, 0
    %p43 = por %p41, %p42
    %p44 = scmp.ne.s32.totalorder %s33, %s36
    %p45 = scmp.eq.s32.totalorder %s16, 3
    %p46 = por %p44, %p45
    %p47 = scmp.ne.s32.totalorder %s36, %s37
    %p48 = scmp.eq.s32.totalorder %s16, 0
    %p49 = por %p47, %p48
    %p50 = scmp.ne.s32.totalorder %s36, %s37
    %p51 = scmp.eq.s32.totalorder %s17, 3
    %p52 = por %p50, %p51
    %p54 = scmp.ne.s32.totalorder %s37, %s53
    %p55 = scmp.eq.s32.totalorder %s17, 0
    %p56 = por %p54, %p55
    %s58 = sadd.s32 %s57, 1
    %p61 = scmp.eq.s32.totalorder %s11, 3
    %p62 = scmp.ne.s32.totalorder %s57, %s59
    %p63 = scmp.eq.s32.totalorder %s11, 0
    %p64 = por %p62, %p63
    %p65 = scmp.ne.s32.totalorder %s57, %s59
    %p66 = scmp.eq.s32.totalorder %s16, 3
    %p67 = por %p65, %p66
    %p68 = scmp.ne.s32.totalorder %s59, %s60
    %p69 = scmp.eq.s32.totalorder %s16, 0
    %p70 = por %p68, %p69
    %p71 = scmp.ne.s32.totalorder %s59, %s60
    %p72 = scmp.eq.s32.totalorder %s17, 3
    %p73 = por %p71, %p72
    %p75 = scmp.ne.s32.totalorder %s60, %s74
    %p76 = scmp.eq.s32.totalorder %s17, 0
    %p77 = por %p75, %p76
    %s79 = sadd.s32 %s78, 1
    %p82 = scmp.eq.s32.totalorder %s11, 3
    %p83 = scmp.ne.s32.totalorder %s78, %s80
    %p84 = scmp.eq.s32.totalorder %s11, 0
    %p85 = por %p83, %p84
    %p86 = scmp.ne.s32.totalorder %s78, %s80
    %p87 = scmp.eq.s32.totalorder %s16, 3
    %p88 = por %p86, %p87
    %p89 = scmp.ne.s32.totalorder %s80, %s81
    %p90 = scmp.eq.s32.totalorder %s16, 0
    %p91 = por %p89, %p90
    %p92 = scmp.ne.s32.totalorder %s80, %s81
    %p93 = scmp.eq.s32.totalorder %s17, 3
    %p94 = por %p92, %p93
    %p96 = scmp.ne.s32.totalorder %s81, %s95
    %p97 = scmp.eq.s32.totalorder %s17, 0
    %p98 = por %p96, %p97
    %s100 = sadd.s32 %s99, 1
    %p103 = scmp.eq.s32.totalorder %s11, 3
    %p104 = scmp.ne.s32.totalorder %s99, %s101
    %p105 = scmp.eq.s32.totalorder %s11, 0
    %p106 = por %p104, %p105
    %p107 = scmp.ne.s32.totalorder %s99, %s101
    %p108 = scmp.eq.s32.totalorder %s16, 3
    %p109 = por %p107, %p108
    %p110 = scmp.ne.s32.totalorder %s101, %s102
    %p111 = scmp.eq.s32.totalorder %s16, 0
    %p112 = por %p110, %p111
    %p113 = scmp.ne.s32.totalorder %s101, %s102
    %p114 = scmp.eq.s32.totalorder %s17, 3
    %p115 = por %p113, %p114
    %p117 = scmp.ne.s32.totalorder %s102, %s116
    %p118 = scmp.eq.s32.totalorder %s17, 0
    %p119 = por %p117, %p118
    %s121 = sadd.s32 %s120, 1
    %p124 = scmp.eq.s32.totalorder %s11, 3
    %p125 = scmp.ne.s32.totalorder %s120, %s122
    %p126 = scmp.eq.s32.totalorder %s11, 0
    %p127 = por %p125, %p126
    %p128 = scmp.ne.s32.totalorder %s120, %s122
    %p129 = scmp.eq.s32.totalorder %s16, 3
    %p130 = por %p128, %p129
    %p131 = scmp.ne.s32.totalorder %s122, %s123
    %p132 = scmp.eq.s32.totalorder %s16, 0
    %p133 = por %p131, %p132
    %p134 = scmp.ne.s32.totalorder %s122, %s123
    %p135 = scmp.eq.s32.totalorder %s17, 3
    %p136 = por %p134, %p135
    %p138 = scmp.ne.s32.totalorder %s123, %s137
    %p139 = scmp.eq.s32.totalorder %s17, 0
    %p140 = por %p138, %p139
    %s141 = ssub.s32 %s18, %s30
    %s142 = ssub.s32 %s19, %s26
    %s143 = sor.u32 %s141, %s142
    %p144 = scmp.eq.s32.totalorder %s143, 0
    %s146 = sadd.s32 %s145, 1
    %s147 = scalar_select %p144, %s145, %s146
    %p150 = pneg %p144
    %p151 = scmp.eq.s32.totalorder %s11, 3
    %p152 = por %p150, %p151
    %p153 = scmp.ne.s32.totalorder %s145, %s148
    %p154 = scmp.eq.s32.totalorder %s11, 0
    %p155 = por %p153, %p154
    %p156 = scmp.ne.s32.totalorder %s145, %s148
    %p157 = scmp.eq.s32.totalorder %s16, 3
    %p158 = por %p156, %p157
    %p159 = scmp.ne.s32.totalorder %s148, %s149
    %p160 = scmp.eq.s32.totalorder %s16, 0
    %p161 = por %p159, %p160
    %p162 = scmp.ne.s32.totalorder %s148, %s149
    %p163 = scmp.eq.s32.totalorder %s17, 3
    %p164 = por %p162, %p163
    %p166 = scmp.ne.s32.totalorder %s149, %s165
    %p167 = scmp.eq.s32.totalorder %s17, 0
    %p168 = por %p166, %p167
    %p169 = scmp.le.s32.totalorder 1, %s11
    %p170 = scmp.lt.s32.totalorder %s11, 5
    %p171 = pnand %p169, %p170
    %p172 = pneg %p171
    // Predicated region
    $region9: #{vgg_split_forward.2} parent=5 // pred_check
      _
    $region10: #{vgg_split_forward.2} parent=5 // pred_check_branch
      %174 = sbr.rel (%p171) target = $region12
    $region11: #{vgg_split_forward.2} parent=5 // pred_region
      %s175 = ssub.s32 %s11, 1
      // Predicated region
      $region13: #{vgg_split_forward.2} parent=11 // pred_check
        %p176 = pneg %p70
      $region14: #{vgg_split_forward.2} parent=11 // pred_check_branch
        %178 = sbr.rel (%p176) target = $region16
      $region15: #{vgg_split_forward.2} parent=11 // pred_region
        _
      $region16: #{vgg_split_forward.2} parent=11 // pred_fallthru
        _
      // Predicated region
      $region17: #{vgg_split_forward.2} parent=11 // pred_check
        %p179 = pneg %p91
      $region18: #{vgg_split_forward.2} parent=11 // pred_check_branch
        %181 = sbr.rel (%p179) target = $region20
      $region19: #{vgg_split_forward.2} parent=11 // pred_region
        _
      $region20: #{vgg_split_forward.2} parent=11 // pred_fallthru
        _
      // Predicated region
      $region21: #{vgg_split_forward.2} parent=11 // pred_check
        %p182 = pneg %p112
      $region22: #{vgg_split_forward.2} parent=11 // pred_check_branch
        %184 = sbr.rel (%p182) target = $region24
      $region23: #{vgg_split_forward.2} parent=11 // pred_region
        _
      $region24: #{vgg_split_forward.2} parent=11 // pred_fallthru
        _
      // Predicated region
      $region25: #{vgg_split_forward.2} parent=11 // pred_check
        %p185 = pneg %p133
      $region26: #{vgg_split_forward.2} parent=11 // pred_check_branch
        %187 = sbr.rel (%p185) target = $region28
      $region27: #{vgg_split_forward.2} parent=11 // pred_region
        _
      $region28: #{vgg_split_forward.2} parent=11 // pred_fallthru
        _
    $region12: #{vgg_split_forward.2} parent=5 // pred_fallthru
      _
    %p188 = scmp.lt.s32.totalorder %s11, 4
    // Predicated region
    $region29: #{vgg_split_forward.2} parent=5 // pred_check
      %p189 = pneg %p188
    $region30: #{vgg_split_forward.2} parent=5 // pred_check_branch
      %191 = sbr.rel (%p189) target = $region32
    $region31: #{vgg_split_forward.2} parent=5 // pred_region
      // Predicated region
      $region33: #{vgg_split_forward.2} parent=31 // pred_check
        %p192 = pneg %p43
      $region34: #{vgg_split_forward.2} parent=31 // pred_check_branch
        %194 = sbr.rel (%p192) target = $region36
      $region35: #{vgg_split_forward.2} parent=31 // pred_region
        %p195 = scmp.lt.s32.totalorder %s18, 1
        %s196 = scalar_select %p195, %s18, 1
        %s197 = smul.addr %s196, 60
        %s198 = smul.addr %s197, 4
        %s199 = scalar_lea.vmem %s0, %s198
      $region36: #{vgg_split_forward.2} parent=31 // pred_fallthru
        _
    $region32: #{vgg_split_forward.2} parent=5 // pred_fallthru
      _
    %p200 = scmp.le.s32.totalorder 1, %s11
    %p201 = scmp.lt.s32.totalorder %s11, 5
    %p202 = pnand %p200, %p201
    %p203 = pneg %p202
    // Predicated region
    $region37: #{vgg_split_forward.2} parent=5 // pred_check
      _
    $region38: #{vgg_split_forward.2} parent=5 // pred_check_branch
      %205 = sbr.rel (%p202) target = $region40
    $region39: #{vgg_split_forward.2} parent=5 // pred_region
      %s206 = ssub.s32 %s11, 1
      %p207 = scmp.lt.s32.totalorder %s20, 1
      %s208 = scalar_select %p207, %s20, 1
      %s209 = smul.addr %s208, 60
      %s210 = smul.addr %s209, 4
      %s211 = scalar_lea.vmem %s0, %s210
      %p212 = pneg %p49
      %p213 = pneg %p46
      %p214 = pneg %p70
      %p215 = pneg %p67
      %p216 = pneg %p91
      %p217 = pneg %p88
      %p218 = pneg %p112
      %p219 = pneg %p109
      %p220 = pneg %p133
      %p221 = pneg %p130
      %p222 = pneg %p161
      %p223 = pneg %p158
      %s224 = smul.u32 4, %s21
      %p225 = scmp.lt.s32.totalorder %s20, 1
      %s226 = scalar_select %p225, %s20, 1
      %p227 = scmp.lt.s32.totalorder %s224, 7
      %s228 = scalar_select %p227, %s224, 7
      %s229 = smul.addr %s226, 8
      %s230 = sadd.s32 %s228, %s229
      %s231 = smul.addr %s230, 4
      %s232 = scalar_lea.vmem %s5, %s231
      %p233 = scmp.lt.s32.totalorder %s20, 1
      %s234 = scalar_select %p233, %s20, 1
      %s235 = smul.addr %s234, 60
      %s236 = smul.addr %s235, 4
      %s237 = scalar_lea.vmem %s0, %s236
      %s238 = smul.u32 4, %s21
      %p239 = scmp.lt.s32.totalorder %s20, 1
      %s240 = scalar_select %p239, %s20, 1
      %p241 = scmp.lt.s32.totalorder %s238, 7
      %s242 = scalar_select %p241, %s238, 7
      %s243 = smul.addr %s240, 8
      %s244 = sadd.s32 %s242, %s243
      %s245 = smul.addr %s244, 4
      %s246 = scalar_lea.vmem %s5, %s245
      %s247 = smul.u32 4, %s21
      %s249 = smul.u32 %s21, 8
      %s250 = smul.u32 %s249, 3
      %s251 = smul.addr %s250, 4
      %s252 = scalar_lea.vmem %s237, %s251
      %v253 = vld [vmem:[%s252] sm:$0xf]
      %v254 = vld [vmem:[%s252 + $0x4] sm:$0xf]
      %v255 = vld [vmem:[%s252 + $0x8] sm:$0x3]
      %v256 = vld [vmem:[%s252 + $0xc] sm:$0xf]
      %v257 = vld [vmem:[%s252 + $0x10] sm:$0xf]
      %v258 = vld [vmem:[%s252 + $0x14] sm:$0x3]
      %v259 = vld [vmem:[%s252 + $0x18] sm:$0xf]
      %v260 = vld [vmem:[%s252 + $0x1c] sm:$0xf]
      %v261 = vld [vmem:[%s252 + $0x20] sm:$0x3]
      %v262 = vld [vmem:[%s252 + $0x24] sm:$0xf]
      %v263 = vld [vmem:[%s252 + $0x28] sm:$0xf]
      %v264 = vld [vmem:[%s252 + $0x2c] sm:$0x3]
      %v265 = vld [vmem:[%s252 + $0x30] sm:$0xf]
      %v266 = vld [vmem:[%s252 + $0x34] sm:$0xf]
      %v267 = vld [vmem:[%s252 + $0x38] sm:$0x3]
      %v268 = vld [vmem:[%s252 + $0x3c] sm:$0xf]
      %v269 = vld [vmem:[%s252 + $0x40] sm:$0xf]
      %v270 = vld [vmem:[%s252 + $0x44] sm:$0x3]
      %v271 = vld [vmem:[%s252 + $0x48] sm:$0xf]
      %v272 = vld [vmem:[%s252 + $0x4c] sm:$0xf]
      %v273 = vld [vmem:[%s252 + $0x50] sm:$0x3]
      %v274 = vld [vmem:[%s252 + $0x54] sm:$0xf]
      %v275 = vld [vmem:[%s252 + $0x58] sm:$0xf]
      %v276 = vld [vmem:[%s252 + $0x5c] sm:$0x3]
      %v277 = vld [vmem:[%s252 + $0x60] sm:$0xf]
      %v278 = vld [vmem:[%s252 + $0x64] sm:$0xf]
      %v279 = vld [vmem:[%s252 + $0x68] sm:$0x3]
      %v280 = vld [vmem:[%s252 + $0x6c] sm:$0xf]
      %v281 = vld [vmem:[%s252 + $0x70] sm:$0xf]
      %v282 = vld [vmem:[%s252 + $0x74] sm:$0x3]
      %s283 = sadd.s32 %s249, 1
      %s284 = smul.u32 %s283, 3
      %s285 = smul.addr %s284, 4
      %s286 = scalar_lea.vmem %s237, %s285
      %v287 = vld [vmem:[%s286] sm:$0xf]
      %v288 = vld [vmem:[%s286 + $0x4] sm:$0xf]
      %v289 = vld [vmem:[%s286 + $0x8] sm:$0x3]
      %v290 = vld [vmem:[%s286 + $0xc] sm:$0xf]
      %v291 = vld [vmem:[%s286 + $0x10] sm:$0xf]
      %v292 = vld [vmem:[%s286 + $0x14] sm:$0x3]
      %v293 = vld [vmem:[%s286 + $0x18] sm:$0xf]
      %v294 = vld [vmem:[%s286 + $0x1c] sm:$0xf]
      %v295 = vld [vmem:[%s286 + $0x20] sm:$0x3]
      %v296 = vld [vmem:[%s286 + $0x24] sm:$0xf]
      %v297 = vld [vmem:[%s286 + $0x28] sm:$0xf]
      %v298 = vld [vmem:[%s286 + $0x2c] sm:$0x3]
      %v299 = vld [vmem:[%s286 + $0x30] sm:$0xf]
      %v300 = vld [vmem:[%s286 + $0x34] sm:$0xf]
      %v301 = vld [vmem:[%s286 + $0x38] sm:$0x3]
      %v302 = vld [vmem:[%s286 + $0x3c] sm:$0xf]
      %v303 = vld [vmem:[%s286 + $0x40] sm:$0xf]
      %v304 = vld [vmem:[%s286 + $0x44] sm:$0x3]
      %v305 = vld [vmem:[%s286 + $0x48] sm:$0xf]
      %v306 = vld [vmem:[%s286 + $0x4c] sm:$0xf]
      %v307 = vld [vmem:[%s286 + $0x50] sm:$0x3]
      %v308 = vld [vmem:[%s286 + $0x54] sm:$0xf]
      %v309 = vld [vmem:[%s286 + $0x58] sm:$0xf]
      %v310 = vld [vmem:[%s286 + $0x5c] sm:$0x3]
      %v311 = vld [vmem:[%s286 + $0x60] sm:$0xf]
      %v312 = vld [vmem:[%s286 + $0x64] sm:$0xf]
      %v313 = vld [vmem:[%s286 + $0x68] sm:$0x3]
      %v314 = vld [vmem:[%s286 + $0x6c] sm:$0xf]
      %v315 = vld [vmem:[%s286 + $0x70] sm:$0xf]
      %v316 = vld [vmem:[%s286 + $0x74] sm:$0x3]
      %s317 = sadd.s32 %s249, 2
      %s318 = smul.u32 %s317, 3
      %s319 = smul.addr %s318, 4
      %s320 = scalar_lea.vmem %s237, %s319
      %v321 = vld [vmem:[%s320] sm:$0xf]
      %v322 = vld [vmem:[%s320 + $0x4] sm:$0xf]
      %v323 = vld [vmem:[%s320 + $0x8] sm:$0x3]
      %v324 = vld [vmem:[%s320 + $0xc] sm:$0xf]
      %v325 = vld [vmem:[%s320 + $0x10] sm:$0xf]
      %v326 = vld [vmem:[%s320 + $0x14] sm:$0x3]
      %v327 = vld [vmem:[%s320 + $0x18] sm:$0xf]
      %v328 = vld [vmem:[%s320 + $0x1c] sm:$0xf]
      %v329 = vld [vmem:[%s320 + $0x20] sm:$0x3]
      %v330 = vld [vmem:[%s320 + $0x24] sm:$0xf]
      %v331 = vld [vmem:[%s320 + $0x28] sm:$0xf]
      %v332 = vld [vmem:[%s320 + $0x2c] sm:$0x3]
      %v333 = vld [vmem:[%s320 + $0x30] sm:$0xf]
      %v334 = vld [vmem:[%s320 + $0x34] sm:$0xf]
      %v335 = vld [vmem:[%s320 + $0x38] sm:$0x3]
      %v336 = vld [vmem:[%s320 + $0x3c] sm:$0xf]
      %v337 = vld [vmem:[%s320 + $0x40] sm:$0xf]
      %v338 = vld [vmem:[%s320 + $0x44] sm:$0x3]
      %v339 = vld [vmem:[%s320 + $0x48] sm:$0xf]
      %v340 = vld [vmem:[%s320 + $0x4c] sm:$0xf]
      %v341 = vld [vmem:[%s320 + $0x50] sm:$0x3]
      %v342 = vld [vmem:[%s320 + $0x54] sm:$0xf]
      %v343 = vld [vmem:[%s320 + $0x58] sm:$0xf]
      %v344 = vld [vmem:[%s320 + $0x5c] sm:$0x3]
      %v345 = vld [vmem:[%s320 + $0x60] sm:$0xf]
      %v346 = vld [vmem:[%s320 + $0x64] sm:$0xf]
      %v347 = vld [vmem:[%s320 + $0x68] sm:$0x3]
      %v348 = vld [vmem:[%s320 + $0x6c] sm:$0xf]
      %v349 = vld [vmem:[%s320 + $0x70] sm:$0xf]
      %v350 = vld [vmem:[%s320 + $0x74] sm:$0x3]
      %v381 = vunpack.c.l.b16 %v253
      %v382 = vunpack.c.l.b16 %v254
      %v383 = vunpack.c.l.b16 %v255
      %v384 = vunpack.c.l.b16 %v256
      %v385 = vunpack.c.l.b16 %v257
      %v386 = vunpack.c.l.b16 %v258
      %v387 = vunpack.c.l.b16 %v259
      %v388 = vunpack.c.l.b16 %v260
      %v389 = vunpack.c.l.b16 %v261
      %v390 = vunpack.c.l.b16 %v262
      %v391 = vunpack.c.l.b16 %v263
      %v392 = vunpack.c.l.b16 %v264
      %v393 = vunpack.c.l.b16 %v265
      %v394 = vunpack.c.l.b16 %v266
      %v395 = vunpack.c.l.b16 %v267
      %v396 = vunpack.c.l.b16 %v268
      %v397 = vunpack.c.l.b16 %v269
      %v398 = vunpack.c.l.b16 %v270
      %v399 = vunpack.c.l.b16 %v271
      %v400 = vunpack.c.l.b16 %v272
      %v401 = vunpack.c.l.b16 %v273
      %v402 = vunpack.c.l.b16 %v274
      %v403 = vunpack.c.l.b16 %v275
      %v404 = vunpack.c.l.b16 %v276
      %v405 = vunpack.c.l.b16 %v277
      %v406 = vunpack.c.l.b16 %v278
      %v407 = vunpack.c.l.b16 %v279
      %v408 = vunpack.c.l.b16 %v280
      %v409 = vunpack.c.l.b16 %v281
      %v410 = vunpack.c.l.b16 %v282
      %v411 = vpack.c.b16 %v382, %v381
      %v412 = vpack.c.b16 %v383, %v383
      %v413 = vpack.c.b16 %v385, %v384
      %v414 = vpack.c.b16 %v386, %v386
      %v415 = vpack.c.b16 %v388, %v387
      %v416 = vpack.c.b16 %v389, %v389
      %v417 = vpack.c.b16 %v391, %v390
      %v418 = vpack.c.b16 %v392, %v392
      %v419 = vpack.c.b16 %v394, %v393
      %v420 = vpack.c.b16 %v395, %v395
      %v421 = vpack.c.b16 %v397, %v396
      %v422 = vpack.c.b16 %v398, %v398
      %v423 = vpack.c.b16 %v400, %v399
      %v424 = vpack.c.b16 %v401, %v401
      %v425 = vpack.c.b16 %v403, %v402
      %v426 = vpack.c.b16 %v404, %v404
      %v427 = vpack.c.b16 %v406, %v405
      %v428 = vpack.c.b16 %v407, %v407
      %v429 = vpack.c.b16 %v409, %v408
      %v430 = vpack.c.b16 %v410, %v410
      %vm431 = vsmask.f32 7424
      %v433 = vshrl.u32 %v411, 16
      %v435 = vshll.u32 %v411, 16
      %v437 = vrot.slane %v435, 1
      %v438 = vor.u32 %v433, %v437
      %v440 = vshll.u32 %v412, 16
      %v442 = vrot.slane %v440, 1
      %v443 = vsel %vm431, %v438, %v442
      %v444 = vshrl.u32 %v412, 16
      %v446 = vor.u32 %v444, %v442
      %v448 = vshrl.u32 %v413, 16
      %v450 = vshll.u32 %v413, 16
      %v452 = vrot.slane %v450, 1
      %v453 = vor.u32 %v448, %v452
      %v455 = vshll.u32 %v414, 16
      %v457 = vrot.slane %v455, 1
      %v458 = vsel %vm431, %v453, %v457
      %v459 = vshrl.u32 %v414, 16
      %v461 = vor.u32 %v459, %v457
      %v463 = vshrl.u32 %v415, 16
      %v465 = vshll.u32 %v415, 16
      %v467 = vrot.slane %v465, 1
      %v468 = vor.u32 %v463, %v467
      %v470 = vshll.u32 %v416, 16
      %v472 = vrot.slane %v470, 1
      %v473 = vsel %vm431, %v468, %v472
      %v474 = vshrl.u32 %v416, 16
      %v476 = vor.u32 %v474, %v472
      %v478 = vshrl.u32 %v417, 16
      %v480 = vshll.u32 %v417, 16
      %v482 = vrot.slane %v480, 1
      %v483 = vor.u32 %v478, %v482
      %v485 = vshll.u32 %v418, 16
      %v487 = vrot.slane %v485, 1
      %v488 = vsel %vm431, %v483, %v487
      %v489 = vshrl.u32 %v418, 16
      %v491 = vor.u32 %v489, %v487
      %v493 = vshrl.u32 %v419, 16
      %v495 = vshll.u32 %v419, 16
      %v497 = vrot.slane %v495, 1
      %v498 = vor.u32 %v493, %v497
      %v500 = vshll.u32 %v420, 16
      %v502 = vrot.slane %v500, 1
      %v503 = vsel %vm431, %v498, %v502
      %v504 = vshrl.u32 %v420, 16
      %v506 = vor.u32 %v504, %v502
      %v508 = vshrl.u32 %v421, 16
      %v510 = vshll.u32 %v421, 16
      %v512 = vrot.slane %v510, 1
      %v513 = vor.u32 %v508, %v512
      %v515 = vshll.u32 %v422, 16
      %v517 = vrot.slane %v515, 1
      %v518 = vsel %vm431, %v513, %v517
      %v519 = vshrl.u32 %v422, 16
      %v521 = vor.u32 %v519, %v517
      %v523 = vshrl.u32 %v423, 16
      %v525 = vshll.u32 %v423, 16
      %v527 = vrot.slane %v525, 1
      %v528 = vor.u32 %v523, %v527
      %v530 = vshll.u32 %v424, 16
      %v532 = vrot.slane %v530, 1
      %v533 = vsel %vm431, %v528, %v532
      %v534 = vshrl.u32 %v424, 16
      %v536 = vor.u32 %v534, %v532
      %v538 = vshrl.u32 %v425, 16
      %v540 = vshll.u32 %v425, 16
      %v542 = vrot.slane %v540, 1
      %v543 = vor.u32 %v538, %v542
      %v545 = vshll.u32 %v426, 16
      %v547 = vrot.slane %v545, 1
      %v548 = vsel %vm431, %v543, %v547
      %v549 = vshrl.u32 %v426, 16
      %v551 = vor.u32 %v549, %v547
      %v553 = vshrl.u32 %v427, 16
      %v555 = vshll.u32 %v427, 16
      %v557 = vrot.slane %v555, 1
      %v558 = vor.u32 %v553, %v557
      %v560 = vshll.u32 %v428, 16
      %v562 = vrot.slane %v560, 1
      %v563 = vsel %vm431, %v558, %v562
      %v564 = vshrl.u32 %v428, 16
      %v566 = vor.u32 %v564, %v562
      %v568 = vshrl.u32 %v429, 16
      %v570 = vshll.u32 %v429, 16
      %v572 = vrot.slane %v570, 1
      %v573 = vor.u32 %v568, %v572
      %v575 = vshll.u32 %v430, 16
      %v577 = vrot.slane %v575, 1
      %v578 = vsel %vm431, %v573, %v577
      %v579 = vshrl.u32 %v430, 16
      %v581 = vor.u32 %v579, %v577
      %582 = vrot.lane.b32.xlu0 %v443, 3
      %v583 = vpop.permute.xlu0 %582
      %584 = vrot.lane.b32.xlu0 %v446, 3
      %v585 = vpop.permute.xlu0 %584
      %586 = vrot.lane.b32.xlu0 %v458, 3
      %v587 = vpop.permute.xlu0 %586
      %588 = vrot.lane.b32.xlu0 %v461, 3
      %v589 = vpop.permute.xlu0 %588
      %590 = vrot.lane.b32.xlu0 %v473, 3
      %v591 = vpop.permute.xlu0 %590
      %592 = vrot.lane.b32.xlu0 %v476, 3
      %v593 = vpop.permute.xlu0 %592
      %594 = vrot.lane.b32.xlu0 %v488, 3
      %v595 = vpop.permute.xlu0 %594
      %596 = vrot.lane.b32.xlu0 %v491, 3
      %v597 = vpop.permute.xlu0 %596
      %598 = vrot.lane.b32.xlu0 %v503, 3
      %v599 = vpop.permute.xlu0 %598
      %600 = vrot.lane.b32.xlu0 %v506, 3
      %v601 = vpop.permute.xlu0 %600
      %602 = vrot.lane.b32.xlu0 %v518, 3
      %v603 = vpop.permute.xlu0 %602
      %604 = vrot.lane.b32.xlu0 %v521, 3
      %v605 = vpop.permute.xlu0 %604
      %606 = vrot.lane.b32.xlu0 %v533, 3
      %v607 = vpop.permute.xlu0 %606
      %608 = vrot.lane.b32.xlu0 %v536, 3
      %v609 = vpop.permute.xlu0 %608
      %610 = vrot.lane.b32.xlu0 %v548, 3
      %v611 = vpop.permute.xlu0 %610
      %612 = vrot.lane.b32.xlu0 %v551, 3
      %v613 = vpop.permute.xlu0 %612
      %614 = vrot.lane.b32.xlu0 %v563, 3
      %v615 = vpop.permute.xlu0 %614
      %616 = vrot.lane.b32.xlu0 %v566, 3
      %v617 = vpop.permute.xlu0 %616
      %618 = vrot.lane.b32.xlu0 %v578, 3
      %v619 = vpop.permute.xlu0 %618
      %620 = vrot.lane.b32.xlu0 %v581, 3
      %v621 = vpop.permute.xlu0 %620
      %vm622 = vcmask 1046528
      %v623 = vrot.slane %v411, 1
      %v624 = vrot.slane %v412, 1
      %v625 = vsel %vm622, %v623, %v624
      %v626 = vrot.slane %v413, 1
      %v627 = vrot.slane %v414, 1
      %v628 = vsel %vm622, %v626, %v627
      %v629 = vrot.slane %v415, 1
      %v630 = vrot.slane %v416, 1
      %v631 = vsel %vm622, %v629, %v630
      %v632 = vrot.slane %v417, 1
      %v633 = vrot.slane %v418, 1
      %v634 = vsel %vm622, %v632, %v633
      %v635 = vrot.slane %v419, 1
      %v636 = vrot.slane %v420, 1
      %v637 = vsel %vm622, %v635, %v636
      %v638 = vrot.slane %v421, 1
      %v639 = vrot.slane %v422, 1
      %v640 = vsel %vm622, %v638, %v639
      %v641 = vrot.slane %v423, 1
      %v642 = vrot.slane %v424, 1
      %v643 = vsel %vm622, %v641, %v642
      %v644 = vrot.slane %v425, 1
      %v645 = vrot.slane %v426, 1
      %v646 = vsel %vm622, %v644, %v645
      %v647 = vrot.slane %v427, 1
      %v648 = vrot.slane %v428, 1
      %v649 = vsel %vm622, %v647, %v648
      %v650 = vrot.slane %v429, 1
      %v651 = vrot.slane %v430, 1
      %v652 = vsel %vm622, %v650, %v651
      %653 = vrot.lane.b32.xlu0 %v625, 6
      %v654 = vpop.permute.xlu0 %653
      %655 = vrot.lane.b32.xlu0 %v624, 6
      %v656 = vpop.permute.xlu0 %655
      %657 = vrot.lane.b32.xlu0 %v628, 6
      %v658 = vpop.permute.xlu0 %657
      %659 = vrot.lane.b32.xlu0 %v627, 6
      %v660 = vpop.permute.xlu0 %659
      %661 = vrot.lane.b32.xlu0 %v631, 6
      %v662 = vpop.permute.xlu0 %661
      %663 = vrot.lane.b32.xlu0 %v630, 6
      %v664 = vpop.permute.xlu0 %663
      %665 = vrot.lane.b32.xlu0 %v634, 6
      %v666 = vpop.permute.xlu0 %665
      %667 = vrot.lane.b32.xlu0 %v633, 6
      %v668 = vpop.permute.xlu0 %667
      %669 = vrot.lane.b32.xlu0 %v637, 6
      %v670 = vpop.permute.xlu0 %669
      %671 = vrot.lane.b32.xlu0 %v636, 6
      %v672 = vpop.permute.xlu0 %671
      %673 = vrot.lane.b32.xlu0 %v640, 6
      %v674 = vpop.permute.xlu0 %673
      %675 = vrot.lane.b32.xlu0 %v639, 6
      %v676 = vpop.permute.xlu0 %675
      %677 = vrot.lane.b32.xlu0 %v643, 6
      %v678 = vpop.permute.xlu0 %677
      %679 = vrot.lane.b32.xlu0 %v642, 6
      %v680 = vpop.permute.xlu0 %679
      %681 = vrot.lane.b32.xlu0 %v646, 6
      %v682 = vpop.permute.xlu0 %681
      %683 = vrot.lane.b32.xlu0 %v645, 6
      %v684 = vpop.permute.xlu0 %683
      %685 = vrot.lane.b32.xlu0 %v649, 6
      %v686 = vpop.permute.xlu0 %685
      %687 = vrot.lane.b32.xlu0 %v648, 6
      %v688 = vpop.permute.xlu0 %687
      %689 = vrot.lane.b32.xlu0 %v652, 6
      %v690 = vpop.permute.xlu0 %689
      %691 = vrot.lane.b32.xlu0 %v651, 6
      %v692 = vpop.permute.xlu0 %691
      %v723 = vunpack.c.l.b16 %v287
      %v724 = vunpack.c.l.b16 %v288
      %v725 = vunpack.c.l.b16 %v289
      %v726 = vunpack.c.l.b16 %v290
      %v727 = vunpack.c.l.b16 %v291
      %v728 = vunpack.c.l.b16 %v292
      %v729 = vunpack.c.l.b16 %v293
      %v730 = vunpack.c.l.b16 %v294
      %v731 = vunpack.c.l.b16 %v295
      %v732 = vunpack.c.l.b16 %v296
      %v733 = vunpack.c.l.b16 %v297
      %v734 = vunpack.c.l.b16 %v298
      %v735 = vunpack.c.l.b16 %v299
      %v736 = vunpack.c.l.b16 %v300
      %v737 = vunpack.c.l.b16 %v301
      %v738 = vunpack.c.l.b16 %v302
      %v739 = vunpack.c.l.b16 %v303
      %v740 = vunpack.c.l.b16 %v304
      %v741 = vunpack.c.l.b16 %v305
      %v742 = vunpack.c.l.b16 %v306
      %v743 = vunpack.c.l.b16 %v307
      %v744 = vunpack.c.l.b16 %v308
      %v745 = vunpack.c.l.b16 %v309
      %v746 = vunpack.c.l.b16 %v310
      %v747 = vunpack.c.l.b16 %v311
      %v748 = vunpack.c.l.b16 %v312
      %v749 = vunpack.c.l.b16 %v313
      %v750 = vunpack.c.l.b16 %v314
      %v751 = vunpack.c.l.b16 %v315
      %v752 = vunpack.c.l.b16 %v316
      %v753 = vpack.c.b16 %v724, %v723
      %v754 = vpack.c.b16 %v725, %v725
      %v755 = vpack.c.b16 %v727, %v726
      %v756 = vpack.c.b16 %v728, %v728
      %v757 = vpack.c.b16 %v730, %v729
      %v758 = vpack.c.b16 %v731, %v731
      %v759 = vpack.c.b16 %v733, %v732
      %v760 = vpack.c.b16 %v734, %v734
      %v761 = vpack.c.b16 %v736, %v735
      %v762 = vpack.c.b16 %v737, %v737
      %v763 = vpack.c.b16 %v739, %v738
      %v764 = vpack.c.b16 %v740, %v740
      %v765 = vpack.c.b16 %v742, %v741
      %v766 = vpack.c.b16 %v743, %v743
      %v767 = vpack.c.b16 %v745, %v744
      %v768 = vpack.c.b16 %v746, %v746
      %v769 = vpack.c.b16 %v748, %v747
      %v770 = vpack.c.b16 %v749, %v749
      %v771 = vpack.c.b16 %v751, %v750
      %v772 = vpack.c.b16 %v752, %v752
      %773 = vrot.lane.b32.xlu0 %v753, 9
      %v774 = vpop.permute.xlu0 %773
      %775 = vrot.lane.b32.xlu0 %v754, 9
      %v776 = vpop.permute.xlu0 %775
      %777 = vrot.lane.b32.xlu0 %v755, 9
      %v778 = vpop.permute.xlu0 %777
      %779 = vrot.lane.b32.xlu0 %v756, 9
      %v780 = vpop.permute.xlu0 %779
      %781 = vrot.lane.b32.xlu0 %v757, 9
      %v782 = vpop.permute.xlu0 %781
      %783 = vrot.lane.b32.xlu0 %v758, 9
      %v784 = vpop.permute.xlu0 %783
      %785 = vrot.lane.b32.xlu0 %v759, 9
      %v786 = vpop.permute.xlu0 %785
      %787 = vrot.lane.b32.xlu0 %v760, 9
      %v788 = vpop.permute.xlu0 %787
      %789 = vrot.lane.b32.xlu0 %v761, 9
      %v790 = vpop.permute.xlu0 %789
      %791 = vrot.lane.b32.xlu0 %v762, 9
      %v792 = vpop.permute.xlu0 %791
      %793 = vrot.lane.b32.xlu0 %v763, 9
      %v794 = vpop.permute.xlu0 %793
      %795 = vrot.lane.b32.xlu0 %v764, 9
      %v796 = vpop.permute.xlu0 %795
      %797 = vrot.lane.b32.xlu0 %v765, 9
      %v798 = vpop.permute.xlu0 %797
      %799 = vrot.lane.b32.xlu0 %v766, 9
      %v800 = vpop.permute.xlu0 %799
      %801 = vrot.lane.b32.xlu0 %v767, 9
      %v802 = vpop.permute.xlu0 %801
      %803 = vrot.lane.b32.xlu0 %v768, 9
      %v804 = vpop.permute.xlu0 %803
      %805 = vrot.lane.b32.xlu0 %v769, 9
      %v806 = vpop.permute.xlu0 %805
      %807 = vrot.lane.b32.xlu0 %v770, 9
      %v808 = vpop.permute.xlu0 %807
      %809 = vrot.lane.b32.xlu0 %v771, 9
      %v810 = vpop.permute.xlu0 %809
      %811 = vrot.lane.b32.xlu0 %v772, 9
      %v812 = vpop.permute.xlu0 %811
      %v814 = vshrl.u32 %v753, 16
      %v816 = vshll.u32 %v753, 16
      %v818 = vrot.slane %v816, 1
      %v819 = vor.u32 %v814, %v818
      %v821 = vshll.u32 %v754, 16
      %v823 = vrot.slane %v821, 1
      %v824 = vsel %vm431, %v819, %v823
      %v825 = vshrl.u32 %v754, 16
      %v827 = vor.u32 %v825, %v823
      %v829 = vshrl.u32 %v755, 16
      %v831 = vshll.u32 %v755, 16
      %v833 = vrot.slane %v831, 1
      %v834 = vor.u32 %v829, %v833
      %v836 = vshll.u32 %v756, 16
      %v838 = vrot.slane %v836, 1
      %v839 = vsel %vm431, %v834, %v838
      %v840 = vshrl.u32 %v756, 16
      %v842 = vor.u32 %v840, %v838
      %v844 = vshrl.u32 %v757, 16
      %v846 = vshll.u32 %v757, 16
      %v848 = vrot.slane %v846, 1
      %v849 = vor.u32 %v844, %v848
      %v851 = vshll.u32 %v758, 16
      %v853 = vrot.slane %v851, 1
      %v854 = vsel %vm431, %v849, %v853
      %v855 = vshrl.u32 %v758, 16
      %v857 = vor.u32 %v855, %v853
      %v859 = vshrl.u32 %v759, 16
      %v861 = vshll.u32 %v759, 16
      %v863 = vrot.slane %v861, 1
      %v864 = vor.u32 %v859, %v863
      %v866 = vshll.u32 %v760, 16
      %v868 = vrot.slane %v866, 1
      %v869 = vsel %vm431, %v864, %v868
      %v870 = vshrl.u32 %v760, 16
      %v872 = vor.u32 %v870, %v868
      %v874 = vshrl.u32 %v761, 16
      %v876 = vshll.u32 %v761, 16
      %v878 = vrot.slane %v876, 1
      %v879 = vor.u32 %v874, %v878
      %v881 = vshll.u32 %v762, 16
      %v883 = vrot.slane %v881, 1
      %v884 = vsel %vm431, %v879, %v883
      %v885 = vshrl.u32 %v762, 16
      %v887 = vor.u32 %v885, %v883
      %v889 = vshrl.u32 %v763, 16
      %v891 = vshll.u32 %v763, 16
      %v893 = vrot.slane %v891, 1
      %v894 = vor.u32 %v889, %v893
      %v896 = vshll.u32 %v764, 16
      %v898 = vrot.slane %v896, 1
      %v899 = vsel %vm431, %v894, %v898
      %v900 = vshrl.u32 %v764, 16
      %v902 = vor.u32 %v900, %v898
      %v904 = vshrl.u32 %v765, 16
      %v906 = vshll.u32 %v765, 16
      %v908 = vrot.slane %v906, 1
      %v909 = vor.u32 %v904, %v908
      %v911 = vshll.u32 %v766, 16
      %v913 = vrot.slane %v911, 1
      %v914 = vsel %vm431, %v909, %v913
      %v915 = vshrl.u32 %v766, 16
      %v917 = vor.u32 %v915, %v913
      %v919 = vshrl.u32 %v767, 16
      %v921 = vshll.u32 %v767, 16
      %v923 = vrot.slane %v921, 1
      %v924 = vor.u32 %v919, %v923
      %v926 = vshll.u32 %v768, 16
      %v928 = vrot.slane %v926, 1
      %v929 = vsel %vm431, %v924, %v928
      %v930 = vshrl.u32 %v768, 16
      %v932 = vor.u32 %v930, %v928
      %v934 = vshrl.u32 %v769, 16
      %v936 = vshll.u32 %v769, 16
      %v938 = vrot.slane %v936, 1
      %v939 = vor.u32 %v934, %v938
      %v941 = vshll.u32 %v770, 16
      %v943 = vrot.slane %v941, 1
      %v944 = vsel %vm431, %v939, %v943
      %v945 = vshrl.u32 %v770, 16
      %v947 = vor.u32 %v945, %v943
      %v949 = vshrl.u32 %v771, 16
      %v951 = vshll.u32 %v771, 16
      %v953 = vrot.slane %v951, 1
      %v954 = vor.u32 %v949, %v953
      %v956 = vshll.u32 %v772, 16
      %v958 = vrot.slane %v956, 1
      %v959 = vsel %vm431, %v954, %v958
      %v960 = vshrl.u32 %v772, 16
      %v962 = vor.u32 %v960, %v958
      %963 = vrot.lane.b32.xlu0 %v824, 12
      %v964 = vpop.permute.xlu0 %963
      %965 = vrot.lane.b32.xlu0 %v827, 12
      %v966 = vpop.permute.xlu0 %965
      %967 = vrot.lane.b32.xlu0 %v839, 12
      %v968 = vpop.permute.xlu0 %967
      %969 = vrot.lane.b32.xlu0 %v842, 12
      %v970 = vpop.permute.xlu0 %969
      %971 = vrot.lane.b32.xlu0 %v854, 12
      %v972 = vpop.permute.xlu0 %971
      %973 = vrot.lane.b32.xlu0 %v857, 12
      %v974 = vpop.permute.xlu0 %973
      %975 = vrot.lane.b32.xlu0 %v869, 12
      %v976 = vpop.permute.xlu0 %975
      %977 = vrot.lane.b32.xlu0 %v872, 12
      %v978 = vpop.permute.xlu0 %977
      %979 = vrot.lane.b32.xlu0 %v884, 12
      %v980 = vpop.permute.xlu0 %979
      %981 = vrot.lane.b32.xlu0 %v887, 12
      %v982 = vpop.permute.xlu0 %981
      %983 = vrot.lane.b32.xlu0 %v899, 12
      %v984 = vpop.permute.xlu0 %983
      %985 = vrot.lane.b32.xlu0 %v902, 12
      %v986 = vpop.permute.xlu0 %985
      %987 = vrot.lane.b32.xlu0 %v914, 12
      %v988 = vpop.permute.xlu0 %987
      %989 = vrot.lane.b32.xlu0 %v917, 12
      %v990 = vpop.permute.xlu0 %989
      %991 = vrot.lane.b32.xlu0 %v929, 12
      %v992 = vpop.permute.xlu0 %991
      %993 = vrot.lane.b32.xlu0 %v932, 12
      %v994 = vpop.permute.xlu0 %993
      %995 = vrot.lane.b32.xlu0 %v944, 12
      %v996 = vpop.permute.xlu0 %995
      %997 = vrot.lane.b32.xlu0 %v947, 12
      %v998 = vpop.permute.xlu0 %997
      %999 = vrot.lane.b32.xlu0 %v959, 12
      %v1000 = vpop.permute.xlu0 %999
      %1001 = vrot.lane.b32.xlu0 %v962, 12
      %v1002 = vpop.permute.xlu0 %1001
      %v1003 = vrot.slane %v753, 1
      %v1004 = vrot.slane %v754, 1
      %v1005 = vsel %vm622, %v1003, %v1004
      %v1006 = vrot.slane %v755, 1
      %v1007 = vrot.slane %v756, 1
      %v1008 = vsel %vm622, %v1006, %v1007
      %v1009 = vrot.slane %v757, 1
      %v1010 = vrot.slane %v758, 1
      %v1011 = vsel %vm622, %v1009, %v1010
      %v1012 = vrot.slane %v759, 1
      %v1013 = vrot.slane %v760, 1
      %v1014 = vsel %vm622, %v1012, %v1013
      %v1015 = vrot.slane %v761, 1
      %v1016 = vrot.slane %v762, 1
      %v1017 = vsel %vm622, %v1015, %v1016
      %v1018 = vrot.slane %v763, 1
      %v1019 = vrot.slane %v764, 1
      %v1020 = vsel %vm622, %v1018, %v1019
      %v1021 = vrot.slane %v765, 1
      %v1022 = vrot.slane %v766, 1
      %v1023 = vsel %vm622, %v1021, %v1022
      %v1024 = vrot.slane %v767, 1
      %v1025 = vrot.slane %v768, 1
      %v1026 = vsel %vm622, %v1024, %v1025
      %v1027 = vrot.slane %v769, 1
      %v1028 = vrot.slane %v770, 1
      %v1029 = vsel %vm622, %v1027, %v1028
      %v1030 = vrot.slane %v771, 1
      %v1031 = vrot.slane %v772, 1
      %v1032 = vsel %vm622, %v1030, %v1031
      %1033 = vrot.lane.b32.xlu0 %v1005, 15
      %v1034 = vpop.permute.xlu0 %1033
      %1035 = vrot.lane.b32.xlu0 %v1004, 15
      %v1036 = vpop.permute.xlu0 %1035
      %1037 = vrot.lane.b32.xlu0 %v1008, 15
      %v1038 = vpop.permute.xlu0 %1037
      %1039 = vrot.lane.b32.xlu0 %v1007, 15
      %v1040 = vpop.permute.xlu0 %1039
      %1041 = vrot.lane.b32.xlu0 %v1011, 15
      %v1042 = vpop.permute.xlu0 %1041
      %1043 = vrot.lane.b32.xlu0 %v1010, 15
      %v1044 = vpop.permute.xlu0 %1043
      %1045 = vrot.lane.b32.xlu0 %v1014, 15
      %v1046 = vpop.permute.xlu0 %1045
      %1047 = vrot.lane.b32.xlu0 %v1013, 15
      %v1048 = vpop.permute.xlu0 %1047
      %1049 = vrot.lane.b32.xlu0 %v1017, 15
      %v1050 = vpop.permute.xlu0 %1049
      %1051 = vrot.lane.b32.xlu0 %v1016, 15
      %v1052 = vpop.permute.xlu0 %1051
      %1053 = vrot.lane.b32.xlu0 %v1020, 15
      %v1054 = vpop.permute.xlu0 %1053
      %1055 = vrot.lane.b32.xlu0 %v1019, 15
      %v1056 = vpop.permute.xlu0 %1055
      %1057 = vrot.lane.b32.xlu0 %v1023, 15
      %v1058 = vpop.permute.xlu0 %1057
      %1059 = vrot.lane.b32.xlu0 %v1022, 15
      %v1060 = vpop.permute.xlu0 %1059
      %1061 = vrot.lane.b32.xlu0 %v1026, 15
      %v1062 = vpop.permute.xlu0 %1061
      %1063 = vrot.lane.b32.xlu0 %v1025, 15
      %v1064 = vpop.permute.xlu0 %1063
      %1065 = vrot.lane.b32.xlu0 %v1029, 15
      %v1066 = vpop.permute.xlu0 %1065
      %1067 = vrot.lane.b32.xlu0 %v1028, 15
      %v1068 = vpop.permute.xlu0 %1067
      %1069 = vrot.lane.b32.xlu0 %v1032, 15
      %v1070 = vpop.permute.xlu0 %1069
      %1071 = vrot.lane.b32.xlu0 %v1031, 15
      %v1072 = vpop.permute.xlu0 %1071
      %v1103 = vunpack.c.l.b16 %v321
      %v1104 = vunpack.c.l.b16 %v322
      %v1105 = vunpack.c.l.b16 %v323
      %v1106 = vunpack.c.l.b16 %v324
      %v1107 = vunpack.c.l.b16 %v325
      %v1108 = vunpack.c.l.b16 %v326
      %v1109 = vunpack.c.l.b16 %v327
      %v1110 = vunpack.c.l.b16 %v328
      %v1111 = vunpack.c.l.b16 %v329
      %v1112 = vunpack.c.l.b16 %v330
      %v1113 = vunpack.c.l.b16 %v331
      %v1114 = vunpack.c.l.b16 %v332
      %v1115 = vunpack.c.l.b16 %v333
      %v1116 = vunpack.c.l.b16 %v334
      %v1117 = vunpack.c.l.b16 %v335
      %v1118 = vunpack.c.l.b16 %v336
      %v1119 = vunpack.c.l.b16 %v337
      %v1120 = vunpack.c.l.b16 %v338
      %v1121 = vunpack.c.l.b16 %v339
      %v1122 = vunpack.c.l.b16 %v340
      %v1123 = vunpack.c.l.b16 %v341
      %v1124 = vunpack.c.l.b16 %v342
      %v1125 = vunpack.c.l.b16 %v343
      %v1126 = vunpack.c.l.b16 %v344
      %v1127 = vunpack.c.l.b16 %v345
      %v1128 = vunpack.c.l.b16 %v346
      %v1129 = vunpack.c.l.b16 %v347
      %v1130 = vunpack.c.l.b16 %v348
      %v1131 = vunpack.c.l.b16 %v349
      %v1132 = vunpack.c.l.b16 %v350
      %v1133 = vpack.c.b16 %v1104, %v1103
      %v1134 = vpack.c.b16 %v1105, %v1105
      %v1135 = vpack.c.b16 %v1107, %v1106
      %v1136 = vpack.c.b16 %v1108, %v1108
      %v1137 = vpack.c.b16 %v1110, %v1109
      %v1138 = vpack.c.b16 %v1111, %v1111
      %v1139 = vpack.c.b16 %v1113, %v1112
      %v1140 = vpack.c.b16 %v1114, %v1114
      %v1141 = vpack.c.b16 %v1116, %v1115
      %v1142 = vpack.c.b16 %v1117, %v1117
      %v1143 = vpack.c.b16 %v1119, %v1118
      %v1144 = vpack.c.b16 %v1120, %v1120
      %v1145 = vpack.c.b16 %v1122, %v1121
      %v1146 = vpack.c.b16 %v1123, %v1123
      %v1147 = vpack.c.b16 %v1125, %v1124
      %v1148 = vpack.c.b16 %v1126, %v1126
      %v1149 = vpack.c.b16 %v1128, %v1127
      %v1150 = vpack.c.b16 %v1129, %v1129
      %v1151 = vpack.c.b16 %v1131, %v1130
      %v1152 = vpack.c.b16 %v1132, %v1132
      %1153 = vrot.lane.b32.xlu0 %v1133, 18
      %v1154 = vpop.permute.xlu0 %1153
      %1155 = vrot.lane.b32.xlu0 %v1134, 18
      %v1156 = vpop.permute.xlu0 %1155
      %1157 = vrot.lane.b32.xlu0 %v1135, 18
      %v1158 = vpop.permute.xlu0 %1157
      %1159 = vrot.lane.b32.xlu0 %v1136, 18
      %v1160 = vpop.permute.xlu0 %1159
      %1161 = vrot.lane.b32.xlu0 %v1137, 18
      %v1162 = vpop.permute.xlu0 %1161
      %1163 = vrot.lane.b32.xlu0 %v1138, 18
      %v1164 = vpop.permute.xlu0 %1163
      %1165 = vrot.lane.b32.xlu0 %v1139, 18
      %v1166 = vpop.permute.xlu0 %1165
      %1167 = vrot.lane.b32.xlu0 %v1140, 18
      %v1168 = vpop.permute.xlu0 %1167
      %1169 = vrot.lane.b32.xlu0 %v1141, 18
      %v1170 = vpop.permute.xlu0 %1169
      %1171 = vrot.lane.b32.xlu0 %v1142, 18
      %v1172 = vpop.permute.xlu0 %1171
      %1173 = vrot.lane.b32.xlu0 %v1143, 18
      %v1174 = vpop.permute.xlu0 %1173
      %1175 = vrot.lane.b32.xlu0 %v1144, 18
      %v1176 = vpop.permute.xlu0 %1175
      %1177 = vrot.lane.b32.xlu0 %v1145, 18
      %v1178 = vpop.permute.xlu0 %1177
      %1179 = vrot.lane.b32.xlu0 %v1146, 18
      %v1180 = vpop.permute.xlu0 %1179
      %1181 = vrot.lane.b32.xlu0 %v1147, 18
      %v1182 = vpop.permute.xlu0 %1181
      %1183 = vrot.lane.b32.xlu0 %v1148, 18
      %v1184 = vpop.permute.xlu0 %1183
      %1185 = vrot.lane.b32.xlu0 %v1149, 18
      %v1186 = vpop.permute.xlu0 %1185
      %1187 = vrot.lane.b32.xlu0 %v1150, 18
      %v1188 = vpop.permute.xlu0 %1187
      %1189 = vrot.lane.b32.xlu0 %v1151, 18
      %v1190 = vpop.permute.xlu0 %1189
      %1191 = vrot.lane.b32.xlu0 %v1152, 18
      %v1192 = vpop.permute.xlu0 %1191
      %v1194 = vshrl.u32 %v1133, 16
      %v1196 = vshll.u32 %v1133, 16
      %v1198 = vrot.slane %v1196, 1
      %v1199 = vor.u32 %v1194, %v1198
      %v1201 = vshll.u32 %v1134, 16
      %v1203 = vrot.slane %v1201, 1
      %v1204 = vsel %vm431, %v1199, %v1203
      %v1205 = vshrl.u32 %v1134, 16
      %v1207 = vor.u32 %v1205, %v1203
      %v1209 = vshrl.u32 %v1135, 16
      %v1211 = vshll.u32 %v1135, 16
      %v1213 = vrot.slane %v1211, 1
      %v1214 = vor.u32 %v1209, %v1213
      %v1216 = vshll.u32 %v1136, 16
      %v1218 = vrot.slane %v1216, 1
      %v1219 = vsel %vm431, %v1214, %v1218
      %v1220 = vshrl.u32 %v1136, 16
      %v1222 = vor.u32 %v1220, %v1218
      %v1224 = vshrl.u32 %v1137, 16
      %v1226 = vshll.u32 %v1137, 16
      %v1228 = vrot.slane %v1226, 1
      %v1229 = vor.u32 %v1224, %v1228
      %v1231 = vshll.u32 %v1138, 16
      %v1233 = vrot.slane %v1231, 1
      %v1234 = vsel %vm431, %v1229, %v1233
      %v1235 = vshrl.u32 %v1138, 16
      %v1237 = vor.u32 %v1235, %v1233
      %v1239 = vshrl.u32 %v1139, 16
      %v1241 = vshll.u32 %v1139, 16
      %v1243 = vrot.slane %v1241, 1
      %v1244 = vor.u32 %v1239, %v1243
      %v1246 = vshll.u32 %v1140, 16
      %v1248 = vrot.slane %v1246, 1
      %v1249 = vsel %vm431, %v1244, %v1248
      %v1250 = vshrl.u32 %v1140, 16
      %v1252 = vor.u32 %v1250, %v1248
      %v1254 = vshrl.u32 %v1141, 16
      %v1256 = vshll.u32 %v1141, 16
      %v1258 = vrot.slane %v1256, 1
      %v1259 = vor.u32 %v1254, %v1258
      %v1261 = vshll.u32 %v1142, 16
      %v1263 = vrot.slane %v1261, 1
      %v1264 = vsel %vm431, %v1259, %v1263
      %v1265 = vshrl.u32 %v1142, 16
      %v1267 = vor.u32 %v1265, %v1263
      %v1269 = vshrl.u32 %v1143, 16
      %v1271 = vshll.u32 %v1143, 16
      %v1273 = vrot.slane %v1271, 1
      %v1274 = vor.u32 %v1269, %v1273
      %v1276 = vshll.u32 %v1144, 16
      %v1278 = vrot.slane %v1276, 1
      %v1279 = vsel %vm431, %v1274, %v1278
      %v1280 = vshrl.u32 %v1144, 16
      %v1282 = vor.u32 %v1280, %v1278
      %v1284 = vshrl.u32 %v1145, 16
      %v1286 = vshll.u32 %v1145, 16
      %v1288 = vrot.slane %v1286, 1
      %v1289 = vor.u32 %v1284, %v1288
      %v1291 = vshll.u32 %v1146, 16
      %v1293 = vrot.slane %v1291, 1
      %v1294 = vsel %vm431, %v1289, %v1293
      %v1295 = vshrl.u32 %v1146, 16
      %v1297 = vor.u32 %v1295, %v1293
      %v1299 = vshrl.u32 %v1147, 16
      %v1301 = vshll.u32 %v1147, 16
      %v1303 = vrot.slane %v1301, 1
      %v1304 = vor.u32 %v1299, %v1303
      %v1306 = vshll.u32 %v1148, 16
      %v1308 = vrot.slane %v1306, 1
      %v1309 = vsel %vm431, %v1304, %v1308
      %v1310 = vshrl.u32 %v1148, 16
      %v1312 = vor.u32 %v1310, %v1308
      %v1314 = vshrl.u32 %v1149, 16
      %v1316 = vshll.u32 %v1149, 16
      %v1318 = vrot.slane %v1316, 1
      %v1319 = vor.u32 %v1314, %v1318
      %v1321 = vshll.u32 %v1150, 16
      %v1323 = vrot.slane %v1321, 1
      %v1324 = vsel %vm431, %v1319, %v1323
      %v1325 = vshrl.u32 %v1150, 16
      %v1327 = vor.u32 %v1325, %v1323
      %v1329 = vshrl.u32 %v1151, 16
      %v1331 = vshll.u32 %v1151, 16
      %v1333 = vrot.slane %v1331, 1
      %v1334 = vor.u32 %v1329, %v1333
      %v1336 = vshll.u32 %v1152, 16
      %v1338 = vrot.slane %v1336, 1
      %v1339 = vsel %vm431, %v1334, %v1338
      %v1340 = vshrl.u32 %v1152, 16
      %v1342 = vor.u32 %v1340, %v1338
      %1343 = vrot.lane.b32.xlu0 %v1204, 21
      %v1344 = vpop.permute.xlu0 %1343
      %1345 = vrot.lane.b32.xlu0 %v1207, 21
      %v1346 = vpop.permute.xlu0 %1345
      %1347 = vrot.lane.b32.xlu0 %v1219, 21
      %v1348 = vpop.permute.xlu0 %1347
      %1349 = vrot.lane.b32.xlu0 %v1222, 21
      %v1350 = vpop.permute.xlu0 %1349
      %1351 = vrot.lane.b32.xlu0 %v1234, 21
      %v1352 = vpop.permute.xlu0 %1351
      %1353 = vrot.lane.b32.xlu0 %v1237, 21
      %v1354 = vpop.permute.xlu0 %1353
      %1355 = vrot.lane.b32.xlu0 %v1249, 21
      %v1356 = vpop.permute.xlu0 %1355
      %1357 = vrot.lane.b32.xlu0 %v1252, 21
      %v1358 = vpop.permute.xlu0 %1357
      %1359 = vrot.lane.b32.xlu0 %v1264, 21
      %v1360 = vpop.permute.xlu0 %1359
      %1361 = vrot.lane.b32.xlu0 %v1267, 21
      %v1362 = vpop.permute.xlu0 %1361
      %1363 = vrot.lane.b32.xlu0 %v1279, 21
      %v1364 = vpop.permute.xlu0 %1363
      %1365 = vrot.lane.b32.xlu0 %v1282, 21
      %v1366 = vpop.permute.xlu0 %1365
      %1367 = vrot.lane.b32.xlu0 %v1294, 21
      %v1368 = vpop.permute.xlu0 %1367
      %1369 = vrot.lane.b32.xlu0 %v1297, 21
      %v1370 = vpop.permute.xlu0 %1369
      %1371 = vrot.lane.b32.xlu0 %v1309, 21
      %v1372 = vpop.permute.xlu0 %1371
      %1373 = vrot.lane.b32.xlu0 %v1312, 21
      %v1374 = vpop.permute.xlu0 %1373
      %1375 = vrot.lane.b32.xlu0 %v1324, 21
      %v1376 = vpop.permute.xlu0 %1375
      %1377 = vrot.lane.b32.xlu0 %v1327, 21
      %v1378 = vpop.permute.xlu0 %1377
      %1379 = vrot.lane.b32.xlu0 %v1339, 21
      %v1380 = vpop.permute.xlu0 %1379
      %1381 = vrot.lane.b32.xlu0 %v1342, 21
      %v1382 = vpop.permute.xlu0 %1381
      %v1383 = vrot.slane %v1133, 1
      %v1384 = vrot.slane %v1134, 1
      %v1385 = vsel %vm622, %v1383, %v1384
      %v1386 = vrot.slane %v1135, 1
      %v1387 = vrot.slane %v1136, 1
      %v1388 = vsel %vm622, %v1386, %v1387
      %v1389 = vrot.slane %v1137, 1
      %v1390 = vrot.slane %v1138, 1
      %v1391 = vsel %vm622, %v1389, %v1390
      %v1392 = vrot.slane %v1139, 1
      %v1393 = vrot.slane %v1140, 1
      %v1394 = vsel %vm622, %v1392, %v1393
      %v1395 = vrot.slane %v1141, 1
      %v1396 = vrot.slane %v1142, 1
      %v1397 = vsel %vm622, %v1395, %v1396
      %v1398 = vrot.slane %v1143, 1
      %v1399 = vrot.slane %v1144, 1
      %v1400 = vsel %vm622, %v1398, %v1399
      %v1401 = vrot.slane %v1145, 1
      %v1402 = vrot.slane %v1146, 1
      %v1403 = vsel %vm622, %v1401, %v1402
      %v1404 = vrot.slane %v1147, 1
      %v1405 = vrot.slane %v1148, 1
      %v1406 = vsel %vm622, %v1404, %v1405
      %v1407 = vrot.slane %v1149, 1
      %v1408 = vrot.slane %v1150, 1
      %v1409 = vsel %vm622, %v1407, %v1408
      %v1410 = vrot.slane %v1151, 1
      %v1411 = vrot.slane %v1152, 1
      %v1412 = vsel %vm622, %v1410, %v1411
      %1413 = vrot.lane.b32.xlu0 %v1385, 24
      %v1414 = vpop.permute.xlu0 %1413
      %1415 = vrot.lane.b32.xlu0 %v1384, 24
      %v1416 = vpop.permute.xlu0 %1415
      %1417 = vrot.lane.b32.xlu0 %v1388, 24
      %v1418 = vpop.permute.xlu0 %1417
      %1419 = vrot.lane.b32.xlu0 %v1387, 24
      %v1420 = vpop.permute.xlu0 %1419
      %1421 = vrot.lane.b32.xlu0 %v1391, 24
      %v1422 = vpop.permute.xlu0 %1421
      %1423 = vrot.lane.b32.xlu0 %v1390, 24
      %v1424 = vpop.permute.xlu0 %1423
      %1425 = vrot.lane.b32.xlu0 %v1394, 24
      %v1426 = vpop.permute.xlu0 %1425
      %1427 = vrot.lane.b32.xlu0 %v1393, 24
      %v1428 = vpop.permute.xlu0 %1427
      %1429 = vrot.lane.b32.xlu0 %v1397, 24
      %v1430 = vpop.permute.xlu0 %1429
      %1431 = vrot.lane.b32.xlu0 %v1396, 24
      %v1432 = vpop.permute.xlu0 %1431
      %1433 = vrot.lane.b32.xlu0 %v1400, 24
      %v1434 = vpop.permute.xlu0 %1433
      %1435 = vrot.lane.b32.xlu0 %v1399, 24
      %v1436 = vpop.permute.xlu0 %1435
      %1437 = vrot.lane.b32.xlu0 %v1403, 24
      %v1438 = vpop.permute.xlu0 %1437
      %1439 = vrot.lane.b32.xlu0 %v1402, 24
      %v1440 = vpop.permute.xlu0 %1439
      %1441 = vrot.lane.b32.xlu0 %v1406, 24
      %v1442 = vpop.permute.xlu0 %1441
      %1443 = vrot.lane.b32.xlu0 %v1405, 24
      %v1444 = vpop.permute.xlu0 %1443
      %1445 = vrot.lane.b32.xlu0 %v1409, 24
      %v1446 = vpop.permute.xlu0 %1445
      %1447 = vrot.lane.b32.xlu0 %v1408, 24
      %v1448 = vpop.permute.xlu0 %1447
      %1449 = vrot.lane.b32.xlu0 %v1412, 24
      %v1450 = vpop.permute.xlu0 %1449
      %1451 = vrot.lane.b32.xlu0 %v1411, 24
      %v1452 = vpop.permute.xlu0 %1451
      %vm1453 = vcmask 23552
      %v1455 = vsel %vm1453, %v411, %v583
      %v1457 = vsel %vm1453, %v412, %v585
      %v1459 = vsel %vm1453, %v413, %v587
      %v1461 = vsel %vm1453, %v414, %v589
      %v1463 = vsel %vm1453, %v415, %v591
      %v1465 = vsel %vm1453, %v416, %v593
      %v1467 = vsel %vm1453, %v417, %v595
      %v1469 = vsel %vm1453, %v418, %v597
      %v1471 = vsel %vm1453, %v419, %v599
      %v1473 = vsel %vm1453, %v420, %v601
      %v1475 = vsel %vm1453, %v421, %v603
      %v1477 = vsel %vm1453, %v422, %v605
      %v1479 = vsel %vm1453, %v423, %v607
      %v1481 = vsel %vm1453, %v424, %v609
      %v1483 = vsel %vm1453, %v425, %v611
      %v1485 = vsel %vm1453, %v426, %v613
      %v1487 = vsel %vm1453, %v427, %v615
      %v1489 = vsel %vm1453, %v428, %v617
      %v1491 = vsel %vm1453, %v429, %v619
      %v1493 = vsel %vm1453, %v430, %v621
      %vm1494 = vcmask 48128
      %v1496 = vsel %vm1494, %v1455, %v654
      %v1498 = vsel %vm1494, %v1457, %v656
      %v1500 = vsel %vm1494, %v1459, %v658
      %v1502 = vsel %vm1494, %v1461, %v660
      %v1504 = vsel %vm1494, %v1463, %v662
      %v1506 = vsel %vm1494, %v1465, %v664
      %v1508 = vsel %vm1494, %v1467, %v666
      %v1510 = vsel %vm1494, %v1469, %v668
      %v1512 = vsel %vm1494, %v1471, %v670
      %v1514 = vsel %vm1494, %v1473, %v672
      %v1516 = vsel %vm1494, %v1475, %v674
      %v1518 = vsel %vm1494, %v1477, %v676
      %v1520 = vsel %vm1494, %v1479, %v678
      %v1522 = vsel %vm1494, %v1481, %v680
      %v1524 = vsel %vm1494, %v1483, %v682
      %v1526 = vsel %vm1494, %v1485, %v684
      %v1528 = vsel %vm1494, %v1487, %v686
      %v1530 = vsel %vm1494, %v1489, %v688
      %v1532 = vsel %vm1494, %v1491, %v690
      %v1534 = vsel %vm1494, %v1493, %v692
      %vm1535 = vcmask 72704
      %v1537 = vsel %vm1535, %v1496, %v774
      %v1539 = vsel %vm1535, %v1498, %v776
      %v1541 = vsel %vm1535, %v1500, %v778
      %v1543 = vsel %vm1535, %v1502, %v780
      %v1545 = vsel %vm1535, %v1504, %v782
      %v1547 = vsel %vm1535, %v1506, %v784
      %v1549 = vsel %vm1535, %v1508, %v786
      %v1551 = vsel %vm1535, %v1510, %v788
      %v1553 = vsel %vm1535, %v1512, %v790
      %v1555 = vsel %vm1535, %v1514, %v792
      %v1557 = vsel %vm1535, %v1516, %v794
      %v1559 = vsel %vm1535, %v1518, %v796
      %v1561 = vsel %vm1535, %v1520, %v798
      %v1563 = vsel %vm1535, %v1522, %v800
      %v1565 = vsel %vm1535, %v1524, %v802
      %v1567 = vsel %vm1535, %v1526, %v804
      %v1569 = vsel %vm1535, %v1528, %v806
      %v1571 = vsel %vm1535, %v1530, %v808
      %v1573 = vsel %vm1535, %v1532, %v810
      %v1575 = vsel %vm1535, %v1534, %v812
      %vm1576 = vcmask 97280
      %v1578 = vsel %vm1576, %v1537, %v964
      %v1580 = vsel %vm1576, %v1539, %v966
      %v1582 = vsel %vm1576, %v1541, %v968
      %v1584 = vsel %vm1576, %v1543, %v970
      %v1586 = vsel %vm1576, %v1545, %v972
      %v1588 = vsel %vm1576, %v1547, %v974
      %v1590 = vsel %vm1576, %v1549, %v976
      %v1592 = vsel %vm1576, %v1551, %v978
      %v1594 = vsel %vm1576, %v1553, %v980
      %v1596 = vsel %vm1576, %v1555, %v982
      %v1598 = vsel %vm1576, %v1557, %v984
      %v1600 = vsel %vm1576, %v1559, %v986
      %v1602 = vsel %vm1576, %v1561, %v988
      %v1604 = vsel %vm1576, %v1563, %v990
      %v1606 = vsel %vm1576, %v1565, %v992
      %v1608 = vsel %vm1576, %v1567, %v994
      %v1610 = vsel %vm1576, %v1569, %v996
      %v1612 = vsel %vm1576, %v1571, %v998
      %v1614 = vsel %vm1576, %v1573, %v1000
      %v1616 = vsel %vm1576, %v1575, %v1002
      %vm1617 = vcmask 121856
      %v1619 = vsel %vm1617, %v1578, %v1034
      %v1621 = vsel %vm1617, %v1580, %v1036
      %v1623 = vsel %vm1617, %v1582, %v1038
      %v1625 = vsel %vm1617, %v1584, %v1040
      %v1627 = vsel %vm1617, %v1586, %v1042
      %v1629 = vsel %vm1617, %v1588, %v1044
      %v1631 = vsel %vm1617, %v1590, %v1046
      %v1633 = vsel %vm1617, %v1592, %v1048
      %v1635 = vsel %vm1617, %v1594, %v1050
      %v1637 = vsel %vm1617, %v1596, %v1052
      %v1639 = vsel %vm1617, %v1598, %v1054
      %v1641 = vsel %vm1617, %v1600, %v1056
      %v1643 = vsel %vm1617, %v1602, %v1058
      %v1645 = vsel %vm1617, %v1604, %v1060
      %v1647 = vsel %vm1617, %v1606, %v1062
      %v1649 = vsel %vm1617, %v1608, %v1064
      %v1651 = vsel %vm1617, %v1610, %v1066
      %v1653 = vsel %vm1617, %v1612, %v1068
      %v1655 = vsel %vm1617, %v1614, %v1070
      %v1657 = vsel %vm1617, %v1616, %v1072
      %vm1658 = vcmask 146432
      %v1660 = vsel %vm1658, %v1619, %v1154
      %v1662 = vsel %vm1658, %v1621, %v1156
      %v1664 = vsel %vm1658, %v1623, %v1158
      %v1666 = vsel %vm1658, %v1625, %v1160
      %v1668 = vsel %vm1658, %v1627, %v1162
      %v1670 = vsel %vm1658, %v1629, %v1164
      %v1672 = vsel %vm1658, %v1631, %v1166
      %v1674 = vsel %vm1658, %v1633, %v1168
      %v1676 = vsel %vm1658, %v1635, %v1170
      %v1678 = vsel %vm1658, %v1637, %v1172
      %v1680 = vsel %vm1658, %v1639, %v1174
      %v1682 = vsel %vm1658, %v1641, %v1176
      %v1684 = vsel %vm1658, %v1643, %v1178
      %v1686 = vsel %vm1658, %v1645, %v1180
      %v1688 = vsel %vm1658, %v1647, %v1182
      %v1690 = vsel %vm1658, %v1649, %v1184
      %v1692 = vsel %vm1658, %v1651, %v1186
      %v1694 = vsel %vm1658, %v1653, %v1188
      %v1696 = vsel %vm1658, %v1655, %v1190
      %v1698 = vsel %vm1658, %v1657, %v1192
      %vm1699 = vcmask 171008
      %v1701 = vsel %vm1699, %v1660, %v1344
      %v1703 = vsel %vm1699, %v1662, %v1346
      %v1705 = vsel %vm1699, %v1664, %v1348
      %v1707 = vsel %vm1699, %v1666, %v1350
      %v1709 = vsel %vm1699, %v1668, %v1352
      %v1711 = vsel %vm1699, %v1670, %v1354
      %v1713 = vsel %vm1699, %v1672, %v1356
      %v1715 = vsel %vm1699, %v1674, %v1358
      %v1717 = vsel %vm1699, %v1676, %v1360
      %v1719 = vsel %vm1699, %v1678, %v1362
      %v1721 = vsel %vm1699, %v1680, %v1364
      %v1723 = vsel %vm1699, %v1682, %v1366
      %v1725 = vsel %vm1699, %v1684, %v1368
      %v1727 = vsel %vm1699, %v1686, %v1370
      %v1729 = vsel %vm1699, %v1688, %v1372
      %v1731 = vsel %vm1699, %v1690, %v1374
      %v1733 = vsel %vm1699, %v1692, %v1376
      %v1735 = vsel %vm1699, %v1694, %v1378
      %v1737 = vsel %vm1699, %v1696, %v1380
      %v1739 = vsel %vm1699, %v1698, %v1382
      %vm1740 = vcmask 195584
      %v1742 = vsel %vm1740, %v1701, %v1414
      %v1744 = vsel %vm1740, %v1703, %v1416
      %v1746 = vsel %vm1740, %v1705, %v1418
      %v1748 = vsel %vm1740, %v1707, %v1420
      %v1750 = vsel %vm1740, %v1709, %v1422
      %v1752 = vsel %vm1740, %v1711, %v1424
      %v1754 = vsel %vm1740, %v1713, %v1426
      %v1756 = vsel %vm1740, %v1715, %v1428
      %v1758 = vsel %vm1740, %v1717, %v1430
      %v1760 = vsel %vm1740, %v1719, %v1432
      %v1762 = vsel %vm1740, %v1721, %v1434
      %v1764 = vsel %vm1740, %v1723, %v1436
      %v1766 = vsel %vm1740, %v1725, %v1438
      %v1768 = vsel %vm1740, %v1727, %v1440
      %v1770 = vsel %vm1740, %v1729, %v1442
      %v1772 = vsel %vm1740, %v1731, %v1444
      %v1774 = vsel %vm1740, %v1733, %v1446
      %v1776 = vsel %vm1740, %v1735, %v1448
      %v1778 = vsel %vm1740, %v1737, %v1450
      %v1780 = vsel %vm1740, %v1739, %v1452
      %v1801 = vcombine.high %v1742, %v1742
      %v1803 = vunpack.c.l.s4 1966171168
      %v1804 = vunpack.c.0.s8 %v1803
      %v1805 = vlaneseq
      %v1806 = vshrl.u32 %v1805, 7
      %v1807 = vsub.s32 %v1804, %v1806
      %v1808 = vrot.slane %v1742, %v1807
      %v1810 = vunpack.c.l.s4 1966171168
      %v1811 = vunpack.c.0.s8 %v1810
      %v1812 = vlaneseq
      %v1813 = vshrl.u32 %v1812, 7
      %v1814 = vsub.s32 %v1811, %v1813
      %v1815 = vrot.slane %v1801, %v1814
      %v1816 = vcombine.high %v1808, %v1808
      %v1817 = vcombine.high %v1815, %v1815
      %v1819 = vunpack.c.l.s4 1966171168
      %v1820 = vunpack.c.0.s8 %v1819
      %v1821 = vlaneseq
      %v1822 = vshrl.u32 %v1821, 7
      %v1823 = vsub.s32 %v1820, %v1822
      %v1824 = vrot.slane %v1808, %v1823
      %v1826 = vunpack.c.l.s4 1966171168
      %v1827 = vunpack.c.0.s8 %v1826
      %v1828 = vlaneseq
      %v1829 = vshrl.u32 %v1828, 7
      %v1830 = vsub.s32 %v1827, %v1829
      %v1831 = vrot.slane %v1815, %v1830
      %v1833 = vunpack.c.l.s4 1966171168
      %v1834 = vunpack.c.0.s8 %v1833
      %v1835 = vlaneseq
      %v1836 = vshrl.u32 %v1835, 7
      %v1837 = vsub.s32 %v1834, %v1836
      %v1838 = vrot.slane %v1816, %v1837
      %v1840 = vunpack.c.l.s4 1966171168
      %v1841 = vunpack.c.0.s8 %v1840
      %v1842 = vlaneseq
      %v1843 = vshrl.u32 %v1842, 7
      %v1844 = vsub.s32 %v1841, %v1843
      %v1845 = vrot.slane %v1817, %v1844
      %v1846 = vcombine.high %v1824, %v1824
      %v1847 = vcombine.high %v1831, %v1831
      %v1848 = vcombine.high %v1838, %v1838
      %v1849 = vcombine.high %v1845, %v1845
      %v1851 = vunpack.c.l.s4 1966171168
      %v1852 = vunpack.c.0.s8 %v1851
      %v1853 = vlaneseq
      %v1854 = vshrl.u32 %v1853, 7
      %v1855 = vsub.s32 %v1852, %v1854
      %v1856 = vrot.slane %v1744, %v1855
      %v1858 = vunpack.c.l.s4 1966171168
      %v1859 = vunpack.c.0.s8 %v1858
      %v1860 = vlaneseq
      %v1861 = vshrl.u32 %v1860, 7
      %v1862 = vsub.s32 %v1859, %v1861
      %v1863 = vrot.slane %v1856, %v1862
      %v1864 = vcombine.high %v1746, %v1746
      %v1866 = vunpack.c.l.s4 1966171168
      %v1867 = vunpack.c.0.s8 %v1866
      %v1868 = vlaneseq
      %v1869 = vshrl.u32 %v1868, 7
      %v1870 = vsub.s32 %v1867, %v1869
      %v1871 = vrot.slane %v1746, %v1870
      %v1873 = vunpack.c.l.s4 1966171168
      %v1874 = vunpack.c.0.s8 %v1873
      %v1875 = vlaneseq
      %v1876 = vshrl.u32 %v1875, 7
      %v1877 = vsub.s32 %v1874, %v1876
      %v1878 = vrot.slane %v1864, %v1877
      %v1879 = vcombine.high %v1871, %v1871
      %v1880 = vcombine.high %v1878, %v1878
      %v1882 = vunpack.c.l.s4 1966171168
      %v1883 = vunpack.c.0.s8 %v1882
      %v1884 = vlaneseq
      %v1885 = vshrl.u32 %v1884, 7
      %v1886 = vsub.s32 %v1883, %v1885
      %v1887 = vrot.slane %v1871, %v1886
      %v1889 = vunpack.c.l.s4 1966171168
      %v1890 = vunpack.c.0.s8 %v1889
      %v1891 = vlaneseq
      %v1892 = vshrl.u32 %v1891, 7
      %v1893 = vsub.s32 %v1890, %v1892
      %v1894 = vrot.slane %v1878, %v1893
      %v1896 = vunpack.c.l.s4 1966171168
      %v1897 = vunpack.c.0.s8 %v1896
      %v1898 = vlaneseq
      %v1899 = vshrl.u32 %v1898, 7
      %v1900 = vsub.s32 %v1897, %v1899
      %v1901 = vrot.slane %v1879, %v1900
      %v1903 = vunpack.c.l.s4 1966171168
      %v1904 = vunpack.c.0.s8 %v1903
      %v1905 = vlaneseq
      %v1906 = vshrl.u32 %v1905, 7
      %v1907 = vsub.s32 %v1904, %v1906
      %v1908 = vrot.slane %v1880, %v1907
      %v1909 = vcombine.high %v1887, %v1887
      %v1910 = vcombine.high %v1894, %v1894
      %v1911 = vcombine.high %v1901, %v1901
      %v1912 = vcombine.high %v1908, %v1908
      %v1914 = vunpack.c.l.s4 1966171168
      %v1915 = vunpack.c.0.s8 %v1914
      %v1916 = vlaneseq
      %v1917 = vshrl.u32 %v1916, 7
      %v1918 = vsub.s32 %v1915, %v1917
      %v1919 = vrot.slane %v1748, %v1918
      %v1921 = vunpack.c.l.s4 1966171168
      %v1922 = vunpack.c.0.s8 %v1921
      %v1923 = vlaneseq
      %v1924 = vshrl.u32 %v1923, 7
      %v1925 = vsub.s32 %v1922, %v1924
      %v1926 = vrot.slane %v1919, %v1925
      %v1927 = vcombine.high %v1750, %v1750
      %v1929 = vunpack.c.l.s4 1966171168
      %v1930 = vunpack.c.0.s8 %v1929
      %v1931 = vlaneseq
      %v1932 = vshrl.u32 %v1931, 7
      %v1933 = vsub.s32 %v1930, %v1932
      %v1934 = vrot.slane %v1750, %v1933
      %v1936 = vunpack.c.l.s4 1966171168
      %v1937 = vunpack.c.0.s8 %v1936
      %v1938 = vlaneseq
      %v1939 = vshrl.u32 %v1938, 7
      %v1940 = vsub.s32 %v1937, %v1939
      %v1941 = vrot.slane %v1927, %v1940
      %v1942 = vcombine.high %v1934, %v1934
      %v1943 = vcombine.high %v1941, %v1941
      %v1945 = vunpack.c.l.s4 1966171168
      %v1946 = vunpack.c.0.s8 %v1945
      %v1947 = vlaneseq
      %v1948 = vshrl.u32 %v1947, 7
      %v1949 = vsub.s32 %v1946, %v1948
      %v1950 = vrot.slane %v1934, %v1949
      %v1952 = vunpack.c.l.s4 1966171168
      %v1953 = vunpack.c.0.s8 %v1952
      %v1954 = vlaneseq
      %v1955 = vshrl.u32 %v1954, 7
      %v1956 = vsub.s32 %v1953, %v1955
      %v1957 = vrot.slane %v1941, %v1956
      %v1959 = vunpack.c.l.s4 1966171168
      %v1960 = vunpack.c.0.s8 %v1959
      %v1961 = vlaneseq
      %v1962 = vshrl.u32 %v1961, 7
      %v1963 = vsub.s32 %v1960, %v1962
      %v1964 = vrot.slane %v1942, %v1963
      %v1966 = vunpack.c.l.s4 1966171168
      %v1967 = vunpack.c.0.s8 %v1966
      %v1968 = vlaneseq
      %v1969 = vshrl.u32 %v1968, 7
      %v1970 = vsub.s32 %v1967, %v1969
      %v1971 = vrot.slane %v1943, %v1970
      %v1972 = vcombine.high %v1950, %v1950
      %v1973 = vcombine.high %v1957, %v1957
      %v1974 = vcombine.high %v1964, %v1964
      %v1975 = vcombine.high %v1971, %v1971
      %v1977 = vunpack.c.l.s4 1966171168
      %v1978 = vunpack.c.0.s8 %v1977
      %v1979 = vlaneseq
      %v1980 = vshrl.u32 %v1979, 7
      %v1981 = vsub.s32 %v1978, %v1980
      %v1982 = vrot.slane %v1752, %v1981
      %v1984 = vunpack.c.l.s4 1966171168
      %v1985 = vunpack.c.0.s8 %v1984
      %v1986 = vlaneseq
      %v1987 = vshrl.u32 %v1986, 7
      %v1988 = vsub.s32 %v1985, %v1987
      %v1989 = vrot.slane %v1982, %v1988
      %v1990 = vcombine.high %v1754, %v1754
      %v1992 = vunpack.c.l.s4 1966171168
      %v1993 = vunpack.c.0.s8 %v1992
      %v1994 = vlaneseq
      %v1995 = vshrl.u32 %v1994, 7
      %v1996 = vsub.s32 %v1993, %v1995
      %v1997 = vrot.slane %v1754, %v1996
      %v1999 = vunpack.c.l.s4 1966171168
      %v2000 = vunpack.c.0.s8 %v1999
      %v2001 = vlaneseq
      %v2002 = vshrl.u32 %v2001, 7
      %v2003 = vsub.s32 %v2000, %v2002
      %v2004 = vrot.slane %v1990, %v2003
      %v2005 = vcombine.high %v1997, %v1997
      %v2006 = vcombine.high %v2004, %v2004
      %v2008 = vunpack.c.l.s4 1966171168
      %v2009 = vunpack.c.0.s8 %v2008
      %v2010 = vlaneseq
      %v2011 = vshrl.u32 %v2010, 7
      %v2012 = vsub.s32 %v2009, %v2011
      %v2013 = vrot.slane %v1997, %v2012
      %v2015 = vunpack.c.l.s4 1966171168
      %v2016 = vunpack.c.0.s8 %v2015
      %v2017 = vlaneseq
      %v2018 = vshrl.u32 %v2017, 7
      %v2019 = vsub.s32 %v2016, %v2018
      %v2020 = vrot.slane %v2004, %v2019
      %v2022 = vunpack.c.l.s4 1966171168
      %v2023 = vunpack.c.0.s8 %v2022
      %v2024 = vlaneseq
      %v2025 = vshrl.u32 %v2024, 7
      %v2026 = vsub.s32 %v2023, %v2025
      %v2027 = vrot.slane %v2005, %v2026
      %v2029 = vunpack.c.l.s4 1966171168
      %v2030 = vunpack.c.0.s8 %v2029
      %v2031 = vlaneseq
      %v2032 = vshrl.u32 %v2031, 7
      %v2033 = vsub.s32 %v2030, %v2032
      %v2034 = vrot.slane %v2006, %v2033
      %v2035 = vcombine.high %v2013, %v2013
      %v2036 = vcombine.high %v2020, %v2020
      %v2037 = vcombine.high %v2027, %v2027
      %v2038 = vcombine.high %v2034, %v2034
      %v2040 = vunpack.c.l.s4 1966171168
      %v2041 = vunpack.c.0.s8 %v2040
      %v2042 = vlaneseq
      %v2043 = vshrl.u32 %v2042, 7
      %v2044 = vsub.s32 %v2041, %v2043
      %v2045 = vrot.slane %v1756, %v2044
      %v2047 = vunpack.c.l.s4 1966171168
      %v2048 = vunpack.c.0.s8 %v2047
      %v2049 = vlaneseq
      %v2050 = vshrl.u32 %v2049, 7
      %v2051 = vsub.s32 %v2048, %v2050
      %v2052 = vrot.slane %v2045, %v2051
      %v2053 = vcombine.high %v1758, %v1758
      %v2055 = vunpack.c.l.s4 1966171168
      %v2056 = vunpack.c.0.s8 %v2055
      %v2057 = vlaneseq
      %v2058 = vshrl.u32 %v2057, 7
      %v2059 = vsub.s32 %v2056, %v2058
      %v2060 = vrot.slane %v1758, %v2059
      %v2062 = vunpack.c.l.s4 1966171168
      %v2063 = vunpack.c.0.s8 %v2062
      %v2064 = vlaneseq
      %v2065 = vshrl.u32 %v2064, 7
      %v2066 = vsub.s32 %v2063, %v2065
      %v2067 = vrot.slane %v2053, %v2066
      %v2068 = vcombine.high %v2060, %v2060
      %v2069 = vcombine.high %v2067, %v2067
      %v2071 = vunpack.c.l.s4 1966171168
      %v2072 = vunpack.c.0.s8 %v2071
      %v2073 = vlaneseq
      %v2074 = vshrl.u32 %v2073, 7
      %v2075 = vsub.s32 %v2072, %v2074
      %v2076 = vrot.slane %v2060, %v2075
      %v2078 = vunpack.c.l.s4 1966171168
      %v2079 = vunpack.c.0.s8 %v2078
      %v2080 = vlaneseq
      %v2081 = vshrl.u32 %v2080, 7
      %v2082 = vsub.s32 %v2079, %v2081
      %v2083 = vrot.slane %v2067, %v2082
      %v2085 = vunpack.c.l.s4 1966171168
      %v2086 = vunpack.c.0.s8 %v2085
      %v2087 = vlaneseq
      %v2088 = vshrl.u32 %v2087, 7
      %v2089 = vsub.s32 %v2086, %v2088
      %v2090 = vrot.slane %v2068, %v2089
      %v2092 = vunpack.c.l.s4 1966171168
      %v2093 = vunpack.c.0.s8 %v2092
      %v2094 = vlaneseq
      %v2095 = vshrl.u32 %v2094, 7
      %v2096 = vsub.s32 %v2093, %v2095
      %v2097 = vrot.slane %v2069, %v2096
      %v2098 = vcombine.high %v2076, %v2076
      %v2099 = vcombine.high %v2083, %v2083
      %v2100 = vcombine.high %v2090, %v2090
      %v2101 = vcombine.high %v2097, %v2097
      %v2103 = vunpack.c.l.s4 1966171168
      %v2104 = vunpack.c.0.s8 %v2103
      %v2105 = vlaneseq
      %v2106 = vshrl.u32 %v2105, 7
      %v2107 = vsub.s32 %v2104, %v2106
      %v2108 = vrot.slane %v1760, %v2107
      %v2110 = vunpack.c.l.s4 1966171168
      %v2111 = vunpack.c.0.s8 %v2110
      %v2112 = vlaneseq
      %v2113 = vshrl.u32 %v2112, 7
      %v2114 = vsub.s32 %v2111, %v2113
      %v2115 = vrot.slane %v2108, %v2114
      %v2116 = vcombine.high %v1762, %v1762
      %v2118 = vunpack.c.l.s4 1966171168
      %v2119 = vunpack.c.0.s8 %v2118
      %v2120 = vlaneseq
      %v2121 = vshrl.u32 %v2120, 7
      %v2122 = vsub.s32 %v2119, %v2121
      %v2123 = vrot.slane %v1762, %v2122
      %v2125 = vunpack.c.l.s4 1966171168
      %v2126 = vunpack.c.0.s8 %v2125
      %v2127 = vlaneseq
      %v2128 = vshrl.u32 %v2127, 7
      %v2129 = vsub.s32 %v2126, %v2128
      %v2130 = vrot.slane %v2116, %v2129
      %v2131 = vcombine.high %v2123, %v2123
      %v2132 = vcombine.high %v2130, %v2130
      %v2134 = vunpack.c.l.s4 1966171168
      %v2135 = vunpack.c.0.s8 %v2134
      %v2136 = vlaneseq
      %v2137 = vshrl.u32 %v2136, 7
      %v2138 = vsub.s32 %v2135, %v2137
      %v2139 = vrot.slane %v2123, %v2138
      %v2141 = vunpack.c.l.s4 1966171168
      %v2142 = vunpack.c.0.s8 %v2141
      %v2143 = vlaneseq
      %v2144 = vshrl.u32 %v2143, 7
      %v2145 = vsub.s32 %v2142, %v2144
      %v2146 = vrot.slane %v2130, %v2145
      %v2148 = vunpack.c.l.s4 1966171168
      %v2149 = vunpack.c.0.s8 %v2148
      %v2150 = vlaneseq
      %v2151 = vshrl.u32 %v2150, 7
      %v2152 = vsub.s32 %v2149, %v2151
      %v2153 = vrot.slane %v2131, %v2152
      %v2155 = vunpack.c.l.s4 1966171168
      %v2156 = vunpack.c.0.s8 %v2155
      %v2157 = vlaneseq
      %v2158 = vshrl.u32 %v2157, 7
      %v2159 = vsub.s32 %v2156, %v2158
      %v2160 = vrot.slane %v2132, %v2159
      %v2161 = vcombine.high %v2139, %v2139
      %v2162 = vcombine.high %v2146, %v2146
      %v2163 = vcombine.high %v2153, %v2153
      %v2164 = vcombine.high %v2160, %v2160
      %v2166 = vunpack.c.l.s4 1966171168
      %v2167 = vunpack.c.0.s8 %v2166
      %v2168 = vlaneseq
      %v2169 = vshrl.u32 %v2168, 7
      %v2170 = vsub.s32 %v2167, %v2169
      %v2171 = vrot.slane %v1764, %v2170
      %v2173 = vunpack.c.l.s4 1966171168
      %v2174 = vunpack.c.0.s8 %v2173
      %v2175 = vlaneseq
      %v2176 = vshrl.u32 %v2175, 7
      %v2177 = vsub.s32 %v2174, %v2176
      %v2178 = vrot.slane %v2171, %v2177
      %v2179 = vcombine.high %v1766, %v1766
      %v2181 = vunpack.c.l.s4 1966171168
      %v2182 = vunpack.c.0.s8 %v2181
      %v2183 = vlaneseq
      %v2184 = vshrl.u32 %v2183, 7
      %v2185 = vsub.s32 %v2182, %v2184
      %v2186 = vrot.slane %v1766, %v2185
      %v2188 = vunpack.c.l.s4 1966171168
      %v2189 = vunpack.c.0.s8 %v2188
      %v2190 = vlaneseq
      %v2191 = vshrl.u32 %v2190, 7
      %v2192 = vsub.s32 %v2189, %v2191
      %v2193 = vrot.slane %v2179, %v2192
      %v2194 = vcombine.high %v2186, %v2186
      %v2195 = vcombine.high %v2193, %v2193
      %v2197 = vunpack.c.l.s4 1966171168
      %v2198 = vunpack.c.0.s8 %v2197
      %v2199 = vlaneseq
      %v2200 = vshrl.u32 %v2199, 7
      %v2201 = vsub.s32 %v2198, %v2200
      %v2202 = vrot.slane %v2186, %v2201
      %v2204 = vunpack.c.l.s4 1966171168
      %v2205 = vunpack.c.0.s8 %v2204
      %v2206 = vlaneseq
      %v2207 = vshrl.u32 %v2206, 7
      %v2208 = vsub.s32 %v2205, %v2207
      %v2209 = vrot.slane %v2193, %v2208
      %v2211 = vunpack.c.l.s4 1966171168
      %v2212 = vunpack.c.0.s8 %v2211
      %v2213 = vlaneseq
      %v2214 = vshrl.u32 %v2213, 7
      %v2215 = vsub.s32 %v2212, %v2214
      %v2216 = vrot.slane %v2194, %v2215
      %v2218 = vunpack.c.l.s4 1966171168
      %v2219 = vunpack.c.0.s8 %v2218
      %v2220 = vlaneseq
      %v2221 = vshrl.u32 %v2220, 7
      %v2222 = vsub.s32 %v2219, %v2221
      %v2223 = vrot.slane %v2195, %v2222
      %v2224 = vcombine.high %v2202, %v2202
      %v2225 = vcombine.high %v2209, %v2209
      %v2226 = vcombine.high %v2216, %v2216
      %v2227 = vcombine.high %v2223, %v2223
      %v2229 = vunpack.c.l.s4 1966171168
      %v2230 = vunpack.c.0.s8 %v2229
      %v2231 = vlaneseq
      %v2232 = vshrl.u32 %v2231, 7
      %v2233 = vsub.s32 %v2230, %v2232
      %v2234 = vrot.slane %v1768, %v2233
      %v2236 = vunpack.c.l.s4 1966171168
      %v2237 = vunpack.c.0.s8 %v2236
      %v2238 = vlaneseq
      %v2239 = vshrl.u32 %v2238, 7
      %v2240 = vsub.s32 %v2237, %v2239
      %v2241 = vrot.slane %v2234, %v2240
      %v2242 = vcombine.high %v1770, %v1770
      %v2244 = vunpack.c.l.s4 1966171168
      %v2245 = vunpack.c.0.s8 %v2244
      %v2246 = vlaneseq
      %v2247 = vshrl.u32 %v2246, 7
      %v2248 = vsub.s32 %v2245, %v2247
      %v2249 = vrot.slane %v1770, %v2248
      %v2251 = vunpack.c.l.s4 1966171168
      %v2252 = vunpack.c.0.s8 %v2251
      %v2253 = vlaneseq
      %v2254 = vshrl.u32 %v2253, 7
      %v2255 = vsub.s32 %v2252, %v2254
      %v2256 = vrot.slane %v2242, %v2255
      %v2257 = vcombine.high %v2249, %v2249
      %v2258 = vcombine.high %v2256, %v2256
      %v2260 = vunpack.c.l.s4 1966171168
      %v2261 = vunpack.c.0.s8 %v2260
      %v2262 = vlaneseq
      %v2263 = vshrl.u32 %v2262, 7
      %v2264 = vsub.s32 %v2261, %v2263
      %v2265 = vrot.slane %v2249, %v2264
      %v2267 = vunpack.c.l.s4 1966171168
      %v2268 = vunpack.c.0.s8 %v2267
      %v2269 = vlaneseq
      %v2270 = vshrl.u32 %v2269, 7
      %v2271 = vsub.s32 %v2268, %v2270
      %v2272 = vrot.slane %v2256, %v2271
      %v2274 = vunpack.c.l.s4 1966171168
      %v2275 = vunpack.c.0.s8 %v2274
      %v2276 = vlaneseq
      %v2277 = vshrl.u32 %v2276, 7
      %v2278 = vsub.s32 %v2275, %v2277
      %v2279 = vrot.slane %v2257, %v2278
      %v2281 = vunpack.c.l.s4 1966171168
      %v2282 = vunpack.c.0.s8 %v2281
      %v2283 = vlaneseq
      %v2284 = vshrl.u32 %v2283, 7
      %v2285 = vsub.s32 %v2282, %v2284
      %v2286 = vrot.slane %v2258, %v2285
      %v2287 = vcombine.high %v2265, %v2265
      %v2288 = vcombine.high %v2272, %v2272
      %v2289 = vcombine.high %v2279, %v2279
      %v2290 = vcombine.high %v2286, %v2286
      %v2292 = vunpack.c.l.s4 1966171168
      %v2293 = vunpack.c.0.s8 %v2292
      %v2294 = vlaneseq
      %v2295 = vshrl.u32 %v2294, 7
      %v2296 = vsub.s32 %v2293, %v2295
      %v2297 = vrot.slane %v1772, %v2296
      %v2299 = vunpack.c.l.s4 1966171168
      %v2300 = vunpack.c.0.s8 %v2299
      %v2301 = vlaneseq
      %v2302 = vshrl.u32 %v2301, 7
      %v2303 = vsub.s32 %v2300, %v2302
      %v2304 = vrot.slane %v2297, %v2303
      %v2305 = vcombine.high %v1774, %v1774
      %v2307 = vunpack.c.l.s4 1966171168
      %v2308 = vunpack.c.0.s8 %v2307
      %v2309 = vlaneseq
      %v2310 = vshrl.u32 %v2309, 7
      %v2311 = vsub.s32 %v2308, %v2310
      %v2312 = vrot.slane %v1774, %v2311
      %v2314 = vunpack.c.l.s4 1966171168
      %v2315 = vunpack.c.0.s8 %v2314
      %v2316 = vlaneseq
      %v2317 = vshrl.u32 %v2316, 7
      %v2318 = vsub.s32 %v2315, %v2317
      %v2319 = vrot.slane %v2305, %v2318
      %v2320 = vcombine.high %v2312, %v2312
      %v2321 = vcombine.high %v2319, %v2319
      %v2323 = vunpack.c.l.s4 1966171168
      %v2324 = vunpack.c.0.s8 %v2323
      %v2325 = vlaneseq
      %v2326 = vshrl.u32 %v2325, 7
      %v2327 = vsub.s32 %v2324, %v2326
      %v2328 = vrot.slane %v2312, %v2327
      %v2330 = vunpack.c.l.s4 1966171168
      %v2331 = vunpack.c.0.s8 %v2330
      %v2332 = vlaneseq
      %v2333 = vshrl.u32 %v2332, 7
      %v2334 = vsub.s32 %v2331, %v2333
      %v2335 = vrot.slane %v2319, %v2334
      %v2337 = vunpack.c.l.s4 1966171168
      %v2338 = vunpack.c.0.s8 %v2337
      %v2339 = vlaneseq
      %v2340 = vshrl.u32 %v2339, 7
      %v2341 = vsub.s32 %v2338, %v2340
      %v2342 = vrot.slane %v2320, %v2341
      %v2344 = vunpack.c.l.s4 1966171168
      %v2345 = vunpack.c.0.s8 %v2344
      %v2346 = vlaneseq
      %v2347 = vshrl.u32 %v2346, 7
      %v2348 = vsub.s32 %v2345, %v2347
      %v2349 = vrot.slane %v2321, %v2348
      %v2350 = vcombine.high %v2328, %v2328
      %v2351 = vcombine.high %v2335, %v2335
      %v2352 = vcombine.high %v2342, %v2342
      %v2353 = vcombine.high %v2349, %v2349
      %v2355 = vunpack.c.l.s4 1966171168
      %v2356 = vunpack.c.0.s8 %v2355
      %v2357 = vlaneseq
      %v2358 = vshrl.u32 %v2357, 7
      %v2359 = vsub.s32 %v2356, %v2358
      %v2360 = vrot.slane %v1776, %v2359
      %v2362 = vunpack.c.l.s4 1966171168
      %v2363 = vunpack.c.0.s8 %v2362
      %v2364 = vlaneseq
      %v2365 = vshrl.u32 %v2364, 7
      %v2366 = vsub.s32 %v2363, %v2365
      %v2367 = vrot.slane %v2360, %v2366
      %v2368 = vcombine.high %v1778, %v1778
      %v2370 = vunpack.c.l.s4 1966171168
      %v2371 = vunpack.c.0.s8 %v2370
      %v2372 = vlaneseq
      %v2373 = vshrl.u32 %v2372, 7
      %v2374 = vsub.s32 %v2371, %v2373
      %v2375 = vrot.slane %v1778, %v2374
      %v2377 = vunpack.c.l.s4 1966171168
      %v2378 = vunpack.c.0.s8 %v2377
      %v2379 = vlaneseq
      %v2380 = vshrl.u32 %v2379, 7
      %v2381 = vsub.s32 %v2378, %v2380
      %v2382 = vrot.slane %v2368, %v2381
      %v2383 = vcombine.high %v2375, %v2375
      %v2384 = vcombine.high %v2382, %v2382
      %v2386 = vunpack.c.l.s4 1966171168
      %v2387 = vunpack.c.0.s8 %v2386
      %v2388 = vlaneseq
      %v2389 = vshrl.u32 %v2388, 7
      %v2390 = vsub.s32 %v2387, %v2389
      %v2391 = vrot.slane %v2375, %v2390
      %v2393 = vunpack.c.l.s4 1966171168
      %v2394 = vunpack.c.0.s8 %v2393
      %v2395 = vlaneseq
      %v2396 = vshrl.u32 %v2395, 7
      %v2397 = vsub.s32 %v2394, %v2396
      %v2398 = vrot.slane %v2382, %v2397
      %v2400 = vunpack.c.l.s4 1966171168
      %v2401 = vunpack.c.0.s8 %v2400
      %v2402 = vlaneseq
      %v2403 = vshrl.u32 %v2402, 7
      %v2404 = vsub.s32 %v2401, %v2403
      %v2405 = vrot.slane %v2383, %v2404
      %v2407 = vunpack.c.l.s4 1966171168
      %v2408 = vunpack.c.0.s8 %v2407
      %v2409 = vlaneseq
      %v2410 = vshrl.u32 %v2409, 7
      %v2411 = vsub.s32 %v2408, %v2410
      %v2412 = vrot.slane %v2384, %v2411
      %v2413 = vcombine.high %v2391, %v2391
      %v2414 = vcombine.high %v2398, %v2398
      %v2415 = vcombine.high %v2405, %v2405
      %v2416 = vcombine.high %v2412, %v2412
      %v2418 = vunpack.c.l.s4 1966171168
      %v2419 = vunpack.c.0.s8 %v2418
      %v2420 = vlaneseq
      %v2421 = vshrl.u32 %v2420, 7
      %v2422 = vsub.s32 %v2419, %v2421
      %v2423 = vrot.slane %v1780, %v2422
      %v2425 = vunpack.c.l.s4 1966171168
      %v2426 = vunpack.c.0.s8 %v2425
      %v2427 = vlaneseq
      %v2428 = vshrl.u32 %v2427, 7
      %v2429 = vsub.s32 %v2426, %v2428
      %v2430 = vrot.slane %v2423, %v2429
      %v2431 = vld [vmem:[%s1] sm:$0xf]
      %v2432 = vld [vmem:[%s1 + $0x4] sm:$0xf]
      %v2433 = vld [vmem:[%s1 + $0x8] sm:$0xf]
      %v2434 = vld [vmem:[%s1 + $0xc] sm:$0x3]
      %v2435 = vld [vmem:[%s2] sm:$0x1]
      %v2437 = vlaneseq
      %v2438 = vshrl.u32 %v2437, 7
      %v2439 = vsub.s32 0, %v2438
      %v2440 = vrot.slane %v2435, %v2439
      %v2442 = vcombine.low %v1824, %v1838
      %v2443 = vcombine.low %v1846, %v1848
      %v2444 = vcombine.low %v1831, %v1845
      %v2445 = vcombine.low %v1847, %v1849
      %v2447 = vunpack.c.l.s4 1966171168
      %v2448 = vunpack.c.0.s8 %v2447
      %v2449 = vlaneseq
      %v2450 = vshrl.u32 %v2449, 7
      %v2451 = vsub.s32 %v2448, %v2450
      %v2452 = vrot.slane %v2442, %v2451
      %v2454 = vunpack.c.l.s4 1966171168
      %v2455 = vunpack.c.0.s8 %v2454
      %v2456 = vlaneseq
      %v2457 = vshrl.u32 %v2456, 7
      %v2458 = vsub.s32 %v2455, %v2457
      %v2459 = vrot.slane %v2443, %v2458
      %v2461 = vunpack.c.l.s4 1966171168
      %v2462 = vunpack.c.0.s8 %v2461
      %v2463 = vlaneseq
      %v2464 = vshrl.u32 %v2463, 7
      %v2465 = vsub.s32 %v2462, %v2464
      %v2466 = vrot.slane %v2444, %v2465
      %v2468 = vunpack.c.l.s4 1966171168
      %v2469 = vunpack.c.0.s8 %v2468
      %v2470 = vlaneseq
      %v2471 = vshrl.u32 %v2470, 7
      %v2472 = vsub.s32 %v2469, %v2471
      %v2473 = vrot.slane %v2445, %v2472
      %v2474 = vcombine.low %v2452, %v2459
      %v2475 = vcombine.low %v2466, %v2473
      %v2477 = vunpack.c.l.s4 1966171168
      %v2478 = vunpack.c.0.s8 %v2477
      %v2479 = vlaneseq
      %v2480 = vshrl.u32 %v2479, 7
      %v2481 = vsub.s32 %v2478, %v2480
      %v2482 = vrot.slane %v2474, %v2481
      %v2484 = vunpack.c.l.s4 1966171168
      %v2485 = vunpack.c.0.s8 %v2484
      %v2486 = vlaneseq
      %v2487 = vshrl.u32 %v2486, 7
      %v2488 = vsub.s32 %v2485, %v2487
      %v2489 = vrot.slane %v2475, %v2488
      %v2490 = vcombine.low %v2482, %v2489
      %v2491 = vcombine.low %v1863, %v1887
      %v2492 = vcombine.low %v1901, %v1909
      %v2493 = vcombine.low %v1911, %v1894
      %v2494 = vcombine.low %v1908, %v1910
      %v2496 = vunpack.c.l.s4 1966171168
      %v2497 = vunpack.c.0.s8 %v2496
      %v2498 = vlaneseq
      %v2499 = vshrl.u32 %v2498, 7
      %v2500 = vsub.s32 %v2497, %v2499
      %v2501 = vrot.slane %v2491, %v2500
      %v2503 = vunpack.c.l.s4 1966171168
      %v2504 = vunpack.c.0.s8 %v2503
      %v2505 = vlaneseq
      %v2506 = vshrl.u32 %v2505, 7
      %v2507 = vsub.s32 %v2504, %v2506
      %v2508 = vrot.slane %v2492, %v2507
      %v2510 = vunpack.c.l.s4 1966171168
      %v2511 = vunpack.c.0.s8 %v2510
      %v2512 = vlaneseq
      %v2513 = vshrl.u32 %v2512, 7
      %v2514 = vsub.s32 %v2511, %v2513
      %v2515 = vrot.slane %v2493, %v2514
      %v2517 = vunpack.c.l.s4 1966171168
      %v2518 = vunpack.c.0.s8 %v2517
      %v2519 = vlaneseq
      %v2520 = vshrl.u32 %v2519, 7
      %v2521 = vsub.s32 %v2518, %v2520
      %v2522 = vrot.slane %v2494, %v2521
      %v2523 = vcombine.low %v2501, %v2508
      %v2524 = vcombine.low %v2515, %v2522
      %v2526 = vunpack.c.l.s4 1966171168
      %v2527 = vunpack.c.0.s8 %v2526
      %v2528 = vlaneseq
      %v2529 = vshrl.u32 %v2528, 7
      %v2530 = vsub.s32 %v2527, %v2529
      %v2531 = vrot.slane %v2523, %v2530
      %v2533 = vunpack.c.l.s4 1966171168
      %v2534 = vunpack.c.0.s8 %v2533
      %v2535 = vlaneseq
      %v2536 = vshrl.u32 %v2535, 7
      %v2537 = vsub.s32 %v2534, %v2536
      %v2538 = vrot.slane %v2524, %v2537
      %v2539 = vcombine.low %v2531, %v2538
      %v2540 = vcombine.low %v1912, %v1926
      %v2541 = vcombine.low %v1950, %v1964
      %v2542 = vcombine.low %v1972, %v1974
      %v2543 = vcombine.low %v1957, %v1971
      %v2545 = vunpack.c.l.s4 1966171168
      %v2546 = vunpack.c.0.s8 %v2545
      %v2547 = vlaneseq
      %v2548 = vshrl.u32 %v2547, 7
      %v2549 = vsub.s32 %v2546, %v2548
      %v2550 = vrot.slane %v2540, %v2549
      %v2552 = vunpack.c.l.s4 1966171168
      %v2553 = vunpack.c.0.s8 %v2552
      %v2554 = vlaneseq
      %v2555 = vshrl.u32 %v2554, 7
      %v2556 = vsub.s32 %v2553, %v2555
      %v2557 = vrot.slane %v2541, %v2556
      %v2559 = vunpack.c.l.s4 1966171168
      %v2560 = vunpack.c.0.s8 %v2559
      %v2561 = vlaneseq
      %v2562 = vshrl.u32 %v2561, 7
      %v2563 = vsub.s32 %v2560, %v2562
      %v2564 = vrot.slane %v2542, %v2563
      %v2566 = vunpack.c.l.s4 1966171168
      %v2567 = vunpack.c.0.s8 %v2566
      %v2568 = vlaneseq
      %v2569 = vshrl.u32 %v2568, 7
      %v2570 = vsub.s32 %v2567, %v2569
      %v2571 = vrot.slane %v2543, %v2570
      %v2572 = vcombine.low %v2550, %v2557
      %v2573 = vcombine.low %v2564, %v2571
      %v2575 = vunpack.c.l.s4 1966171168
      %v2576 = vunpack.c.0.s8 %v2575
      %v2577 = vlaneseq
      %v2578 = vshrl.u32 %v2577, 7
      %v2579 = vsub.s32 %v2576, %v2578
      %v2580 = vrot.slane %v2572, %v2579
      %v2582 = vunpack.c.l.s4 1966171168
      %v2583 = vunpack.c.0.s8 %v2582
      %v2584 = vlaneseq
      %v2585 = vshrl.u32 %v2584, 7
      %v2586 = vsub.s32 %v2583, %v2585
      %v2587 = vrot.slane %v2573, %v2586
      %v2588 = vcombine.low %v2580, %v2587
      %v2589 = vcombine.low %v1973, %v1975
      %v2590 = vcombine.low %v1989, %v2013
      %v2591 = vcombine.low %v2027, %v2035
      %v2592 = vcombine.low %v2037, %v2020
      %v2594 = vunpack.c.l.s4 1966171168
      %v2595 = vunpack.c.0.s8 %v2594
      %v2596 = vlaneseq
      %v2597 = vshrl.u32 %v2596, 7
      %v2598 = vsub.s32 %v2595, %v2597
      %v2599 = vrot.slane %v2589, %v2598
      %v2601 = vunpack.c.l.s4 1966171168
      %v2602 = vunpack.c.0.s8 %v2601
      %v2603 = vlaneseq
      %v2604 = vshrl.u32 %v2603, 7
      %v2605 = vsub.s32 %v2602, %v2604
      %v2606 = vrot.slane %v2590, %v2605
      %v2608 = vunpack.c.l.s4 1966171168
      %v2609 = vunpack.c.0.s8 %v2608
      %v2610 = vlaneseq
      %v2611 = vshrl.u32 %v2610, 7
      %v2612 = vsub.s32 %v2609, %v2611
      %v2613 = vrot.slane %v2591, %v2612
      %v2615 = vunpack.c.l.s4 1966171168
      %v2616 = vunpack.c.0.s8 %v2615
      %v2617 = vlaneseq
      %v2618 = vshrl.u32 %v2617, 7
      %v2619 = vsub.s32 %v2616, %v2618
      %v2620 = vrot.slane %v2592, %v2619
      %v2621 = vcombine.low %v2599, %v2606
      %v2622 = vcombine.low %v2613, %v2620
      %v2624 = vunpack.c.l.s4 1966171168
      %v2625 = vunpack.c.0.s8 %v2624
      %v2626 = vlaneseq
      %v2627 = vshrl.u32 %v2626, 7
      %v2628 = vsub.s32 %v2625, %v2627
      %v2629 = vrot.slane %v2621, %v2628
      %v2631 = vunpack.c.l.s4 1966171168
      %v2632 = vunpack.c.0.s8 %v2631
      %v2633 = vlaneseq
      %v2634 = vshrl.u32 %v2633, 7
      %v2635 = vsub.s32 %v2632, %v2634
      %v2636 = vrot.slane %v2622, %v2635
      %v2637 = vcombine.low %v2629, %v2636
      %v2638 = vcombine.low %v2034, %v2036
      %v2639 = vcombine.low %v2038, %v2052
      %v2640 = vcombine.low %v2076, %v2090
      %v2641 = vcombine.low %v2098, %v2100
      %v2643 = vunpack.c.l.s4 1966171168
      %v2644 = vunpack.c.0.s8 %v2643
      %v2645 = vlaneseq
      %v2646 = vshrl.u32 %v2645, 7
      %v2647 = vsub.s32 %v2644, %v2646
      %v2648 = vrot.slane %v2638, %v2647
      %v2650 = vunpack.c.l.s4 1966171168
      %v2651 = vunpack.c.0.s8 %v2650
      %v2652 = vlaneseq
      %v2653 = vshrl.u32 %v2652, 7
      %v2654 = vsub.s32 %v2651, %v2653
      %v2655 = vrot.slane %v2639, %v2654
      %v2657 = vunpack.c.l.s4 1966171168
      %v2658 = vunpack.c.0.s8 %v2657
      %v2659 = vlaneseq
      %v2660 = vshrl.u32 %v2659, 7
      %v2661 = vsub.s32 %v2658, %v2660
      %v2662 = vrot.slane %v2640, %v2661
      %v2664 = vunpack.c.l.s4 1966171168
      %v2665 = vunpack.c.0.s8 %v2664
      %v2666 = vlaneseq
      %v2667 = vshrl.u32 %v2666, 7
      %v2668 = vsub.s32 %v2665, %v2667
      %v2669 = vrot.slane %v2641, %v2668
      %v2670 = vcombine.low %v2648, %v2655
      %v2671 = vcombine.low %v2662, %v2669
      %v2673 = vunpack.c.l.s4 1966171168
      %v2674 = vunpack.c.0.s8 %v2673
      %v2675 = vlaneseq
      %v2676 = vshrl.u32 %v2675, 7
      %v2677 = vsub.s32 %v2674, %v2676
      %v2678 = vrot.slane %v2670, %v2677
      %v2680 = vunpack.c.l.s4 1966171168
      %v2681 = vunpack.c.0.s8 %v2680
      %v2682 = vlaneseq
      %v2683 = vshrl.u32 %v2682, 7
      %v2684 = vsub.s32 %v2681, %v2683
      %v2685 = vrot.slane %v2671, %v2684
      %v2686 = vcombine.low %v2678, %v2685
      %v2687 = vcombine.low %v2083, %v2097
      %v2688 = vcombine.low %v2099, %v2101
      %v2689 = vcombine.low %v2115, %v2139
      %v2690 = vcombine.low %v2153, %v2161
      %v2692 = vunpack.c.l.s4 1966171168
      %v2693 = vunpack.c.0.s8 %v2692
      %v2694 = vlaneseq
      %v2695 = vshrl.u32 %v2694, 7
      %v2696 = vsub.s32 %v2693, %v2695
      %v2697 = vrot.slane %v2687, %v2696
      %v2699 = vunpack.c.l.s4 1966171168
      %v2700 = vunpack.c.0.s8 %v2699
      %v2701 = vlaneseq
      %v2702 = vshrl.u32 %v2701, 7
      %v2703 = vsub.s32 %v2700, %v2702
      %v2704 = vrot.slane %v2688, %v2703
      %v2706 = vunpack.c.l.s4 1966171168
      %v2707 = vunpack.c.0.s8 %v2706
      %v2708 = vlaneseq
      %v2709 = vshrl.u32 %v2708, 7
      %v2710 = vsub.s32 %v2707, %v2709
      %v2711 = vrot.slane %v2689, %v2710
      %v2713 = vunpack.c.l.s4 1966171168
      %v2714 = vunpack.c.0.s8 %v2713
      %v2715 = vlaneseq
      %v2716 = vshrl.u32 %v2715, 7
      %v2717 = vsub.s32 %v2714, %v2716
      %v2718 = vrot.slane %v2690, %v2717
      %v2719 = vcombine.low %v2697, %v2704
      %v2720 = vcombine.low %v2711, %v2718
      %v2722 = vunpack.c.l.s4 1966171168
      %v2723 = vunpack.c.0.s8 %v2722
      %v2724 = vlaneseq
      %v2725 = vshrl.u32 %v2724, 7
      %v2726 = vsub.s32 %v2723, %v2725
      %v2727 = vrot.slane %v2719, %v2726
      %v2729 = vunpack.c.l.s4 1966171168
      %v2730 = vunpack.c.0.s8 %v2729
      %v2731 = vlaneseq
      %v2732 = vshrl.u32 %v2731, 7
      %v2733 = vsub.s32 %v2730, %v2732
      %v2734 = vrot.slane %v2720, %v2733
      %v2735 = vcombine.low %v2727, %v2734
      %v2736 = vcombine.low %v2163, %v2146
      %v2737 = vcombine.low %v2160, %v2162
      %v2738 = vcombine.low %v2164, %v2178
      %v2739 = vcombine.low %v2202, %v2216
      %v2741 = vunpack.c.l.s4 1966171168
      %v2742 = vunpack.c.0.s8 %v2741
      %v2743 = vlaneseq
      %v2744 = vshrl.u32 %v2743, 7
      %v2745 = vsub.s32 %v2742, %v2744
      %v2746 = vrot.slane %v2736, %v2745
      %v2748 = vunpack.c.l.s4 1966171168
      %v2749 = vunpack.c.0.s8 %v2748
      %v2750 = vlaneseq
      %v2751 = vshrl.u32 %v2750, 7
      %v2752 = vsub.s32 %v2749, %v2751
      %v2753 = vrot.slane %v2737, %v2752
      %v2755 = vunpack.c.l.s4 1966171168
      %v2756 = vunpack.c.0.s8 %v2755
      %v2757 = vlaneseq
      %v2758 = vshrl.u32 %v2757, 7
      %v2759 = vsub.s32 %v2756, %v2758
      %v2760 = vrot.slane %v2738, %v2759
      %v2762 = vunpack.c.l.s4 1966171168
      %v2763 = vunpack.c.0.s8 %v2762
      %v2764 = vlaneseq
      %v2765 = vshrl.u32 %v2764, 7
      %v2766 = vsub.s32 %v2763, %v2765
      %v2767 = vrot.slane %v2739, %v2766
      %v2768 = vcombine.low %v2746, %v2753
      %v2769 = vcombine.low %v2760, %v2767
      %v2771 = vunpack.c.l.s4 1966171168
      %v2772 = vunpack.c.0.s8 %v2771
      %v2773 = vlaneseq
      %v2774 = vshrl.u32 %v2773, 7
      %v2775 = vsub.s32 %v2772, %v2774
      %v2776 = vrot.slane %v2768, %v2775
      %v2778 = vunpack.c.l.s4 1966171168
      %v2779 = vunpack.c.0.s8 %v2778
      %v2780 = vlaneseq
      %v2781 = vshrl.u32 %v2780, 7
      %v2782 = vsub.s32 %v2779, %v2781
      %v2783 = vrot.slane %v2769, %v2782
      %v2784 = vcombine.low %v2776, %v2783
      %v2785 = vcombine.low %v2224, %v2226
      %v2786 = vcombine.low %v2209, %v2223
      %v2787 = vcombine.low %v2225, %v2227
      %v2788 = vcombine.low %v2241, %v2265
      %v2790 = vunpack.c.l.s4 1966171168
      %v2791 = vunpack.c.0.s8 %v2790
      %v2792 = vlaneseq
      %v2793 = vshrl.u32 %v2792, 7
      %v2794 = vsub.s32 %v2791, %v2793
      %v2795 = vrot.slane %v2785, %v2794
      %v2797 = vunpack.c.l.s4 1966171168
      %v2798 = vunpack.c.0.s8 %v2797
      %v2799 = vlaneseq
      %v2800 = vshrl.u32 %v2799, 7
      %v2801 = vsub.s32 %v2798, %v2800
      %v2802 = vrot.slane %v2786, %v2801
      %v2804 = vunpack.c.l.s4 1966171168
      %v2805 = vunpack.c.0.s8 %v2804
      %v2806 = vlaneseq
      %v2807 = vshrl.u32 %v2806, 7
      %v2808 = vsub.s32 %v2805, %v2807
      %v2809 = vrot.slane %v2787, %v2808
      %v2811 = vunpack.c.l.s4 1966171168
      %v2812 = vunpack.c.0.s8 %v2811
      %v2813 = vlaneseq
      %v2814 = vshrl.u32 %v2813, 7
      %v2815 = vsub.s32 %v2812, %v2814
      %v2816 = vrot.slane %v2788, %v2815
      %v2817 = vcombine.low %v2795, %v2802
      %v2818 = vcombine.low %v2809, %v2816
      %v2820 = vunpack.c.l.s4 1966171168
      %v2821 = vunpack.c.0.s8 %v2820
      %v2822 = vlaneseq
      %v2823 = vshrl.u32 %v2822, 7
      %v2824 = vsub.s32 %v2821, %v2823
      %v2825 = vrot.slane %v2817, %v2824
      %v2827 = vunpack.c.l.s4 1966171168
      %v2828 = vunpack.c.0.s8 %v2827
      %v2829 = vlaneseq
      %v2830 = vshrl.u32 %v2829, 7
      %v2831 = vsub.s32 %v2828, %v2830
      %v2832 = vrot.slane %v2818, %v2831
      %v2833 = vcombine.low %v2825, %v2832
      %v2834 = vcombine.low %v2279, %v2287
      %v2835 = vcombine.low %v2289, %v2272
      %v2836 = vcombine.low %v2286, %v2288
      %v2837 = vcombine.low %v2290, %v2304
      %v2839 = vunpack.c.l.s4 1966171168
      %v2840 = vunpack.c.0.s8 %v2839
      %v2841 = vlaneseq
      %v2842 = vshrl.u32 %v2841, 7
      %v2843 = vsub.s32 %v2840, %v2842
      %v2844 = vrot.slane %v2834, %v2843
      %v2846 = vunpack.c.l.s4 1966171168
      %v2847 = vunpack.c.0.s8 %v2846
      %v2848 = vlaneseq
      %v2849 = vshrl.u32 %v2848, 7
      %v2850 = vsub.s32 %v2847, %v2849
      %v2851 = vrot.slane %v2835, %v2850
      %v2853 = vunpack.c.l.s4 1966171168
      %v2854 = vunpack.c.0.s8 %v2853
      %v2855 = vlaneseq
      %v2856 = vshrl.u32 %v2855, 7
      %v2857 = vsub.s32 %v2854, %v2856
      %v2858 = vrot.slane %v2836, %v2857
      %v2860 = vunpack.c.l.s4 1966171168
      %v2861 = vunpack.c.0.s8 %v2860
      %v2862 = vlaneseq
      %v2863 = vshrl.u32 %v2862, 7
      %v2864 = vsub.s32 %v2861, %v2863
      %v2865 = vrot.slane %v2837, %v2864
      %v2866 = vcombine.low %v2844, %v2851
      %v2867 = vcombine.low %v2858, %v2865
      %v2869 = vunpack.c.l.s4 1966171168
      %v2870 = vunpack.c.0.s8 %v2869
      %v2871 = vlaneseq
      %v2872 = vshrl.u32 %v2871, 7
      %v2873 = vsub.s32 %v2870, %v2872
      %v2874 = vrot.slane %v2866, %v2873
      %v2876 = vunpack.c.l.s4 1966171168
      %v2877 = vunpack.c.0.s8 %v2876
      %v2878 = vlaneseq
      %v2879 = vshrl.u32 %v2878, 7
      %v2880 = vsub.s32 %v2877, %v2879
      %v2881 = vrot.slane %v2867, %v2880
      %v2882 = vcombine.low %v2874, %v2881
      %v2883 = vcombine.low %v2328, %v2342
      %v2884 = vcombine.low %v2350, %v2352
      %v2885 = vcombine.low %v2335, %v2349
      %v2886 = vcombine.low %v2351, %v2353
      %v2888 = vunpack.c.l.s4 1966171168
      %v2889 = vunpack.c.0.s8 %v2888
      %v2890 = vlaneseq
      %v2891 = vshrl.u32 %v2890, 7
      %v2892 = vsub.s32 %v2889, %v2891
      %v2893 = vrot.slane %v2883, %v2892
      %v2895 = vunpack.c.l.s4 1966171168
      %v2896 = vunpack.c.0.s8 %v2895
      %v2897 = vlaneseq
      %v2898 = vshrl.u32 %v2897, 7
      %v2899 = vsub.s32 %v2896, %v2898
      %v2900 = vrot.slane %v2884, %v2899
      %v2902 = vunpack.c.l.s4 1966171168
      %v2903 = vunpack.c.0.s8 %v2902
      %v2904 = vlaneseq
      %v2905 = vshrl.u32 %v2904, 7
      %v2906 = vsub.s32 %v2903, %v2905
      %v2907 = vrot.slane %v2885, %v2906
      %v2909 = vunpack.c.l.s4 1966171168
      %v2910 = vunpack.c.0.s8 %v2909
      %v2911 = vlaneseq
      %v2912 = vshrl.u32 %v2911, 7
      %v2913 = vsub.s32 %v2910, %v2912
      %v2914 = vrot.slane %v2886, %v2913
      %v2915 = vcombine.low %v2893, %v2900
      %v2916 = vcombine.low %v2907, %v2914
      %v2918 = vunpack.c.l.s4 1966171168
      %v2919 = vunpack.c.0.s8 %v2918
      %v2920 = vlaneseq
      %v2921 = vshrl.u32 %v2920, 7
      %v2922 = vsub.s32 %v2919, %v2921
      %v2923 = vrot.slane %v2915, %v2922
      %v2925 = vunpack.c.l.s4 1966171168
      %v2926 = vunpack.c.0.s8 %v2925
      %v2927 = vlaneseq
      %v2928 = vshrl.u32 %v2927, 7
      %v2929 = vsub.s32 %v2926, %v2928
      %v2930 = vrot.slane %v2916, %v2929
      %v2931 = vcombine.low %v2923, %v2930
      %v2932 = vcombine.low %v2367, %v2391
      %v2933 = vcombine.low %v2405, %v2413
      %v2934 = vcombine.low %v2415, %v2398
      %v2935 = vcombine.low %v2412, %v2414
      %v2937 = vunpack.c.l.s4 1966171168
      %v2938 = vunpack.c.0.s8 %v2937
      %v2939 = vlaneseq
      %v2940 = vshrl.u32 %v2939, 7
      %v2941 = vsub.s32 %v2938, %v2940
      %v2942 = vrot.slane %v2932, %v2941
      %v2944 = vunpack.c.l.s4 1966171168
      %v2945 = vunpack.c.0.s8 %v2944
      %v2946 = vlaneseq
      %v2947 = vshrl.u32 %v2946, 7
      %v2948 = vsub.s32 %v2945, %v2947
      %v2949 = vrot.slane %v2933, %v2948
      %v2951 = vunpack.c.l.s4 1966171168
      %v2952 = vunpack.c.0.s8 %v2951
      %v2953 = vlaneseq
      %v2954 = vshrl.u32 %v2953, 7
      %v2955 = vsub.s32 %v2952, %v2954
      %v2956 = vrot.slane %v2934, %v2955
      %v2958 = vunpack.c.l.s4 1966171168
      %v2959 = vunpack.c.0.s8 %v2958
      %v2960 = vlaneseq
      %v2961 = vshrl.u32 %v2960, 7
      %v2962 = vsub.s32 %v2959, %v2961
      %v2963 = vrot.slane %v2935, %v2962
      %v2964 = vcombine.low %v2942, %v2949
      %v2965 = vcombine.low %v2956, %v2963
      %v2967 = vunpack.c.l.s4 1966171168
      %v2968 = vunpack.c.0.s8 %v2967
      %v2969 = vlaneseq
      %v2970 = vshrl.u32 %v2969, 7
      %v2971 = vsub.s32 %v2968, %v2970
      %v2972 = vrot.slane %v2964, %v2971
      %v2974 = vunpack.c.l.s4 1966171168
      %v2975 = vunpack.c.0.s8 %v2974
      %v2976 = vlaneseq
      %v2977 = vshrl.u32 %v2976, 7
      %v2978 = vsub.s32 %v2975, %v2977
      %v2979 = vrot.slane %v2965, %v2978
      %v2980 = vcombine.low %v2972, %v2979
      %v2981 = vcombine.low %v2416, %v2430
      %v2983 = vunpack.c.l.s4 1966171168
      %v2984 = vunpack.c.0.s8 %v2983
      %v2985 = vlaneseq
      %v2986 = vshrl.u32 %v2985, 7
      %v2987 = vsub.s32 %v2984, %v2986
      %v2988 = vrot.slane %v2981, %v2987
      %v2990 = vunpack.c.l.s4 1966171168
      %v2991 = vunpack.c.0.s8 %v2990
      %v2992 = vlaneseq
      %v2993 = vshrl.u32 %v2992, 7
      %v2994 = vsub.s32 %v2991, %v2993
      %v2995 = vrot.slane %v2988, %v2994
      %v3000 = vunpack.c.l.b16 %v2431
      %v3001 = vunpack.c.l.b16 %v2432
      %v3002 = vunpack.c.l.b16 %v2433
      %v3003 = vunpack.c.l.b16 %v2434
      %v3004 = vpack.c.b16 %v3001, %v3000
      %v3005 = vpack.c.b16 %v3003, %v3002
      %vm3007 = vcmask 220160
      %v3009 = vsel %vm3007, %v2490, 0
      %v3012 = vsel %vm3007, %v2539, 0
      %v3015 = vsel %vm3007, %v2588, 0
      %v3018 = vsel %vm3007, %v2637, 0
      %v3021 = vsel %vm3007, %v2686, 0
      %v3024 = vsel %vm3007, %v2735, 0
      %v3027 = vsel %vm3007, %v2784, 0
      %v3030 = vsel %vm3007, %v2833, 0
      %v3033 = vsel %vm3007, %v2882, 0
      %v3036 = vsel %vm3007, %v2931, 0
      %v3039 = vsel %vm3007, %v2980, 0
      %v3042 = vsel %vm3007, %v2995, 0
      %vm3044 = vcmask 1044480
      %vm3045 = vcmask 1045504
      %v3046 = vsel %vm3044, 4294967295, 65535
      %v3047 = vsel %vm3045, %v3046, 0
      %v3049 = vand.u32 %v3005, %v3047
      %3051 = vmatprep.subr.bf16.mxu0 0
      %3052 = vmatpush1.bf16.msra.mxu0 %v3004
      %3053 = vmatprep.subr.bf16.mxu0 0
      %3054 = vmatpush1.bf16.msra.mxu0 %v3049
      %3055 = vmatprep.subr.bf16.mxu0 0
      %3056 = vmatpush1.bf16.msra.mxu0 0
      %3057 = vmatprep.subr.bf16.mxu0 0
      %3058 = vmatpush1.bf16.msra.mxu0 0
      %3059 = vmatprep.subr.bf16.mxu0 0
      %3060 = vmatpush1.bf16.msra.mxu0 0
      %3061 = vmatprep.subr.bf16.mxu0 0
      %3062 = vmatpush1.bf16.msra.mxu0 0
      %3063 = vmatprep.subr.bf16.mxu0 0
      %3064 = vmatpush1.bf16.msra.mxu0 0
      %3065 = vmatprep.subr.bf16.mxu0 0
      %3066 = vmatpush1.bf16.msra.mxu0 0
      %3067 = vmatprep.subr.bf16.mxu0 0
      %3068 = vmatpush1.bf16.msra.mxu0 0
      %3069 = vmatprep.subr.bf16.mxu0 0
      %3070 = vmatpush1.bf16.msra.mxu0 0
      %3071 = vmatprep.subr.bf16.mxu0 0
      %3072 = vmatpush1.bf16.msra.mxu0 0
      %3073 = vmatprep.subr.bf16.mxu0 0
      %3074 = vmatpush1.bf16.msra.mxu0 0
      %3075 = vmatprep.subr.bf16.mxu0 0
      %3076 = vmatpush1.bf16.msra.mxu0 0
      %3077 = vmatprep.subr.bf16.mxu0 0
      %3078 = vmatpush1.bf16.msra.mxu0 0
      %3079 = vmatprep.subr.bf16.mxu0 0
      %3080 = vmatpush1.bf16.msra.mxu0 0
      %3081 = vmatprep.subr.bf16.mxu0 0
      %3082 = vmatpush1.bf16.msra.mxu0 0
      %3083 = vmatprep.mubr.bf16.mxu0 0
      %3084 = vmatmul.mubr.bf16.gmra.mrb[0].mxu0 %v3009
      %v3085 = vpop.f32.mrb[0].mxu0
      %v3086 = vadd.f32 %v2440, %v3085
      %v3087 = vpop.f32.mrb[0].mxu0
      %v3088 = vpop.f32.mrb[0].mxu0
      %v3089 = vadd.f32 %v2440, %v3088
      %v3090 = vpop.f32.mrb[0].mxu0
      %3091 = vmatprep.mubr.bf16.mxu0 0
      %3092 = vmatmul.mubr.bf16.gmra.mrb[0].mxu0 %v3012
      %v3093 = vpop.f32.mrb[0].mxu0
      %v3094 = vadd.f32 %v2440, %v3093
      %v3095 = vpop.f32.mrb[0].mxu0
      %v3096 = vpop.f32.mrb[0].mxu0
      %v3097 = vadd.f32 %v2440, %v3096
      %v3098 = vpop.f32.mrb[0].mxu0
      %3099 = vmatprep.mubr.bf16.mxu0 0
      %3100 = vmatmul.mubr.bf16.gmra.mrb[0].mxu0 %v3015
      %v3101 = vpop.f32.mrb[0].mxu0
      %v3102 = vadd.f32 %v2440, %v3101
      %v3103 = vpop.f32.mrb[0].mxu0
      %v3104 = vpop.f32.mrb[0].mxu0
      %v3105 = vadd.f32 %v2440, %v3104
      %v3106 = vpop.f32.mrb[0].mxu0
      %3107 = vmatprep.mubr.bf16.mxu0 0
      %3108 = vmatmul.mubr.bf16.gmra.mrb[0].mxu0 %v3018
      %v3109 = vpop.f32.mrb[0].mxu0
      %v3110 = vadd.f32 %v2440, %v3109
      %v3111 = vpop.f32.mrb[0].mxu0
      %v3112 = vpop.f32.mrb[0].mxu0
      %v3113 = vadd.f32 %v2440, %v3112
      %v3114 = vpop.f32.mrb[0].mxu0
      %3115 = vmatprep.mubr.bf16.mxu0 0
      %3116 = vmatmul.mubr.bf16.gmra.mrb[0].mxu0 %v3021
      %v3117 = vpop.f32.mrb[0].mxu0
      %v3118 = vadd.f32 %v2440, %v3117
      %v3119 = vpop.f32.mrb[0].mxu0
      %v3120 = vpop.f32.mrb[0].mxu0
      %v3121 = vadd.f32 %v2440, %v3120
      %v3122 = vpop.f32.mrb[0].mxu0
      %3123 = vmatprep.mubr.bf16.mxu0 0
      %3124 = vmatmul.mubr.bf16.gmra.mrb[0].mxu0 %v3024
      %v3125 = vpop.f32.mrb[0].mxu0
      %v3126 = vadd.f32 %v2440, %v3125
      %v3127 = vpop.f32.mrb[0].mxu0
      %v3128 = vpop.f32.mrb[0].mxu0
      %v3129 = vadd.f32 %v2440, %v3128
      %v3130 = vpop.f32.mrb[0].mxu0
      %3131 = vmatprep.mubr.bf16.mxu0 0
      %3132 = vmatmul.mubr.bf16.gmra.mrb[0].mxu0 %v3027
      %v3133 = vpop.f32.mrb[0].mxu0
      %v3134 = vadd.f32 %v2440, %v3133
      %v3135 = vpop.f32.mrb[0].mxu0
      %v3136 = vpop.f32.mrb[0].mxu0
      %v3137 = vadd.f32 %v2440, %v3136
      %v3138 = vpop.f32.mrb[0].mxu0
      %3139 = vmatprep.mubr.bf16.mxu0 0
      %3140 = vmatmul.mubr.bf16.gmra.mrb[0].mxu0 %v3030
      %v3141 = vpop.f32.mrb[0].mxu0
      %v3142 = vadd.f32 %v2440, %v3141
      %v3143 = vpop.f32.mrb[0].mxu0
      %v3144 = vpop.f32.mrb[0].mxu0
      %v3145 = vadd.f32 %v2440, %v3144
      %v3146 = vpop.f32.mrb[0].mxu0
      %3147 = vmatprep.mubr.bf16.mxu0 0
      %3148 = vmatmul.mubr.bf16.gmra.mrb[0].mxu0 %v3033
      %v3149 = vpop.f32.mrb[0].mxu0
      %v3150 = vadd.f32 %v2440, %v3149
      %v3151 = vpop.f32.mrb[0].mxu0
      %v3152 = vpop.f32.mrb[0].mxu0
      %v3153 = vadd.f32 %v2440, %v3152
      %v3154 = vpop.f32.mrb[0].mxu0
      %3155 = vmatprep.mubr.bf16.mxu0 0
      %3156 = vmatmul.mubr.bf16.gmra.mrb[0].mxu0 %v3036
      %v3157 = vpop.f32.mrb[0].mxu0
      %v3158 = vadd.f32 %v2440, %v3157
      %v3159 = vpop.f32.mrb[0].mxu0
      %v3160 = vpop.f32.mrb[0].mxu0
      %v3161 = vadd.f32 %v2440, %v3160
      %v3162 = vpop.f32.mrb[0].mxu0
      %3163 = vmatprep.mubr.bf16.mxu0 0
      %3164 = vmatmul.mubr.bf16.gmra.mrb[0].mxu0 %v3039
      %v3165 = vpop.f32.mrb[0].mxu0
      %v3166 = vadd.f32 %v2440, %v3165
      %v3167 = vpop.f32.mrb[0].mxu0
      %v3168 = vpop.f32.mrb[0].mxu0
      %v3169 = vadd.f32 %v2440, %v3168
      %v3170 = vpop.f32.mrb[0].mxu0
      %3171 = vmatprep.mubr.bf16.mxu0 0
      %3172 = vmatmul.mubr.bf16.gmra.mrb[0].mxu0 %v3042
      %v3173 = vpop.f32.mrb[0].mxu0
      %v3174 = vadd.f32 %v2440, %v3173
      %v3175 = vpop.f32.mrb[0].mxu0
      %v3176 = vpop.f32.mrb[0].mxu0
      %v3177 = vpop.f32.mrb[0].mxu0
      %3178 = vdwg.mxu0
      %v3179 = vmax.f32 %v3086, 0.0
      %v3180 = vmax.f32 %v3089, 0.0
      %v3181 = vmax.f32 %v3094, 0.0
      %v3182 = vmax.f32 %v3097, 0.0
      %v3183 = vmax.f32 %v3102, 0.0
      %v3184 = vmax.f32 %v3105, 0.0
      %v3185 = vmax.f32 %v3110, 0.0
      %v3186 = vmax.f32 %v3113, 0.0
      %v3187 = vmax.f32 %v3118, 0.0
      %v3188 = vmax.f32 %v3121, 0.0
      %v3189 = vmax.f32 %v3126, 0.0
      %v3190 = vmax.f32 %v3129, 0.0
      %v3191 = vmax.f32 %v3134, 0.0
      %v3192 = vmax.f32 %v3137, 0.0
      %v3193 = vmax.f32 %v3142, 0.0
      %v3194 = vmax.f32 %v3145, 0.0
      %v3195 = vmax.f32 %v3150, 0.0
      %v3196 = vmax.f32 %v3153, 0.0
      %v3197 = vmax.f32 %v3158, 0.0
      %v3198 = vmax.f32 %v3161, 0.0
      %v3199 = vmax.f32 %v3166, 0.0
      %v3200 = vmax.f32 %v3169, 0.0
      %v3201 = vmax.f32 %v3174, 0.0
      %v3225 = vcombine.high %v3179, %v3179
      %v3227 = vunpack.c.l.s4 1983009808
      %v3228 = vunpack.c.0.s8 %v3227
      %v3229 = vlaneseq
      %v3230 = vshrl.u32 %v3229, 7
      %v3231 = vsub.s32 %v3228, %v3230
      %v3232 = vrot.slane %v3179, %v3231
      %v3234 = vunpack.c.l.s4 1983009808
      %v3235 = vunpack.c.0.s8 %v3234
      %v3236 = vlaneseq
      %v3237 = vshrl.u32 %v3236, 7
      %v3238 = vsub.s32 %v3235, %v3237
      %v3239 = vrot.slane %v3225, %v3238
      %v3240 = vcombine.high %v3232, %v3232
      %v3241 = vcombine.high %v3239, %v3239
      %v3242 = vcombine.high %v3180, %v3180
      %v3244 = vunpack.c.l.s4 1983009808
      %v3245 = vunpack.c.0.s8 %v3244
      %v3246 = vlaneseq
      %v3247 = vshrl.u32 %v3246, 7
      %v3248 = vsub.s32 %v3245, %v3247
      %v3249 = vrot.slane %v3180, %v3248
      %v3251 = vunpack.c.l.s4 1983009808
      %v3252 = vunpack.c.0.s8 %v3251
      %v3253 = vlaneseq
      %v3254 = vshrl.u32 %v3253, 7
      %v3255 = vsub.s32 %v3252, %v3254
      %v3256 = vrot.slane %v3242, %v3255
      %v3257 = vcombine.high %v3249, %v3249
      %v3258 = vcombine.high %v3256, %v3256
      %v3259 = vcombine.high %v3181, %v3181
      %v3261 = vunpack.c.l.s4 1983009808
      %v3262 = vunpack.c.0.s8 %v3261
      %v3263 = vlaneseq
      %v3264 = vshrl.u32 %v3263, 7
      %v3265 = vsub.s32 %v3262, %v3264
      %v3266 = vrot.slane %v3181, %v3265
      %v3268 = vunpack.c.l.s4 1983009808
      %v3269 = vunpack.c.0.s8 %v3268
      %v3270 = vlaneseq
      %v3271 = vshrl.u32 %v3270, 7
      %v3272 = vsub.s32 %v3269, %v3271
      %v3273 = vrot.slane %v3259, %v3272
      %v3274 = vcombine.high %v3266, %v3266
      %v3275 = vcombine.high %v3273, %v3273
      %v3276 = vcombine.high %v3182, %v3182
      %v3278 = vunpack.c.l.s4 1983009808
      %v3279 = vunpack.c.0.s8 %v3278
      %v3280 = vlaneseq
      %v3281 = vshrl.u32 %v3280, 7
      %v3282 = vsub.s32 %v3279, %v3281
      %v3283 = vrot.slane %v3182, %v3282
      %v3285 = vunpack.c.l.s4 1983009808
      %v3286 = vunpack.c.0.s8 %v3285
      %v3287 = vlaneseq
      %v3288 = vshrl.u32 %v3287, 7
      %v3289 = vsub.s32 %v3286, %v3288
      %v3290 = vrot.slane %v3276, %v3289
      %v3291 = vcombine.high %v3283, %v3283
      %v3292 = vcombine.high %v3290, %v3290
      %v3293 = vcombine.high %v3183, %v3183
      %v3295 = vunpack.c.l.s4 1983009808
      %v3296 = vunpack.c.0.s8 %v3295
      %v3297 = vlaneseq
      %v3298 = vshrl.u32 %v3297, 7
      %v3299 = vsub.s32 %v3296, %v3298
      %v3300 = vrot.slane %v3183, %v3299
      %v3302 = vunpack.c.l.s4 1983009808
      %v3303 = vunpack.c.0.s8 %v3302
      %v3304 = vlaneseq
      %v3305 = vshrl.u32 %v3304, 7
      %v3306 = vsub.s32 %v3303, %v3305
      %v3307 = vrot.slane %v3293, %v3306
      %v3308 = vcombine.high %v3300, %v3300
      %v3309 = vcombine.high %v3307, %v3307
      %v3310 = vcombine.high %v3184, %v3184
      %v3312 = vunpack.c.l.s4 1983009808
      %v3313 = vunpack.c.0.s8 %v3312
      %v3314 = vlaneseq
      %v3315 = vshrl.u32 %v3314, 7
      %v3316 = vsub.s32 %v3313, %v3315
      %v3317 = vrot.slane %v3184, %v3316
      %v3319 = vunpack.c.l.s4 1983009808
      %v3320 = vunpack.c.0.s8 %v3319
      %v3321 = vlaneseq
      %v3322 = vshrl.u32 %v3321, 7
      %v3323 = vsub.s32 %v3320, %v3322
      %v3324 = vrot.slane %v3310, %v3323
      %v3325 = vcombine.high %v3317, %v3317
      %v3326 = vcombine.high %v3324, %v3324
      %v3327 = vcombine.high %v3185, %v3185
      %v3329 = vunpack.c.l.s4 1983009808
      %v3330 = vunpack.c.0.s8 %v3329
      %v3331 = vlaneseq
      %v3332 = vshrl.u32 %v3331, 7
      %v3333 = vsub.s32 %v3330, %v3332
      %v3334 = vrot.slane %v3185, %v3333
      %v3336 = vunpack.c.l.s4 1983009808
      %v3337 = vunpack.c.0.s8 %v3336
      %v3338 = vlaneseq
      %v3339 = vshrl.u32 %v3338, 7
      %v3340 = vsub.s32 %v3337, %v3339
      %v3341 = vrot.slane %v3327, %v3340
      %v3342 = vcombine.high %v3334, %v3334
      %v3343 = vcombine.high %v3341, %v3341
      %v3344 = vcombine.high %v3186, %v3186
      %v3346 = vunpack.c.l.s4 1983009808
      %v3347 = vunpack.c.0.s8 %v3346
      %v3348 = vlaneseq
      %v3349 = vshrl.u32 %v3348, 7
      %v3350 = vsub.s32 %v3347, %v3349
      %v3351 = vrot.slane %v3186, %v3350
      %v3353 = vunpack.c.l.s4 1983009808
      %v3354 = vunpack.c.0.s8 %v3353
      %v3355 = vlaneseq
      %v3356 = vshrl.u32 %v3355, 7
      %v3357 = vsub.s32 %v3354, %v3356
      %v3358 = vrot.slane %v3344, %v3357
      %v3359 = vcombine.high %v3351, %v3351
      %v3360 = vcombine.high %v3358, %v3358
      %v3361 = vcombine.high %v3187, %v3187
      %v3363 = vunpack.c.l.s4 1983009808
      %v3364 = vunpack.c.0.s8 %v3363
      %v3365 = vlaneseq
      %v3366 = vshrl.u32 %v3365, 7
      %v3367 = vsub.s32 %v3364, %v3366
      %v3368 = vrot.slane %v3187, %v3367
      %v3370 = vunpack.c.l.s4 1983009808
      %v3371 = vunpack.c.0.s8 %v3370
      %v3372 = vlaneseq
      %v3373 = vshrl.u32 %v3372, 7
      %v3374 = vsub.s32 %v3371, %v3373
      %v3375 = vrot.slane %v3361, %v3374
      %v3376 = vcombine.high %v3368, %v3368
      %v3377 = vcombine.high %v3375, %v3375
      %v3378 = vcombine.high %v3188, %v3188
      %v3380 = vunpack.c.l.s4 1983009808
      %v3381 = vunpack.c.0.s8 %v3380
      %v3382 = vlaneseq
      %v3383 = vshrl.u32 %v3382, 7
      %v3384 = vsub.s32 %v3381, %v3383
      %v3385 = vrot.slane %v3188, %v3384
      %v3387 = vunpack.c.l.s4 1983009808
      %v3388 = vunpack.c.0.s8 %v3387
      %v3389 = vlaneseq
      %v3390 = vshrl.u32 %v3389, 7
      %v3391 = vsub.s32 %v3388, %v3390
      %v3392 = vrot.slane %v3378, %v3391
      %v3393 = vcombine.high %v3385, %v3385
      %v3394 = vcombine.high %v3392, %v3392
      %v3395 = vcombine.high %v3189, %v3189
      %v3397 = vunpack.c.l.s4 1983009808
      %v3398 = vunpack.c.0.s8 %v3397
      %v3399 = vlaneseq
      %v3400 = vshrl.u32 %v3399, 7
      %v3401 = vsub.s32 %v3398, %v3400
      %v3402 = vrot.slane %v3189, %v3401
      %v3404 = vunpack.c.l.s4 1983009808
      %v3405 = vunpack.c.0.s8 %v3404
      %v3406 = vlaneseq
      %v3407 = vshrl.u32 %v3406, 7
      %v3408 = vsub.s32 %v3405, %v3407
      %v3409 = vrot.slane %v3395, %v3408
      %v3410 = vcombine.high %v3402, %v3402
      %v3411 = vcombine.high %v3409, %v3409
      %v3412 = vcombine.high %v3190, %v3190
      %v3414 = vunpack.c.l.s4 1983009808
      %v3415 = vunpack.c.0.s8 %v3414
      %v3416 = vlaneseq
      %v3417 = vshrl.u32 %v3416, 7
      %v3418 = vsub.s32 %v3415, %v3417
      %v3419 = vrot.slane %v3190, %v3418
      %v3421 = vunpack.c.l.s4 1983009808
      %v3422 = vunpack.c.0.s8 %v3421
      %v3423 = vlaneseq
      %v3424 = vshrl.u32 %v3423, 7
      %v3425 = vsub.s32 %v3422, %v3424
      %v3426 = vrot.slane %v3412, %v3425
      %v3427 = vcombine.high %v3419, %v3419
      %v3428 = vcombine.high %v3426, %v3426
      %v3429 = vcombine.high %v3191, %v3191
      %v3431 = vunpack.c.l.s4 1983009808
      %v3432 = vunpack.c.0.s8 %v3431
      %v3433 = vlaneseq
      %v3434 = vshrl.u32 %v3433, 7
      %v3435 = vsub.s32 %v3432, %v3434
      %v3436 = vrot.slane %v3191, %v3435
      %v3438 = vunpack.c.l.s4 1983009808
      %v3439 = vunpack.c.0.s8 %v3438
      %v3440 = vlaneseq
      %v3441 = vshrl.u32 %v3440, 7
      %v3442 = vsub.s32 %v3439, %v3441
      %v3443 = vrot.slane %v3429, %v3442
      %v3444 = vcombine.high %v3436, %v3436
      %v3445 = vcombine.high %v3443, %v3443
      %v3446 = vcombine.high %v3192, %v3192
      %v3448 = vunpack.c.l.s4 1983009808
      %v3449 = vunpack.c.0.s8 %v3448
      %v3450 = vlaneseq
      %v3451 = vshrl.u32 %v3450, 7
      %v3452 = vsub.s32 %v3449, %v3451
      %v3453 = vrot.slane %v3192, %v3452
      %v3455 = vunpack.c.l.s4 1983009808
      %v3456 = vunpack.c.0.s8 %v3455
      %v3457 = vlaneseq
      %v3458 = vshrl.u32 %v3457, 7
      %v3459 = vsub.s32 %v3456, %v3458
      %v3460 = vrot.slane %v3446, %v3459
      %v3461 = vcombine.high %v3453, %v3453
      %v3462 = vcombine.high %v3460, %v3460
      %v3463 = vcombine.high %v3193, %v3193
      %v3465 = vunpack.c.l.s4 1983009808
      %v3466 = vunpack.c.0.s8 %v3465
      %v3467 = vlaneseq
      %v3468 = vshrl.u32 %v3467, 7
      %v3469 = vsub.s32 %v3466, %v3468
      %v3470 = vrot.slane %v3193, %v3469
      %v3472 = vunpack.c.l.s4 1983009808
      %v3473 = vunpack.c.0.s8 %v3472
      %v3474 = vlaneseq
      %v3475 = vshrl.u32 %v3474, 7
      %v3476 = vsub.s32 %v3473, %v3475
      %v3477 = vrot.slane %v3463, %v3476
      %v3478 = vcombine.high %v3470, %v3470
      %v3479 = vcombine.high %v3477, %v3477
      %v3480 = vcombine.high %v3194, %v3194
      %v3482 = vunpack.c.l.s4 1983009808
      %v3483 = vunpack.c.0.s8 %v3482
      %v3484 = vlaneseq
      %v3485 = vshrl.u32 %v3484, 7
      %v3486 = vsub.s32 %v3483, %v3485
      %v3487 = vrot.slane %v3194, %v3486
      %v3489 = vunpack.c.l.s4 1983009808
      %v3490 = vunpack.c.0.s8 %v3489
      %v3491 = vlaneseq
      %v3492 = vshrl.u32 %v3491, 7
      %v3493 = vsub.s32 %v3490, %v3492
      %v3494 = vrot.slane %v3480, %v3493
      %v3495 = vcombine.high %v3487, %v3487
      %v3496 = vcombine.high %v3494, %v3494
      %v3497 = vcombine.high %v3195, %v3195
      %v3499 = vunpack.c.l.s4 1983009808
      %v3500 = vunpack.c.0.s8 %v3499
      %v3501 = vlaneseq
      %v3502 = vshrl.u32 %v3501, 7
      %v3503 = vsub.s32 %v3500, %v3502
      %v3504 = vrot.slane %v3195, %v3503
      %v3506 = vunpack.c.l.s4 1983009808
      %v3507 = vunpack.c.0.s8 %v3506
      %v3508 = vlaneseq
      %v3509 = vshrl.u32 %v3508, 7
      %v3510 = vsub.s32 %v3507, %v3509
      %v3511 = vrot.slane %v3497, %v3510
      %v3512 = vcombine.high %v3504, %v3504
      %v3513 = vcombine.high %v3511, %v3511
      %v3514 = vcombine.high %v3196, %v3196
      %v3516 = vunpack.c.l.s4 1983009808
      %v3517 = vunpack.c.0.s8 %v3516
      %v3518 = vlaneseq
      %v3519 = vshrl.u32 %v3518, 7
      %v3520 = vsub.s32 %v3517, %v3519
      %v3521 = vrot.slane %v3196, %v3520
      %v3523 = vunpack.c.l.s4 1983009808
      %v3524 = vunpack.c.0.s8 %v3523
      %v3525 = vlaneseq
      %v3526 = vshrl.u32 %v3525, 7
      %v3527 = vsub.s32 %v3524, %v3526
      %v3528 = vrot.slane %v3514, %v3527
      %v3529 = vcombine.high %v3521, %v3521
      %v3530 = vcombine.high %v3528, %v3528
      %v3531 = vcombine.high %v3197, %v3197
      %v3533 = vunpack.c.l.s4 1983009808
      %v3534 = vunpack.c.0.s8 %v3533
      %v3535 = vlaneseq
      %v3536 = vshrl.u32 %v3535, 7
      %v3537 = vsub.s32 %v3534, %v3536
      %v3538 = vrot.slane %v3197, %v3537
      %v3540 = vunpack.c.l.s4 1983009808
      %v3541 = vunpack.c.0.s8 %v3540
      %v3542 = vlaneseq
      %v3543 = vshrl.u32 %v3542, 7
      %v3544 = vsub.s32 %v3541, %v3543
      %v3545 = vrot.slane %v3531, %v3544
      %v3546 = vcombine.high %v3538, %v3538
      %v3547 = vcombine.high %v3545, %v3545
      %v3548 = vcombine.high %v3198, %v3198
      %v3550 = vunpack.c.l.s4 1983009808
      %v3551 = vunpack.c.0.s8 %v3550
      %v3552 = vlaneseq
      %v3553 = vshrl.u32 %v3552, 7
      %v3554 = vsub.s32 %v3551, %v3553
      %v3555 = vrot.slane %v3198, %v3554
      %v3557 = vunpack.c.l.s4 1983009808
      %v3558 = vunpack.c.0.s8 %v3557
      %v3559 = vlaneseq
      %v3560 = vshrl.u32 %v3559, 7
      %v3561 = vsub.s32 %v3558, %v3560
      %v3562 = vrot.slane %v3548, %v3561
      %v3563 = vcombine.high %v3555, %v3555
      %v3564 = vcombine.high %v3562, %v3562
      %v3565 = vcombine.high %v3199, %v3199
      %v3567 = vunpack.c.l.s4 1983009808
      %v3568 = vunpack.c.0.s8 %v3567
      %v3569 = vlaneseq
      %v3570 = vshrl.u32 %v3569, 7
      %v3571 = vsub.s32 %v3568, %v3570
      %v3572 = vrot.slane %v3199, %v3571
      %v3574 = vunpack.c.l.s4 1983009808
      %v3575 = vunpack.c.0.s8 %v3574
      %v3576 = vlaneseq
      %v3577 = vshrl.u32 %v3576, 7
      %v3578 = vsub.s32 %v3575, %v3577
      %v3579 = vrot.slane %v3565, %v3578
      %v3580 = vcombine.high %v3572, %v3572
      %v3581 = vcombine.high %v3579, %v3579
      %v3582 = vcombine.high %v3200, %v3200
      %v3584 = vunpack.c.l.s4 1983009808
      %v3585 = vunpack.c.0.s8 %v3584
      %v3586 = vlaneseq
      %v3587 = vshrl.u32 %v3586, 7
      %v3588 = vsub.s32 %v3585, %v3587
      %v3589 = vrot.slane %v3200, %v3588
      %v3591 = vunpack.c.l.s4 1983009808
      %v3592 = vunpack.c.0.s8 %v3591
      %v3593 = vlaneseq
      %v3594 = vshrl.u32 %v3593, 7
      %v3595 = vsub.s32 %v3592, %v3594
      %v3596 = vrot.slane %v3582, %v3595
      %v3597 = vcombine.high %v3589, %v3589
      %v3598 = vcombine.high %v3596, %v3596
      %v3600 = vunpack.c.l.s4 1983009808
      %v3601 = vunpack.c.0.s8 %v3600
      %v3602 = vlaneseq
      %v3603 = vshrl.u32 %v3602, 7
      %v3604 = vsub.s32 %v3601, %v3603
      %v3605 = vrot.slane %v3201, %v3604
      %v3606 = vcombine.high %v3605, %v3605
      %s3607 = ssub.s32 %s249, 1
      %v3608 = vstv %s3607
      %v3609 = vadd.s32 %v3608, 1
      %v3610 = vadd.s32 %v3608, 2
      %v3611 = vadd.s32 %v3608, 3
      %v3612 = vadd.s32 %v3608, 4
      %v3613 = vadd.s32 %v3608, 5
      %v3614 = vadd.s32 %v3608, 6
      %v3615 = vadd.s32 %v3608, 7
      %v3616 = vadd.s32 %v3608, 8
      %v3617 = vadd.s32 %v3608, 9
      %v3618 = vlaneseq
      %v3619 = vshrl.u32 %v3618, 7
      %v3620 = vadd.s32 %v3619, 8
      %v3621 = vadd.s32 %v3619, 16
      %v3622 = vadd.s32 %v3619, 4294967295
      %v3623 = vadd.s32 %v3620, 4294967295
      %v3624 = vadd.s32 %v3621, 4294967295
      %vm3625 = vcmp.ge.s32.totalorder %v3608, 0
      %vm3626 = vcmp.ge.s32.totalorder %v3609, 0
      %vm3627 = vcmp.ge.s32.totalorder %v3610, 0
      %vm3628 = vcmp.ge.s32.totalorder %v3611, 0
      %vm3629 = vcmp.ge.s32.totalorder %v3612, 0
      %vm3630 = vcmp.ge.s32.totalorder %v3613, 0
      %vm3631 = vcmp.ge.s32.totalorder %v3614, 0
      %vm3632 = vcmp.ge.s32.totalorder %v3615, 0
      %vm3633 = vcmp.ge.s32.totalorder %v3616, 0
      %vm3634 = vcmp.ge.s32.totalorder %v3617, 0
      %vm3635 = vcmp.lt.s32.totalorder %v3608, 16
      %vm3636 = vcmp.lt.s32.totalorder %v3609, 16
      %vm3637 = vcmp.lt.s32.totalorder %v3610, 16
      %vm3638 = vcmp.lt.s32.totalorder %v3611, 16
      %vm3639 = vcmp.lt.s32.totalorder %v3612, 16
      %vm3640 = vcmp.lt.s32.totalorder %v3613, 16
      %vm3641 = vcmp.lt.s32.totalorder %v3614, 16
      %vm3642 = vcmp.lt.s32.totalorder %v3615, 16
      %vm3643 = vcmp.lt.s32.totalorder %v3616, 16
      %vm3644 = vcmp.lt.s32.totalorder %v3617, 16
      %vm3645 = vmand %vm3625, %vm3635
      %vm3646 = vmand %vm3626, %vm3636
      %vm3647 = vmand %vm3627, %vm3637
      %vm3648 = vmand %vm3628, %vm3638
      %vm3649 = vmand %vm3629, %vm3639
      %vm3650 = vmand %vm3630, %vm3640
      %vm3651 = vmand %vm3631, %vm3641
      %vm3652 = vmand %vm3632, %vm3642
      %vm3653 = vmand %vm3633, %vm3643
      %vm3654 = vmand %vm3634, %vm3644
      %vm3655 = vcmp.ge.s32.totalorder %v3622, 0
      %vm3656 = vcmp.ge.s32.totalorder %v3623, 0
      %vm3657 = vcmp.ge.s32.totalorder %v3624, 0
      %vm3658 = vmand %vm3645, %vm3655
      %vm3659 = vmand %vm3645, %vm3656
      %vm3660 = vmand %vm3645, %vm3657
      %vm3661 = vmand %vm3646, %vm3655
      %vm3662 = vmand %vm3646, %vm3656
      %vm3663 = vmand %vm3646, %vm3657
      %vm3664 = vmand %vm3647, %vm3655
      %vm3665 = vmand %vm3647, %vm3656
      %vm3666 = vmand %vm3647, %vm3657
      %vm3667 = vmand %vm3648, %vm3655
      %vm3668 = vmand %vm3648, %vm3656
      %vm3669 = vmand %vm3648, %vm3657
      %vm3670 = vmand %vm3649, %vm3655
      %vm3671 = vmand %vm3649, %vm3656
      %vm3672 = vmand %vm3649, %vm3657
      %vm3673 = vmand %vm3650, %vm3655
      %vm3674 = vmand %vm3650, %vm3656
      %vm3675 = vmand %vm3650, %vm3657
      %vm3676 = vmand %vm3651, %vm3655
      %vm3677 = vmand %vm3651, %vm3656
      %vm3678 = vmand %vm3651, %vm3657
      %vm3679 = vmand %vm3652, %vm3655
      %vm3680 = vmand %vm3652, %vm3656
      %vm3681 = vmand %vm3652, %vm3657
      %vm3682 = vmand %vm3653, %vm3655
      %vm3683 = vmand %vm3653, %vm3656
      %vm3684 = vmand %vm3653, %vm3657
      %vm3685 = vmand %vm3654, %vm3655
      %vm3686 = vmand %vm3654, %vm3656
      %vm3687 = vmand %vm3654, %vm3657
      %vm3688 = vcmp.lt.s32.totalorder %v3622, 16
      %vm3689 = vcmp.lt.s32.totalorder %v3623, 16
      %vm3690 = vcmp.lt.s32.totalorder %v3624, 16
      %vm3691 = vmand %vm3658, %vm3688
      %vm3692 = vmand %vm3659, %vm3689
      %vm3693 = vmand %vm3660, %vm3690
      %vm3694 = vmand %vm3661, %vm3688
      %vm3695 = vmand %vm3662, %vm3689
      %vm3696 = vmand %vm3663, %vm3690
      %vm3697 = vmand %vm3664, %vm3688
      %vm3698 = vmand %vm3665, %vm3689
      %vm3699 = vmand %vm3666, %vm3690
      %vm3700 = vmand %vm3667, %vm3688
      %vm3701 = vmand %vm3668, %vm3689
      %vm3702 = vmand %vm3669, %vm3690
      %vm3703 = vmand %vm3670, %vm3688
      %vm3704 = vmand %vm3671, %vm3689
      %vm3705 = vmand %vm3672, %vm3690
      %vm3706 = vmand %vm3673, %vm3688
      %vm3707 = vmand %vm3674, %vm3689
      %vm3708 = vmand %vm3675, %vm3690
      %vm3709 = vmand %vm3676, %vm3688
      %vm3710 = vmand %vm3677, %vm3689
      %vm3711 = vmand %vm3678, %vm3690
      %vm3712 = vmand %vm3679, %vm3688
      %vm3713 = vmand %vm3680, %vm3689
      %vm3714 = vmand %vm3681, %vm3690
      %vm3715 = vmand %vm3682, %vm3688
      %vm3716 = vmand %vm3683, %vm3689
      %vm3717 = vmand %vm3684, %vm3690
      %vm3718 = vmand %vm3685, %vm3688
      %vm3719 = vmand %vm3686, %vm3689
      %vm3720 = vmand %vm3687, %vm3690
      %v3721 = vsel %vm3691, 1, 0
      %v3722 = vsel %vm3692, 1, 0
      %v3723 = vsel %vm3693, 1, 0
      %v3724 = vsel %vm3694, 1, 0
      %v3725 = vsel %vm3695, 1, 0
      %v3726 = vsel %vm3696, 1, 0
      %v3727 = vsel %vm3697, 1, 0
      %v3728 = vsel %vm3698, 1, 0
      %v3729 = vsel %vm3699, 1, 0
      %v3730 = vsel %vm3700, 1, 0
      %v3731 = vsel %vm3701, 1, 0
      %v3732 = vsel %vm3702, 1, 0
      %v3733 = vsel %vm3703, 1, 0
      %v3734 = vsel %vm3704, 1, 0
      %v3735 = vsel %vm3705, 1, 0
      %v3736 = vsel %vm3706, 1, 0
      %v3737 = vsel %vm3707, 1, 0
      %v3738 = vsel %vm3708, 1, 0
      %v3739 = vsel %vm3709, 1, 0
      %v3740 = vsel %vm3710, 1, 0
      %v3741 = vsel %vm3711, 1, 0
      %v3742 = vsel %vm3712, 1, 0
      %v3743 = vsel %vm3713, 1, 0
      %v3744 = vsel %vm3714, 1, 0
      %v3745 = vsel %vm3715, 1, 0
      %v3746 = vsel %vm3716, 1, 0
      %v3747 = vsel %vm3717, 1, 0
      %v3748 = vsel %vm3718, 1, 0
      %v3749 = vsel %vm3719, 1, 0
      %v3750 = vsel %vm3720, 1, 0
      %vm3751 = vcmp.eq.s32.totalorder %v3721, 1
      %vm3752 = vcmp.eq.s32.totalorder %v3722, 1
      %vm3753 = vcmp.eq.s32.totalorder %v3723, 1
      %vm3754 = vcmp.eq.s32.totalorder %v3724, 1
      %vm3755 = vcmp.eq.s32.totalorder %v3725, 1
      %vm3756 = vcmp.eq.s32.totalorder %v3726, 1
      %vm3757 = vcmp.eq.s32.totalorder %v3727, 1
      %vm3758 = vcmp.eq.s32.totalorder %v3728, 1
      %vm3759 = vcmp.eq.s32.totalorder %v3729, 1
      %vm3760 = vcmp.eq.s32.totalorder %v3730, 1
      %vm3761 = vcmp.eq.s32.totalorder %v3731, 1
      %vm3762 = vcmp.eq.s32.totalorder %v3732, 1
      %vm3763 = vcmp.eq.s32.totalorder %v3733, 1
      %vm3764 = vcmp.eq.s32.totalorder %v3734, 1
      %vm3765 = vcmp.eq.s32.totalorder %v3735, 1
      %vm3766 = vcmp.eq.s32.totalorder %v3736, 1
      %vm3767 = vcmp.eq.s32.totalorder %v3737, 1
      %vm3768 = vcmp.eq.s32.totalorder %v3738, 1
      %vm3769 = vcmp.eq.s32.totalorder %v3739, 1
      %vm3770 = vcmp.eq.s32.totalorder %v3740, 1
      %vm3771 = vcmp.eq.s32.totalorder %v3741, 1
      %vm3772 = vcmp.eq.s32.totalorder %v3742, 1
      %vm3773 = vcmp.eq.s32.totalorder %v3743, 1
      %vm3774 = vcmp.eq.s32.totalorder %v3744, 1
      %vm3775 = vcmp.eq.s32.totalorder %v3745, 1
      %vm3776 = vcmp.eq.s32.totalorder %v3746, 1
      %vm3777 = vcmp.eq.s32.totalorder %v3747, 1
      %vm3778 = vcmp.eq.s32.totalorder %v3748, 1
      %vm3779 = vcmp.eq.s32.totalorder %v3749, 1
      %vm3780 = vcmp.eq.s32.totalorder %v3750, 1
      %v3781 = vcombine.low %v3232, %v3240
      %v3782 = vcombine.low %v3239, %v3241
      %v3784 = vunpack.c.l.s4 1983009808
      %v3785 = vunpack.c.0.s8 %v3784
      %v3786 = vlaneseq
      %v3787 = vshrl.u32 %v3786, 7
      %v3788 = vsub.s32 %v3785, %v3787
      %v3789 = vrot.slane %v3781, %v3788
      %v3791 = vunpack.c.l.s4 1983009808
      %v3792 = vunpack.c.0.s8 %v3791
      %v3793 = vlaneseq
      %v3794 = vshrl.u32 %v3793, 7
      %v3795 = vsub.s32 %v3792, %v3794
      %v3796 = vrot.slane %v3782, %v3795
      %v3797 = vcombine.low %v3789, %v3796
      %v3798 = vcombine.low %v3249, %v3257
      %v3799 = vcombine.low %v3256, %v3258
      %v3801 = vunpack.c.l.s4 1983009808
      %v3802 = vunpack.c.0.s8 %v3801
      %v3803 = vlaneseq
      %v3804 = vshrl.u32 %v3803, 7
      %v3805 = vsub.s32 %v3802, %v3804
      %v3806 = vrot.slane %v3798, %v3805
      %v3808 = vunpack.c.l.s4 1983009808
      %v3809 = vunpack.c.0.s8 %v3808
      %v3810 = vlaneseq
      %v3811 = vshrl.u32 %v3810, 7
      %v3812 = vsub.s32 %v3809, %v3811
      %v3813 = vrot.slane %v3799, %v3812
      %v3814 = vcombine.low %v3806, %v3813
      %v3816 = vunpack.c.l.s4 1983009808
      %v3817 = vunpack.c.0.s8 %v3816
      %v3818 = vlaneseq
      %v3819 = vshrl.u32 %v3818, 7
      %v3820 = vsub.s32 %v3817, %v3819
      %v3821 = vrot.slane %v3266, %v3820
      %v3822 = vcombine.low %v3274, %v3273
      %v3823 = vcombine.low %v3275, %v3283
      %v3825 = vunpack.c.l.s4 1983009808
      %v3826 = vunpack.c.0.s8 %v3825
      %v3827 = vlaneseq
      %v3828 = vshrl.u32 %v3827, 7
      %v3829 = vsub.s32 %v3826, %v3828
      %v3830 = vrot.slane %v3822, %v3829
      %v3832 = vunpack.c.l.s4 1983009808
      %v3833 = vunpack.c.0.s8 %v3832
      %v3834 = vlaneseq
      %v3835 = vshrl.u32 %v3834, 7
      %v3836 = vsub.s32 %v3833, %v3835
      %v3837 = vrot.slane %v3823, %v3836
      %v3838 = vcombine.low %v3830, %v3837
      %v3839 = vcombine.low %v3291, %v3290
      %v3840 = vcombine.low %v3292, %v3300
      %v3842 = vunpack.c.l.s4 1983009808
      %v3843 = vunpack.c.0.s8 %v3842
      %v3844 = vlaneseq
      %v3845 = vshrl.u32 %v3844, 7
      %v3846 = vsub.s32 %v3843, %v3845
      %v3847 = vrot.slane %v3839, %v3846
      %v3849 = vunpack.c.l.s4 1983009808
      %v3850 = vunpack.c.0.s8 %v3849
      %v3851 = vlaneseq
      %v3852 = vshrl.u32 %v3851, 7
      %v3853 = vsub.s32 %v3850, %v3852
      %v3854 = vrot.slane %v3840, %v3853
      %v3855 = vcombine.low %v3847, %v3854
      %v3857 = vunpack.c.l.s4 1983009808
      %v3858 = vunpack.c.0.s8 %v3857
      %v3859 = vlaneseq
      %v3860 = vshrl.u32 %v3859, 7
      %v3861 = vsub.s32 %v3858, %v3860
      %v3862 = vrot.slane %v3308, %v3861
      %v3863 = vcombine.low %v3307, %v3309
      %v3864 = vcombine.low %v3317, %v3325
      %v3866 = vunpack.c.l.s4 1983009808
      %v3867 = vunpack.c.0.s8 %v3866
      %v3868 = vlaneseq
      %v3869 = vshrl.u32 %v3868, 7
      %v3870 = vsub.s32 %v3867, %v3869
      %v3871 = vrot.slane %v3863, %v3870
      %v3873 = vunpack.c.l.s4 1983009808
      %v3874 = vunpack.c.0.s8 %v3873
      %v3875 = vlaneseq
      %v3876 = vshrl.u32 %v3875, 7
      %v3877 = vsub.s32 %v3874, %v3876
      %v3878 = vrot.slane %v3864, %v3877
      %v3879 = vcombine.low %v3871, %v3878
      %v3880 = vcombine.low %v3324, %v3326
      %v3881 = vcombine.low %v3334, %v3342
      %v3883 = vunpack.c.l.s4 1983009808
      %v3884 = vunpack.c.0.s8 %v3883
      %v3885 = vlaneseq
      %v3886 = vshrl.u32 %v3885, 7
      %v3887 = vsub.s32 %v3884, %v3886
      %v3888 = vrot.slane %v3880, %v3887
      %v3890 = vunpack.c.l.s4 1983009808
      %v3891 = vunpack.c.0.s8 %v3890
      %v3892 = vlaneseq
      %v3893 = vshrl.u32 %v3892, 7
      %v3894 = vsub.s32 %v3891, %v3893
      %v3895 = vrot.slane %v3881, %v3894
      %v3896 = vcombine.low %v3888, %v3895
      %v3898 = vunpack.c.l.s4 1983009808
      %v3899 = vunpack.c.0.s8 %v3898
      %v3900 = vlaneseq
      %v3901 = vshrl.u32 %v3900, 7
      %v3902 = vsub.s32 %v3899, %v3901
      %v3903 = vrot.slane %v3341, %v3902
      %v3904 = vcombine.low %v3343, %v3351
      %v3905 = vcombine.low %v3359, %v3358
      %v3907 = vunpack.c.l.s4 1983009808
      %v3908 = vunpack.c.0.s8 %v3907
      %v3909 = vlaneseq
      %v3910 = vshrl.u32 %v3909, 7
      %v3911 = vsub.s32 %v3908, %v3910
      %v3912 = vrot.slane %v3904, %v3911
      %v3914 = vunpack.c.l.s4 1983009808
      %v3915 = vunpack.c.0.s8 %v3914
      %v3916 = vlaneseq
      %v3917 = vshrl.u32 %v3916, 7
      %v3918 = vsub.s32 %v3915, %v3917
      %v3919 = vrot.slane %v3905, %v3918
      %v3920 = vcombine.low %v3912, %v3919
      %v3921 = vcombine.low %v3360, %v3368
      %v3922 = vcombine.low %v3376, %v3375
      %v3924 = vunpack.c.l.s4 1983009808
      %v3925 = vunpack.c.0.s8 %v3924
      %v3926 = vlaneseq
      %v3927 = vshrl.u32 %v3926, 7
      %v3928 = vsub.s32 %v3925, %v3927
      %v3929 = vrot.slane %v3921, %v3928
      %v3931 = vunpack.c.l.s4 1983009808
      %v3932 = vunpack.c.0.s8 %v3931
      %v3933 = vlaneseq
      %v3934 = vshrl.u32 %v3933, 7
      %v3935 = vsub.s32 %v3932, %v3934
      %v3936 = vrot.slane %v3922, %v3935
      %v3937 = vcombine.low %v3929, %v3936
      %v3939 = vunpack.c.l.s4 1983009808
      %v3940 = vunpack.c.0.s8 %v3939
      %v3941 = vlaneseq
      %v3942 = vshrl.u32 %v3941, 7
      %v3943 = vsub.s32 %v3940, %v3942
      %v3944 = vrot.slane %v3377, %v3943
      %v3945 = vcombine.low %v3385, %v3393
      %v3946 = vcombine.low %v3392, %v3394
      %v3948 = vunpack.c.l.s4 1983009808
      %v3949 = vunpack.c.0.s8 %v3948
      %v3950 = vlaneseq
      %v3951 = vshrl.u32 %v3950, 7
      %v3952 = vsub.s32 %v3949, %v3951
      %v3953 = vrot.slane %v3945, %v3952
      %v3955 = vunpack.c.l.s4 1983009808
      %v3956 = vunpack.c.0.s8 %v3955
      %v3957 = vlaneseq
      %v3958 = vshrl.u32 %v3957, 7
      %v3959 = vsub.s32 %v3956, %v3958
      %v3960 = vrot.slane %v3946, %v3959
      %v3961 = vcombine.low %v3953, %v3960
      %v3962 = vcombine.low %v3402, %v3410
      %v3963 = vcombine.low %v3409, %v3411
      %v3965 = vunpack.c.l.s4 1983009808
      %v3966 = vunpack.c.0.s8 %v3965
      %v3967 = vlaneseq
      %v3968 = vshrl.u32 %v3967, 7
      %v3969 = vsub.s32 %v3966, %v3968
      %v3970 = vrot.slane %v3962, %v3969
      %v3972 = vunpack.c.l.s4 1983009808
      %v3973 = vunpack.c.0.s8 %v3972
      %v3974 = vlaneseq
      %v3975 = vshrl.u32 %v3974, 7
      %v3976 = vsub.s32 %v3973, %v3975
      %v3977 = vrot.slane %v3963, %v3976
      %v3978 = vcombine.low %v3970, %v3977
      %v3980 = vunpack.c.l.s4 1983009808
      %v3981 = vunpack.c.0.s8 %v3980
      %v3982 = vlaneseq
      %v3983 = vshrl.u32 %v3982, 7
      %v3984 = vsub.s32 %v3981, %v3983
      %v3985 = vrot.slane %v3419, %v3984
      %v3986 = vcombine.low %v3427, %v3426
      %v3987 = vcombine.low %v3428, %v3436
      %v3989 = vunpack.c.l.s4 1983009808
      %v3990 = vunpack.c.0.s8 %v3989
      %v3991 = vlaneseq
      %v3992 = vshrl.u32 %v3991, 7
      %v3993 = vsub.s32 %v3990, %v3992
      %v3994 = vrot.slane %v3986, %v3993
      %v3996 = vunpack.c.l.s4 1983009808
      %v3997 = vunpack.c.0.s8 %v3996
      %v3998 = vlaneseq
      %v3999 = vshrl.u32 %v3998, 7
      %v4000 = vsub.s32 %v3997, %v3999
      %v4001 = vrot.slane %v3987, %v4000
      %v4002 = vcombine.low %v3994, %v4001
      %v4003 = vcombine.low %v3444, %v3443
      %v4004 = vcombine.low %v3445, %v3453
      %v4006 = vunpack.c.l.s4 1983009808
      %v4007 = vunpack.c.0.s8 %v4006
      %v4008 = vlaneseq
      %v4009 = vshrl.u32 %v4008, 7
      %v4010 = vsub.s32 %v4007, %v4009
      %v4011 = vrot.slane %v4003, %v4010
      %v4013 = vunpack.c.l.s4 1983009808
      %v4014 = vunpack.c.0.s8 %v4013
      %v4015 = vlaneseq
      %v4016 = vshrl.u32 %v4015, 7
      %v4017 = vsub.s32 %v4014, %v4016
      %v4018 = vrot.slane %v4004, %v4017
      %v4019 = vcombine.low %v4011, %v4018
      %v4021 = vunpack.c.l.s4 1983009808
      %v4022 = vunpack.c.0.s8 %v4021
      %v4023 = vlaneseq
      %v4024 = vshrl.u32 %v4023, 7
      %v4025 = vsub.s32 %v4022, %v4024
      %v4026 = vrot.slane %v3461, %v4025
      %v4027 = vcombine.low %v3460, %v3462
      %v4028 = vcombine.low %v3470, %v3478
      %v4030 = vunpack.c.l.s4 1983009808
      %v4031 = vunpack.c.0.s8 %v4030
      %v4032 = vlaneseq
      %v4033 = vshrl.u32 %v4032, 7
      %v4034 = vsub.s32 %v4031, %v4033
      %v4035 = vrot.slane %v4027, %v4034
      %v4037 = vunpack.c.l.s4 1983009808
      %v4038 = vunpack.c.0.s8 %v4037
      %v4039 = vlaneseq
      %v4040 = vshrl.u32 %v4039, 7
      %v4041 = vsub.s32 %v4038, %v4040
      %v4042 = vrot.slane %v4028, %v4041
      %v4043 = vcombine.low %v4035, %v4042
      %v4044 = vcombine.low %v3477, %v3479
      %v4045 = vcombine.low %v3487, %v3495
      %v4047 = vunpack.c.l.s4 1983009808
      %v4048 = vunpack.c.0.s8 %v4047
      %v4049 = vlaneseq
      %v4050 = vshrl.u32 %v4049, 7
      %v4051 = vsub.s32 %v4048, %v4050
      %v4052 = vrot.slane %v4044, %v4051
      %v4054 = vunpack.c.l.s4 1983009808
      %v4055 = vunpack.c.0.s8 %v4054
      %v4056 = vlaneseq
      %v4057 = vshrl.u32 %v4056, 7
      %v4058 = vsub.s32 %v4055, %v4057
      %v4059 = vrot.slane %v4045, %v4058
      %v4060 = vcombine.low %v4052, %v4059
      %v4062 = vunpack.c.l.s4 1983009808
      %v4063 = vunpack.c.0.s8 %v4062
      %v4064 = vlaneseq
      %v4065 = vshrl.u32 %v4064, 7
      %v4066 = vsub.s32 %v4063, %v4065
      %v4067 = vrot.slane %v3494, %v4066
      %v4068 = vcombine.low %v3496, %v3504
      %v4069 = vcombine.low %v3512, %v3511
      %v4071 = vunpack.c.l.s4 1983009808
      %v4072 = vunpack.c.0.s8 %v4071
      %v4073 = vlaneseq
      %v4074 = vshrl.u32 %v4073, 7
      %v4075 = vsub.s32 %v4072, %v4074
      %v4076 = vrot.slane %v4068, %v4075
      %v4078 = vunpack.c.l.s4 1983009808
      %v4079 = vunpack.c.0.s8 %v4078
      %v4080 = vlaneseq
      %v4081 = vshrl.u32 %v4080, 7
      %v4082 = vsub.s32 %v4079, %v4081
      %v4083 = vrot.slane %v4069, %v4082
      %v4084 = vcombine.low %v4076, %v4083
      %v4085 = vcombine.low %v3513, %v3521
      %v4086 = vcombine.low %v3529, %v3528
      %v4088 = vunpack.c.l.s4 1983009808
      %v4089 = vunpack.c.0.s8 %v4088
      %v4090 = vlaneseq
      %v4091 = vshrl.u32 %v4090, 7
      %v4092 = vsub.s32 %v4089, %v4091
      %v4093 = vrot.slane %v4085, %v4092
      %v4095 = vunpack.c.l.s4 1983009808
      %v4096 = vunpack.c.0.s8 %v4095
      %v4097 = vlaneseq
      %v4098 = vshrl.u32 %v4097, 7
      %v4099 = vsub.s32 %v4096, %v4098
      %v4100 = vrot.slane %v4086, %v4099
      %v4101 = vcombine.low %v4093, %v4100
      %v4103 = vunpack.c.l.s4 1983009808
      %v4104 = vunpack.c.0.s8 %v4103
      %v4105 = vlaneseq
      %v4106 = vshrl.u32 %v4105, 7
      %v4107 = vsub.s32 %v4104, %v4106
      %v4108 = vrot.slane %v3530, %v4107
      %v4109 = vcombine.low %v3538, %v3546
      %v4110 = vcombine.low %v3545, %v3547
      %v4112 = vunpack.c.l.s4 1983009808
      %v4113 = vunpack.c.0.s8 %v4112
      %v4114 = vlaneseq
      %v4115 = vshrl.u32 %v4114, 7
      %v4116 = vsub.s32 %v4113, %v4115
      %v4117 = vrot.slane %v4109, %v4116
      %v4119 = vunpack.c.l.s4 1983009808
      %v4120 = vunpack.c.0.s8 %v4119
      %v4121 = vlaneseq
      %v4122 = vshrl.u32 %v4121, 7
      %v4123 = vsub.s32 %v4120, %v4122
      %v4124 = vrot.slane %v4110, %v4123
      %v4125 = vcombine.low %v4117, %v4124
      %v4126 = vcombine.low %v3555, %v3563
      %v4127 = vcombine.low %v3562, %v3564
      %v4129 = vunpack.c.l.s4 1983009808
      %v4130 = vunpack.c.0.s8 %v4129
      %v4131 = vlaneseq
      %v4132 = vshrl.u32 %v4131, 7
      %v4133 = vsub.s32 %v4130, %v4132
      %v4134 = vrot.slane %v4126, %v4133
      %v4136 = vunpack.c.l.s4 1983009808
      %v4137 = vunpack.c.0.s8 %v4136
      %v4138 = vlaneseq
      %v4139 = vshrl.u32 %v4138, 7
      %v4140 = vsub.s32 %v4137, %v4139
      %v4141 = vrot.slane %v4127, %v4140
      %v4142 = vcombine.low %v4134, %v4141
      %v4144 = vunpack.c.l.s4 1983009808
      %v4145 = vunpack.c.0.s8 %v4144
      %v4146 = vlaneseq
      %v4147 = vshrl.u32 %v4146, 7
      %v4148 = vsub.s32 %v4145, %v4147
      %v4149 = vrot.slane %v3572, %v4148
      %v4150 = vcombine.low %v3580, %v3579
      %v4151 = vcombine.low %v3581, %v3589
      %v4153 = vunpack.c.l.s4 1983009808
      %v4154 = vunpack.c.0.s8 %v4153
      %v4155 = vlaneseq
      %v4156 = vshrl.u32 %v4155, 7
      %v4157 = vsub.s32 %v4154, %v4156
      %v4158 = vrot.slane %v4150, %v4157
      %v4160 = vunpack.c.l.s4 1983009808
      %v4161 = vunpack.c.0.s8 %v4160
      %v4162 = vlaneseq
      %v4163 = vshrl.u32 %v4162, 7
      %v4164 = vsub.s32 %v4161, %v4163
      %v4165 = vrot.slane %v4151, %v4164
      %v4166 = vcombine.low %v4158, %v4165
      %v4167 = vcombine.low %v3597, %v3596
      %v4168 = vcombine.low %v3598, %v3605
      %v4170 = vunpack.c.l.s4 1983009808
      %v4171 = vunpack.c.0.s8 %v4170
      %v4172 = vlaneseq
      %v4173 = vshrl.u32 %v4172, 7
      %v4174 = vsub.s32 %v4171, %v4173
      %v4175 = vrot.slane %v4167, %v4174
      %v4177 = vunpack.c.l.s4 1983009808
      %v4178 = vunpack.c.0.s8 %v4177
      %v4179 = vlaneseq
      %v4180 = vshrl.u32 %v4179, 7
      %v4181 = vsub.s32 %v4178, %v4180
      %v4182 = vrot.slane %v4168, %v4181
      %v4183 = vcombine.low %v4175, %v4182
      %v4185 = vunpack.c.l.s4 1983009808
      %v4186 = vunpack.c.0.s8 %v4185
      %v4187 = vlaneseq
      %v4188 = vshrl.u32 %v4187, 7
      %v4189 = vsub.s32 %v4186, %v4188
      %v4190 = vrot.slane %v3606, %v4189
      %v4221 = vsel %vm3751, %v3797, 0.0
      %v4222 = vsel %vm3752, %v3814, 0.0
      %v4223 = vsel %vm3753, %v3821, 0.0
      %v4224 = vsel %vm3754, %v3838, 0.0
      %v4225 = vsel %vm3755, %v3855, 0.0
      %v4226 = vsel %vm3756, %v3862, 0.0
      %v4227 = vsel %vm3757, %v3879, 0.0
      %v4228 = vsel %vm3758, %v3896, 0.0
      %v4229 = vsel %vm3759, %v3903, 0.0
      %v4230 = vsel %vm3760, %v3920, 0.0
      %v4231 = vsel %vm3761, %v3937, 0.0
      %v4232 = vsel %vm3762, %v3944, 0.0
      %v4233 = vsel %vm3763, %v3961, 0.0
      %v4234 = vsel %vm3764, %v3978, 0.0
      %v4235 = vsel %vm3765, %v3985, 0.0
      %v4236 = vsel %vm3766, %v4002, 0.0
      %v4237 = vsel %vm3767, %v4019, 0.0
      %v4238 = vsel %vm3768, %v4026, 0.0
      %v4239 = vsel %vm3769, %v4043, 0.0
      %v4240 = vsel %vm3770, %v4060, 0.0
      %v4241 = vsel %vm3771, %v4067, 0.0
      %v4242 = vsel %vm3772, %v4084, 0.0
      %v4243 = vsel %vm3773, %v4101, 0.0
      %v4244 = vsel %vm3774, %v4108, 0.0
      %v4245 = vsel %vm3775, %v4125, 0.0
      %v4246 = vsel %vm3776, %v4142, 0.0
      %v4247 = vsel %vm3777, %v4149, 0.0
      %v4248 = vsel %vm3778, %v4166, 0.0
      %v4249 = vsel %vm3779, %v4183, 0.0
      %v4250 = vsel %vm3780, %v4190, 0.0
      %v4251 = vpack.c.bf16 %v4222, %v4221
      %v4252 = vpack.c.bf16 %v4223, %v4223
      %v4253 = vpack.c.bf16 %v4225, %v4224
      %v4254 = vpack.c.bf16 %v4226, %v4226
      %v4255 = vpack.c.bf16 %v4228, %v4227
      %v4256 = vpack.c.bf16 %v4229, %v4229
      %v4257 = vpack.c.bf16 %v4231, %v4230
      %v4258 = vpack.c.bf16 %v4232, %v4232
      %v4259 = vpack.c.bf16 %v4234, %v4233
      %v4260 = vpack.c.bf16 %v4235, %v4235
      %v4261 = vpack.c.bf16 %v4237, %v4236
      %v4262 = vpack.c.bf16 %v4238, %v4238
      %v4263 = vpack.c.bf16 %v4240, %v4239
      %v4264 = vpack.c.bf16 %v4241, %v4241
      %v4265 = vpack.c.bf16 %v4243, %v4242
      %v4266 = vpack.c.bf16 %v4244, %v4244
      %v4267 = vpack.c.bf16 %v4246, %v4245
      %v4268 = vpack.c.bf16 %v4247, %v4247
      %v4269 = vpack.c.bf16 %v4249, %v4248
      %v4270 = vpack.c.bf16 %v4250, %v4250
      %v4291 = vunpack.c.l.b16 %v4251
      %v4292 = vunpack.c.h.b16 %v4251
      %v4293 = vunpack.c.l.b16 %v4252
      %v4294 = vunpack.c.l.b16 %v4253
      %v4295 = vunpack.c.h.b16 %v4253
      %v4296 = vunpack.c.l.b16 %v4254
      %v4297 = vunpack.c.l.b16 %v4255
      %v4298 = vunpack.c.h.b16 %v4255
      %v4299 = vunpack.c.l.b16 %v4256
      %v4300 = vunpack.c.l.b16 %v4257
      %v4301 = vunpack.c.h.b16 %v4257
      %v4302 = vunpack.c.l.b16 %v4258
      %v4303 = vunpack.c.l.b16 %v4259
      %v4304 = vunpack.c.h.b16 %v4259
      %v4305 = vunpack.c.l.b16 %v4260
      %v4306 = vunpack.c.l.b16 %v4261
      %v4307 = vunpack.c.h.b16 %v4261
      %v4308 = vunpack.c.l.b16 %v4262
      %v4309 = vunpack.c.l.b16 %v4263
      %v4310 = vunpack.c.h.b16 %v4263
      %v4311 = vunpack.c.l.b16 %v4264
      %v4312 = vunpack.c.l.b16 %v4265
      %v4313 = vunpack.c.h.b16 %v4265
      %v4314 = vunpack.c.l.b16 %v4266
      %v4315 = vunpack.c.l.b16 %v4267
      %v4316 = vunpack.c.h.b16 %v4267
      %v4317 = vunpack.c.l.b16 %v4268
      %v4318 = vunpack.c.l.b16 %v4269
      %v4319 = vunpack.c.h.b16 %v4269
      %v4320 = vunpack.c.l.b16 %v4270
      %v4321 = vpack.c.b16 %v4291, %v4291
      %v4322 = vpack.c.b16 %v4292, %v4292
      %v4323 = vpack.c.b16 %v4293, %v4293
      %v4324 = vpack.c.b16 %v4294, %v4294
      %v4325 = vpack.c.b16 %v4295, %v4295
      %v4326 = vpack.c.b16 %v4296, %v4296
      %v4327 = vpack.c.b16 %v4297, %v4297
      %v4328 = vpack.c.b16 %v4298, %v4298
      %v4329 = vpack.c.b16 %v4299, %v4299
      %v4330 = vpack.c.b16 %v4300, %v4300
      %v4331 = vpack.c.b16 %v4301, %v4301
      %v4332 = vpack.c.b16 %v4302, %v4302
      %v4333 = vpack.c.b16 %v4303, %v4303
      %v4334 = vpack.c.b16 %v4304, %v4304
      %v4335 = vpack.c.b16 %v4305, %v4305
      %v4336 = vpack.c.b16 %v4306, %v4306
      %v4337 = vpack.c.b16 %v4307, %v4307
      %v4338 = vpack.c.b16 %v4308, %v4308
      %v4339 = vpack.c.b16 %v4309, %v4309
      %v4340 = vpack.c.b16 %v4310, %v4310
      %v4341 = vpack.c.b16 %v4311, %v4311
      %v4342 = vpack.c.b16 %v4312, %v4312
      %v4343 = vpack.c.b16 %v4313, %v4313
      %v4344 = vpack.c.b16 %v4314, %v4314
      %v4345 = vpack.c.b16 %v4315, %v4315
      %v4346 = vpack.c.b16 %v4316, %v4316
      %v4347 = vpack.c.b16 %v4317, %v4317
      %v4348 = vpack.c.b16 %v4318, %v4318
      %v4349 = vpack.c.b16 %v4319, %v4319
      %v4350 = vpack.c.b16 %v4320, %v4320
      %vm4381 = vcmask 519168
      %4382 = vst.msk [vmem:[#allocation2] sm:$0xf] %vm4381, %v4321
      %4383 = vst.msk [vmem:[#allocation2 + $0x4] sm:$0xf] %vm4381, %v4322
      %vm4384 = vcmask 516096
      %4385 = vst.msk [vmem:[#allocation2 + $0x8] sm:$0x1] %vm4384, %v4323
      %4386 = vst.msk [vmem:[#allocation2 + $0xc] sm:$0xf] %vm4381, %v4324
      %4387 = vst.msk [vmem:[#allocation2 + $0x10] sm:$0xf] %vm4381, %v4325
      %4388 = vst.msk [vmem:[#allocation2 + $0x14] sm:$0x1] %vm4384, %v4326
      %4389 = vst.msk [vmem:[#allocation2 + $0x18] sm:$0xf] %vm4381, %v4327
      %4390 = vst.msk [vmem:[#allocation2 + $0x1c] sm:$0xf] %vm4381, %v4328
      %4391 = vst.msk [vmem:[#allocation2 + $0x20] sm:$0x1] %vm4384, %v4329
      %4392 = vst.msk [vmem:[#allocation2 + $0x24] sm:$0xf] %vm4381, %v4330
      %4393 = vst.msk [vmem:[#allocation2 + $0x28] sm:$0xf] %vm4381, %v4331
      %4394 = vst.msk [vmem:[#allocation2 + $0x2c] sm:$0x1] %vm4384, %v4332
      %4395 = vst.msk [vmem:[#allocation2 + $0x30] sm:$0xf] %vm4381, %v4333
      %4396 = vst.msk [vmem:[#allocation2 + $0x34] sm:$0xf] %vm4381, %v4334
      %4397 = vst.msk [vmem:[#allocation2 + $0x38] sm:$0x1] %vm4384, %v4335
      %4398 = vst.msk [vmem:[#allocation2 + $0x3c] sm:$0xf] %vm4381, %v4336
      %4399 = vst.msk [vmem:[#allocation2 + $0x40] sm:$0xf] %vm4381, %v4337
      %4400 = vst.msk [vmem:[#allocation2 + $0x44] sm:$0x1] %vm4384, %v4338
      %4401 = vst.msk [vmem:[#allocation2 + $0x48] sm:$0xf] %vm4381, %v4339
      %4402 = vst.msk [vmem:[#allocation2 + $0x4c] sm:$0xf] %vm4381, %v4340
      %4403 = vst.msk [vmem:[#allocation2 + $0x50] sm:$0x1] %vm4384, %v4341
      %4404 = vst.msk [vmem:[#allocation2 + $0x54] sm:$0xf] %vm4381, %v4342
      %4405 = vst.msk [vmem:[#allocation2 + $0x58] sm:$0xf] %vm4381, %v4343
      %4406 = vst.msk [vmem:[#allocation2 + $0x5c] sm:$0x1] %vm4384, %v4344
      %4407 = vst.msk [vmem:[#allocation2 + $0x60] sm:$0xf] %vm4381, %v4345
      %4408 = vst.msk [vmem:[#allocation2 + $0x64] sm:$0xf] %vm4381, %v4346
      %4409 = vst.msk [vmem:[#allocation2 + $0x68] sm:$0x1] %vm4384, %v4347
      %4410 = vst.msk [vmem:[#allocation2 + $0x6c] sm:$0xf] %vm4381, %v4348
      %4411 = vst.msk [vmem:[#allocation2 + $0x70] sm:$0xf] %vm4381, %v4349
      %4412 = vst.msk [vmem:[#allocation2 + $0x74] sm:$0x1] %vm4384, %v4350
      %v4413 = vld [vmem:[#allocation2] sm:$0xf]
      %v4414 = vld [vmem:[#allocation2 + $0x4] sm:$0xf]
      %v4415 = vld [vmem:[#allocation2 + $0x8] sm:$0x1]
      %v4416 = vld [vmem:[#allocation2 + $0xc] sm:$0xf]
      %v4417 = vld [vmem:[#allocation2 + $0x10] sm:$0xf]
      %v4418 = vld [vmem:[#allocation2 + $0x14] sm:$0x1]
      %v4419 = vld [vmem:[#allocation2 + $0x18] sm:$0xf]
      %v4420 = vld [vmem:[#allocation2 + $0x1c] sm:$0xf]
      %v4421 = vld [vmem:[#allocation2 + $0x20] sm:$0x1]
      %v4422 = vld [vmem:[#allocation2 + $0x24] sm:$0xf]
      %v4423 = vld [vmem:[#allocation2 + $0x28] sm:$0xf]
      %v4424 = vld [vmem:[#allocation2 + $0x2c] sm:$0x1]
      %v4425 = vld [vmem:[#allocation2 + $0x30] sm:$0xf]
      %v4426 = vld [vmem:[#allocation2 + $0x34] sm:$0xf]
      %v4427 = vld [vmem:[#allocation2 + $0x38] sm:$0x1]
      %v4428 = vld [vmem:[#allocation2 + $0x3c] sm:$0xf]
      %v4429 = vld [vmem:[#allocation2 + $0x40] sm:$0xf]
      %v4430 = vld [vmem:[#allocation2 + $0x44] sm:$0x1]
      %v4431 = vld [vmem:[#allocation2 + $0x48] sm:$0xf]
      %v4432 = vld [vmem:[#allocation2 + $0x4c] sm:$0xf]
      %v4433 = vld [vmem:[#allocation2 + $0x50] sm:$0x1]
      %v4434 = vld [vmem:[#allocation2 + $0x54] sm:$0xf]
      %v4435 = vld [vmem:[#allocation2 + $0x58] sm:$0xf]
      %v4436 = vld [vmem:[#allocation2 + $0x5c] sm:$0x1]
      %v4453 = vunpack.c.l.b16 %v4413
      %v4454 = vunpack.c.l.b16 %v4414
      %v4455 = vunpack.c.l.b16 %v4416
      %v4456 = vunpack.c.l.b16 %v4417
      %v4457 = vunpack.c.l.b16 %v4419
      %v4458 = vunpack.c.l.b16 %v4420
      %v4459 = vunpack.c.l.b16 %v4422
      %v4460 = vunpack.c.l.b16 %v4423
      %v4461 = vunpack.c.l.b16 %v4425
      %v4462 = vunpack.c.l.b16 %v4426
      %v4463 = vunpack.c.l.b16 %v4428
      %v4464 = vunpack.c.l.b16 %v4429
      %v4465 = vunpack.c.l.b16 %v4431
      %v4466 = vunpack.c.l.b16 %v4432
      %v4467 = vunpack.c.l.b16 %v4434
      %v4468 = vunpack.c.l.b16 %v4435
      %v4469 = vpack.c.b16 %v4454, %v4453
      %v4470 = vpack.c.b16 %v4456, %v4455
      %v4471 = vpack.c.b16 %v4458, %v4457
      %v4472 = vpack.c.b16 %v4460, %v4459
      %v4473 = vpack.c.b16 %v4462, %v4461
      %v4474 = vpack.c.b16 %v4464, %v4463
      %v4475 = vpack.c.b16 %v4466, %v4465
      %v4476 = vpack.c.b16 %v4468, %v4467
      %v4485 = vunpack.c.l.b16 %v4415
      %v4486 = vunpack.c.l.b16 %v4418
      %v4487 = vunpack.c.l.b16 %v4421
      %v4488 = vunpack.c.l.b16 %v4424
      %v4489 = vunpack.c.l.b16 %v4427
      %v4490 = vunpack.c.l.b16 %v4430
      %v4491 = vunpack.c.l.b16 %v4433
      %v4492 = vunpack.c.l.b16 %v4436
      %v4493 = vpack.c.b16 %v4485, %v4485
      %v4494 = vpack.c.b16 %v4486, %v4486
      %v4495 = vpack.c.b16 %v4487, %v4487
      %v4496 = vpack.c.b16 %v4488, %v4488
      %v4497 = vpack.c.b16 %v4489, %v4489
      %v4498 = vpack.c.b16 %v4490, %v4490
      %v4499 = vpack.c.b16 %v4491, %v4491
      %v4500 = vpack.c.b16 %v4492, %v4492
      %v4502 = vshrl.u32 %v4469, 16
      %v4504 = vshll.u32 %v4469, 16
      %v4506 = vrot.slane %v4504, 1
      %v4507 = vor.u32 %v4502, %v4506
      %v4509 = vshll.u32 %v4493, 16
      %v4511 = vrot.slane %v4509, 1
      %v4512 = vsel %vm431, %v4507, %v4511
      %v4514 = vshrl.u32 %v4470, 16
      %v4516 = vshll.u32 %v4470, 16
      %v4518 = vrot.slane %v4516, 1
      %v4519 = vor.u32 %v4514, %v4518
      %v4521 = vshll.u32 %v4494, 16
      %v4523 = vrot.slane %v4521, 1
      %v4524 = vsel %vm431, %v4519, %v4523
      %v4526 = vshrl.u32 %v4471, 16
      %v4528 = vshll.u32 %v4471, 16
      %v4530 = vrot.slane %v4528, 1
      %v4531 = vor.u32 %v4526, %v4530
      %v4533 = vshll.u32 %v4495, 16
      %v4535 = vrot.slane %v4533, 1
      %v4536 = vsel %vm431, %v4531, %v4535
      %v4538 = vshrl.u32 %v4472, 16
      %v4540 = vshll.u32 %v4472, 16
      %v4542 = vrot.slane %v4540, 1
      %v4543 = vor.u32 %v4538, %v4542
      %v4545 = vshll.u32 %v4496, 16
      %v4547 = vrot.slane %v4545, 1
      %v4548 = vsel %vm431, %v4543, %v4547
      %v4550 = vshrl.u32 %v4473, 16
      %v4552 = vshll.u32 %v4473, 16
      %v4554 = vrot.slane %v4552, 1
      %v4555 = vor.u32 %v4550, %v4554
      %v4557 = vshll.u32 %v4497, 16
      %v4559 = vrot.slane %v4557, 1
      %v4560 = vsel %vm431, %v4555, %v4559
      %v4562 = vshrl.u32 %v4474, 16
      %v4564 = vshll.u32 %v4474, 16
      %v4566 = vrot.slane %v4564, 1
      %v4567 = vor.u32 %v4562, %v4566
      %v4569 = vshll.u32 %v4498, 16
      %v4571 = vrot.slane %v4569, 1
      %v4572 = vsel %vm431, %v4567, %v4571
      %v4574 = vshrl.u32 %v4475, 16
      %v4576 = vshll.u32 %v4475, 16
      %v4578 = vrot.slane %v4576, 1
      %v4579 = vor.u32 %v4574, %v4578
      %v4581 = vshll.u32 %v4499, 16
      %v4583 = vrot.slane %v4581, 1
      %v4584 = vsel %vm431, %v4579, %v4583
      %v4586 = vshrl.u32 %v4476, 16
      %v4588 = vshll.u32 %v4476, 16
      %v4590 = vrot.slane %v4588, 1
      %v4591 = vor.u32 %v4586, %v4590
      %v4593 = vshll.u32 %v4500, 16
      %v4595 = vrot.slane %v4593, 1
      %v4596 = vsel %vm431, %v4591, %v4595
      %4597 = vrot.lane.b32.xlu0 %v4512, 64
      %v4598 = vpop.permute.xlu0 %4597
      %4599 = vrot.lane.b32.xlu0 %v4524, 64
      %v4600 = vpop.permute.xlu0 %4599
      %4601 = vrot.lane.b32.xlu0 %v4536, 64
      %v4602 = vpop.permute.xlu0 %4601
      %4603 = vrot.lane.b32.xlu0 %v4548, 64
      %v4604 = vpop.permute.xlu0 %4603
      %4605 = vrot.lane.b32.xlu0 %v4560, 64
      %v4606 = vpop.permute.xlu0 %4605
      %4607 = vrot.lane.b32.xlu0 %v4572, 64
      %v4608 = vpop.permute.xlu0 %4607
      %4609 = vrot.lane.b32.xlu0 %v4584, 64
      %v4610 = vpop.permute.xlu0 %4609
      %4611 = vrot.lane.b32.xlu0 %v4596, 64
      %v4612 = vpop.permute.xlu0 %4611
      %v4613 = vrot.slane %v4469, 1
      %v4614 = vrot.slane %v4493, 1
      %v4615 = vsel %vm622, %v4613, %v4614
      %v4616 = vrot.slane %v4470, 1
      %v4617 = vrot.slane %v4494, 1
      %v4618 = vsel %vm622, %v4616, %v4617
      %v4619 = vrot.slane %v4471, 1
      %v4620 = vrot.slane %v4495, 1
      %v4621 = vsel %vm622, %v4619, %v4620
      %v4622 = vrot.slane %v4472, 1
      %v4623 = vrot.slane %v4496, 1
      %v4624 = vsel %vm622, %v4622, %v4623
      %v4625 = vrot.slane %v4473, 1
      %v4626 = vrot.slane %v4497, 1
      %v4627 = vsel %vm622, %v4625, %v4626
      %v4628 = vrot.slane %v4474, 1
      %v4629 = vrot.slane %v4498, 1
      %v4630 = vsel %vm622, %v4628, %v4629
      %v4631 = vrot.slane %v4475, 1
      %v4632 = vrot.slane %v4499, 1
      %v4633 = vsel %vm622, %v4631, %v4632
      %v4634 = vrot.slane %v4476, 1
      %v4635 = vrot.slane %v4500, 1
      %v4636 = vsel %vm622, %v4634, %v4635
      %vm4637 = vcmask 523264
      %v4639 = vsel %vm4637, %v4469, %v4598
      %v4642 = vsel %vm4637, %v4470, %v4600
      %v4645 = vsel %vm4637, %v4471, %v4602
      %v4648 = vsel %vm4637, %v4472, %v4604
      %v4651 = vsel %vm4637, %v4473, %v4606
      %v4654 = vsel %vm4637, %v4474, %v4608
      %v4657 = vsel %vm4637, %v4475, %v4610
      %v4660 = vsel %vm4637, %v4476, %v4612
      %v4662 = vld [vmem:[%s3] sm:$0xf]
      %v4663 = vld [vmem:[%s3 + $0x4] sm:$0xf]
      %v4664 = vld [vmem:[%s3 + $0x8] sm:$0xf]
      %v4665 = vld [vmem:[%s3 + $0xc] sm:$0xf]
      %v4666 = vld [vmem:[%s3 + $0x10] sm:$0xf]
      %v4667 = vld [vmem:[%s3 + $0x14] sm:$0xf]
      %v4668 = vld [vmem:[%s3 + $0x18] sm:$0xf]
      %v4669 = vld [vmem:[%s3 + $0x1c] sm:$0xf]
      %v4670 = vld [vmem:[%s3 + $0x20] sm:$0xf]
      %v4671 = vld [vmem:[%s3 + $0x24] sm:$0xf]
      %v4672 = vld [vmem:[%s3 + $0x28] sm:$0xf]
      %v4673 = vld [vmem:[%s3 + $0x2c] sm:$0xf]
      %v4674 = vld [vmem:[%s3 + $0x30] sm:$0xf]
      %v4675 = vld [vmem:[%s3 + $0x34] sm:$0xf]
      %v4676 = vld [vmem:[%s3 + $0x38] sm:$0xf]
      %v4677 = vld [vmem:[%s3 + $0x3c] sm:$0xf]
      %v4678 = vld [vmem:[%s3 + $0x40] sm:$0xf]
      %v4679 = vld [vmem:[%s3 + $0x44] sm:$0xf]
      %v4680 = vld [vmem:[%s3 + $0x48] sm:$0xf]
      %v4681 = vld [vmem:[%s3 + $0x4c] sm:$0xf]
      %v4682 = vld [vmem:[%s3 + $0x50] sm:$0xf]
      %v4683 = vld [vmem:[%s3 + $0x54] sm:$0xf]
      %v4684 = vld [vmem:[%s3 + $0x58] sm:$0xf]
      %v4685 = vld [vmem:[%s3 + $0x5c] sm:$0xf]
      %s4686 = scalar_lea.vmem [#allocation2], 12
      %v4687 = vld [vmem:[%s4686] sm:$0xf]
      %v4688 = vld [vmem:[%s4686 + $0x4] sm:$0xf]
      %v4689 = vld [vmem:[%s4686 + $0x8] sm:$0x1]
      %v4690 = vld [vmem:[%s4686 + $0xc] sm:$0xf]
      %v4691 = vld [vmem:[%s4686 + $0x10] sm:$0xf]
      %v4692 = vld [vmem:[%s4686 + $0x14] sm:$0x1]
      %v4693 = vld [vmem:[%s4686 + $0x18] sm:$0xf]
      %v4694 = vld [vmem:[%s4686 + $0x1c] sm:$0xf]
      %v4695 = vld [vmem:[%s4686 + $0x20] sm:$0x1]
      %v4696 = vld [vmem:[%s4686 + $0x24] sm:$0xf]
      %v4697 = vld [vmem:[%s4686 + $0x28] sm:$0xf]
      %v4698 = vld [vmem:[%s4686 + $0x2c] sm:$0x1]
      %v4699 = vld [vmem:[%s4686 + $0x30] sm:$0xf]
      %v4700 = vld [vmem:[%s4686 + $0x34] sm:$0xf]
      %v4701 = vld [vmem:[%s4686 + $0x38] sm:$0x1]
      %v4702 = vld [vmem:[%s4686 + $0x3c] sm:$0xf]
      %v4703 = vld [vmem:[%s4686 + $0x40] sm:$0xf]
      %v4704 = vld [vmem:[%s4686 + $0x44] sm:$0x1]
      %v4705 = vld [vmem:[%s4686 + $0x48] sm:$0xf]
      %v4706 = vld [vmem:[%s4686 + $0x4c] sm:$0xf]
      %v4707 = vld [vmem:[%s4686 + $0x50] sm:$0x1]
      %v4708 = vld [vmem:[%s4686 + $0x54] sm:$0xf]
      %v4709 = vld [vmem:[%s4686 + $0x58] sm:$0xf]
      %v4710 = vld [vmem:[%s4686 + $0x5c] sm:$0x1]
      %v4727 = vunpack.c.l.b16 %v4687
      %v4728 = vunpack.c.l.b16 %v4688
      %v4729 = vunpack.c.l.b16 %v4690
      %v4730 = vunpack.c.l.b16 %v4691
      %v4731 = vunpack.c.l.b16 %v4693
      %v4732 = vunpack.c.l.b16 %v4694
      %v4733 = vunpack.c.l.b16 %v4696
      %v4734 = vunpack.c.l.b16 %v4697
      %v4735 = vunpack.c.l.b16 %v4699
      %v4736 = vunpack.c.l.b16 %v4700
      %v4737 = vunpack.c.l.b16 %v4702
      %v4738 = vunpack.c.l.b16 %v4703
      %v4739 = vunpack.c.l.b16 %v4705
      %v4740 = vunpack.c.l.b16 %v4706
      %v4741 = vunpack.c.l.b16 %v4708
      %v4742 = vunpack.c.l.b16 %v4709
      %v4743 = vpack.c.b16 %v4728, %v4727
      %v4744 = vpack.c.b16 %v4730, %v4729
      %v4745 = vpack.c.b16 %v4732, %v4731
      %v4746 = vpack.c.b16 %v4734, %v4733
      %v4747 = vpack.c.b16 %v4736, %v4735
      %v4748 = vpack.c.b16 %v4738, %v4737
      %v4749 = vpack.c.b16 %v4740, %v4739
      %v4750 = vpack.c.b16 %v4742, %v4741
      %v4759 = vunpack.c.l.b16 %v4689
      %v4760 = vunpack.c.l.b16 %v4692
      %v4761 = vunpack.c.l.b16 %v4695
      %v4762 = vunpack.c.l.b16 %v4698
      %v4763 = vunpack.c.l.b16 %v4701
      %v4764 = vunpack.c.l.b16 %v4704
      %v4765 = vunpack.c.l.b16 %v4707
      %v4766 = vunpack.c.l.b16 %v4710
      %v4767 = vpack.c.b16 %v4759, %v4759
      %v4768 = vpack.c.b16 %v4760, %v4760
      %v4769 = vpack.c.b16 %v4761, %v4761
      %v4770 = vpack.c.b16 %v4762, %v4762
      %v4771 = vpack.c.b16 %v4763, %v4763
      %v4772 = vpack.c.b16 %v4764, %v4764
      %v4773 = vpack.c.b16 %v4765, %v4765
      %v4774 = vpack.c.b16 %v4766, %v4766
      %v4776 = vshrl.u32 %v4743, 16
      %v4778 = vshll.u32 %v4743, 16
      %v4780 = vrot.slane %v4778, 1
      %v4781 = vor.u32 %v4776, %v4780
      %v4783 = vshll.u32 %v4767, 16
      %v4785 = vrot.slane %v4783, 1
      %v4786 = vsel %vm431, %v4781, %v4785
      %v4788 = vshrl.u32 %v4744, 16
      %v4790 = vshll.u32 %v4744, 16
      %v4792 = vrot.slane %v4790, 1
      %v4793 = vor.u32 %v4788, %v4792
      %v4795 = vshll.u32 %v4768, 16
      %v4797 = vrot.slane %v4795, 1
      %v4798 = vsel %vm431, %v4793, %v4797
      %v4800 = vshrl.u32 %v4745, 16
      %v4802 = vshll.u32 %v4745, 16
      %v4804 = vrot.slane %v4802, 1
      %v4805 = vor.u32 %v4800, %v4804
      %v4807 = vshll.u32 %v4769, 16
      %v4809 = vrot.slane %v4807, 1
      %v4810 = vsel %vm431, %v4805, %v4809
      %v4812 = vshrl.u32 %v4746, 16
      %v4814 = vshll.u32 %v4746, 16
      %v4816 = vrot.slane %v4814, 1
      %v4817 = vor.u32 %v4812, %v4816
      %v4819 = vshll.u32 %v4770, 16
      %v4821 = vrot.slane %v4819, 1
      %v4822 = vsel %vm431, %v4817, %v4821
      %v4824 = vshrl.u32 %v4747, 16
      %v4826 = vshll.u32 %v4747, 16
      %v4828 = vrot.slane %v4826, 1
      %v4829 = vor.u32 %v4824, %v4828
      %v4831 = vshll.u32 %v4771, 16
      %v4833 = vrot.slane %v4831, 1
      %v4834 = vsel %vm431, %v4829, %v4833
      %v4836 = vshrl.u32 %v4748, 16
      %v4838 = vshll.u32 %v4748, 16
      %v4840 = vrot.slane %v4838, 1
      %v4841 = vor.u32 %v4836, %v4840
      %v4843 = vshll.u32 %v4772, 16
      %v4845 = vrot.slane %v4843, 1
      %v4846 = vsel %vm431, %v4841, %v4845
      %v4848 = vshrl.u32 %v4749, 16
      %v4850 = vshll.u32 %v4749, 16
      %v4852 = vrot.slane %v4850, 1
      %v4853 = vor.u32 %v4848, %v4852
      %v4855 = vshll.u32 %v4773, 16
      %v4857 = vrot.slane %v4855, 1
      %v4858 = vsel %vm431, %v4853, %v4857
      %v4860 = vshrl.u32 %v4750, 16
      %v4862 = vshll.u32 %v4750, 16
      %v4864 = vrot.slane %v4862, 1
      %v4865 = vor.u32 %v4860, %v4864
      %v4867 = vshll.u32 %v4774, 16
      %v4869 = vrot.slane %v4867, 1
      %v4870 = vsel %vm431, %v4865, %v4869
      %4871 = vrot.lane.b32.xlu0 %v4786, 64
      %v4872 = vpop.permute.xlu0 %4871
      %4873 = vrot.lane.b32.xlu0 %v4798, 64
      %v4874 = vpop.permute.xlu0 %4873
      %4875 = vrot.lane.b32.xlu0 %v4810, 64
      %v4876 = vpop.permute.xlu0 %4875
      %4877 = vrot.lane.b32.xlu0 %v4822, 64
      %v4878 = vpop.permute.xlu0 %4877
      %4879 = vrot.lane.b32.xlu0 %v4834, 64
      %v4880 = vpop.permute.xlu0 %4879
      %4881 = vrot.lane.b32.xlu0 %v4846, 64
      %v4882 = vpop.permute.xlu0 %4881
      %4883 = vrot.lane.b32.xlu0 %v4858, 64
      %v4884 = vpop.permute.xlu0 %4883
      %4885 = vrot.lane.b32.xlu0 %v4870, 64
      %v4886 = vpop.permute.xlu0 %4885
      %v4887 = vrot.slane %v4743, 1
      %v4888 = vrot.slane %v4767, 1
      %v4889 = vsel %vm622, %v4887, %v4888
      %v4890 = vrot.slane %v4744, 1
      %v4891 = vrot.slane %v4768, 1
      %v4892 = vsel %vm622, %v4890, %v4891
      %v4893 = vrot.slane %v4745, 1
      %v4894 = vrot.slane %v4769, 1
      %v4895 = vsel %vm622, %v4893, %v4894
      %v4896 = vrot.slane %v4746, 1
      %v4897 = vrot.slane %v4770, 1
      %v4898 = vsel %vm622, %v4896, %v4897
      %v4899 = vrot.slane %v4747, 1
      %v4900 = vrot.slane %v4771, 1
      %v4901 = vsel %vm622, %v4899, %v4900
      %v4902 = vrot.slane %v4748, 1
      %v4903 = vrot.slane %v4772, 1
      %v4904 = vsel %vm622, %v4902, %v4903
      %v4905 = vrot.slane %v4749, 1
      %v4906 = vrot.slane %v4773, 1
      %v4907 = vsel %vm622, %v4905, %v4906
      %v4908 = vrot.slane %v4750, 1
      %v4909 = vrot.slane %v4774, 1
      %v4910 = vsel %vm622, %v4908, %v4909
      %v4912 = vsel %vm4637, %v4743, %v4872
      %v4915 = vsel %vm4637, %v4744, %v4874
      %v4918 = vsel %vm4637, %v4745, %v4876
      %v4921 = vsel %vm4637, %v4746, %v4878
      %v4924 = vsel %vm4637, %v4747, %v4880
      %v4927 = vsel %vm4637, %v4748, %v4882
      %v4930 = vsel %vm4637, %v4749, %v4884
      %v4933 = vsel %vm4637, %v4750, %v4886
      %s4935 = scalar_lea.vmem %s3, 96
      %v4936 = vld [vmem:[%s4935] sm:$0xf]
      %v4937 = vld [vmem:[%s4935 + $0x4] sm:$0xf]
      %v4938 = vld [vmem:[%s4935 + $0x8] sm:$0xf]
      %v4939 = vld [vmem:[%s4935 + $0xc] sm:$0xf]
      %v4940 = vld [vmem:[%s4935 + $0x10] sm:$0xf]
      %v4941 = vld [vmem:[%s4935 + $0x14] sm:$0xf]
      %v4942 = vld [vmem:[%s4935 + $0x18] sm:$0xf]
      %v4943 = vld [vmem:[%s4935 + $0x1c] sm:$0xf]
      %v4944 = vld [vmem:[%s4935 + $0x20] sm:$0xf]
      %v4945 = vld [vmem:[%s4935 + $0x24] sm:$0xf]
      %v4946 = vld [vmem:[%s4935 + $0x28] sm:$0xf]
      %v4947 = vld [vmem:[%s4935 + $0x2c] sm:$0xf]
      %v4948 = vld [vmem:[%s4935 + $0x30] sm:$0xf]
      %v4949 = vld [vmem:[%s4935 + $0x34] sm:$0xf]
      %v4950 = vld [vmem:[%s4935 + $0x38] sm:$0xf]
      %v4951 = vld [vmem:[%s4935 + $0x3c] sm:$0xf]
      %v4952 = vld [vmem:[%s4935 + $0x40] sm:$0xf]
      %v4953 = vld [vmem:[%s4935 + $0x44] sm:$0xf]
      %v4954 = vld [vmem:[%s4935 + $0x48] sm:$0xf]
      %v4955 = vld [vmem:[%s4935 + $0x4c] sm:$0xf]
      %v4956 = vld [vmem:[%s4935 + $0x50] sm:$0xf]
      %v4957 = vld [vmem:[%s4935 + $0x54] sm:$0xf]
      %v4958 = vld [vmem:[%s4935 + $0x58] sm:$0xf]
      %v4959 = vld [vmem:[%s4935 + $0x5c] sm:$0xf]
      %v4984 = vunpack.c.l.b16 %v4936
      %v4985 = vunpack.c.l.b16 %v4937
      %v4986 = vunpack.c.l.b16 %v4938
      %v4987 = vunpack.c.l.b16 %v4939
      %v4988 = vunpack.c.l.b16 %v4940
      %v4989 = vunpack.c.l.b16 %v4941
      %v4990 = vunpack.c.l.b16 %v4942
      %v4991 = vunpack.c.l.b16 %v4943
      %v4992 = vunpack.c.l.b16 %v4944
      %v4993 = vunpack.c.l.b16 %v4945
      %v4994 = vunpack.c.l.b16 %v4946
      %v4995 = vunpack.c.l.b16 %v4947
      %v4996 = vunpack.c.l.b16 %v4948
      %v4997 = vunpack.c.l.b16 %v4949
      %v4998 = vunpack.c.l.b16 %v4950
      %v4999 = vunpack.c.l.b16 %v4951
      %v5000 = vunpack.c.l.b16 %v4952
      %v5001 = vunpack.c.l.b16 %v4953
      %v5002 = vunpack.c.l.b16 %v4954
      %v5003 = vunpack.c.l.b16 %v4955
      %v5004 = vunpack.c.l.b16 %v4956
      %v5005 = vunpack.c.l.b16 %v4957
      %v5006 = vunpack.c.l.b16 %v4958
      %v5007 = vunpack.c.l.b16 %v4959
      %v5008 = vpack.c.b16 %v4985, %v4984
      %v5009 = vpack.c.b16 %v4987, %v4986
      %v5010 = vpack.c.b16 %v4989, %v4988
      %v5011 = vpack.c.b16 %v4991, %v4990
      %v5012 = vpack.c.b16 %v4993, %v4992
      %v5013 = vpack.c.b16 %v4995, %v4994
      %v5014 = vpack.c.b16 %v4997, %v4996
      %v5015 = vpack.c.b16 %v4999, %v4998
      %v5016 = vpack.c.b16 %v5001, %v5000
      %v5017 = vpack.c.b16 %v5003, %v5002
      %v5018 = vpack.c.b16 %v5005, %v5004
      %v5019 = vpack.c.b16 %v5007, %v5006
      %v5033 = vsel %vm4637, %v4889, 0
      %v5036 = vsel %vm4637, %v4892, 0
      %v5039 = vsel %vm4637, %v4895, 0
      %v5042 = vsel %vm4637, %v4898, 0
      %v5045 = vsel %vm4637, %v4901, 0
      %v5048 = vsel %vm4637, %v4904, 0
      %v5051 = vsel %vm4637, %v4907, 0
      %v5054 = vsel %vm4637, %v4910, 0
      %5056 = vmatprep.subr.bf16.mxu0 0
      %5057 = vmatpush1.bf16.msra.mxu0 %v5008
      %5058 = vmatprep.subr.bf16.mxu0 0
      %5059 = vmatpush1.bf16.msra.mxu0 %v5009
      %5060 = vmatprep.subr.bf16.mxu0 0
      %5061 = vmatpush1.bf16.msra.mxu0 %v5010
      %5062 = vmatprep.subr.bf16.mxu0 0
      %5063 = vmatpush1.bf16.msra.mxu0 %v5011
      %5064 = vmatprep.subr.bf16.mxu0 0
      %5065 = vmatpush1.bf16.msra.mxu0 %v5012
      %5066 = vmatprep.subr.bf16.mxu0 0
      %5067 = vmatpush1.bf16.msra.mxu0 %v5013
      %5068 = vmatprep.subr.bf16.mxu0 0
      %5069 = vmatpush1.bf16.msra.mxu0 %v5014
      %5070 = vmatprep.subr.bf16.mxu0 0
      %5071 = vmatpush1.bf16.msra.mxu0 %v5015
      %5072 = vmatprep.subr.bf16.mxu0 0
      %5073 = vmatpush1.bf16.msra.mxu0 %v5016
      %5074 = vmatprep.subr.bf16.mxu0 0
      %5075 = vmatpush1.bf16.msra.mxu0 %v5017
      %5076 = vmatprep.subr.bf16.mxu0 0
      %5077 = vmatpush1.bf16.msra.mxu0 %v5018
      %5078 = vmatprep.subr.bf16.mxu0 0
      %5079 = vmatpush1.bf16.msra.mxu0 %v5019
      %5080 = vmatprep.subr.bf16.mxu0 0
      %5081 = vmatpush1.bf16.msra.mxu0 0
      %5082 = vmatprep.subr.bf16.mxu0 0
      %5083 = vmatpush1.bf16.msra.mxu0 0
      %5084 = vmatprep.subr.bf16.mxu0 0
      %5085 = vmatpush1.bf16.msra.mxu0 0
      %5086 = vmatprep.subr.bf16.mxu0 0
      %5087 = vmatpush1.bf16.msra.mxu0 0
      %5088 = vmatprep.mubr.bf16.mxu0 %v5033
      %5089 = vmatmul.mubr.bf16.gmra.mrb[0].mxu0 %v4912
      %v5090 = vpop.f32.mrb[0].mxu0
      %v5091 = vadd.f32 0.0, %v5090
      %v5092 = vpop.f32.mrb[0].mxu0
      %v5093 = vpop.f32.mrb[0].mxu0
      %v5094 = vadd.f32 0.0, %v5093
      %v5095 = vpop.f32.mrb[0].mxu0
      %5096 = vmatprep.mubr.bf16.mxu0 %v5036
      %5097 = vmatmul.mubr.bf16.gmra.mrb[0].mxu0 %v4915
      %v5098 = vpop.f32.mrb[0].mxu0
      %v5099 = vadd.f32 0.0, %v5098
      %v5100 = vpop.f32.mrb[0].mxu0
      %v5101 = vpop.f32.mrb[0].mxu0
      %v5102 = vadd.f32 0.0, %v5101
      %v5103 = vpop.f32.mrb[0].mxu0
      %5104 = vmatprep.mubr.bf16.mxu0 %v5039
      %5105 = vmatmul.mubr.bf16.gmra.mrb[0].mxu0 %v4918
      %v5106 = vpop.f32.mrb[0].mxu0
      %v5107 = vadd.f32 0.0, %v5106
      %v5108 = vpop.f32.mrb[0].mxu0
      %v5109 = vpop.f32.mrb[0].mxu0
      %v5110 = vadd.f32 0.0, %v5109
      %v5111 = vpop.f32.mrb[0].mxu0
      %5112 = vmatprep.mubr.bf16.mxu0 %v5042
      %5113 = vmatmul.mubr.bf16.gmra.mrb[0].mxu0 %v4921
      %v5114 = vpop.f32.mrb[0].mxu0
      %v5115 = vadd.f32 0.0, %v5114
      %v5116 = vpop.f32.mrb[0].mxu0
      %v5117 = vpop.f32.mrb[0].mxu0
      %v5118 = vadd.f32 0.0, %v5117
      %v5119 = vpop.f32.mrb[0].mxu0
      %5120 = vmatprep.mubr.bf16.mxu0 %v5045
      %5121 = vmatmul.mubr.bf16.gmra.mrb[0].mxu0 %v4924
      %v5122 = vpop.f32.mrb[0].mxu0
      %v5123 = vadd.f32 0.0, %v5122
      %v5124 = vpop.f32.mrb[0].mxu0
      %v5125 = vpop.f32.mrb[0].mxu0
      %v5126 = vadd.f32 0.0, %v5125
      %v5127 = vpop.f32.mrb[0].mxu0
      %5128 = vmatprep.mubr.bf16.mxu0 %v5048
      %5129 = vmatmul.mubr.bf16.gmra.mrb[0].mxu0 %v4927
      %v5130 = vpop.f32.mrb[0].mxu0
      %v5131 = vadd.f32 0.0, %v5130
      %v5132 = vpop.f32.mrb[0].mxu0
      %v5133 = vpop.f32.mrb[0].mxu0
      %v5134 = vadd.f32 0.0, %v5133
      %v5135 = vpop.f32.mrb[0].mxu0
      %5136 = vmatprep.mubr.bf16.mxu0 %v5051
      %5137 = vmatmul.mubr.bf16.gmra.mrb[0].mxu0 %v4930
      %v5138 = vpop.f32.mrb[0].mxu0
      %v5139 = vadd.f32 0.0, %v5138
      %v5140 = vpop.f32.mrb[0].mxu0
      %v5141 = vpop.f32.mrb[0].mxu0
      %v5142 = vadd.f32 0.0, %v5141
      %v5143 = vpop.f32.mrb[0].mxu0
      %5144 = vmatprep.mubr.bf16.mxu0 %v5054
      %5145 = vmatmul.mubr.bf16.gmra.mrb[0].mxu0 %v4933
      %v5146 = vpop.f32.mrb[0].mxu0
      %v5147 = vadd.f32 0.0, %v5146
      %v5148 = vpop.f32.mrb[0].mxu0
      %v5149 = vpop.f32.mrb[0].mxu0
      %v5150 = vadd.f32 0.0, %v5149
      %v5151 = vpop.f32.mrb[0].mxu0
      %5152 = vdwg.mxu0
      %v5177 = vunpack.c.l.b16 %v4662
      %v5178 = vunpack.c.l.b16 %v4663
      %v5179 = vunpack.c.l.b16 %v4664
      %v5180 = vunpack.c.l.b16 %v4665
      %v5181 = vunpack.c.l.b16 %v4666
      %v5182 = vunpack.c.l.b16 %v4667
      %v5183 = vunpack.c.l.b16 %v4668
      %v5184 = vunpack.c.l.b16 %v4669
      %v5185 = vunpack.c.l.b16 %v4670
      %v5186 = vunpack.c.l.b16 %v4671
      %v5187 = vunpack.c.l.b16 %v4672
      %v5188 = vunpack.c.l.b16 %v4673
      %v5189 = vunpack.c.l.b16 %v4674
      %v5190 = vunpack.c.l.b16 %v4675
      %v5191 = vunpack.c.l.b16 %v4676
      %v5192 = vunpack.c.l.b16 %v4677
      %v5193 = vunpack.c.l.b16 %v4678
      %v5194 = vunpack.c.l.b16 %v4679
      %v5195 = vunpack.c.l.b16 %v4680
      %v5196 = vunpack.c.l.b16 %v4681
      %v5197 = vunpack.c.l.b16 %v4682
      %v5198 = vunpack.c.l.b16 %v4683
      %v5199 = vunpack.c.l.b16 %v4684
      %v5200 = vunpack.c.l.b16 %v4685
      %v5201 = vpack.c.b16 %v5178, %v5177
      %v5202 = vpack.c.b16 %v5180, %v5179
      %v5203 = vpack.c.b16 %v5182, %v5181
      %v5204 = vpack.c.b16 %v5184, %v5183
      %v5205 = vpack.c.b16 %v5186, %v5185
      %v5206 = vpack.c.b16 %v5188, %v5187
      %v5207 = vpack.c.b16 %v5190, %v5189
      %v5208 = vpack.c.b16 %v5192, %v5191
      %v5209 = vpack.c.b16 %v5194, %v5193
      %v5210 = vpack.c.b16 %v5196, %v5195
      %v5211 = vpack.c.b16 %v5198, %v5197
      %v5212 = vpack.c.b16 %v5200, %v5199
      %v5226 = vsel %vm4637, %v4615, 0
      %v5229 = vsel %vm4637, %v4618, 0
      %v5232 = vsel %vm4637, %v4621, 0
      %v5235 = vsel %vm4637, %v4624, 0
      %v5238 = vsel %vm4637, %v4627, 0
      %v5241 = vsel %vm4637, %v4630, 0
      %v5244 = vsel %vm4637, %v4633, 0
      %v5247 = vsel %vm4637, %v4636, 0
      %5249 = vmatprep.subr.bf16.mxu0 0
      %5250 = vmatpush1.bf16.msra.mxu0 %v5201
      %5251 = vmatprep.subr.bf16.mxu0 0
      %5252 = vmatpush1.bf16.msra.mxu0 %v5202
      %5253 = vmatprep.subr.bf16.mxu0 0
      %5254 = vmatpush1.bf16.msra.mxu0 %v5203
      %5255 = vmatprep.subr.bf16.mxu0 0
      %5256 = vmatpush1.bf16.msra.mxu0 %v5204
      %5257 = vmatprep.subr.bf16.mxu0 0
      %5258 = vmatpush1.bf16.msra.mxu0 %v5205
      %5259 = vmatprep.subr.bf16.mxu0 0
      %5260 = vmatpush1.bf16.msra.mxu0 %v5206
      %5261 = vmatprep.subr.bf16.mxu0 0
      %5262 = vmatpush1.bf16.msra.mxu0 %v5207
      %5263 = vmatprep.subr.bf16.mxu0 0
      %5264 = vmatpush1.bf16.msra.mxu0 %v5208
      %5265 = vmatprep.subr.bf16.mxu0 0
      %5266 = vmatpush1.bf16.msra.mxu0 %v5209
      %5267 = vmatprep.subr.bf16.mxu0 0
      %5268 = vmatpush1.bf16.msra.mxu0 %v5210
      %5269 = vmatprep.subr.bf16.mxu0 0
      %5270 = vmatpush1.bf16.msra.mxu0 %v5211
      %5271 = vmatprep.subr.bf16.mxu0 0
      %5272 = vmatpush1.bf16.msra.mxu0 %v5212
      %5273 = vmatprep.subr.bf16.mxu0 0
      %5274 = vmatpush1.bf16.msra.mxu0 0
      %5275 = vmatprep.subr.bf16.mxu0 0
      %5276 = vmatpush1.bf16.msra.mxu0 0
      %5277 = vmatprep.subr.bf16.mxu0 0
      %5278 = vmatpush1.bf16.msra.mxu0 0
      %5279 = vmatprep.subr.bf16.mxu0 0
      %5280 = vmatpush1.bf16.msra.mxu0 0
      %5281 = vmatprep.mubr.bf16.mxu0 %v5226
      %5282 = vmatmul.mubr.bf16.gmra.mrb[0].mxu0 %v4639
      %v5283 = vpop.f32.mrb[0].mxu0
      %v5284 = vadd.f32 %v5091, %v5283
      %v5285 = vpop.f32.mrb[0].mxu0
      %v5286 = vpop.f32.mrb[0].mxu0
      %v5287 = vadd.f32 %v5094, %v5286
      %v5288 = vpop.f32.mrb[0].mxu0
      %5289 = vmatprep.mubr.bf16.mxu0 %v5229
      %5290 = vmatmul.mubr.bf16.gmra.mrb[0].mxu0 %v4642
      %v5291 = vpop.f32.mrb[0].mxu0
      %v5292 = vadd.f32 %v5099, %v5291
      %v5293 = vpop.f32.mrb[0].mxu0
      %v5294 = vpop.f32.mrb[0].mxu0
      %v5295 = vadd.f32 %v5102, %v5294
      %v5296 = vpop.f32.mrb[0].mxu0
      %5297 = vmatprep.mubr.bf16.mxu0 %v5232
      %5298 = vmatmul.mubr.bf16.gmra.mrb[0].mxu0 %v4645
      %v5299 = vpop.f32.mrb[0].mxu0
      %v5300 = vadd.f32 %v5107, %v5299
      %v5301 = vpop.f32.mrb[0].mxu0
      %v5302 = vpop.f32.mrb[0].mxu0
      %v5303 = vadd.f32 %v5110, %v5302
      %v5304 = vpop.f32.mrb[0].mxu0
      %5305 = vmatprep.mubr.bf16.mxu0 %v5235
      %5306 = vmatmul.mubr.bf16.gmra.mrb[0].mxu0 %v4648
      %v5307 = vpop.f32.mrb[0].mxu0
      %v5308 = vadd.f32 %v5115, %v5307
      %v5309 = vpop.f32.mrb[0].mxu0
      %v5310 = vpop.f32.mrb[0].mxu0
      %v5311 = vadd.f32 %v5118, %v5310
      %v5312 = vpop.f32.mrb[0].mxu0
      %5313 = vmatprep.mubr.bf16.mxu0 %v5238
      %5314 = vmatmul.mubr.bf16.gmra.mrb[0].mxu0 %v4651
      %v5315 = vpop.f32.mrb[0].mxu0
      %v5316 = vadd.f32 %v5123, %v5315
      %v5317 = vpop.f32.mrb[0].mxu0
      %v5318 = vpop.f32.mrb[0].mxu0
      %v5319 = vadd.f32 %v5126, %v5318
      %v5320 = vpop.f32.mrb[0].mxu0
      %5321 = vmatprep.mubr.bf16.mxu0 %v5241
      %5322 = vmatmul.mubr.bf16.gmra.mrb[0].mxu0 %v4654
      %v5323 = vpop.f32.mrb[0].mxu0
      %v5324 = vadd.f32 %v5131, %v5323
      %v5325 = vpop.f32.mrb[0].mxu0
      %v5326 = vpop.f32.mrb[0].mxu0
      %v5327 = vadd.f32 %v5134, %v5326
      %v5328 = vpop.f32.mrb[0].mxu0
      %5329 = vmatprep.mubr.bf16.mxu0 %v5244
      %5330 = vmatmul.mubr.bf16.gmra.mrb[0].mxu0 %v4657
      %v5331 = vpop.f32.mrb[0].mxu0
      %v5332 = vadd.f32 %v5139, %v5331
      %v5333 = vpop.f32.mrb[0].mxu0
      %v5334 = vpop.f32.mrb[0].mxu0
      %v5335 = vadd.f32 %v5142, %v5334
      %v5336 = vpop.f32.mrb[0].mxu0
      %5337 = vmatprep.mubr.bf16.mxu0 %v5247
      %5338 = vmatmul.mubr.bf16.gmra.mrb[0].mxu0 %v4660
      %v5339 = vpop.f32.mrb[0].mxu0
      %v5340 = vadd.f32 %v5147, %v5339
      %v5341 = vpop.f32.mrb[0].mxu0
      %v5342 = vpop.f32.mrb[0].mxu0
      %v5343 = vadd.f32 %v5150, %v5342
      %v5344 = vpop.f32.mrb[0].mxu0
      %5345 = vdwg.mxu0
      %s5346 = scalar_lea.vmem [#allocation2], 24
      %v5347 = vld [vmem:[%s5346] sm:$0xf]
      %v5348 = vld [vmem:[%s5346 + $0x4] sm:$0xf]
      %v5349 = vld [vmem:[%s5346 + $0x8] sm:$0x1]
      %v5350 = vld [vmem:[%s5346 + $0xc] sm:$0xf]
      %v5351 = vld [vmem:[%s5346 + $0x10] sm:$0xf]
      %v5352 = vld [vmem:[%s5346 + $0x14] sm:$0x1]
      %v5353 = vld [vmem:[%s5346 + $0x18] sm:$0xf]
      %v5354 = vld [vmem:[%s5346 + $0x1c] sm:$0xf]
      %v5355 = vld [vmem:[%s5346 + $0x20] sm:$0x1]
      %v5356 = vld [vmem:[%s5346 + $0x24] sm:$0xf]
      %v5357 = vld [vmem:[%s5346 + $0x28] sm:$0xf]
      %v5358 = vld [vmem:[%s5346 + $0x2c] sm:$0x1]
      %v5359 = vld [vmem:[%s5346 + $0x30] sm:$0xf]
      %v5360 = vld [vmem:[%s5346 + $0x34] sm:$0xf]
      %v5361 = vld [vmem:[%s5346 + $0x38] sm:$0x1]
      %v5362 = vld [vmem:[%s5346 + $0x3c] sm:$0xf]
      %v5363 = vld [vmem:[%s5346 + $0x40] sm:$0xf]
      %v5364 = vld [vmem:[%s5346 + $0x44] sm:$0x1]
      %v5365 = vld [vmem:[%s5346 + $0x48] sm:$0xf]
      %v5366 = vld [vmem:[%s5346 + $0x4c] sm:$0xf]
      %v5367 = vld [vmem:[%s5346 + $0x50] sm:$0x1]
      %v5368 = vld [vmem:[%s5346 + $0x54] sm:$0xf]
      %v5369 = vld [vmem:[%s5346 + $0x58] sm:$0xf]
      %v5370 = vld [vmem:[%s5346 + $0x5c] sm:$0x1]
      %v5387 = vunpack.c.l.b16 %v5347
      %v5388 = vunpack.c.l.b16 %v5348
      %v5389 = vunpack.c.l.b16 %v5350
      %v5390 = vunpack.c.l.b16 %v5351
      %v5391 = vunpack.c.l.b16 %v5353
      %v5392 = vunpack.c.l.b16 %v5354
      %v5393 = vunpack.c.l.b16 %v5356
      %v5394 = vunpack.c.l.b16 %v5357
      %v5395 = vunpack.c.l.b16 %v5359
      %v5396 = vunpack.c.l.b16 %v5360
      %v5397 = vunpack.c.l.b16 %v5362
      %v5398 = vunpack.c.l.b16 %v5363
      %v5399 = vunpack.c.l.b16 %v5365
      %v5400 = vunpack.c.l.b16 %v5366
      %v5401 = vunpack.c.l.b16 %v5368
      %v5402 = vunpack.c.l.b16 %v5369
      %v5403 = vpack.c.b16 %v5388, %v5387
      %v5404 = vpack.c.b16 %v5390, %v5389
      %v5405 = vpack.c.b16 %v5392, %v5391
      %v5406 = vpack.c.b16 %v5394, %v5393
      %v5407 = vpack.c.b16 %v5396, %v5395
      %v5408 = vpack.c.b16 %v5398, %v5397
      %v5409 = vpack.c.b16 %v5400, %v5399
      %v5410 = vpack.c.b16 %v5402, %v5401
      %v5419 = vunpack.c.l.b16 %v5349
      %v5420 = vunpack.c.l.b16 %v5352
      %v5421 = vunpack.c.l.b16 %v5355
      %v5422 = vunpack.c.l.b16 %v5358
      %v5423 = vunpack.c.l.b16 %v5361
      %v5424 = vunpack.c.l.b16 %v5364
      %v5425 = vunpack.c.l.b16 %v5367
      %v5426 = vunpack.c.l.b16 %v5370
      %v5427 = vpack.c.b16 %v5419, %v5419
      %v5428 = vpack.c.b16 %v5420, %v5420
      %v5429 = vpack.c.b16 %v5421, %v5421
      %v5430 = vpack.c.b16 %v5422, %v5422
      %v5431 = vpack.c.b16 %v5423, %v5423
      %v5432 = vpack.c.b16 %v5424, %v5424
      %v5433 = vpack.c.b16 %v5425, %v5425
      %v5434 = vpack.c.b16 %v5426, %v5426
      %v5436 = vshrl.u32 %v5403, 16
      %v5438 = vshll.u32 %v5403, 16
      %v5440 = vrot.slane %v5438, 1
      %v5441 = vor.u32 %v5436, %v5440
      %v5443 = vshll.u32 %v5427, 16
      %v5445 = vrot.slane %v5443, 1
      %v5446 = vsel %vm431, %v5441, %v5445
      %v5448 = vshrl.u32 %v5404, 16
      %v5450 = vshll.u32 %v5404, 16
      %v5452 = vrot.slane %v5450, 1
      %v5453 = vor.u32 %v5448, %v5452
      %v5455 = vshll.u32 %v5428, 16
      %v5457 = vrot.slane %v5455, 1
      %v5458 = vsel %vm431, %v5453, %v5457
      %v5460 = vshrl.u32 %v5405, 16
      %v5462 = vshll.u32 %v5405, 16
      %v5464 = vrot.slane %v5462, 1
      %v5465 = vor.u32 %v5460, %v5464
      %v5467 = vshll.u32 %v5429, 16
      %v5469 = vrot.slane %v5467, 1
      %v5470 = vsel %vm431, %v5465, %v5469
      %v5472 = vshrl.u32 %v5406, 16
      %v5474 = vshll.u32 %v5406, 16
      %v5476 = vrot.slane %v5474, 1
      %v5477 = vor.u32 %v5472, %v5476
      %v5479 = vshll.u32 %v5430, 16
      %v5481 = vrot.slane %v5479, 1
      %v5482 = vsel %vm431, %v5477, %v5481
      %v5484 = vshrl.u32 %v5407, 16
      %v5486 = vshll.u32 %v5407, 16
      %v5488 = vrot.slane %v5486, 1
      %v5489 = vor.u32 %v5484, %v5488
      %v5491 = vshll.u32 %v5431, 16
      %v5493 = vrot.slane %v5491, 1
      %v5494 = vsel %vm431, %v5489, %v5493
      %v5496 = vshrl.u32 %v5408, 16
      %v5498 = vshll.u32 %v5408, 16
      %v5500 = vrot.slane %v5498, 1
      %v5501 = vor.u32 %v5496, %v5500
      %v5503 = vshll.u32 %v5432, 16
      %v5505 = vrot.slane %v5503, 1
      %v5506 = vsel %vm431, %v5501, %v5505
      %v5508 = vshrl.u32 %v5409, 16
      %v5510 = vshll.u32 %v5409, 16
      %v5512 = vrot.slane %v5510, 1
      %v5513 = vor.u32 %v5508, %v5512
      %v5515 = vshll.u32 %v5433, 16
      %v5517 = vrot.slane %v5515, 1
      %v5518 = vsel %vm431, %v5513, %v5517
      %v5520 = vshrl.u32 %v5410, 16
      %v5522 = vshll.u32 %v5410, 16
      %v5524 = vrot.slane %v5522, 1
      %v5525 = vor.u32 %v5520, %v5524
      %v5527 = vshll.u32 %v5434, 16
      %v5529 = vrot.slane %v5527, 1
      %v5530 = vsel %vm431, %v5525, %v5529
      %5531 = vrot.lane.b32.xlu0 %v5446, 64
      %v5532 = vpop.permute.xlu0 %5531
      %5533 = vrot.lane.b32.xlu0 %v5458, 64
      %v5534 = vpop.permute.xlu0 %5533
      %5535 = vrot.lane.b32.xlu0 %v5470, 64
      %v5536 = vpop.permute.xlu0 %5535
      %5537 = vrot.lane.b32.xlu0 %v5482, 64
      %v5538 = vpop.permute.xlu0 %5537
      %5539 = vrot.lane.b32.xlu0 %v5494, 64
      %v5540 = vpop.permute.xlu0 %5539
      %5541 = vrot.lane.b32.xlu0 %v5506, 64
      %v5542 = vpop.permute.xlu0 %5541
      %5543 = vrot.lane.b32.xlu0 %v5518, 64
      %v5544 = vpop.permute.xlu0 %5543
      %5545 = vrot.lane.b32.xlu0 %v5530, 64
      %v5546 = vpop.permute.xlu0 %5545
      %v5547 = vrot.slane %v5403, 1
      %v5548 = vrot.slane %v5427, 1
      %v5549 = vsel %vm622, %v5547, %v5548
      %v5550 = vrot.slane %v5404, 1
      %v5551 = vrot.slane %v5428, 1
      %v5552 = vsel %vm622, %v5550, %v5551
      %v5553 = vrot.slane %v5405, 1
      %v5554 = vrot.slane %v5429, 1
      %v5555 = vsel %vm622, %v5553, %v5554
      %v5556 = vrot.slane %v5406, 1
      %v5557 = vrot.slane %v5430, 1
      %v5558 = vsel %vm622, %v5556, %v5557
      %v5559 = vrot.slane %v5407, 1
      %v5560 = vrot.slane %v5431, 1
      %v5561 = vsel %vm622, %v5559, %v5560
      %v5562 = vrot.slane %v5408, 1
      %v5563 = vrot.slane %v5432, 1
      %v5564 = vsel %vm622, %v5562, %v5563
      %v5565 = vrot.slane %v5409, 1
      %v5566 = vrot.slane %v5433, 1
      %v5567 = vsel %vm622, %v5565, %v5566
      %v5568 = vrot.slane %v5410, 1
      %v5569 = vrot.slane %v5434, 1
      %v5570 = vsel %vm622, %v5568, %v5569
      %v5572 = vsel %vm4637, %v5403, %v5532
      %v5575 = vsel %vm4637, %v5404, %v5534
      %v5578 = vsel %vm4637, %v5405, %v5536
      %v5581 = vsel %vm4637, %v5406, %v5538
      %v5584 = vsel %vm4637, %v5407, %v5540
      %v5587 = vsel %vm4637, %v5408, %v5542
      %v5590 = vsel %vm4637, %v5409, %v5544
      %v5593 = vsel %vm4637, %v5410, %v5546
      %s5595 = scalar_lea.vmem %s3, 192
      %v5596 = vld [vmem:[%s5595] sm:$0xf]
      %v5597 = vld [vmem:[%s5595 + $0x4] sm:$0xf]
      %v5598 = vld [vmem:[%s5595 + $0x8] sm:$0xf]
      %v5599 = vld [vmem:[%s5595 + $0xc] sm:$0xf]
      %v5600 = vld [vmem:[%s5595 + $0x10] sm:$0xf]
      %v5601 = vld [vmem:[%s5595 + $0x14] sm:$0xf]
      %v5602 = vld [vmem:[%s5595 + $0x18] sm:$0xf]
      %v5603 = vld [vmem:[%s5595 + $0x1c] sm:$0xf]
      %v5604 = vld [vmem:[%s5595 + $0x20] sm:$0xf]
      %v5605 = vld [vmem:[%s5595 + $0x24] sm:$0xf]
      %v5606 = vld [vmem:[%s5595 + $0x28] sm:$0xf]
      %v5607 = vld [vmem:[%s5595 + $0x2c] sm:$0xf]
      %v5608 = vld [vmem:[%s5595 + $0x30] sm:$0xf]
      %v5609 = vld [vmem:[%s5595 + $0x34] sm:$0xf]
      %v5610 = vld [vmem:[%s5595 + $0x38] sm:$0xf]
      %v5611 = vld [vmem:[%s5595 + $0x3c] sm:$0xf]
      %v5612 = vld [vmem:[%s5595 + $0x40] sm:$0xf]
      %v5613 = vld [vmem:[%s5595 + $0x44] sm:$0xf]
      %v5614 = vld [vmem:[%s5595 + $0x48] sm:$0xf]
      %v5615 = vld [vmem:[%s5595 + $0x4c] sm:$0xf]
      %v5616 = vld [vmem:[%s5595 + $0x50] sm:$0xf]
      %v5617 = vld [vmem:[%s5595 + $0x54] sm:$0xf]
      %v5618 = vld [vmem:[%s5595 + $0x58] sm:$0xf]
      %v5619 = vld [vmem:[%s5595 + $0x5c] sm:$0xf]
      %v5644 = vunpack.c.l.b16 %v5596
      %v5645 = vunpack.c.l.b16 %v5597
      %v5646 = vunpack.c.l.b16 %v5598
      %v5647 = vunpack.c.l.b16 %v5599
      %v5648 = vunpack.c.l.b16 %v5600
      %v5649 = vunpack.c.l.b16 %v5601
      %v5650 = vunpack.c.l.b16 %v5602
      %v5651 = vunpack.c.l.b16 %v5603
      %v5652 = vunpack.c.l.b16 %v5604
      %v5653 = vunpack.c.l.b16 %v5605
      %v5654 = vunpack.c.l.b16 %v5606
      %v5655 = vunpack.c.l.b16 %v5607
      %v5656 = vunpack.c.l.b16 %v5608
      %v5657 = vunpack.c.l.b16 %v5609
      %v5658 = vunpack.c.l.b16 %v5610
      %v5659 = vunpack.c.l.b16 %v5611
      %v5660 = vunpack.c.l.b16 %v5612
      %v5661 = vunpack.c.l.b16 %v5613
      %v5662 = vunpack.c.l.b16 %v5614
      %v5663 = vunpack.c.l.b16 %v5615
      %v5664 = vunpack.c.l.b16 %v5616
      %v5665 = vunpack.c.l.b16 %v5617
      %v5666 = vunpack.c.l.b16 %v5618
      %v5667 = vunpack.c.l.b16 %v5619
      %v5668 = vpack.c.b16 %v5645, %v5644
      %v5669 = vpack.c.b16 %v5647, %v5646
      %v5670 = vpack.c.b16 %v5649, %v5648
      %v5671 = vpack.c.b16 %v5651, %v5650
      %v5672 = vpack.c.b16 %v5653, %v5652
      %v5673 = vpack.c.b16 %v5655, %v5654
      %v5674 = vpack.c.b16 %v5657, %v5656
      %v5675 = vpack.c.b16 %v5659, %v5658
      %v5676 = vpack.c.b16 %v5661, %v5660
      %v5677 = vpack.c.b16 %v5663, %v5662
      %v5678 = vpack.c.b16 %v5665, %v5664
      %v5679 = vpack.c.b16 %v5667, %v5666
      %v5693 = vsel %vm4637, %v5549, 0
      %v5696 = vsel %vm4637, %v5552, 0
      %v5699 = vsel %vm4637, %v5555, 0
      %v5702 = vsel %vm4637, %v5558, 0
      %v5705 = vsel %vm4637, %v5561, 0
      %v5708 = vsel %vm4637, %v5564, 0
      %v5711 = vsel %vm4637, %v5567, 0
      %v5714 = vsel %vm4637, %v5570, 0
      %5716 = vmatprep.subr.bf16.mxu0 0
      %5717 = vmatpush1.bf16.msra.mxu0 %v5668
      %5718 = vmatprep.subr.bf16.mxu0 0
      %5719 = vmatpush1.bf16.msra.mxu0 %v5669
      %5720 = vmatprep.subr.bf16.mxu0 0
      %5721 = vmatpush1.bf16.msra.mxu0 %v5670
      %5722 = vmatprep.subr.bf16.mxu0 0
      %5723 = vmatpush1.bf16.msra.mxu0 %v5671
      %5724 = vmatprep.subr.bf16.mxu0 0
      %5725 = vmatpush1.bf16.msra.mxu0 %v5672
      %5726 = vmatprep.subr.bf16.mxu0 0
      %5727 = vmatpush1.bf16.msra.mxu0 %v5673
      %5728 = vmatprep.subr.bf16.mxu0 0
      %5729 = vmatpush1.bf16.msra.mxu0 %v5674
      %5730 = vmatprep.subr.bf16.mxu0 0
      %5731 = vmatpush1.bf16.msra.mxu0 %v5675
      %5732 = vmatprep.subr.bf16.mxu0 0
      %5733 = vmatpush1.bf16.msra.mxu0 %v5676
      %5734 = vmatprep.subr.bf16.mxu0 0
      %5735 = vmatpush1.bf16.msra.mxu0 %v5677
      %5736 = vmatprep.subr.bf16.mxu0 0
      %5737 = vmatpush1.bf16.msra.mxu0 %v5678
      %5738 = vmatprep.subr.bf16.mxu0 0
      %5739 = vmatpush1.bf16.msra.mxu0 %v5679
      %5740 = vmatprep.subr.bf16.mxu0 0
      %5741 = vmatpush1.bf16.msra.mxu0 0
      %5742 = vmatprep.subr.bf16.mxu0 0
      %5743 = vmatpush1.bf16.msra.mxu0 0
      %5744 = vmatprep.subr.bf16.mxu0 0
      %5745 = vmatpush1.bf16.msra.mxu0 0
      %5746 = vmatprep.subr.bf16.mxu0 0
      %5747 = vmatpush1.bf16.msra.mxu0 0
      %5748 = vmatprep.mubr.bf16.mxu0 %v5693
      %5749 = vmatmul.mubr.bf16.gmra.mrb[0].mxu0 %v5572
      %v5750 = vpop.f32.mrb[0].mxu0
      %v5751 = vadd.f32 0.0, %v5750
      %v5752 = vpop.f32.mrb[0].mxu0
      %v5753 = vpop.f32.mrb[0].mxu0
      %v5754 = vadd.f32 0.0, %v5753
      %v5755 = vpop.f32.mrb[0].mxu0
      %5756 = vmatprep.mubr.bf16.mxu0 %v5696
      %5757 = vmatmul.mubr.bf16.gmra.mrb[0].mxu0 %v5575
      %v5758 = vpop.f32.mrb[0].mxu0
      %v5759 = vadd.f32 0.0, %v5758
      %v5760 = vpop.f32.mrb[0].mxu0
      %v5761 = vpop.f32.mrb[0].mxu0
      %v5762 = vadd.f32 0.0, %v5761
      %v5763 = vpop.f32.mrb[0].mxu0
      %5764 = vmatprep.mubr.bf16.mxu0 %v5699
      %5765 = vmatmul.mubr.bf16.gmra.mrb[0].mxu0 %v5578
      %v5766 = vpop.f32.mrb[0].mxu0
      %v5767 = vadd.f32 0.0, %v5766
      %v5768 = vpop.f32.mrb[0].mxu0
      %v5769 = vpop.f32.mrb[0].mxu0
      %v5770 = vadd.f32 0.0, %v5769
      %v5771 = vpop.f32.mrb[0].mxu0
      %5772 = vmatprep.mubr.bf16.mxu0 %v5702
      %5773 = vmatmul.mubr.bf16.gmra.mrb[0].mxu0 %v5581
      %v5774 = vpop.f32.mrb[0].mxu0
      %v5775 = vadd.f32 0.0, %v5774
      %v5776 = vpop.f32.mrb[0].mxu0
      %v5777 = vpop.f32.mrb[0].mxu0
      %v5778 = vadd.f32 0.0, %v5777
      %v5779 = vpop.f32.mrb[0].mxu0
      %5780 = vmatprep.mubr.bf16.mxu0 %v5705
      %5781 = vmatmul.mubr.bf16.gmra.mrb[0].mxu0 %v5584
      %v5782 = vpop.f32.mrb[0].mxu0
      %v5783 = vadd.f32 0.0, %v5782
      %v5784 = vpop.f32.mrb[0].mxu0
      %v5785 = vpop.f32.mrb[0].mxu0
      %v5786 = vadd.f32 0.0, %v5785
      %v5787 = vpop.f32.mrb[0].mxu0
      %5788 = vmatprep.mubr.bf16.mxu0 %v5708
      %5789 = vmatmul.mubr.bf16.gmra.mrb[0].mxu0 %v5587
      %v5790 = vpop.f32.mrb[0].mxu0
      %v5791 = vadd.f32 0.0, %v5790
      %v5792 = vpop.f32.mrb[0].mxu0
      %v5793 = vpop.f32.mrb[0].mxu0
      %v5794 = vadd.f32 0.0, %v5793
      %v5795 = vpop.f32.mrb[0].mxu0
      %5796 = vmatprep.mubr.bf16.mxu0 %v5711
      %5797 = vmatmul.mubr.bf16.gmra.mrb[0].mxu0 %v5590
      %v5798 = vpop.f32.mrb[0].mxu0
      %v5799 = vadd.f32 0.0, %v5798
      %v5800 = vpop.f32.mrb[0].mxu0
      %v5801 = vpop.f32.mrb[0].mxu0
      %v5802 = vadd.f32 0.0, %v5801
      %v5803 = vpop.f32.mrb[0].mxu0
      %5804 = vmatprep.mubr.bf16.mxu0 %v5714
      %5805 = vmatmul.mubr.bf16.gmra.mrb[0].mxu0 %v5593
      %v5806 = vpop.f32.mrb[0].mxu0
      %v5807 = vadd.f32 0.0, %v5806
      %v5808 = vpop.f32.mrb[0].mxu0
      %v5809 = vpop.f32.mrb[0].mxu0
      %v5810 = vadd.f32 0.0, %v5809
      %v5811 = vpop.f32.mrb[0].mxu0
      %5812 = vdwg.mxu0
      %v5813 = vadd.f32 %v5284, %v5751
      %v5814 = vadd.f32 %v5287, %v5754
      %v5815 = vadd.f32 %v5292, %v5759
      %v5816 = vadd.f32 %v5295, %v5762
      %v5817 = vadd.f32 %v5300, %v5767
      %v5818 = vadd.f32 %v5303, %v5770
      %v5819 = vadd.f32 %v5308, %v5775
      %v5820 = vadd.f32 %v5311, %v5778
      %v5821 = vadd.f32 %v5316, %v5783
      %v5822 = vadd.f32 %v5319, %v5786
      %v5823 = vadd.f32 %v5324, %v5791
      %v5824 = vadd.f32 %v5327, %v5794
      %v5825 = vadd.f32 %v5332, %v5799
      %v5826 = vadd.f32 %v5335, %v5802
      %v5827 = vadd.f32 %v5340, %v5807
      %v5828 = vadd.f32 %v5343, %v5810
      %v5829 = vld [vmem:[%s4] sm:$0x1]
      %v5831 = vlaneseq
      %v5832 = vshrl.u32 %v5831, 7
      %v5833 = vsub.s32 0, %v5832
      %v5834 = vrot.slane %v5829, %v5833
      %v5836 = vadd.f32 %v5813, %v5834
      %v5837 = vadd.f32 %v5814, %v5834
      %v5838 = vadd.f32 %v5815, %v5834
      %v5839 = vadd.f32 %v5816, %v5834
      %v5840 = vadd.f32 %v5817, %v5834
      %v5841 = vadd.f32 %v5818, %v5834
      %v5842 = vadd.f32 %v5819, %v5834
      %v5843 = vadd.f32 %v5820, %v5834
      %v5844 = vadd.f32 %v5821, %v5834
      %v5845 = vadd.f32 %v5822, %v5834
      %v5846 = vadd.f32 %v5823, %v5834
      %v5847 = vadd.f32 %v5824, %v5834
      %v5848 = vadd.f32 %v5825, %v5834
      %v5849 = vadd.f32 %v5826, %v5834
      %v5850 = vadd.f32 %v5827, %v5834
      %v5851 = vadd.f32 %v5828, %v5834
      %v5852 = vmax.f32 %v5836, 0.0
      %v5853 = vmax.f32 %v5837, 0.0
      %v5854 = vmax.f32 %v5838, 0.0
      %v5855 = vmax.f32 %v5839, 0.0
      %v5856 = vmax.f32 %v5840, 0.0
      %v5857 = vmax.f32 %v5841, 0.0
      %v5858 = vmax.f32 %v5842, 0.0
      %v5859 = vmax.f32 %v5843, 0.0
      %v5860 = vmax.f32 %v5844, 0.0
      %v5861 = vmax.f32 %v5845, 0.0
      %v5862 = vmax.f32 %v5846, 0.0
      %v5863 = vmax.f32 %v5847, 0.0
      %v5864 = vmax.f32 %v5848, 0.0
      %v5865 = vmax.f32 %v5849, 0.0
      %v5866 = vmax.f32 %v5850, 0.0
      %v5867 = vmax.f32 %v5851, 0.0
      %v5868 = vmax.f32 %v5852, %v5854
      %v5869 = vmax.f32 %v5853, %v5855
      %v5870 = vmax.f32 %v5856, %v5858
      %v5871 = vmax.f32 %v5857, %v5859
      %v5872 = vmax.f32 %v5860, %v5862
      %v5873 = vmax.f32 %v5861, %v5863
      %v5874 = vmax.f32 %v5864, %v5866
      %v5875 = vmax.f32 %v5865, %v5867
      %v5884 = vcombine.high %v5868, %v5868
      %v5886 = vunpack.c.l.s4 1983009808
      %v5887 = vunpack.c.0.s8 %v5886
      %v5888 = vlaneseq
      %v5889 = vshrl.u32 %v5888, 7
      %v5890 = vsub.s32 %v5887, %v5889
      %v5891 = vrot.slane %v5868, %v5890
      %v5893 = vunpack.c.l.s4 1983009808
      %v5894 = vunpack.c.0.s8 %v5893
      %v5895 = vlaneseq
      %v5896 = vshrl.u32 %v5895, 7
      %v5897 = vsub.s32 %v5894, %v5896
      %v5898 = vrot.slane %v5884, %v5897
      %v5899 = vcombine.high %v5891, %v5891
      %v5900 = vcombine.high %v5898, %v5898
      %v5901 = vcombine.high %v5869, %v5869
      %v5903 = vunpack.c.l.s4 1983009808
      %v5904 = vunpack.c.0.s8 %v5903
      %v5905 = vlaneseq
      %v5906 = vshrl.u32 %v5905, 7
      %v5907 = vsub.s32 %v5904, %v5906
      %v5908 = vrot.slane %v5869, %v5907
      %v5910 = vunpack.c.l.s4 1983009808
      %v5911 = vunpack.c.0.s8 %v5910
      %v5912 = vlaneseq
      %v5913 = vshrl.u32 %v5912, 7
      %v5914 = vsub.s32 %v5911, %v5913
      %v5915 = vrot.slane %v5901, %v5914
      %v5916 = vcombine.high %v5908, %v5908
      %v5917 = vcombine.high %v5915, %v5915
      %v5918 = vcombine.high %v5870, %v5870
      %v5920 = vunpack.c.l.s4 1983009808
      %v5921 = vunpack.c.0.s8 %v5920
      %v5922 = vlaneseq
      %v5923 = vshrl.u32 %v5922, 7
      %v5924 = vsub.s32 %v5921, %v5923
      %v5925 = vrot.slane %v5870, %v5924
      %v5927 = vunpack.c.l.s4 1983009808
      %v5928 = vunpack.c.0.s8 %v5927
      %v5929 = vlaneseq
      %v5930 = vshrl.u32 %v5929, 7
      %v5931 = vsub.s32 %v5928, %v5930
      %v5932 = vrot.slane %v5918, %v5931
      %v5933 = vcombine.high %v5925, %v5925
      %v5934 = vcombine.high %v5932, %v5932
      %v5935 = vcombine.high %v5871, %v5871
      %v5937 = vunpack.c.l.s4 1983009808
      %v5938 = vunpack.c.0.s8 %v5937
      %v5939 = vlaneseq
      %v5940 = vshrl.u32 %v5939, 7
      %v5941 = vsub.s32 %v5938, %v5940
      %v5942 = vrot.slane %v5871, %v5941
      %v5944 = vunpack.c.l.s4 1983009808
      %v5945 = vunpack.c.0.s8 %v5944
      %v5946 = vlaneseq
      %v5947 = vshrl.u32 %v5946, 7
      %v5948 = vsub.s32 %v5945, %v5947
      %v5949 = vrot.slane %v5935, %v5948
      %v5950 = vcombine.high %v5942, %v5942
      %v5951 = vcombine.high %v5949, %v5949
      %v5952 = vcombine.high %v5872, %v5872
      %v5954 = vunpack.c.l.s4 1983009808
      %v5955 = vunpack.c.0.s8 %v5954
      %v5956 = vlaneseq
      %v5957 = vshrl.u32 %v5956, 7
      %v5958 = vsub.s32 %v5955, %v5957
      %v5959 = vrot.slane %v5872, %v5958
      %v5961 = vunpack.c.l.s4 1983009808
      %v5962 = vunpack.c.0.s8 %v5961
      %v5963 = vlaneseq
      %v5964 = vshrl.u32 %v5963, 7
      %v5965 = vsub.s32 %v5962, %v5964
      %v5966 = vrot.slane %v5952, %v5965
      %v5967 = vcombine.high %v5959, %v5959
      %v5968 = vcombine.high %v5966, %v5966
      %v5969 = vcombine.high %v5873, %v5873
      %v5971 = vunpack.c.l.s4 1983009808
      %v5972 = vunpack.c.0.s8 %v5971
      %v5973 = vlaneseq
      %v5974 = vshrl.u32 %v5973, 7
      %v5975 = vsub.s32 %v5972, %v5974
      %v5976 = vrot.slane %v5873, %v5975
      %v5978 = vunpack.c.l.s4 1983009808
      %v5979 = vunpack.c.0.s8 %v5978
      %v5980 = vlaneseq
      %v5981 = vshrl.u32 %v5980, 7
      %v5982 = vsub.s32 %v5979, %v5981
      %v5983 = vrot.slane %v5969, %v5982
      %v5984 = vcombine.high %v5976, %v5976
      %v5985 = vcombine.high %v5983, %v5983
      %v5986 = vcombine.high %v5874, %v5874
      %v5988 = vunpack.c.l.s4 1983009808
      %v5989 = vunpack.c.0.s8 %v5988
      %v5990 = vlaneseq
      %v5991 = vshrl.u32 %v5990, 7
      %v5992 = vsub.s32 %v5989, %v5991
      %v5993 = vrot.slane %v5874, %v5992
      %v5995 = vunpack.c.l.s4 1983009808
      %v5996 = vunpack.c.0.s8 %v5995
      %v5997 = vlaneseq
      %v5998 = vshrl.u32 %v5997, 7
      %v5999 = vsub.s32 %v5996, %v5998
      %v6000 = vrot.slane %v5986, %v5999
      %v6001 = vcombine.high %v5993, %v5993
      %v6002 = vcombine.high %v6000, %v6000
      %v6003 = vcombine.high %v5875, %v5875
      %v6005 = vunpack.c.l.s4 1983009808
      %v6006 = vunpack.c.0.s8 %v6005
      %v6007 = vlaneseq
      %v6008 = vshrl.u32 %v6007, 7
      %v6009 = vsub.s32 %v6006, %v6008
      %v6010 = vrot.slane %v5875, %v6009
      %v6012 = vunpack.c.l.s4 1983009808
      %v6013 = vunpack.c.0.s8 %v6012
      %v6014 = vlaneseq
      %v6015 = vshrl.u32 %v6014, 7
      %v6016 = vsub.s32 %v6013, %v6015
      %v6017 = vrot.slane %v6003, %v6016
      %v6018 = vcombine.high %v6010, %v6010
      %v6019 = vcombine.high %v6017, %v6017
      %v6052 = vrot.slane %v5891, 7
      %v6053 = vrot.slane %v6052, 2
      %v6054 = vrot.slane %v5899, 7
      %v6055 = vrot.slane %v6054, 2
      %v6056 = vrot.slane %v5898, 7
      %v6057 = vrot.slane %v6056, 2
      %v6058 = vrot.slane %v5900, 7
      %v6059 = vrot.slane %v6058, 2
      %v6060 = vrot.slane %v5908, 7
      %v6061 = vrot.slane %v6060, 2
      %v6062 = vrot.slane %v5916, 7
      %v6063 = vrot.slane %v6062, 2
      %v6064 = vrot.slane %v5915, 7
      %v6065 = vrot.slane %v6064, 2
      %v6066 = vrot.slane %v5917, 7
      %v6067 = vrot.slane %v6066, 2
      %v6068 = vrot.slane %v5925, 7
      %v6069 = vrot.slane %v6068, 2
      %v6070 = vrot.slane %v5933, 7
      %v6071 = vrot.slane %v6070, 2
      %v6072 = vrot.slane %v5932, 7
      %v6073 = vrot.slane %v6072, 2
      %v6074 = vrot.slane %v5934, 7
      %v6075 = vrot.slane %v6074, 2
      %v6076 = vrot.slane %v5942, 7
      %v6077 = vrot.slane %v6076, 2
      %v6078 = vrot.slane %v5950, 7
      %v6079 = vrot.slane %v6078, 2
      %v6080 = vrot.slane %v5949, 7
      %v6081 = vrot.slane %v6080, 2
      %v6082 = vrot.slane %v5951, 7
      %v6083 = vrot.slane %v6082, 2
      %v6084 = vrot.slane %v5959, 7
      %v6085 = vrot.slane %v6084, 2
      %v6086 = vrot.slane %v5967, 7
      %v6087 = vrot.slane %v6086, 2
      %v6088 = vrot.slane %v5966, 7
      %v6089 = vrot.slane %v6088, 2
      %v6090 = vrot.slane %v5968, 7
      %v6091 = vrot.slane %v6090, 2
      %v6092 = vrot.slane %v5976, 7
      %v6093 = vrot.slane %v6092, 2
      %v6094 = vrot.slane %v5984, 7
      %v6095 = vrot.slane %v6094, 2
      %v6096 = vrot.slane %v5983, 7
      %v6097 = vrot.slane %v6096, 2
      %v6098 = vrot.slane %v5985, 7
      %v6099 = vrot.slane %v6098, 2
      %v6100 = vrot.slane %v5993, 7
      %v6101 = vrot.slane %v6100, 2
      %v6102 = vrot.slane %v6001, 7
      %v6103 = vrot.slane %v6102, 2
      %v6104 = vrot.slane %v6000, 7
      %v6105 = vrot.slane %v6104, 2
      %v6106 = vrot.slane %v6002, 7
      %v6107 = vrot.slane %v6106, 2
      %v6108 = vrot.slane %v6010, 7
      %v6109 = vrot.slane %v6108, 2
      %v6110 = vrot.slane %v6018, 7
      %v6111 = vrot.slane %v6110, 2
      %v6112 = vrot.slane %v6017, 7
      %v6113 = vrot.slane %v6112, 2
      %v6114 = vrot.slane %v6019, 7
      %v6115 = vrot.slane %v6114, 2
      %v6148 = vmax.f32 %v5891, %v6053
      %v6149 = vmax.f32 %v5899, %v6055
      %v6150 = vmax.f32 %v5898, %v6057
      %v6151 = vmax.f32 %v5900, %v6059
      %v6152 = vmax.f32 %v5908, %v6061
      %v6153 = vmax.f32 %v5916, %v6063
      %v6154 = vmax.f32 %v5915, %v6065
      %v6155 = vmax.f32 %v5917, %v6067
      %v6156 = vmax.f32 %v5925, %v6069
      %v6157 = vmax.f32 %v5933, %v6071
      %v6158 = vmax.f32 %v5932, %v6073
      %v6159 = vmax.f32 %v5934, %v6075
      %v6160 = vmax.f32 %v5942, %v6077
      %v6161 = vmax.f32 %v5950, %v6079
      %v6162 = vmax.f32 %v5949, %v6081
      %v6163 = vmax.f32 %v5951, %v6083
      %v6164 = vmax.f32 %v5959, %v6085
      %v6165 = vmax.f32 %v5967, %v6087
      %v6166 = vmax.f32 %v5966, %v6089
      %v6167 = vmax.f32 %v5968, %v6091
      %v6168 = vmax.f32 %v5976, %v6093
      %v6169 = vmax.f32 %v5984, %v6095
      %v6170 = vmax.f32 %v5983, %v6097
      %v6171 = vmax.f32 %v5985, %v6099
      %v6172 = vmax.f32 %v5993, %v6101
      %v6173 = vmax.f32 %v6001, %v6103
      %v6174 = vmax.f32 %v6000, %v6105
      %v6175 = vmax.f32 %v6002, %v6107
      %v6176 = vmax.f32 %v6010, %v6109
      %v6177 = vmax.f32 %v6018, %v6111
      %v6178 = vmax.f32 %v6017, %v6113
      %v6179 = vmax.f32 %v6019, %v6115
      %v6180 = vpack.c.bf16 %v6148, %v6148
      %v6181 = vpack.c.bf16 %v6149, %v6149
      %v6182 = vpack.c.bf16 %v6150, %v6150
      %v6183 = vpack.c.bf16 %v6151, %v6151
      %v6184 = vpack.c.bf16 %v6152, %v6152
      %v6185 = vpack.c.bf16 %v6153, %v6153
      %v6186 = vpack.c.bf16 %v6154, %v6154
      %v6187 = vpack.c.bf16 %v6155, %v6155
      %v6188 = vpack.c.bf16 %v6156, %v6156
      %v6189 = vpack.c.bf16 %v6157, %v6157
      %v6190 = vpack.c.bf16 %v6158, %v6158
      %v6191 = vpack.c.bf16 %v6159, %v6159
      %v6192 = vpack.c.bf16 %v6160, %v6160
      %v6193 = vpack.c.bf16 %v6161, %v6161
      %v6194 = vpack.c.bf16 %v6162, %v6162
      %v6195 = vpack.c.bf16 %v6163, %v6163
      %v6196 = vpack.c.bf16 %v6164, %v6164
      %v6197 = vpack.c.bf16 %v6165, %v6165
      %v6198 = vpack.c.bf16 %v6166, %v6166
      %v6199 = vpack.c.bf16 %v6167, %v6167
      %v6200 = vpack.c.bf16 %v6168, %v6168
      %v6201 = vpack.c.bf16 %v6169, %v6169
      %v6202 = vpack.c.bf16 %v6170, %v6170
      %v6203 = vpack.c.bf16 %v6171, %v6171
      %v6204 = vpack.c.bf16 %v6172, %v6172
      %v6205 = vpack.c.bf16 %v6173, %v6173
      %v6206 = vpack.c.bf16 %v6174, %v6174
      %v6207 = vpack.c.bf16 %v6175, %v6175
      %v6208 = vpack.c.bf16 %v6176, %v6176
      %v6209 = vpack.c.bf16 %v6177, %v6177
      %v6210 = vpack.c.bf16 %v6178, %v6178
      %v6211 = vpack.c.bf16 %v6179, %v6179
      %v6244 = vunpack.c.l.b16 %v6180
      %v6245 = vunpack.c.l.b16 %v6181
      %v6246 = vunpack.c.l.b16 %v6182
      %v6247 = vunpack.c.l.b16 %v6183
      %v6248 = vunpack.c.l.b16 %v6184
      %v6249 = vunpack.c.l.b16 %v6185
      %v6250 = vunpack.c.l.b16 %v6186
      %v6251 = vunpack.c.l.b16 %v6187
      %v6252 = vunpack.c.l.b16 %v6188
      %v6253 = vunpack.c.l.b16 %v6189
      %v6254 = vunpack.c.l.b16 %v6190
      %v6255 = vunpack.c.l.b16 %v6191
      %v6256 = vunpack.c.l.b16 %v6192
      %v6257 = vunpack.c.l.b16 %v6193
      %v6258 = vunpack.c.l.b16 %v6194
      %v6259 = vunpack.c.l.b16 %v6195
      %v6260 = vunpack.c.l.b16 %v6196
      %v6261 = vunpack.c.l.b16 %v6197
      %v6262 = vunpack.c.l.b16 %v6198
      %v6263 = vunpack.c.l.b16 %v6199
      %v6264 = vunpack.c.l.b16 %v6200
      %v6265 = vunpack.c.l.b16 %v6201
      %v6266 = vunpack.c.l.b16 %v6202
      %v6267 = vunpack.c.l.b16 %v6203
      %v6268 = vunpack.c.l.b16 %v6204
      %v6269 = vunpack.c.l.b16 %v6205
      %v6270 = vunpack.c.l.b16 %v6206
      %v6271 = vunpack.c.l.b16 %v6207
      %v6272 = vunpack.c.l.b16 %v6208
      %v6273 = vunpack.c.l.b16 %v6209
      %v6274 = vunpack.c.l.b16 %v6210
      %v6275 = vunpack.c.l.b16 %v6211
      %v6276 = vpack.c.b16 %v6244, %v6244
      %v6277 = vpack.c.b16 %v6245, %v6245
      %v6278 = vpack.c.b16 %v6246, %v6246
      %v6279 = vpack.c.b16 %v6247, %v6247
      %v6280 = vpack.c.b16 %v6248, %v6248
      %v6281 = vpack.c.b16 %v6249, %v6249
      %v6282 = vpack.c.b16 %v6250, %v6250
      %v6283 = vpack.c.b16 %v6251, %v6251
      %v6284 = vpack.c.b16 %v6252, %v6252
      %v6285 = vpack.c.b16 %v6253, %v6253
      %v6286 = vpack.c.b16 %v6254, %v6254
      %v6287 = vpack.c.b16 %v6255, %v6255
      %v6288 = vpack.c.b16 %v6256, %v6256
      %v6289 = vpack.c.b16 %v6257, %v6257
      %v6290 = vpack.c.b16 %v6258, %v6258
      %v6291 = vpack.c.b16 %v6259, %v6259
      %v6292 = vpack.c.b16 %v6260, %v6260
      %v6293 = vpack.c.b16 %v6261, %v6261
      %v6294 = vpack.c.b16 %v6262, %v6262
      %v6295 = vpack.c.b16 %v6263, %v6263
      %v6296 = vpack.c.b16 %v6264, %v6264
      %v6297 = vpack.c.b16 %v6265, %v6265
      %v6298 = vpack.c.b16 %v6266, %v6266
      %v6299 = vpack.c.b16 %v6267, %v6267
      %v6300 = vpack.c.b16 %v6268, %v6268
      %v6301 = vpack.c.b16 %v6269, %v6269
      %v6302 = vpack.c.b16 %v6270, %v6270
      %v6303 = vpack.c.b16 %v6271, %v6271
      %v6304 = vpack.c.b16 %v6272, %v6272
      %v6305 = vpack.c.b16 %v6273, %v6273
      %v6306 = vpack.c.b16 %v6274, %v6274
      %v6307 = vpack.c.b16 %v6275, %v6275
      %v6308 = vunpack.c.l.b16 %v6276
      %v6309 = vunpack.c.l.b16 %v6277
      %v6310 = vunpack.c.l.b16 %v6278
      %v6311 = vunpack.c.l.b16 %v6279
      %v6312 = vunpack.c.l.b16 %v6280
      %v6313 = vunpack.c.l.b16 %v6281
      %v6314 = vunpack.c.l.b16 %v6282
      %v6315 = vunpack.c.l.b16 %v6283
      %v6316 = vunpack.c.l.b16 %v6284
      %v6317 = vunpack.c.l.b16 %v6285
      %v6318 = vunpack.c.l.b16 %v6286
      %v6319 = vunpack.c.l.b16 %v6287
      %v6320 = vunpack.c.l.b16 %v6288
      %v6321 = vunpack.c.l.b16 %v6289
      %v6322 = vunpack.c.l.b16 %v6290
      %v6323 = vunpack.c.l.b16 %v6291
      %v6324 = vunpack.c.l.b16 %v6292
      %v6325 = vunpack.c.l.b16 %v6293
      %v6326 = vunpack.c.l.b16 %v6294
      %v6327 = vunpack.c.l.b16 %v6295
      %v6328 = vunpack.c.l.b16 %v6296
      %v6329 = vunpack.c.l.b16 %v6297
      %v6330 = vunpack.c.l.b16 %v6298
      %v6331 = vunpack.c.l.b16 %v6299
      %v6332 = vunpack.c.l.b16 %v6300
      %v6333 = vunpack.c.l.b16 %v6301
      %v6334 = vunpack.c.l.b16 %v6302
      %v6335 = vunpack.c.l.b16 %v6303
      %v6336 = vunpack.c.l.b16 %v6304
      %v6337 = vunpack.c.l.b16 %v6305
      %v6338 = vunpack.c.l.b16 %v6306
      %v6339 = vunpack.c.l.b16 %v6307
      %v6340 = vrot.slane %v6309, 7
      %vm6341 = vcmask 1041409
      %v6342 = vsel %vm6341, %v6340, %v6308
      %v6343 = vrot.slane %v6310, 6
      %vm6344 = vcmask 1042434
      %v6345 = vsel %vm6344, %v6343, %v6342
      %v6346 = vrot.slane %v6311, 5
      %vm6347 = vcmask 1043459
      %v6348 = vsel %vm6347, %v6346, %v6345
      %v6349 = vrot.slane %v6312, 4
      %vm6350 = vcmask 1044484
      %v6351 = vsel %vm6350, %v6349, %v6348
      %v6352 = vrot.slane %v6313, 3
      %vm6353 = vcmask 1045509
      %v6354 = vsel %vm6353, %v6352, %v6351
      %v6355 = vrot.slane %v6314, 2
      %vm6356 = vcmask 1046534
      %v6357 = vsel %vm6356, %v6355, %v6354
      %v6358 = vrot.slane %v6315, 1
      %vm6359 = vcmask 1047559
      %v6360 = vsel %vm6359, %v6358, %v6357
      %v6361 = vrot.slane %v6317, 7
      %v6362 = vsel %vm6341, %v6361, %v6316
      %v6363 = vrot.slane %v6318, 6
      %v6364 = vsel %vm6344, %v6363, %v6362
      %v6365 = vrot.slane %v6319, 5
      %v6366 = vsel %vm6347, %v6365, %v6364
      %v6367 = vrot.slane %v6320, 4
      %v6368 = vsel %vm6350, %v6367, %v6366
      %v6369 = vrot.slane %v6321, 3
      %v6370 = vsel %vm6353, %v6369, %v6368
      %v6371 = vrot.slane %v6322, 2
      %v6372 = vsel %vm6356, %v6371, %v6370
      %v6373 = vrot.slane %v6323, 1
      %v6374 = vsel %vm6359, %v6373, %v6372
      %v6375 = vrot.slane %v6325, 7
      %v6376 = vsel %vm6341, %v6375, %v6324
      %v6377 = vrot.slane %v6326, 6
      %v6378 = vsel %vm6344, %v6377, %v6376
      %v6379 = vrot.slane %v6327, 5
      %v6380 = vsel %vm6347, %v6379, %v6378
      %v6381 = vrot.slane %v6328, 4
      %v6382 = vsel %vm6350, %v6381, %v6380
      %v6383 = vrot.slane %v6329, 3
      %v6384 = vsel %vm6353, %v6383, %v6382
      %v6385 = vrot.slane %v6330, 2
      %v6386 = vsel %vm6356, %v6385, %v6384
      %v6387 = vrot.slane %v6331, 1
      %v6388 = vsel %vm6359, %v6387, %v6386
      %v6389 = vrot.slane %v6333, 7
      %v6390 = vsel %vm6341, %v6389, %v6332
      %v6391 = vrot.slane %v6334, 6
      %v6392 = vsel %vm6344, %v6391, %v6390
      %v6393 = vrot.slane %v6335, 5
      %v6394 = vsel %vm6347, %v6393, %v6392
      %v6395 = vrot.slane %v6336, 4
      %v6396 = vsel %vm6350, %v6395, %v6394
      %v6397 = vrot.slane %v6337, 3
      %v6398 = vsel %vm6353, %v6397, %v6396
      %v6399 = vrot.slane %v6338, 2
      %v6400 = vsel %vm6356, %v6399, %v6398
      %v6401 = vrot.slane %v6339, 1
      %v6402 = vsel %vm6359, %v6401, %v6400
      %v6403 = vpack.c.b16 %v6360, %v6360
      %v6404 = vpack.c.b16 %v6374, %v6374
      %v6405 = vpack.c.b16 %v6388, %v6388
      %v6406 = vpack.c.b16 %v6402, %v6402
      %6411 = vst.msk [vmem:[%s246] sm:$0xf] %vm4381, %v6403
      %6412 = vst.msk [vmem:[%s246 + $0x4] sm:$0xf] %vm4381, %v6404
      %6413 = vst.msk [vmem:[%s246 + $0x8] sm:$0xf] %vm4381, %v6405
      %6414 = vst.msk [vmem:[%s246 + $0xc] sm:$0xf] %vm4381, %v6406
      %s6415 = smul.u32 4, %s21
      %p6416 = scmp.lt.s32.totalorder %s20, 1
      %s6417 = scalar_select %p6416, %s20, 1
      %p6418 = scmp.lt.s32.totalorder %s6415, 7
      %s6419 = scalar_select %p6418, %s6415, 7
      %s6420 = smul.addr %s6417, 8
      %s6421 = sadd.s32 %s6419, %s6420
      %s6422 = smul.addr %s6421, 4
      %s6423 = scalar_lea.vmem %s5, %s6422
      // Predicated region
      $region41: #{vgg_split_forward.2} parent=39 // pred_check
        %p6424 = pneg %p158
      $region42: #{vgg_split_forward.2} parent=39 // pred_check_branch
        %6426 = sbr.rel (%p6424) target = $region44
      $region43: #{vgg_split_forward.2} parent=39 // pred_region
        %s6427 = smul.u32 4, %s21
      $region44: #{vgg_split_forward.2} parent=39 // pred_fallthru
        _
    $region40: #{vgg_split_forward.2} parent=5 // pred_fallthru
      _
    %p6428 = scmp.le.s32.totalorder 2, %s11
    // Predicated region
    $region45: #{vgg_split_forward.2} parent=5 // pred_check
      %p6429 = pneg %p6428
    $region46: #{vgg_split_forward.2} parent=5 // pred_check_branch
      %6431 = sbr.rel (%p6429) target = $region48
    $region47: #{vgg_split_forward.2} parent=5 // pred_region
      %s6432 = ssub.s32 %s11, 2
      // Predicated region
      $region49: #{vgg_split_forward.2} parent=47 // pred_check
        %p6433 = pneg %p164
      $region50: #{vgg_split_forward.2} parent=47 // pred_check_branch
        %6435 = sbr.rel (%p6433) target = $region52
      $region51: #{vgg_split_forward.2} parent=47 // pred_region
        %s6436 = smul.u32 4, %s23
        %p6437 = scmp.lt.s32.totalorder %s22, 1
        %s6438 = scalar_select %p6437, %s22, 1
        %p6439 = scmp.lt.s32.totalorder %s6436, 7
        %s6440 = scalar_select %p6439, %s6436, 7
        %s6441 = smul.addr %s6438, 8
        %s6442 = sadd.s32 %s6440, %s6441
        %s6443 = smul.addr %s6442, 4
        %s6444 = scalar_lea.vmem %s5, %s6443
      $region52: #{vgg_split_forward.2} parent=47 // pred_fallthru
        _
    $region48: #{vgg_split_forward.2} parent=5 // pred_fallthru
      _
  $region6: #{vgg_split_forward.2} parent=0 // loop_footer
    %s15 = sadd.s32 1, %s11
  $region7: #{vgg_split_forward.2} parent=0 // loop_footer_branch
    %10 = sbr.rel target = $region3
  $region8: #{vgg_split_forward.2} parent=0 // loop_exit
    _

</llo_original>
